<compile_context>
chip_gen: v6e
topology: v6e:2x2x1
jax: 0.10.0
libtpu: 0.0.40
codegen_flags: <defaults>
</compile_context>

<pallas_src>
import functools

import numpy as np

import jax
import jax.numpy as jnp
from jax import lax
from jax.experimental import pallas as pl
from jax.experimental.pallas import tpu as pltpu


# -----------------------------------------------------------------------------
# tanh-form GELU (EUP tanh; deviation from exact erf GELU ~1e-3, well inside
# the test tolerance).
# -----------------------------------------------------------------------------
def _gelu_tanh(x):
    c = 0.7978845608028654  # sqrt(2/pi)
    return 0.5 * x * (1.0 + jnp.tanh(c * (x + 0.044715 * x * x * x)))


# -----------------------------------------------------------------------------
# Pallas kernel: a block of window-rows per grid step, whole Swin block fused.
# -----------------------------------------------------------------------------
def _swin_block_kernel(x_ref, bm_ref,
                       g1_ref, b1_ref,
                       wqkv_ref, bqkv_ref, wp_ref, bp_ref,
                       g2_ref, b2_ref,
                       wm1_ref, bm1_ref, wm2_ref, bm2_ref,
                       o_ref, *, ws, num_heads, scale, eps):
    # x_ref   : (1, wrows*ws, W, C)  raw (already cyclically shifted) rows
    # bm_ref  : (nwin, nH, N, N) or (1, nH, N, N)  rel-pos bias (+ shift mask)
    # wqkv    : (C, 3C) bf16, bqkv: (1, 3C) f32    fused qkv weights
    # wp      : (C, C)  bf16, bp  : (1, C)  f32    output projection
    # g1,b1,g2,b2: (1, C) f32                      LayerNorm affine params
    # wm1:(C,Hd) wm2:(Hd,C) bf16, bm1:(1,Hd) bm2:(1,C) f32   MLP weights
    f32, bf16 = jnp.float32, jnp.bfloat16
    _, rblk, W, C = x_ref.shape
    wrows = rblk // ws
    nww = W // ws
    nwin = wrows * nww
    N = ws * ws
    ntok = nwin * N
    nh = num_heads
    hd = C // nh

    # ---- window partition (static slices + concat; window-major token order)
    x_img = x_ref[0]                                     # (wrows*ws, W, C)
    tiles = [x_img[r * ws:(r + 1) * ws, w * ws:(w + 1) * ws, :]
             for r in range(wrows) for w in range(nww)]
    xw = jnp.concatenate(tiles, axis=0).reshape(ntok, C).astype(f32)

    # ---- LayerNorm 1 (per token, over C) ----
    mu = jnp.mean(xw, axis=-1, keepdims=True)
    xc = xw - mu
    var = jnp.mean(xc * xc, axis=-1, keepdims=True)
    xn = xc * lax.rsqrt(var + eps) * g1_ref[...] + b1_ref[...]

    # ---- fused QKV: one lane-dense matmul (bf16 operands, f32 accum) ----
    qkv = jnp.dot(xn.astype(bf16), wqkv_ref[...],
                  preferred_element_type=f32) + bqkv_ref[...]       # (ntok, 3C)

    def split_heads(part, q_scale=None):
        # -> (nwin*nh, N, hd), batch index = win*nh + head
        cols = []
        for h in range(nh):
            c0 = part * C + h * hd
            m = qkv[:, c0:c0 + hd]
            if q_scale is not None:
                m = m * q_scale
            cols.append(m.reshape(nwin, 1, N, hd))
        return jnp.concatenate(cols, axis=1).reshape(nwin * nh, N, hd)

    q = split_heads(0, scale).astype(bf16)
    k = split_heads(1).astype(bf16)
    v = split_heads(2).astype(bf16)

    # ---- batched attention over the merged (window, head) axis ----
    s = jnp.einsum('bnd,bmd->bnm', q, k, preferred_element_type=f32)
    s = s.reshape(nwin, nh, N, N) + bm_ref[...]          # bias (+ mask), bcast ok
    s = s.reshape(nwin * nh, N, N)
    s = s - jnp.max(s, axis=-1, keepdims=True)
    p = jnp.exp(s)
    p = p * pl.reciprocal(jnp.sum(p, axis=-1, keepdims=True), approx=True)

    o = jnp.einsum('bnm,bmd->bnd', p.astype(bf16), v,
                   preferred_element_type=f32)           # (nwin*nh, N, hd)

    # ---- merge heads (lane concat) + dense output projection ----
    o4 = o.reshape(nwin, nh, N, hd)
    oc = jnp.concatenate([o4[:, h] for h in range(nh)], axis=-1).reshape(ntok, C)
    attn = jnp.dot(oc.astype(bf16), wp_ref[...],
                   preferred_element_type=f32) + bp_ref[...]

    x1 = xw + attn                                       # residual 1

    # ---- LayerNorm 2 + MLP + residual 2 ----
    mu2 = jnp.mean(x1, axis=-1, keepdims=True)
    xc2 = x1 - mu2
    var2 = jnp.mean(xc2 * xc2, axis=-1, keepdims=True)
    x2 = xc2 * lax.rsqrt(var2 + eps) * g2_ref[...] + b2_ref[...]

    h1 = jnp.dot(x2.astype(bf16), wm1_ref[...],
                 preferred_element_type=f32) + bm1_ref[...]
    h1 = _gelu_tanh(h1)
    out = x1 + jnp.dot(h1.astype(bf16), wm2_ref[...],
                       preferred_element_type=f32) + bm2_ref[...]

    # ---- window reverse, write back (lane-dense (…, C=128) store) ----
    out_t = out.reshape(nwin, ws, ws, C)
    row_imgs = []
    for r in range(wrows):
        row_imgs.append(jnp.concatenate(
            [out_t[r * nww + w] for w in range(nww)], axis=1))      # (ws, W, C)
    out_img = jnp.concatenate(row_imgs, axis=0)                     # (rblk, W, C)
    o_ref[...] = out_img.reshape(1, rblk, W, C).astype(o_ref.dtype)


# -----------------------------------------------------------------------------
# Static helpers (mirror the torch module's init-time buffers).
# -----------------------------------------------------------------------------
def _relative_position_index(ws):
    coords = np.stack(np.meshgrid(np.arange(ws), np.arange(ws), indexing="ij"))
    coords = coords.reshape(2, -1)                               # (2, N)
    rel = coords[:, :, None] - coords[:, None, :]                # (2, N, N)
    rel = rel.transpose(1, 2, 0).copy()
    rel[:, :, 0] += ws - 1
    rel[:, :, 1] += ws - 1
    rel[:, :, 0] *= 2 * ws - 1
    return rel.sum(-1)                                           # (N, N) ints


def _shift_attn_mask(H, W, ws, shift):
    # SwinTransformerBlock.calculate_mask
    img = np.zeros((H, W), np.float32)
    slices = (slice(0, -ws), slice(-ws, -shift), slice(-shift, None))
    cnt = 0
    for hs in slices:
        for wsl in slices:
            img[hs, wsl] = cnt
            cnt += 1
    mw = img.reshape(H // ws, ws, W // ws, ws).transpose(0, 2, 1, 3)
    mw = mw.reshape(-1, ws * ws)
    diff = mw[:, None, :] - mw[:, :, None]
    return np.where(diff != 0, -100.0, 0.0).astype(np.float32)   # (nW, N, N)


def _pick_window_rows(nWh, nWw, ws, C, hidden, num_heads,
                      budget_bytes=6 * 1024 * 1024):
    """Largest number of window-rows per grid step whose working set fits."""
    N = ws * ws
    best = 1
    for r in range(1, nWh + 1):
        if nWh % r:
            continue
        nwin = r * nWw
        ntok = nwin * N
        est = 4 * ntok * (6 * C + 3 * C + hidden)        # f32 token activations
        est += 4 * nwin * num_heads * N * N * 3          # scores / probs / bias block
        est += 2 * 2 * 4 * ntok * C                      # in/out x blocks, 2x buffered
        if est <= budget_bytes:
            best = r
    return best


# -----------------------------------------------------------------------------
# Wrapper: layout prep, fused-weight transposes, pallas_call.
# -----------------------------------------------------------------------------
def swin_block_forward(x_nchw, params, *, input_resolution, num_heads,
                       window_size, shift_size, eps=1e-5):
    B, C, H, W = x_nchw.shape
    assert (H, W) == tuple(input_resolution)   # x_size == input_resolution path

    # Module __init__ adjustment.
    if min(H, W) <= window_size:
        shift_size = 0
        window_size = min(H, W)
    assert H % window_size == 0 and W % window_size == 0
    ws = window_size
    N = ws * ws
    nWh, nWw = H // ws, W // ws
    nW = nWh * nWw
    hd = C // num_heads
    scale = hd ** (-0.5)
    hidden = params["fc1_w"].shape[0]
    f32, bf16 = jnp.float32, jnp.bfloat16

    # torch x.view(B, H, W, C) is a pure reshape; optional cyclic shift.
    # (For large H*W this roll could be folded into the window fetch DMA.)
    x_img = x_nchw.reshape(B, H, W, C).astype(f32)
    if shift_size > 0:
        x_img = jnp.roll(x_img, shift=(-shift_size, -shift_size), axis=(1, 2))

    # Relative position bias (nH, N, N) pre-added with the shift mask.
    rel_idx = _relative_position_index(ws).reshape(-1)
    bias = jnp.take(params["rpb_table"].astype(f32),
                    jnp.asarray(rel_idx, jnp.int32), axis=0)
    bias = bias.reshape(N, N, num_heads).transpose(2, 0, 1)          # (nH, N, N)
    if shift_size > 0:
        mask = jnp.asarray(_shift_attn_mask(H, W, ws, shift_size))   # (nW, N, N)
        bm = bias[None, :, :, :] + mask[:, None, :, :]               # (nW, nH, N, N)
    else:
        bm = bias[None, :, :, :]                                     # (1, nH, N, N)

    # Fused weights, transposed to (in, out); MXU operands shipped as bf16.
    wqkv = params["qkv_w"].astype(f32).T.astype(bf16)                # (C, 3C)
    bqkv = params["qkv_b"].astype(f32).reshape(1, 3 * C)
    wp = params["proj_w"].astype(f32).T.astype(bf16)                 # (C, C)
    bp = params["proj_b"].astype(f32).reshape(1, C)
    g1 = params["norm1_w"].astype(f32).reshape(1, C)
    b1 = params["norm1_b"].astype(f32).reshape(1, C)
    g2 = params["norm2_w"].astype(f32).reshape(1, C)
    b2 = params["norm2_b"].astype(f32).reshape(1, C)
    wm1 = params["fc1_w"].astype(f32).T.astype(bf16)                 # (C, hidden)
    bm1 = params["fc1_b"].astype(f32).reshape(1, hidden)
    wm2 = params["fc2_w"].astype(f32).T.astype(bf16)                 # (hidden, C)
    bm2 = params["fc2_b"].astype(f32).reshape(1, C)

    wrows = _pick_window_rows(nWh, nWw, ws, C, hidden, num_heads)
    WIN = wrows * nWw                                   # windows per grid step
    grid = (B, nWh // wrows)

    kernel = functools.partial(_swin_block_kernel, ws=ws, num_heads=num_heads,
                               scale=scale, eps=eps)

    def full(shape):
        # whole-array block, constant index map -> fetched once, stays in VMEM
        return pl.BlockSpec(shape, lambda b, i: (0,) * len(shape))

    x_spec = pl.BlockSpec((1, wrows * ws, W, C), lambda b, i: (b, i, 0, 0))
    if shift_size > 0:
        bm_spec = pl.BlockSpec((WIN, num_heads, N, N), lambda b, i: (i, 0, 0, 0))
    else:
        bm_spec = pl.BlockSpec((1, num_heads, N, N), lambda b, i: (0, 0, 0, 0))

    out_img = pl.pallas_call(
        kernel,
        out_shape=jax.ShapeDtypeStruct((B, H, W, C), f32),
        grid_spec=pltpu.PrefetchScalarGridSpec(
            num_scalar_prefetch=0,
            grid=grid,
            in_specs=[
                x_spec,
                bm_spec,
                full((1, C)), full((1, C)),
                full((C, 3 * C)), full((1, 3 * C)),
                full((C, C)), full((1, C)),
                full((1, C)), full((1, C)),
                full((C, hidden)), full((1, hidden)),
                full((hidden, C)), full((1, C)),
            ],
            out_specs=pl.BlockSpec((1, wrows * ws, W, C),
                                   lambda b, i: (b, i, 0, 0)),
        ),
        compiler_params=pltpu.CompilerParams(
            dimension_semantics=("parallel", "parallel"),
            vmem_limit_bytes=32 * 1024 * 1024),
    )(x_img, bm, g1, b1, wqkv, bqkv, wp, bp, g2, b2, wm1, bm1, wm2, bm2)

    # Shift back (per-token residual/MLP already applied inside the kernel,
    # they commute with the token permutation).
    if shift_size > 0:
        out_img = jnp.roll(out_img, shift=(shift_size, shift_size), axis=(1, 2))

    # torch final x.view(B, C, H, W) is a pure reshape.
    return out_img.reshape(B, C, H, W)


# -----------------------------------------------------------------------------
# Pure-JAX reference (direct transliteration of the PyTorch forward).
# -----------------------------------------------------------------------------
def swin_block_reference(x_nchw, params, *, num_heads, window_size, shift_size,
                         eps=1e-5):
    PH = jax.lax.Precision.HIGHEST
    B, C, H, W = x_nchw.shape
    if min(H, W) <= window_size:
        shift_size = 0
        window_size = min(H, W)
    ws = window_size
    N = ws * ws
    nW = (H // ws) * (W // ws)
    hd = C // num_heads
    scale = hd ** (-0.5)
    f32 = jnp.float32

    def layernorm(t, g, b):
        mu = jnp.mean(t, -1, keepdims=True)
        var = jnp.mean((t - mu) ** 2, -1, keepdims=True)
        return (t - mu) / jnp.sqrt(var + eps) * g + b

    x = x_nchw.reshape(B, H, W, C).astype(f32)
    shortcut = x
    xn = layernorm(x.reshape(-1, C), params["norm1_w"], params["norm1_b"])
    xn = xn.reshape(B, H, W, C)
    if shift_size > 0:
        xn = jnp.roll(xn, (-shift_size, -shift_size), (1, 2))
    # window partition
    xw = xn.reshape(B, H // ws, ws, W // ws, ws, C)
    xw = xw.transpose(0, 1, 3, 2, 4, 5).reshape(-1, N, C)
    B_ = xw.shape[0]
    # attention
    qkv = jnp.dot(xw, params["qkv_w"].T, precision=PH) + params["qkv_b"]
    qkv = qkv.reshape(B_, N, 3, num_heads, hd).transpose(2, 0, 3, 1, 4)
    q, k, v = qkv[0] * scale, qkv[1], qkv[2]
    attn = jnp.einsum("bhid,bhjd->bhij", q, k, precision=PH)
    rel_idx = _relative_position_index(ws).reshape(-1)
    bias = jnp.take(params["rpb_table"], jnp.asarray(rel_idx, jnp.int32), axis=0)
    bias = bias.reshape(N, N, num_heads).transpose(2, 0, 1)
    attn = attn + bias[None]
    if shift_size > 0:
        mask = jnp.asarray(_shift_attn_mask(H, W, ws, shift_size))
        attn = attn.reshape(B_ // nW, nW, num_heads, N, N) + mask[None, :, None]
        attn = attn.reshape(B_, num_heads, N, N)
    attn = jax.nn.softmax(attn, axis=-1)
    out = jnp.einsum("bhij,bhjd->bhid", attn, v, precision=PH)
    out = out.transpose(0, 2, 1, 3).reshape(B_, N, C)
    out = jnp.dot(out, params["proj_w"].T, precision=PH) + params["proj_b"]
    # window reverse
    out = out.reshape(B, H // ws, W // ws, ws, ws, C)
    out = out.transpose(0, 1, 3, 2, 4, 5).reshape(B, H, W, C)
    if shift_size > 0:
        out = jnp.roll(out, (shift_size, shift_size), (1, 2))
    x = shortcut + out
    xf = x.reshape(-1, C)
    y = layernorm(xf, params["norm2_w"], params["norm2_b"])
    y = jnp.dot(y, params["fc1_w"].T, precision=PH) + params["fc1_b"]
    y = jax.nn.gelu(y, approximate=False)
    y = jnp.dot(y, params["fc2_w"].T, precision=PH) + params["fc2_b"]
    xf = xf + y
    return xf.reshape(B, C, H, W)


def make_params(key, dim, num_heads, window_size, mlp_ratio=4.0):
    hidden = int(dim * mlp_ratio)
    nrel = (2 * window_size - 1) ** 2
    ks = jax.random.split(key, 13)
    rnd = lambda k, shape, s: s * jax.random.normal(k, shape, jnp.float32)
    return {
        "norm1_w": 1.0 + rnd(ks[0], (dim,), 0.05),
        "norm1_b": rnd(ks[1], (dim,), 0.05),
        "qkv_w": rnd(ks[2], (3 * dim, dim), 0.05),
        "qkv_b": rnd(ks[3], (3 * dim,), 0.02),
        "rpb_table": rnd(ks[4], (nrel, num_heads), 0.02),
        "proj_w": rnd(ks[5], (dim, dim), 0.05),
        "proj_b": rnd(ks[6], (dim,), 0.02),
        "norm2_w": 1.0 + rnd(ks[7], (dim,), 0.05),
        "norm2_b": rnd(ks[8], (dim,), 0.05),
        "fc1_w": rnd(ks[9], (hidden, dim), 0.05),
        "fc1_b": rnd(ks[10], (hidden,), 0.02),
        "fc2_w": rnd(ks[11], (dim, hidden), 0.05),
        "fc2_b": rnd(ks[12], (dim,), 0.02),
    }


if __name__ == "__main__":
    # dim=128 keeps the channel/lane axis dense; shift_size>0 exercises the
    # shifted-window + attention-mask path.
    B, C, H, W = 2, 128, 16, 16
    num_heads, window_size, shift_size = 4, 8, 4

    key = jax.random.PRNGKey(0)
    kx, kp = jax.random.split(key)
    x = jax.random.normal(kx, (B, C, H, W), jnp.float32)
    params = make_params(kp, C, num_heads, window_size, mlp_ratio=4.0)

    fwd = jax.jit(functools.partial(
        swin_block_forward, input_resolution=(H, W), num_heads=num_heads,
        window_size=window_size, shift_size=shift_size))
    out = jax.block_until_ready(fwd(x, params))

    ref = swin_block_reference(x, params, num_heads=num_heads,
                               window_size=window_size, shift_size=shift_size)

    assert out.shape == (B, C, H, W), out.shape
    max_diff = float(jnp.max(jnp.abs(out - ref)))
    # Tolerance leaves slack for bf16 MXU operands + tanh-GELU + approx
    # reciprocal vs the f32/erf reference; typical observed diff is ~1e-3.
    assert jnp.allclose(out, ref, atol=2e-2, rtol=2e-2), max_diff
    print("KERNEL_OK")
</pallas_src>

<mosaic_0001>
module attributes {stable_mosaic.version = 11 : i64} {
  func.func @_swin_block_kernel(%arg0: i32, %arg1: i32, %arg2: memref<1x16x16x128xf32, #tpu.memory_space<vmem>>, %arg3: memref<4x4x64x64xf32, #tpu.memory_space<vmem>>, %arg4: memref<1x128xf32, #tpu.memory_space<vmem>>, %arg5: memref<1x128xf32, #tpu.memory_space<vmem>>, %arg6: memref<128x384xbf16, #tpu.memory_space<vmem>>, %arg7: memref<1x384xf32, #tpu.memory_space<vmem>>, %arg8: memref<128x128xbf16, #tpu.memory_space<vmem>>, %arg9: memref<1x128xf32, #tpu.memory_space<vmem>>, %arg10: memref<1x128xf32, #tpu.memory_space<vmem>>, %arg11: memref<1x128xf32, #tpu.memory_space<vmem>>, %arg12: memref<128x512xbf16, #tpu.memory_space<vmem>>, %arg13: memref<1x512xf32, #tpu.memory_space<vmem>>, %arg14: memref<512x128xbf16, #tpu.memory_space<vmem>>, %arg15: memref<1x128xf32, #tpu.memory_space<vmem>>, %arg16: memref<1x16x16x128xf32, #tpu.memory_space<vmem>>) attributes {dimension_semantics = [#tpu.dimension_semantics<parallel>, #tpu.dimension_semantics<parallel>], iteration_bounds = array<i64: 2, 1>, scalar_prefetch = 0 : i64, scratch_operands = 0 : i64, tpu.core_type = #tpu.core_type<tc>, window_params = [{transform_indices = @transform_0, window_bounds = array<i64: 1, 16, 16, 128>}, {transform_indices = @transform_1, window_bounds = array<i64: 4, 4, 64, 64>}, {pipeline_mode = #tpu.pipeline_mode<synchronous>, transform_indices = @transform_2, window_bounds = array<i64: 1, 128>}, {pipeline_mode = #tpu.pipeline_mode<synchronous>, transform_indices = @transform_3, window_bounds = array<i64: 1, 128>}, {pipeline_mode = #tpu.pipeline_mode<synchronous>, transform_indices = @transform_4, window_bounds = array<i64: 128, 384>}, {pipeline_mode = #tpu.pipeline_mode<synchronous>, transform_indices = @transform_5, window_bounds = array<i64: 1, 384>}, {pipeline_mode = #tpu.pipeline_mode<synchronous>, transform_indices = @transform_6, window_bounds = array<i64: 128, 128>}, {pipeline_mode = #tpu.pipeline_mode<synchronous>, transform_indices = @transform_7, window_bounds = array<i64: 1, 128>}, {pipeline_mode = #tpu.pipeline_mode<synchronous>, transform_indices = @transform_8, window_bounds = array<i64: 1, 128>}, {pipeline_mode = #tpu.pipeline_mode<synchronous>, transform_indices = @transform_9, window_bounds = array<i64: 1, 128>}, {pipeline_mode = #tpu.pipeline_mode<synchronous>, transform_indices = @transform_10, window_bounds = array<i64: 128, 512>}, {pipeline_mode = #tpu.pipeline_mode<synchronous>, transform_indices = @transform_11, window_bounds = array<i64: 1, 512>}, {pipeline_mode = #tpu.pipeline_mode<synchronous>, transform_indices = @transform_12, window_bounds = array<i64: 512, 128>}, {pipeline_mode = #tpu.pipeline_mode<synchronous>, transform_indices = @transform_13, window_bounds = array<i64: 1, 128>}, {transform_indices = @transform_14, window_bounds = array<i64: 1, 16, 16, 128>}]} {
    %c0 = arith.constant 0 : index
    %c0_0 = arith.constant 0 : index
    %c0_1 = arith.constant 0 : index
    %c0_2 = arith.constant 0 : index
    %0 = vector.load %arg2[%c0, %c0_0, %c0_1, %c0_2] : memref<1x16x16x128xf32, #tpu.memory_space<vmem>>, vector<1x16x16x128xf32>
    %1 = vector.shape_cast %0 : vector<1x16x16x128xf32> to vector<16x16x128xf32>
    %2 = vector.extract_strided_slice %1 {offsets = [0, 0, 0], sizes = [8, 8, 128], strides = [1, 1, 1]} : vector<16x16x128xf32> to vector<8x8x128xf32>
    %3 = vector.extract_strided_slice %1 {offsets = [0, 8, 0], sizes = [8, 8, 128], strides = [1, 1, 1]} : vector<16x16x128xf32> to vector<8x8x128xf32>
    %4 = vector.extract_strided_slice %1 {offsets = [8, 0, 0], sizes = [8, 8, 128], strides = [1, 1, 1]} : vector<16x16x128xf32> to vector<8x8x128xf32>
    %5 = vector.extract_strided_slice %1 {offsets = [8, 8, 0], sizes = [8, 8, 128], strides = [1, 1, 1]} : vector<16x16x128xf32> to vector<8x8x128xf32>
    %6 = tpu.concatenate %2, %3, %4, %5 in 0 : vector<8x8x128xf32>, vector<8x8x128xf32>, vector<8x8x128xf32>, vector<8x8x128xf32> -> vector<32x8x128xf32>
    %7 = vector.shape_cast %6 : vector<32x8x128xf32> to vector<256x128xf32>
    %cst = arith.constant dense<0.000000e+00> : vector<256xf32>
    %8 = vector.multi_reduction <add>, %7, %cst [1] : vector<256x128xf32> to vector<256xf32>
    %9 = vector.shape_cast %8 : vector<256xf32> to vector<256x1xf32>
    %cst_3 = arith.constant 1.280000e+02 : f32
    %10 = vector.broadcast %cst_3 : f32 to vector<256x1xf32>
    %11 = arith.divf %9, %10 : vector<256x1xf32>
    %12 = vector.broadcast %11 : vector<256x1xf32> to vector<256x128xf32>
    %13 = arith.subf %7, %12 : vector<256x128xf32>
    %14 = arith.mulf %13, %13 : vector<256x128xf32>
    %cst_4 = arith.constant dense<0.000000e+00> : vector<256xf32>
    %15 = vector.multi_reduction <add>, %14, %cst_4 [1] : vector<256x128xf32> to vector<256xf32>
    %16 = vector.shape_cast %15 : vector<256xf32> to vector<256x1xf32>
    %cst_5 = arith.constant 1.280000e+02 : f32
    %17 = vector.broadcast %cst_5 : f32 to vector<256x1xf32>
    %18 = arith.divf %16, %17 : vector<256x1xf32>
    %cst_6 = arith.constant 9.99999974E-6 : f32
    %19 = vector.broadcast %cst_6 : f32 to vector<256x1xf32>
    %20 = arith.addf %18, %19 : vector<256x1xf32>
    %21 = math.rsqrt %20 : vector<256x1xf32>
    %22 = vector.broadcast %21 : vector<256x1xf32> to vector<256x128xf32>
    %23 = arith.mulf %13, %22 : vector<256x128xf32>
    %c0_7 = arith.constant 0 : index
    %c0_8 = arith.constant 0 : index
    %24 = vector.load %arg4[%c0_7, %c0_8] : memref<1x128xf32, #tpu.memory_space<vmem>>, vector<1x128xf32>
    %25 = vector.broadcast %24 : vector<1x128xf32> to vector<256x128xf32>
    %26 = arith.mulf %23, %25 : vector<256x128xf32>
    %c0_9 = arith.constant 0 : index
    %c0_10 = arith.constant 0 : index
    %27 = vector.load %arg5[%c0_9, %c0_10] : memref<1x128xf32, #tpu.memory_space<vmem>>, vector<1x128xf32>
    %28 = vector.broadcast %27 : vector<1x128xf32> to vector<256x128xf32>
    %29 = arith.addf %26, %28 : vector<256x128xf32>
    %30 = arith.truncf %29 : vector<256x128xf32> to vector<256x128xbf16>
    %c0_11 = arith.constant 0 : index
    %c0_12 = arith.constant 0 : index
    %31 = vector.load %arg6[%c0_11, %c0_12] : memref<128x384xbf16, #tpu.memory_space<vmem>>, vector<128x384xbf16>
    %cst_13 = arith.constant dense<0.000000e+00> : vector<256x384xf32>
    %32 = tpu.matmul %30, %31, %cst_13 {dimension_numbers = #tpu.dot_dimension_numbers<[1], [0], [0], [1], [0, 0, 1, 1], [], []>} : vector<256x128xbf16>, vector<128x384xbf16>, vector<256x384xf32> -> vector<256x384xf32>
    %c0_14 = arith.constant 0 : index
    %c0_15 = arith.constant 0 : index
    %33 = vector.load %arg7[%c0_14, %c0_15] : memref<1x384xf32, #tpu.memory_space<vmem>>, vector<1x384xf32>
    %34 = vector.broadcast %33 : vector<1x384xf32> to vector<256x384xf32>
    %35 = arith.addf %32, %34 : vector<256x384xf32>
    %36 = vector.extract_strided_slice %35 {offsets = [0, 0], sizes = [256, 32], strides = [1, 1]} : vector<256x384xf32> to vector<256x32xf32>
    %cst_16 = arith.constant 0.176776692 : f32
    %37 = vector.broadcast %cst_16 : f32 to vector<256x32xf32>
    %38 = arith.mulf %36, %37 : vector<256x32xf32>
    %39 = vector.shape_cast %38 : vector<256x32xf32> to vector<4x1x64x32xf32>
    %40 = vector.extract_strided_slice %35 {offsets = [0, 32], sizes = [256, 32], strides = [1, 1]} : vector<256x384xf32> to vector<256x32xf32>
    %cst_17 = arith.constant 0.176776692 : f32
    %41 = vector.broadcast %cst_17 : f32 to vector<256x32xf32>
    %42 = arith.mulf %40, %41 : vector<256x32xf32>
    %43 = vector.shape_cast %42 : vector<256x32xf32> to vector<4x1x64x32xf32>
    %44 = vector.extract_strided_slice %35 {offsets = [0, 64], sizes = [256, 32], strides = [1, 1]} : vector<256x384xf32> to vector<256x32xf32>
    %cst_18 = arith.constant 0.176776692 : f32
    %45 = vector.broadcast %cst_18 : f32 to vector<256x32xf32>
    %46 = arith.mulf %44, %45 : vector<256x32xf32>
    %47 = vector.shape_cast %46 : vector<256x32xf32> to vector<4x1x64x32xf32>
    %48 = vector.extract_strided_slice %35 {offsets = [0, 96], sizes = [256, 32], strides = [1, 1]} : vector<256x384xf32> to vector<256x32xf32>
    %cst_19 = arith.constant 0.176776692 : f32
    %49 = vector.broadcast %cst_19 : f32 to vector<256x32xf32>
    %50 = arith.mulf %48, %49 : vector<256x32xf32>
    %51 = vector.shape_cast %50 : vector<256x32xf32> to vector<4x1x64x32xf32>
    %52 = tpu.concatenate %39, %43, %47, %51 in 1 : vector<4x1x64x32xf32>, vector<4x1x64x32xf32>, vector<4x1x64x32xf32>, vector<4x1x64x32xf32> -> vector<4x4x64x32xf32>
    %53 = vector.shape_cast %52 : vector<4x4x64x32xf32> to vector<16x64x32xf32>
    %54 = arith.truncf %53 : vector<16x64x32xf32> to vector<16x64x32xbf16>
    %55 = vector.extract_strided_slice %35 {offsets = [0, 128], sizes = [256, 32], strides = [1, 1]} : vector<256x384xf32> to vector<256x32xf32>
    %56 = vector.shape_cast %55 : vector<256x32xf32> to vector<4x1x64x32xf32>
    %57 = vector.extract_strided_slice %35 {offsets = [0, 160], sizes = [256, 32], strides = [1, 1]} : vector<256x384xf32> to vector<256x32xf32>
    %58 = vector.shape_cast %57 : vector<256x32xf32> to vector<4x1x64x32xf32>
    %59 = vector.extract_strided_slice %35 {offsets = [0, 192], sizes = [256, 32], strides = [1, 1]} : vector<256x384xf32> to vector<256x32xf32>
    %60 = vector.shape_cast %59 : vector<256x32xf32> to vector<4x1x64x32xf32>
    %61 = vector.extract_strided_slice %35 {offsets = [0, 224], sizes = [256, 32], strides = [1, 1]} : vector<256x384xf32> to vector<256x32xf32>
    %62 = vector.shape_cast %61 : vector<256x32xf32> to vector<4x1x64x32xf32>
    %63 = tpu.concatenate %56, %58, %60, %62 in 1 : vector<4x1x64x32xf32>, vector<4x1x64x32xf32>, vector<4x1x64x32xf32>, vector<4x1x64x32xf32> -> vector<4x4x64x32xf32>
    %64 = vector.shape_cast %63 : vector<4x4x64x32xf32> to vector<16x64x32xf32>
    %65 = arith.truncf %64 : vector<16x64x32xf32> to vector<16x64x32xbf16>
    %66 = vector.extract_strided_slice %35 {offsets = [0, 256], sizes = [256, 32], strides = [1, 1]} : vector<256x384xf32> to vector<256x32xf32>
    %67 = vector.shape_cast %66 : vector<256x32xf32> to vector<4x1x64x32xf32>
    %68 = vector.extract_strided_slice %35 {offsets = [0, 288], sizes = [256, 32], strides = [1, 1]} : vector<256x384xf32> to vector<256x32xf32>
    %69 = vector.shape_cast %68 : vector<256x32xf32> to vector<4x1x64x32xf32>
    %70 = vector.extract_strided_slice %35 {offsets = [0, 320], sizes = [256, 32], strides = [1, 1]} : vector<256x384xf32> to vector<256x32xf32>
    %71 = vector.shape_cast %70 : vector<256x32xf32> to vector<4x1x64x32xf32>
    %72 = vector.extract_strided_slice %35 {offsets = [0, 352], sizes = [256, 32], strides = [1, 1]} : vector<256x384xf32> to vector<256x32xf32>
    %73 = vector.shape_cast %72 : vector<256x32xf32> to vector<4x1x64x32xf32>
    %74 = tpu.concatenate %67, %69, %71, %73 in 1 : vector<4x1x64x32xf32>, vector<4x1x64x32xf32>, vector<4x1x64x32xf32>, vector<4x1x64x32xf32> -> vector<4x4x64x32xf32>
    %75 = vector.shape_cast %74 : vector<4x4x64x32xf32> to vector<16x64x32xf32>
    %76 = arith.truncf %75 : vector<16x64x32xf32> to vector<16x64x32xbf16>
    "tpu.trace_start"() <{level = 10 : i32, message = "bnd,bmd->bnm"}> : () -> ()
    %cst_20 = arith.constant dense<0.000000e+00> : vector<16x64x64xf32>
    %77 = tpu.matmul %54, %65, %cst_20 {dimension_numbers = #tpu.dot_dimension_numbers<[2], [2], [1], [1], [0, 0, 0, 1, 1, 1], [0], [0]>} : vector<16x64x32xbf16>, vector<16x64x32xbf16>, vector<16x64x64xf32> -> vector<16x64x64xf32>
    "tpu.trace_stop"() : () -> ()
    %78 = vector.shape_cast %77 : vector<16x64x64xf32> to vector<4x4x64x64xf32>
    %c0_21 = arith.constant 0 : index
    %c0_22 = arith.constant 0 : index
    %c0_23 = arith.constant 0 : index
    %c0_24 = arith.constant 0 : index
    %79 = vector.load %arg3[%c0_21, %c0_22, %c0_23, %c0_24] : memref<4x4x64x64xf32, #tpu.memory_space<vmem>>, vector<4x4x64x64xf32>
    %80 = arith.addf %78, %79 : vector<4x4x64x64xf32>
    %81 = vector.shape_cast %80 : vector<4x4x64x64xf32> to vector<16x64x64xf32>
    %cst_25 = arith.constant dense<0xFF800000> : vector<16x64xf32>
    %82 = vector.multi_reduction <maximumf>, %81, %cst_25 [2] : vector<16x64x64xf32> to vector<16x64xf32>
    %83 = vector.shape_cast %82 : vector<16x64xf32> to vector<16x64x1xf32>
    %84 = vector.broadcast %83 : vector<16x64x1xf32> to vector<16x64x64xf32>
    %85 = arith.subf %81, %84 : vector<16x64x64xf32>
    %86 = math.exp %85 : vector<16x64x64xf32>
    %cst_26 = arith.constant dense<0.000000e+00> : vector<16x64xf32>
    %87 = vector.multi_reduction <add>, %86, %cst_26 [2] : vector<16x64x64xf32> to vector<16x64xf32>
    %88 = vector.shape_cast %87 : vector<16x64xf32> to vector<16x64x1xf32>
    %89 = tpu.reciprocal %88 {approx = true} : vector<16x64x1xf32> -> vector<16x64x1xf32>
    %90 = vector.broadcast %89 : vector<16x64x1xf32> to vector<16x64x64xf32>
    %91 = arith.mulf %86, %90 : vector<16x64x64xf32>
    %92 = arith.truncf %91 : vector<16x64x64xf32> to vector<16x64x64xbf16>
    "tpu.trace_start"() <{level = 10 : i32, message = "bnm,bmd->bnd"}> : () -> ()
    %cst_27 = arith.constant dense<0.000000e+00> : vector<16x64x32xf32>
    %93 = tpu.matmul %92, %76, %cst_27 {dimension_numbers = #tpu.dot_dimension_numbers<[2], [1], [1], [2], [0, 0, 0, 1, 1, 2], [0], [0]>} : vector<16x64x64xbf16>, vector<16x64x32xbf16>, vector<16x64x32xf32> -> vector<16x64x32xf32>
    "tpu.trace_stop"() : () -> ()
    %94 = vector.shape_cast %93 : vector<16x64x32xf32> to vector<4x4x64x32xf32>
    %95 = vector.extract_strided_slice %94 {offsets = [0, 0, 0, 0], sizes = [4, 1, 64, 32], strides = [1, 1, 1, 1]} : vector<4x4x64x32xf32> to vector<4x1x64x32xf32>
    %96 = vector.shape_cast %95 : vector<4x1x64x32xf32> to vector<4x64x32xf32>
    %97 = vector.extract_strided_slice %94 {offsets = [0, 1, 0, 0], sizes = [4, 1, 64, 32], strides = [1, 1, 1, 1]} : vector<4x4x64x32xf32> to vector<4x1x64x32xf32>
    %98 = vector.shape_cast %97 : vector<4x1x64x32xf32> to vector<4x64x32xf32>
    %99 = vector.extract_strided_slice %94 {offsets = [0, 2, 0, 0], sizes = [4, 1, 64, 32], strides = [1, 1, 1, 1]} : vector<4x4x64x32xf32> to vector<4x1x64x32xf32>
    %100 = vector.shape_cast %99 : vector<4x1x64x32xf32> to vector<4x64x32xf32>
    %101 = vector.extract_strided_slice %94 {offsets = [0, 3, 0, 0], sizes = [4, 1, 64, 32], strides = [1, 1, 1, 1]} : vector<4x4x64x32xf32> to vector<4x1x64x32xf32>
    %102 = vector.shape_cast %101 : vector<4x1x64x32xf32> to vector<4x64x32xf32>
    %103 = tpu.concatenate %96, %98, %100, %102 in 2 : vector<4x64x32xf32>, vector<4x64x32xf32>, vector<4x64x32xf32>, vector<4x64x32xf32> -> vector<4x64x128xf32>
    %104 = vector.shape_cast %103 : vector<4x64x128xf32> to vector<256x128xf32>
    %105 = arith.truncf %104 : vector<256x128xf32> to vector<256x128xbf16>
    %c0_28 = arith.constant 0 : index
    %c0_29 = arith.constant 0 : index
    %106 = vector.load %arg8[%c0_28, %c0_29] : memref<128x128xbf16, #tpu.memory_space<vmem>>, vector<128x128xbf16>
    %cst_30 = arith.constant dense<0.000000e+00> : vector<256x128xf32>
    %107 = tpu.matmul %105, %106, %cst_30 {dimension_numbers = #tpu.dot_dimension_numbers<[1], [0], [0], [1], [0, 0, 1, 1], [], []>} : vector<256x128xbf16>, vector<128x128xbf16>, vector<256x128xf32> -> vector<256x128xf32>
    %c0_31 = arith.constant 0 : index
    %c0_32 = arith.constant 0 : index
    %108 = vector.load %arg9[%c0_31, %c0_32] : memref<1x128xf32, #tpu.memory_space<vmem>>, vector<1x128xf32>
    %109 = vector.broadcast %108 : vector<1x128xf32> to vector<256x128xf32>
    %110 = arith.addf %107, %109 : vector<256x128xf32>
    %111 = arith.addf %7, %110 : vector<256x128xf32>
    %cst_33 = arith.constant dense<0.000000e+00> : vector<256xf32>
    %112 = vector.multi_reduction <add>, %111, %cst_33 [1] : vector<256x128xf32> to vector<256xf32>
    %113 = vector.shape_cast %112 : vector<256xf32> to vector<256x1xf32>
    %cst_34 = arith.constant 1.280000e+02 : f32
    %114 = vector.broadcast %cst_34 : f32 to vector<256x1xf32>
    %115 = arith.divf %113, %114 : vector<256x1xf32>
    %116 = vector.broadcast %115 : vector<256x1xf32> to vector<256x128xf32>
    %117 = arith.subf %111, %116 : vector<256x128xf32>
    %118 = arith.mulf %117, %117 : vector<256x128xf32>
    %cst_35 = arith.constant dense<0.000000e+00> : vector<256xf32>
    %119 = vector.multi_reduction <add>, %118, %cst_35 [1] : vector<256x128xf32> to vector<256xf32>
    %120 = vector.shape_cast %119 : vector<256xf32> to vector<256x1xf32>
    %cst_36 = arith.constant 1.280000e+02 : f32
    %121 = vector.broadcast %cst_36 : f32 to vector<256x1xf32>
    %122 = arith.divf %120, %121 : vector<256x1xf32>
    %cst_37 = arith.constant 9.99999974E-6 : f32
    %123 = vector.broadcast %cst_37 : f32 to vector<256x1xf32>
    %124 = arith.addf %122, %123 : vector<256x1xf32>
    %125 = math.rsqrt %124 : vector<256x1xf32>
    %126 = vector.broadcast %125 : vector<256x1xf32> to vector<256x128xf32>
    %127 = arith.mulf %117, %126 : vector<256x128xf32>
    %c0_38 = arith.constant 0 : index
    %c0_39 = arith.constant 0 : index
    %128 = vector.load %arg10[%c0_38, %c0_39] : memref<1x128xf32, #tpu.memory_space<vmem>>, vector<1x128xf32>
    %129 = vector.broadcast %128 : vector<1x128xf32> to vector<256x128xf32>
    %130 = arith.mulf %127, %129 : vector<256x128xf32>
    %c0_40 = arith.constant 0 : index
    %c0_41 = arith.constant 0 : index
    %131 = vector.load %arg11[%c0_40, %c0_41] : memref<1x128xf32, #tpu.memory_space<vmem>>, vector<1x128xf32>
    %132 = vector.broadcast %131 : vector<1x128xf32> to vector<256x128xf32>
    %133 = arith.addf %130, %132 : vector<256x128xf32>
    %134 = arith.truncf %133 : vector<256x128xf32> to vector<256x128xbf16>
    %c0_42 = arith.constant 0 : index
    %c0_43 = arith.constant 0 : index
    %135 = vector.load %arg12[%c0_42, %c0_43] : memref<128x512xbf16, #tpu.memory_space<vmem>>, vector<128x512xbf16>
    %cst_44 = arith.constant dense<0.000000e+00> : vector<256x512xf32>
    %136 = tpu.matmul %134, %135, %cst_44 {dimension_numbers = #tpu.dot_dimension_numbers<[1], [0], [0], [1], [0, 0, 1, 1], [], []>} : vector<256x128xbf16>, vector<128x512xbf16>, vector<256x512xf32> -> vector<256x512xf32>
    %c0_45 = arith.constant 0 : index
    %c0_46 = arith.constant 0 : index
    %137 = vector.load %arg13[%c0_45, %c0_46] : memref<1x512xf32, #tpu.memory_space<vmem>>, vector<1x512xf32>
    %138 = vector.broadcast %137 : vector<1x512xf32> to vector<256x512xf32>
    %139 = arith.addf %136, %138 : vector<256x512xf32>
    %cst_47 = arith.constant 5.000000e-01 : f32
    %140 = vector.broadcast %cst_47 : f32 to vector<256x512xf32>
    %141 = arith.mulf %140, %139 : vector<256x512xf32>
    %cst_48 = arith.constant 4.471500e-02 : f32
    %142 = vector.broadcast %cst_48 : f32 to vector<256x512xf32>
    %143 = arith.mulf %142, %139 : vector<256x512xf32>
    %144 = arith.mulf %143, %139 : vector<256x512xf32>
    %145 = arith.mulf %144, %139 : vector<256x512xf32>
    %146 = arith.addf %139, %145 : vector<256x512xf32>
    %cst_49 = arith.constant 0.797884583 : f32
    %147 = vector.broadcast %cst_49 : f32 to vector<256x512xf32>
    %148 = arith.mulf %147, %146 : vector<256x512xf32>
    %149 = math.tanh %148 : vector<256x512xf32>
    %cst_50 = arith.constant 1.000000e+00 : f32
    %150 = vector.broadcast %cst_50 : f32 to vector<256x512xf32>
    %151 = arith.addf %150, %149 : vector<256x512xf32>
    %152 = arith.mulf %141, %151 : vector<256x512xf32>
    %153 = arith.truncf %152 : vector<256x512xf32> to vector<256x512xbf16>
    %c0_51 = arith.constant 0 : index
    %c0_52 = arith.constant 0 : index
    %154 = vector.load %arg14[%c0_51, %c0_52] : memref<512x128xbf16, #tpu.memory_space<vmem>>, vector<512x128xbf16>
    %cst_53 = arith.constant dense<0.000000e+00> : vector<256x128xf32>
    %155 = tpu.matmul %153, %154, %cst_53 {dimension_numbers = #tpu.dot_dimension_numbers<[1], [0], [0], [1], [0, 0, 1, 1], [], []>} : vector<256x512xbf16>, vector<512x128xbf16>, vector<256x128xf32> -> vector<256x128xf32>
    %156 = arith.addf %111, %155 : vector<256x128xf32>
    %c0_54 = arith.constant 0 : index
    %c0_55 = arith.constant 0 : index
    %157 = vector.load %arg15[%c0_54, %c0_55] : memref<1x128xf32, #tpu.memory_space<vmem>>, vector<1x128xf32>
    %158 = vector.broadcast %157 : vector<1x128xf32> to vector<256x128xf32>
    %159 = arith.addf %156, %158 : vector<256x128xf32>
    %160 = vector.shape_cast %159 : vector<256x128xf32> to vector<4x8x8x128xf32>
    %161 = vector.extract_strided_slice %160 {offsets = [0, 0, 0, 0], sizes = [1, 8, 8, 128], strides = [1, 1, 1, 1]} : vector<4x8x8x128xf32> to vector<1x8x8x128xf32>
    %162 = vector.shape_cast %161 : vector<1x8x8x128xf32> to vector<8x8x128xf32>
    %163 = vector.extract_strided_slice %160 {offsets = [1, 0, 0, 0], sizes = [1, 8, 8, 128], strides = [1, 1, 1, 1]} : vector<4x8x8x128xf32> to vector<1x8x8x128xf32>
    %164 = vector.shape_cast %163 : vector<1x8x8x128xf32> to vector<8x8x128xf32>
    %165 = tpu.concatenate %162, %164 in 1 : vector<8x8x128xf32>, vector<8x8x128xf32> -> vector<8x16x128xf32>
    %166 = vector.extract_strided_slice %160 {offsets = [2, 0, 0, 0], sizes = [1, 8, 8, 128], strides = [1, 1, 1, 1]} : vector<4x8x8x128xf32> to vector<1x8x8x128xf32>
    %167 = vector.shape_cast %166 : vector<1x8x8x128xf32> to vector<8x8x128xf32>
    %168 = vector.extract_strided_slice %160 {offsets = [3, 0, 0, 0], sizes = [1, 8, 8, 128], strides = [1, 1, 1, 1]} : vector<4x8x8x128xf32> to vector<1x8x8x128xf32>
    %169 = vector.shape_cast %168 : vector<1x8x8x128xf32> to vector<8x8x128xf32>
    %170 = tpu.concatenate %167, %169 in 1 : vector<8x8x128xf32>, vector<8x8x128xf32> -> vector<8x16x128xf32>
    %171 = tpu.concatenate %165, %170 in 0 : vector<8x16x128xf32>, vector<8x16x128xf32> -> vector<16x16x128xf32>
    %172 = vector.shape_cast %171 : vector<16x16x128xf32> to vector<1x16x16x128xf32>
    %c0_56 = arith.constant 0 : index
    %c0_57 = arith.constant 0 : index
    %c0_58 = arith.constant 0 : index
    %c0_59 = arith.constant 0 : index
    %173 = vector.load %arg16[%c0_56, %c0_57, %c0_58, %c0_59] : memref<1x16x16x128xf32, #tpu.memory_space<vmem>>, vector<1x16x16x128xf32>
    tpu.vector_store %arg16[%c0_56, %c0_57, %c0_58, %c0_59], %172 {strides = array<i32>} : memref<1x16x16x128xf32, #tpu.memory_space<vmem>>, vector<1x16x16x128xf32>,
    return
  }
  func.func @transform_0(%arg0: i32, %arg1: i32) -> (i32, i32, i32, i32) {
    %c0_i32 = arith.constant 0 : i32
    %c0_i32_0 = arith.constant 0 : i32
    %c0_i32_1 = arith.constant 0 : i32
    return %arg0, %arg1, %c0_i32, %c0_i32_0 : i32, i32, i32, i32
  }
  func.func @transform_1(%arg0: i32, %arg1: i32) -> (i32, i32, i32, i32) {
    %c0_i32 = arith.constant 0 : i32
    %c0_i32_0 = arith.constant 0 : i32
    %c0_i32_1 = arith.constant 0 : i32
    %c0_i32_2 = arith.constant 0 : i32
    return %arg1, %c0_i32, %c0_i32_0, %c0_i32_1 : i32, i32, i32, i32
  }
  func.func @transform_2(%arg0: i32, %arg1: i32) -> (i32, i32) {
    %c0_i32 = arith.constant 0 : i32
    %c0_i32_0 = arith.constant 0 : i32
    %c0_i32_1 = arith.constant 0 : i32
    return %c0_i32, %c0_i32_0 : i32, i32
  }
  func.func @transform_3(%arg0: i32, %arg1: i32) -> (i32, i32) {
    %c0_i32 = arith.constant 0 : i32
    %c0_i32_0 = arith.constant 0 : i32
    %c0_i32_1 = arith.constant 0 : i32
    return %c0_i32, %c0_i32_0 : i32, i32
  }
  func.func @transform_4(%arg0: i32, %arg1: i32) -> (i32, i32) {
    %c0_i32 = arith.constant 0 : i32
    %c0_i32_0 = arith.constant 0 : i32
    %c0_i32_1 = arith.constant 0 : i32
    return %c0_i32, %c0_i32_0 : i32, i32
  }
  func.func @transform_5(%arg0: i32, %arg1: i32) -> (i32, i32) {
    %c0_i32 = arith.constant 0 : i32
    %c0_i32_0 = arith.constant 0 : i32
    %c0_i32_1 = arith.constant 0 : i32
    return %c0_i32, %c0_i32_0 : i32, i32
  }
  func.func @transform_6(%arg0: i32, %arg1: i32) -> (i32, i32) {
    %c0_i32 = arith.constant 0 : i32
    %c0_i32_0 = arith.constant 0 : i32
    %c0_i32_1 = arith.constant 0 : i32
    return %c0_i32, %c0_i32_0 : i32, i32
  }
  func.func @transform_7(%arg0: i32, %arg1: i32) -> (i32, i32) {
    %c0_i32 = arith.constant 0 : i32
    %c0_i32_0 = arith.constant 0 : i32
    %c0_i32_1 = arith.constant 0 : i32
    return %c0_i32, %c0_i32_0 : i32, i32
  }
  func.func @transform_8(%arg0: i32, %arg1: i32) -> (i32, i32) {
    %c0_i32 = arith.constant 0 : i32
    %c0_i32_0 = arith.constant 0 : i32
    %c0_i32_1 = arith.constant 0 : i32
    return %c0_i32, %c0_i32_0 : i32, i32
  }
  func.func @transform_9(%arg0: i32, %arg1: i32) -> (i32, i32) {
    %c0_i32 = arith.constant 0 : i32
    %c0_i32_0 = arith.constant 0 : i32
    %c0_i32_1 = arith.constant 0 : i32
    return %c0_i32, %c0_i32_0 : i32, i32
  }
  func.func @transform_10(%arg0: i32, %arg1: i32) -> (i32, i32) {
    %c0_i32 = arith.constant 0 : i32
    %c0_i32_0 = arith.constant 0 : i32
    %c0_i32_1 = arith.constant 0 : i32
    return %c0_i32, %c0_i32_0 : i32, i32
  }
  func.func @transform_11(%arg0: i32, %arg1: i32) -> (i32, i32) {
    %c0_i32 = arith.constant 0 : i32
    %c0_i32_0 = arith.constant 0 : i32
    %c0_i32_1 = arith.constant 0 : i32
    return %c0_i32, %c0_i32_0 : i32, i32
  }
  func.func @transform_12(%arg0: i32, %arg1: i32) -> (i32, i32) {
    %c0_i32 = arith.constant 0 : i32
    %c0_i32_0 = arith.constant 0 : i32
    %c0_i32_1 = arith.constant 0 : i32
    return %c0_i32, %c0_i32_0 : i32, i32
  }
  func.func @transform_13(%arg0: i32, %arg1: i32) -> (i32, i32) {
    %c0_i32 = arith.constant 0 : i32
    %c0_i32_0 = arith.constant 0 : i32
    %c0_i32_1 = arith.constant 0 : i32
    return %c0_i32, %c0_i32_0 : i32, i32
  }
  func.func @transform_14(%arg0: i32, %arg1: i32) -> (i32, i32, i32, i32) {
    %c0_i32 = arith.constant 0 : i32
    %c0_i32_0 = arith.constant 0 : i32
    %c0_i32_1 = arith.constant 0 : i32
    return %arg0, %arg1, %c0_i32, %c0_i32_0 : i32, i32, i32, i32
  }
}

</mosaic_0001>

<llo_original>
// kernel: swin_block_forward.1
$region0: #{swin_block_forward.1}
  #allocation0 [shape = 'u32[]', space=smem, size = 0x4, offset = 0x4, fixed_abs, tag = 'smem constant byte address 0x4 - core index']
  #allocation1 [shape = 'u32[144,128]{1,0:T(1,128)}', space=vmem, size = 0x12000, scoped, tag = 'internal scratch']
  %s0 = inlined_call_operand.vmem [shape: f32[2,16,16,128], index: 0, kind: input, shape index: {}]
  %s1 = inlined_call_operand.vmem [shape: f32[4,4,64,64], index: 1, kind: input, shape index: {}]
  %s2 = inlined_call_operand.vmem [shape: f32[1,128], index: 2, kind: input, shape index: {}]
  %s3 = inlined_call_operand.vmem [shape: f32[1,128], index: 3, kind: input, shape index: {}]
  %s4 = inlined_call_operand.vmem [shape: bf16[128,384], index: 4, kind: input, shape index: {}]
  %s5 = inlined_call_operand.vmem [shape: f32[1,384], index: 5, kind: input, shape index: {}]
  %s6 = inlined_call_operand.vmem [shape: bf16[128,128], index: 6, kind: input, shape index: {}]
  %s7 = inlined_call_operand.vmem [shape: f32[1,128], index: 7, kind: input, shape index: {}]
  %s8 = inlined_call_operand.vmem [shape: f32[1,128], index: 8, kind: input, shape index: {}]
  %s9 = inlined_call_operand.vmem [shape: f32[1,128], index: 9, kind: input, shape index: {}]
  %s10 = inlined_call_operand.vmem [shape: bf16[128,512], index: 10, kind: input, shape index: {}]
  %s11 = inlined_call_operand.vmem [shape: f32[1,512], index: 11, kind: input, shape index: {}]
  %s12 = inlined_call_operand.vmem [shape: bf16[512,128], index: 12, kind: input, shape index: {}]
  %s13 = inlined_call_operand.vmem [shape: f32[1,128], index: 13, kind: input, shape index: {}]
  %s14 = inlined_call_operand.vmem [shape: f32[2,16,16,128], index: 14, kind: output, shape index: {}]
  %s15 = sld [smem:[#allocation0]]
  $region89: #{swin_block_forward.1} parent=0
    _
  %s17 = ssub.s32 1, %s15
  %s18 = scalar_select 0, %s17, %s15
  loop: start=0, step=1, limit=4
  $region2: #{swin_block_forward.1} parent=0 // loop_pre_header
    _
  $region3: #{swin_block_forward.1} parent=0 // loop_header
    %s20 = sphi 0, %s24
    %p21 = scmp.ge.s32.totalorder %s20, 4
    %s27 = sphi 0, %s39
    %s28 = sphi 0, %s35
    %s29 = sphi 0, %s27
    %s30 = sphi 0, %s28
    %s31 = sphi 0, %s29
    %s32 = sphi 0, %s30
    %s44 = sphi 0, %s46
    %s47 = sphi 0, %s44
    %s48 = sphi 0, %s47
    %s64 = sphi 0, %s48
    %s70 = sphi 0, %s72
    %s73 = sphi 0, %s70
    %s74 = sphi 0, %s73
    %s90 = sphi 0, %s74
    %s94 = sphi 0, %s94
    %s96 = sphi 0, %s94
    %s97 = sphi 0, %s96
    %s111 = sphi 0, %s97
    %s115 = sphi 0, %s115
    %s117 = sphi 0, %s115
    %s118 = sphi 0, %s117
    %s132 = sphi 0, %s118
    %s136 = sphi 0, %s136
    %s138 = sphi 0, %s136
    %s139 = sphi 0, %s138
    %s153 = sphi 0, %s139
    %s157 = sphi 0, %s157
    %s159 = sphi 0, %s157
    %s160 = sphi 0, %s159
    %s174 = sphi 0, %s160
    %s178 = sphi 0, %s178
    %s180 = sphi 0, %s178
    %s181 = sphi 0, %s180
    %s195 = sphi 0, %s181
    %s199 = sphi 0, %s199
    %s201 = sphi 0, %s199
    %s202 = sphi 0, %s201
    %s216 = sphi 0, %s202
    %s220 = sphi 0, %s220
    %s222 = sphi 0, %s220
    %s223 = sphi 0, %s222
    %s237 = sphi 0, %s223
    %s241 = sphi 0, %s241
    %s243 = sphi 0, %s241
    %s244 = sphi 0, %s243
    %s258 = sphi 0, %s244
    %s262 = sphi 0, %s262
    %s264 = sphi 0, %s262
    %s265 = sphi 0, %s264
    %s279 = sphi 0, %s265
    %s283 = sphi 0, %s283
    %s285 = sphi 0, %s283
    %s286 = sphi 0, %s285
    %s300 = sphi 0, %s286
    %s304 = sphi 0, %s304
    %s306 = sphi 0, %s304
    %s307 = sphi 0, %s306
    %s321 = sphi 0, %s307
    %s325 = sphi 0, %s325
    %s327 = sphi 0, %s325
    %s328 = sphi 0, %s327
    %s342 = sphi 0, %s328
    %s350 = sphi 0, %s352
    %s353 = sphi 0, %s350
    %s354 = sphi 0, %s353
    %s370 = sphi 0, %s354
  $region4: #{swin_block_forward.1} parent=0 // loop_header_branch
    %23 = sbr.rel (%p21) target = $region8
  $region5: #{swin_block_forward.1} parent=0 // loop_body
    %s25 = ssub.s32 %s20, 1
    %s26 = ssub.s32 %s20, 2
    %s33 = sadd.s32 1, %s28
    %p34 = scmp.ge.s32.totalorder %s33, 1
    %s35 = scalar_select %p34, 0, %s33
    %s36 = sadd.s32 1, %s27
    %s37 = scalar_select %p34, %s36, %s27
    %p38 = scmp.ge.s32.totalorder %s37, 2
    %s39 = scalar_select %p38, 0, %s37
    %s40 = ssub.s32 %s27, %s39
    %s41 = ssub.s32 %s28, %s35
    %s42 = sor.u32 %s40, %s41
    %p43 = scmp.eq.s32.totalorder %s42, 0
    %s45 = sadd.s32 %s44, 1
    %s46 = scalar_select %p43, %s44, %s45
    %p49 = pneg %p43
    %p50 = scmp.eq.s32.totalorder %s20, 1
    %p51 = por %p49, %p50
    %p52 = scmp.ne.s32.totalorder %s44, %s47
    %p53 = scmp.eq.s32.totalorder %s20, 0
    %p54 = por %p52, %p53
    %p55 = scmp.ne.s32.totalorder %s44, %s47
    %p56 = scmp.eq.s32.totalorder %s25, 1
    %p57 = por %p55, %p56
    %p58 = scmp.ne.s32.totalorder %s47, %s48
    %p59 = scmp.eq.s32.totalorder %s25, 0
    %p60 = por %p58, %p59
    %p61 = scmp.ne.s32.totalorder %s47, %s48
    %p62 = scmp.eq.s32.totalorder %s26, 1
    %p63 = por %p61, %p62
    %p65 = scmp.ne.s32.totalorder %s48, %s64
    %p66 = scmp.eq.s32.totalorder %s26, 0
    %p67 = por %p65, %p66
    %s68 = ssub.s32 %s28, %s35
    %p69 = scmp.eq.s32.totalorder %s68, 0
    %s71 = sadd.s32 %s70, 1
    %s72 = scalar_select %p69, %s70, %s71
    %p75 = pneg %p69
    %p76 = scmp.eq.s32.totalorder %s20, 1
    %p77 = por %p75, %p76
    %p78 = scmp.ne.s32.totalorder %s70, %s73
    %p79 = scmp.eq.s32.totalorder %s20, 0
    %p80 = por %p78, %p79
    %p81 = scmp.ne.s32.totalorder %s70, %s73
    %p82 = scmp.eq.s32.totalorder %s25, 1
    %p83 = por %p81, %p82
    %p84 = scmp.ne.s32.totalorder %s73, %s74
    %p85 = scmp.eq.s32.totalorder %s25, 0
    %p86 = por %p84, %p85
    %p87 = scmp.ne.s32.totalorder %s73, %s74
    %p88 = scmp.eq.s32.totalorder %s26, 1
    %p89 = por %p87, %p88
    %p91 = scmp.ne.s32.totalorder %s74, %s90
    %p92 = scmp.eq.s32.totalorder %s26, 0
    %p93 = por %p91, %p92
    %s95 = sadd.s32 %s94, 1
    %p98 = scmp.eq.s32.totalorder %s20, 1
    %p99 = scmp.ne.s32.totalorder %s94, %s96
    %p100 = scmp.eq.s32.totalorder %s20, 0
    %p101 = por %p99, %p100
    %p102 = scmp.ne.s32.totalorder %s94, %s96
    %p103 = scmp.eq.s32.totalorder %s25, 1
    %p104 = por %p102, %p103
    %p105 = scmp.ne.s32.totalorder %s96, %s97
    %p106 = scmp.eq.s32.totalorder %s25, 0
    %p107 = por %p105, %p106
    %p108 = scmp.ne.s32.totalorder %s96, %s97
    %p109 = scmp.eq.s32.totalorder %s26, 1
    %p110 = por %p108, %p109
    %p112 = scmp.ne.s32.totalorder %s97, %s111
    %p113 = scmp.eq.s32.totalorder %s26, 0
    %p114 = por %p112, %p113
    %s116 = sadd.s32 %s115, 1
    %p119 = scmp.eq.s32.totalorder %s20, 1
    %p120 = scmp.ne.s32.totalorder %s115, %s117
    %p121 = scmp.eq.s32.totalorder %s20, 0
    %p122 = por %p120, %p121
    %p123 = scmp.ne.s32.totalorder %s115, %s117
    %p124 = scmp.eq.s32.totalorder %s25, 1
    %p125 = por %p123, %p124
    %p126 = scmp.ne.s32.totalorder %s117, %s118
    %p127 = scmp.eq.s32.totalorder %s25, 0
    %p128 = por %p126, %p127
    %p129 = scmp.ne.s32.totalorder %s117, %s118
    %p130 = scmp.eq.s32.totalorder %s26, 1
    %p131 = por %p129, %p130
    %p133 = scmp.ne.s32.totalorder %s118, %s132
    %p134 = scmp.eq.s32.totalorder %s26, 0
    %p135 = por %p133, %p134
    %s137 = sadd.s32 %s136, 1
    %p140 = scmp.eq.s32.totalorder %s20, 1
    %p141 = scmp.ne.s32.totalorder %s136, %s138
    %p142 = scmp.eq.s32.totalorder %s20, 0
    %p143 = por %p141, %p142
    %p144 = scmp.ne.s32.totalorder %s136, %s138
    %p145 = scmp.eq.s32.totalorder %s25, 1
    %p146 = por %p144, %p145
    %p147 = scmp.ne.s32.totalorder %s138, %s139
    %p148 = scmp.eq.s32.totalorder %s25, 0
    %p149 = por %p147, %p148
    %p150 = scmp.ne.s32.totalorder %s138, %s139
    %p151 = scmp.eq.s32.totalorder %s26, 1
    %p152 = por %p150, %p151
    %p154 = scmp.ne.s32.totalorder %s139, %s153
    %p155 = scmp.eq.s32.totalorder %s26, 0
    %p156 = por %p154, %p155
    %s158 = sadd.s32 %s157, 1
    %p161 = scmp.eq.s32.totalorder %s20, 1
    %p162 = scmp.ne.s32.totalorder %s157, %s159
    %p163 = scmp.eq.s32.totalorder %s20, 0
    %p164 = por %p162, %p163
    %p165 = scmp.ne.s32.totalorder %s157, %s159
    %p166 = scmp.eq.s32.totalorder %s25, 1
    %p167 = por %p165, %p166
    %p168 = scmp.ne.s32.totalorder %s159, %s160
    %p169 = scmp.eq.s32.totalorder %s25, 0
    %p170 = por %p168, %p169
    %p171 = scmp.ne.s32.totalorder %s159, %s160
    %p172 = scmp.eq.s32.totalorder %s26, 1
    %p173 = por %p171, %p172
    %p175 = scmp.ne.s32.totalorder %s160, %s174
    %p176 = scmp.eq.s32.totalorder %s26, 0
    %p177 = por %p175, %p176
    %s179 = sadd.s32 %s178, 1
    %p182 = scmp.eq.s32.totalorder %s20, 1
    %p183 = scmp.ne.s32.totalorder %s178, %s180
    %p184 = scmp.eq.s32.totalorder %s20, 0
    %p185 = por %p183, %p184
    %p186 = scmp.ne.s32.totalorder %s178, %s180
    %p187 = scmp.eq.s32.totalorder %s25, 1
    %p188 = por %p186, %p187
    %p189 = scmp.ne.s32.totalorder %s180, %s181
    %p190 = scmp.eq.s32.totalorder %s25, 0
    %p191 = por %p189, %p190
    %p192 = scmp.ne.s32.totalorder %s180, %s181
    %p193 = scmp.eq.s32.totalorder %s26, 1
    %p194 = por %p192, %p193
    %p196 = scmp.ne.s32.totalorder %s181, %s195
    %p197 = scmp.eq.s32.totalorder %s26, 0
    %p198 = por %p196, %p197
    %s200 = sadd.s32 %s199, 1
    %p203 = scmp.eq.s32.totalorder %s20, 1
    %p204 = scmp.ne.s32.totalorder %s199, %s201
    %p205 = scmp.eq.s32.totalorder %s20, 0
    %p206 = por %p204, %p205
    %p207 = scmp.ne.s32.totalorder %s199, %s201
    %p208 = scmp.eq.s32.totalorder %s25, 1
    %p209 = por %p207, %p208
    %p210 = scmp.ne.s32.totalorder %s201, %s202
    %p211 = scmp.eq.s32.totalorder %s25, 0
    %p212 = por %p210, %p211
    %p213 = scmp.ne.s32.totalorder %s201, %s202
    %p214 = scmp.eq.s32.totalorder %s26, 1
    %p215 = por %p213, %p214
    %p217 = scmp.ne.s32.totalorder %s202, %s216
    %p218 = scmp.eq.s32.totalorder %s26, 0
    %p219 = por %p217, %p218
    %s221 = sadd.s32 %s220, 1
    %p224 = scmp.eq.s32.totalorder %s20, 1
    %p225 = scmp.ne.s32.totalorder %s220, %s222
    %p226 = scmp.eq.s32.totalorder %s20, 0
    %p227 = por %p225, %p226
    %p228 = scmp.ne.s32.totalorder %s220, %s222
    %p229 = scmp.eq.s32.totalorder %s25, 1
    %p230 = por %p228, %p229
    %p231 = scmp.ne.s32.totalorder %s222, %s223
    %p232 = scmp.eq.s32.totalorder %s25, 0
    %p233 = por %p231, %p232
    %p234 = scmp.ne.s32.totalorder %s222, %s223
    %p235 = scmp.eq.s32.totalorder %s26, 1
    %p236 = por %p234, %p235
    %p238 = scmp.ne.s32.totalorder %s223, %s237
    %p239 = scmp.eq.s32.totalorder %s26, 0
    %p240 = por %p238, %p239
    %s242 = sadd.s32 %s241, 1
    %p245 = scmp.eq.s32.totalorder %s20, 1
    %p246 = scmp.ne.s32.totalorder %s241, %s243
    %p247 = scmp.eq.s32.totalorder %s20, 0
    %p248 = por %p246, %p247
    %p249 = scmp.ne.s32.totalorder %s241, %s243
    %p250 = scmp.eq.s32.totalorder %s25, 1
    %p251 = por %p249, %p250
    %p252 = scmp.ne.s32.totalorder %s243, %s244
    %p253 = scmp.eq.s32.totalorder %s25, 0
    %p254 = por %p252, %p253
    %p255 = scmp.ne.s32.totalorder %s243, %s244
    %p256 = scmp.eq.s32.totalorder %s26, 1
    %p257 = por %p255, %p256
    %p259 = scmp.ne.s32.totalorder %s244, %s258
    %p260 = scmp.eq.s32.totalorder %s26, 0
    %p261 = por %p259, %p260
    %s263 = sadd.s32 %s262, 1
    %p266 = scmp.eq.s32.totalorder %s20, 1
    %p267 = scmp.ne.s32.totalorder %s262, %s264
    %p268 = scmp.eq.s32.totalorder %s20, 0
    %p269 = por %p267, %p268
    %p270 = scmp.ne.s32.totalorder %s262, %s264
    %p271 = scmp.eq.s32.totalorder %s25, 1
    %p272 = por %p270, %p271
    %p273 = scmp.ne.s32.totalorder %s264, %s265
    %p274 = scmp.eq.s32.totalorder %s25, 0
    %p275 = por %p273, %p274
    %p276 = scmp.ne.s32.totalorder %s264, %s265
    %p277 = scmp.eq.s32.totalorder %s26, 1
    %p278 = por %p276, %p277
    %p280 = scmp.ne.s32.totalorder %s265, %s279
    %p281 = scmp.eq.s32.totalorder %s26, 0
    %p282 = por %p280, %p281
    %s284 = sadd.s32 %s283, 1
    %p287 = scmp.eq.s32.totalorder %s20, 1
    %p288 = scmp.ne.s32.totalorder %s283, %s285
    %p289 = scmp.eq.s32.totalorder %s20, 0
    %p290 = por %p288, %p289
    %p291 = scmp.ne.s32.totalorder %s283, %s285
    %p292 = scmp.eq.s32.totalorder %s25, 1
    %p293 = por %p291, %p292
    %p294 = scmp.ne.s32.totalorder %s285, %s286
    %p295 = scmp.eq.s32.totalorder %s25, 0
    %p296 = por %p294, %p295
    %p297 = scmp.ne.s32.totalorder %s285, %s286
    %p298 = scmp.eq.s32.totalorder %s26, 1
    %p299 = por %p297, %p298
    %p301 = scmp.ne.s32.totalorder %s286, %s300
    %p302 = scmp.eq.s32.totalorder %s26, 0
    %p303 = por %p301, %p302
    %s305 = sadd.s32 %s304, 1
    %p308 = scmp.eq.s32.totalorder %s20, 1
    %p309 = scmp.ne.s32.totalorder %s304, %s306
    %p310 = scmp.eq.s32.totalorder %s20, 0
    %p311 = por %p309, %p310
    %p312 = scmp.ne.s32.totalorder %s304, %s306
    %p313 = scmp.eq.s32.totalorder %s25, 1
    %p314 = por %p312, %p313
    %p315 = scmp.ne.s32.totalorder %s306, %s307
    %p316 = scmp.eq.s32.totalorder %s25, 0
    %p317 = por %p315, %p316
    %p318 = scmp.ne.s32.totalorder %s306, %s307
    %p319 = scmp.eq.s32.totalorder %s26, 1
    %p320 = por %p318, %p319
    %p322 = scmp.ne.s32.totalorder %s307, %s321
    %p323 = scmp.eq.s32.totalorder %s26, 0
    %p324 = por %p322, %p323
    %s326 = sadd.s32 %s325, 1
    %p329 = scmp.eq.s32.totalorder %s20, 1
    %p330 = scmp.ne.s32.totalorder %s325, %s327
    %p331 = scmp.eq.s32.totalorder %s20, 0
    %p332 = por %p330, %p331
    %p333 = scmp.ne.s32.totalorder %s325, %s327
    %p334 = scmp.eq.s32.totalorder %s25, 1
    %p335 = por %p333, %p334
    %p336 = scmp.ne.s32.totalorder %s327, %s328
    %p337 = scmp.eq.s32.totalorder %s25, 0
    %p338 = por %p336, %p337
    %p339 = scmp.ne.s32.totalorder %s327, %s328
    %p340 = scmp.eq.s32.totalorder %s26, 1
    %p341 = por %p339, %p340
    %p343 = scmp.ne.s32.totalorder %s328, %s342
    %p344 = scmp.eq.s32.totalorder %s26, 0
    %p345 = por %p343, %p344
    %s346 = ssub.s32 %s27, %s39
    %s347 = ssub.s32 %s28, %s35
    %s348 = sor.u32 %s346, %s347
    %p349 = scmp.eq.s32.totalorder %s348, 0
    %s351 = sadd.s32 %s350, 1
    %s352 = scalar_select %p349, %s350, %s351
    %p355 = pneg %p349
    %p356 = scmp.eq.s32.totalorder %s20, 1
    %p357 = por %p355, %p356
    %p358 = scmp.ne.s32.totalorder %s350, %s353
    %p359 = scmp.eq.s32.totalorder %s20, 0
    %p360 = por %p358, %p359
    %p361 = scmp.ne.s32.totalorder %s350, %s353
    %p362 = scmp.eq.s32.totalorder %s25, 1
    %p363 = por %p361, %p362
    %p364 = scmp.ne.s32.totalorder %s353, %s354
    %p365 = scmp.eq.s32.totalorder %s25, 0
    %p366 = por %p364, %p365
    %p367 = scmp.ne.s32.totalorder %s353, %s354
    %p368 = scmp.eq.s32.totalorder %s26, 1
    %p369 = por %p367, %p368
    %p371 = scmp.ne.s32.totalorder %s354, %s370
    %p372 = scmp.eq.s32.totalorder %s26, 0
    %p373 = por %p371, %p372
    %p374 = scmp.le.s32.totalorder 1, %s20
    %p375 = scmp.lt.s32.totalorder %s20, 3
    %p376 = pnand %p374, %p375
    %p377 = pneg %p376
    // Predicated region
    $region9: #{swin_block_forward.1} parent=5 // pred_check
      _
    $region10: #{swin_block_forward.1} parent=5 // pred_check_branch
      %379 = sbr.rel (%p376) target = $region12
    $region11: #{swin_block_forward.1} parent=5 // pred_region
      %s380 = ssub.s32 %s20, 1
      // Predicated region
      $region13: #{swin_block_forward.1} parent=11 // pred_check
        %p381 = pneg %p86
      $region14: #{swin_block_forward.1} parent=11 // pred_check_branch
        %383 = sbr.rel (%p381) target = $region16
      $region15: #{swin_block_forward.1} parent=11 // pred_region
        %s384 = smul.u32 4, %s30
        %p385 = scmp.lt.s32.totalorder %s384, 3
        %s386 = scalar_select %p385, %s384, 3
        %s387 = smul.addr %s386, 32
        %s388 = smul.addr %s387, 8
        %s389 = scalar_lea.vmem %s1, %s388
        %s390 = smul.u32 4, %s30
      $region16: #{swin_block_forward.1} parent=11 // pred_fallthru
        _
      // Predicated region
      $region17: #{swin_block_forward.1} parent=11 // pred_check
        %p391 = pneg %p107
      $region18: #{swin_block_forward.1} parent=11 // pred_check_branch
        %393 = sbr.rel (%p391) target = $region20
      $region19: #{swin_block_forward.1} parent=11 // pred_region
        _
      $region20: #{swin_block_forward.1} parent=11 // pred_fallthru
        _
      // Predicated region
      $region21: #{swin_block_forward.1} parent=11 // pred_check
        %p394 = pneg %p128
      $region22: #{swin_block_forward.1} parent=11 // pred_check_branch
        %396 = sbr.rel (%p394) target = $region24
      $region23: #{swin_block_forward.1} parent=11 // pred_region
        _
      $region24: #{swin_block_forward.1} parent=11 // pred_fallthru
        _
      // Predicated region
      $region25: #{swin_block_forward.1} parent=11 // pred_check
        %p397 = pneg %p149
      $region26: #{swin_block_forward.1} parent=11 // pred_check_branch
        %399 = sbr.rel (%p397) target = $region28
      $region27: #{swin_block_forward.1} parent=11 // pred_region
        _
      $region28: #{swin_block_forward.1} parent=11 // pred_fallthru
        _
      // Predicated region
      $region29: #{swin_block_forward.1} parent=11 // pred_check
        %p400 = pneg %p170
      $region30: #{swin_block_forward.1} parent=11 // pred_check_branch
        %402 = sbr.rel (%p400) target = $region32
      $region31: #{swin_block_forward.1} parent=11 // pred_region
        _
      $region32: #{swin_block_forward.1} parent=11 // pred_fallthru
        _
      // Predicated region
      $region33: #{swin_block_forward.1} parent=11 // pred_check
        %p403 = pneg %p191
      $region34: #{swin_block_forward.1} parent=11 // pred_check_branch
        %405 = sbr.rel (%p403) target = $region36
      $region35: #{swin_block_forward.1} parent=11 // pred_region
        _
      $region36: #{swin_block_forward.1} parent=11 // pred_fallthru
        _
      // Predicated region
      $region37: #{swin_block_forward.1} parent=11 // pred_check
        %p406 = pneg %p212
      $region38: #{swin_block_forward.1} parent=11 // pred_check_branch
        %408 = sbr.rel (%p406) target = $region40
      $region39: #{swin_block_forward.1} parent=11 // pred_region
        _
      $region40: #{swin_block_forward.1} parent=11 // pred_fallthru
        _
      // Predicated region
      $region41: #{swin_block_forward.1} parent=11 // pred_check
        %p409 = pneg %p233
      $region42: #{swin_block_forward.1} parent=11 // pred_check_branch
        %411 = sbr.rel (%p409) target = $region44
      $region43: #{swin_block_forward.1} parent=11 // pred_region
        _
      $region44: #{swin_block_forward.1} parent=11 // pred_fallthru
        _
      // Predicated region
      $region45: #{swin_block_forward.1} parent=11 // pred_check
        %p412 = pneg %p254
      $region46: #{swin_block_forward.1} parent=11 // pred_check_branch
        %414 = sbr.rel (%p412) target = $region48
      $region47: #{swin_block_forward.1} parent=11 // pred_region
        _
      $region48: #{swin_block_forward.1} parent=11 // pred_fallthru
        _
      // Predicated region
      $region49: #{swin_block_forward.1} parent=11 // pred_check
        %p415 = pneg %p275
      $region50: #{swin_block_forward.1} parent=11 // pred_check_branch
        %417 = sbr.rel (%p415) target = $region52
      $region51: #{swin_block_forward.1} parent=11 // pred_region
        _
      $region52: #{swin_block_forward.1} parent=11 // pred_fallthru
        _
      // Predicated region
      $region53: #{swin_block_forward.1} parent=11 // pred_check
        %p418 = pneg %p296
      $region54: #{swin_block_forward.1} parent=11 // pred_check_branch
        %420 = sbr.rel (%p418) target = $region56
      $region55: #{swin_block_forward.1} parent=11 // pred_region
        _
      $region56: #{swin_block_forward.1} parent=11 // pred_fallthru
        _
      // Predicated region
      $region57: #{swin_block_forward.1} parent=11 // pred_check
        %p421 = pneg %p317
      $region58: #{swin_block_forward.1} parent=11 // pred_check_branch
        %423 = sbr.rel (%p421) target = $region60
      $region59: #{swin_block_forward.1} parent=11 // pred_region
        _
      $region60: #{swin_block_forward.1} parent=11 // pred_fallthru
        _
      // Predicated region
      $region61: #{swin_block_forward.1} parent=11 // pred_check
        %p424 = pneg %p338
      $region62: #{swin_block_forward.1} parent=11 // pred_check_branch
        %426 = sbr.rel (%p424) target = $region64
      $region63: #{swin_block_forward.1} parent=11 // pred_region
        _
      $region64: #{swin_block_forward.1} parent=11 // pred_fallthru
        _
    $region12: #{swin_block_forward.1} parent=5 // pred_fallthru
      _
    %p427 = scmp.lt.s32.totalorder %s20, 2
    // Predicated region
    $region65: #{swin_block_forward.1} parent=5 // pred_check
      %p428 = pneg %p427
    $region66: #{swin_block_forward.1} parent=5 // pred_check_branch
      %430 = sbr.rel (%p428) target = $region68
    $region67: #{swin_block_forward.1} parent=5 // pred_region
      // Predicated region
      $region69: #{swin_block_forward.1} parent=67 // pred_check
        %p431 = pneg %p54
      $region70: #{swin_block_forward.1} parent=67 // pred_check_branch
        %433 = sbr.rel (%p431) target = $region72
      $region71: #{swin_block_forward.1} parent=67 // pred_region
        %s434 = smul.u32 16, %s28
        %p435 = scmp.lt.s32.totalorder %s27, 1
        %s436 = scalar_select %p435, %s27, 1
        %p437 = scmp.lt.s32.totalorder %s434, 15
        %s438 = scalar_select %p437, %s434, 15
        %s439 = smul.addr %s438, 2
        %s440 = smul.addr %s436, 32
        %s441 = sadd.s32 %s439, %s440
        %s442 = smul.addr %s441, 8
        %s443 = scalar_lea.vmem %s0, %s442
        %s444 = smul.u32 16, %s28
      $region72: #{swin_block_forward.1} parent=67 // pred_fallthru
        _
    $region68: #{swin_block_forward.1} parent=5 // pred_fallthru
      _
    %p445 = scmp.le.s32.totalorder 1, %s20
    %p446 = scmp.lt.s32.totalorder %s20, 3
    %p447 = pnand %p445, %p446
    %p448 = pneg %p447
    // Predicated region
    $region73: #{swin_block_forward.1} parent=5 // pred_check
      _
    $region74: #{swin_block_forward.1} parent=5 // pred_check_branch
      %450 = sbr.rel (%p447) target = $region76
    $region75: #{swin_block_forward.1} parent=5 // pred_region
      %s451 = ssub.s32 %s20, 1
      %s452 = smul.u32 16, %s30
      %p453 = scmp.lt.s32.totalorder %s29, 1
      %s454 = scalar_select %p453, %s29, 1
      %p455 = scmp.lt.s32.totalorder %s452, 15
      %s456 = scalar_select %p455, %s452, 15
      %s457 = smul.addr %s456, 2
      %s458 = smul.addr %s454, 32
      %s459 = sadd.s32 %s457, %s458
      %s460 = smul.addr %s459, 8
      %s461 = scalar_lea.vmem %s0, %s460
      %p462 = pneg %p60
      %p463 = pneg %p57
      %s464 = smul.u32 4, %s30
      %p465 = scmp.lt.s32.totalorder %s464, 3
      %s466 = scalar_select %p465, %s464, 3
      %s467 = smul.addr %s466, 32
      %s468 = smul.addr %s467, 8
      %s469 = scalar_lea.vmem %s1, %s468
      %p470 = pneg %p86
      %p471 = pneg %p83
      %p472 = pneg %p107
      %p473 = pneg %p104
      %p474 = pneg %p128
      %p475 = pneg %p125
      %p476 = pneg %p149
      %p477 = pneg %p146
      %p478 = pneg %p170
      %p479 = pneg %p167
      %p480 = pneg %p191
      %p481 = pneg %p188
      %p482 = pneg %p212
      %p483 = pneg %p209
      %p484 = pneg %p233
      %p485 = pneg %p230
      %p486 = pneg %p254
      %p487 = pneg %p251
      %p488 = pneg %p275
      %p489 = pneg %p272
      %p490 = pneg %p296
      %p491 = pneg %p293
      %p492 = pneg %p317
      %p493 = pneg %p314
      %p494 = pneg %p338
      %p495 = pneg %p335
      %p496 = pneg %p366
      %p497 = pneg %p363
      %s498 = smul.u32 16, %s30
      %p499 = scmp.lt.s32.totalorder %s29, 1
      %s500 = scalar_select %p499, %s29, 1
      %p501 = scmp.lt.s32.totalorder %s498, 15
      %s502 = scalar_select %p501, %s498, 15
      %s503 = smul.addr %s502, 2
      %s504 = smul.addr %s500, 32
      %s505 = sadd.s32 %s503, %s504
      %s506 = smul.addr %s505, 8
      %s507 = scalar_lea.vmem %s14, %s506
      %s508 = smul.u32 16, %s30
      %p509 = scmp.lt.s32.totalorder %s29, 1
      %s510 = scalar_select %p509, %s29, 1
      %p511 = scmp.lt.s32.totalorder %s508, 15
      %s512 = scalar_select %p511, %s508, 15
      %s513 = smul.addr %s512, 2
      %s514 = smul.addr %s510, 32
      %s515 = sadd.s32 %s513, %s514
      %s516 = smul.addr %s515, 8
      %s517 = scalar_lea.vmem %s0, %s516
      %s518 = smul.u32 16, %s30
      %s519 = smul.u32 4, %s30
      %p520 = scmp.lt.s32.totalorder %s519, 3
      %s521 = scalar_select %p520, %s519, 3
      %s522 = smul.addr %s521, 32
      %s523 = smul.addr %s522, 8
      %s524 = scalar_lea.vmem %s1, %s523
      %s525 = smul.u32 4, %s30
      %s526 = smul.u32 16, %s30
      %p527 = scmp.lt.s32.totalorder %s29, 1
      %s528 = scalar_select %p527, %s29, 1
      %p529 = scmp.lt.s32.totalorder %s526, 15
      %s530 = scalar_select %p529, %s526, 15
      %s531 = smul.addr %s530, 2
      %s532 = smul.addr %s528, 32
      %s533 = sadd.s32 %s531, %s532
      %s534 = smul.addr %s533, 8
      %s535 = scalar_lea.vmem %s14, %s534
      %s536 = smul.u32 16, %s30
      %v538 = vld [vmem:[%s517] sm:$0xff]
      %v539 = vld [vmem:[%s517 + $0x8] sm:$0xff]
      %v540 = vld [vmem:[%s517 + $0x10] sm:$0xff]
      %v541 = vld [vmem:[%s517 + $0x18] sm:$0xff]
      %v542 = vld [vmem:[%s517 + $0x20] sm:$0xff]
      %v543 = vld [vmem:[%s517 + $0x28] sm:$0xff]
      %v544 = vld [vmem:[%s517 + $0x30] sm:$0xff]
      %v545 = vld [vmem:[%s517 + $0x38] sm:$0xff]
      %v546 = vld [vmem:[%s517 + $0x40] sm:$0xff]
      %v547 = vld [vmem:[%s517 + $0x48] sm:$0xff]
      %v548 = vld [vmem:[%s517 + $0x50] sm:$0xff]
      %v549 = vld [vmem:[%s517 + $0x58] sm:$0xff]
      %v550 = vld [vmem:[%s517 + $0x60] sm:$0xff]
      %v551 = vld [vmem:[%s517 + $0x68] sm:$0xff]
      %v552 = vld [vmem:[%s517 + $0x70] sm:$0xff]
      %v553 = vld [vmem:[%s517 + $0x78] sm:$0xff]
      %v554 = vld [vmem:[%s517 + $0x80] sm:$0xff]
      %v555 = vld [vmem:[%s517 + $0x88] sm:$0xff]
      %v556 = vld [vmem:[%s517 + $0x90] sm:$0xff]
      %v557 = vld [vmem:[%s517 + $0x98] sm:$0xff]
      %v558 = vld [vmem:[%s517 + $0xa0] sm:$0xff]
      %v559 = vld [vmem:[%s517 + $0xa8] sm:$0xff]
      %v560 = vld [vmem:[%s517 + $0xb0] sm:$0xff]
      %v561 = vld [vmem:[%s517 + $0xb8] sm:$0xff]
      %v562 = vld [vmem:[%s517 + $0xc0] sm:$0xff]
      %v563 = vld [vmem:[%s517 + $0xc8] sm:$0xff]
      %v564 = vld [vmem:[%s517 + $0xd0] sm:$0xff]
      %v565 = vld [vmem:[%s517 + $0xd8] sm:$0xff]
      %v566 = vld [vmem:[%s517 + $0xe0] sm:$0xff]
      %v567 = vld [vmem:[%s517 + $0xe8] sm:$0xff]
      %v568 = vld [vmem:[%s517 + $0xf0] sm:$0xff]
      %v569 = vld [vmem:[%s517 + $0xf8] sm:$0xff]
      %570 = vadd.xlane.f32.xlu0 %v538
      %v571 = vpop.xlane.xlu0 %570
      %572 = vadd.xlane.f32.xlu0 %v540
      %v573 = vpop.xlane.xlu0 %572
      %574 = vadd.xlane.f32.xlu0 %v542
      %v575 = vpop.xlane.xlu0 %574
      %576 = vadd.xlane.f32.xlu0 %v544
      %v577 = vpop.xlane.xlu0 %576
      %578 = vadd.xlane.f32.xlu0 %v546
      %v579 = vpop.xlane.xlu0 %578
      %580 = vadd.xlane.f32.xlu0 %v548
      %v581 = vpop.xlane.xlu0 %580
      %582 = vadd.xlane.f32.xlu0 %v550
      %v583 = vpop.xlane.xlu0 %582
      %584 = vadd.xlane.f32.xlu0 %v552
      %v585 = vpop.xlane.xlu0 %584
      %586 = vadd.xlane.f32.xlu0 %v539
      %v587 = vpop.xlane.xlu0 %586
      %588 = vadd.xlane.f32.xlu0 %v541
      %v589 = vpop.xlane.xlu0 %588
      %590 = vadd.xlane.f32.xlu0 %v543
      %v591 = vpop.xlane.xlu0 %590
      %592 = vadd.xlane.f32.xlu0 %v545
      %v593 = vpop.xlane.xlu0 %592
      %594 = vadd.xlane.f32.xlu0 %v547
      %v595 = vpop.xlane.xlu0 %594
      %596 = vadd.xlane.f32.xlu0 %v549
      %v597 = vpop.xlane.xlu0 %596
      %598 = vadd.xlane.f32.xlu0 %v551
      %v599 = vpop.xlane.xlu0 %598
      %600 = vadd.xlane.f32.xlu0 %v553
      %v601 = vpop.xlane.xlu0 %600
      %602 = vadd.xlane.f32.xlu0 %v554
      %v603 = vpop.xlane.xlu0 %602
      %604 = vadd.xlane.f32.xlu0 %v556
      %v605 = vpop.xlane.xlu0 %604
      %606 = vadd.xlane.f32.xlu0 %v558
      %v607 = vpop.xlane.xlu0 %606
      %608 = vadd.xlane.f32.xlu0 %v560
      %v609 = vpop.xlane.xlu0 %608
      %610 = vadd.xlane.f32.xlu0 %v562
      %v611 = vpop.xlane.xlu0 %610
      %612 = vadd.xlane.f32.xlu0 %v564
      %v613 = vpop.xlane.xlu0 %612
      %614 = vadd.xlane.f32.xlu0 %v566
      %v615 = vpop.xlane.xlu0 %614
      %616 = vadd.xlane.f32.xlu0 %v568
      %v617 = vpop.xlane.xlu0 %616
      %618 = vadd.xlane.f32.xlu0 %v555
      %v619 = vpop.xlane.xlu0 %618
      %620 = vadd.xlane.f32.xlu0 %v557
      %v621 = vpop.xlane.xlu0 %620
      %622 = vadd.xlane.f32.xlu0 %v559
      %v623 = vpop.xlane.xlu0 %622
      %624 = vadd.xlane.f32.xlu0 %v561
      %v625 = vpop.xlane.xlu0 %624
      %626 = vadd.xlane.f32.xlu0 %v563
      %v627 = vpop.xlane.xlu0 %626
      %628 = vadd.xlane.f32.xlu0 %v565
      %v629 = vpop.xlane.xlu0 %628
      %630 = vadd.xlane.f32.xlu0 %v567
      %v631 = vpop.xlane.xlu0 %630
      %632 = vadd.xlane.f32.xlu0 %v569
      %v633 = vpop.xlane.xlu0 %632
      %v634 = vrcp.pop 128.0
      %v635 = vmul.f32 %v571, %v634
      %v636 = vmul.f32 %v573, %v634
      %v637 = vmul.f32 %v575, %v634
      %v638 = vmul.f32 %v577, %v634
      %v639 = vmul.f32 %v579, %v634
      %v640 = vmul.f32 %v581, %v634
      %v641 = vmul.f32 %v583, %v634
      %v642 = vmul.f32 %v585, %v634
      %v643 = vmul.f32 %v587, %v634
      %v644 = vmul.f32 %v589, %v634
      %v645 = vmul.f32 %v591, %v634
      %v646 = vmul.f32 %v593, %v634
      %v647 = vmul.f32 %v595, %v634
      %v648 = vmul.f32 %v597, %v634
      %v649 = vmul.f32 %v599, %v634
      %v650 = vmul.f32 %v601, %v634
      %v651 = vmul.f32 %v603, %v634
      %v652 = vmul.f32 %v605, %v634
      %v653 = vmul.f32 %v607, %v634
      %v654 = vmul.f32 %v609, %v634
      %v655 = vmul.f32 %v611, %v634
      %v656 = vmul.f32 %v613, %v634
      %v657 = vmul.f32 %v615, %v634
      %v658 = vmul.f32 %v617, %v634
      %v659 = vmul.f32 %v619, %v634
      %v660 = vmul.f32 %v621, %v634
      %v661 = vmul.f32 %v623, %v634
      %v662 = vmul.f32 %v625, %v634
      %v663 = vmul.f32 %v627, %v634
      %v664 = vmul.f32 %v629, %v634
      %v665 = vmul.f32 %v631, %v634
      %v666 = vmul.f32 %v633, %v634
      %v667 = vsub.f32 %v538, %v635
      %v668 = vsub.f32 %v540, %v636
      %v669 = vsub.f32 %v542, %v637
      %v670 = vsub.f32 %v544, %v638
      %v671 = vsub.f32 %v546, %v639
      %v672 = vsub.f32 %v548, %v640
      %v673 = vsub.f32 %v550, %v641
      %v674 = vsub.f32 %v552, %v642
      %v675 = vsub.f32 %v539, %v643
      %v676 = vsub.f32 %v541, %v644
      %v677 = vsub.f32 %v543, %v645
      %v678 = vsub.f32 %v545, %v646
      %v679 = vsub.f32 %v547, %v647
      %v680 = vsub.f32 %v549, %v648
      %v681 = vsub.f32 %v551, %v649
      %v682 = vsub.f32 %v553, %v650
      %v683 = vsub.f32 %v554, %v651
      %v684 = vsub.f32 %v556, %v652
      %v685 = vsub.f32 %v558, %v653
      %v686 = vsub.f32 %v560, %v654
      %v687 = vsub.f32 %v562, %v655
      %v688 = vsub.f32 %v564, %v656
      %v689 = vsub.f32 %v566, %v657
      %v690 = vsub.f32 %v568, %v658
      %v691 = vsub.f32 %v555, %v659
      %v692 = vsub.f32 %v557, %v660
      %v693 = vsub.f32 %v559, %v661
      %v694 = vsub.f32 %v561, %v662
      %v695 = vsub.f32 %v563, %v663
      %v696 = vsub.f32 %v565, %v664
      %v697 = vsub.f32 %v567, %v665
      %v698 = vsub.f32 %v569, %v666
      %v699 = vmul.f32 %v667, %v667
      %v700 = vmul.f32 %v668, %v668
      %v701 = vmul.f32 %v669, %v669
      %v702 = vmul.f32 %v670, %v670
      %v703 = vmul.f32 %v671, %v671
      %v704 = vmul.f32 %v672, %v672
      %v705 = vmul.f32 %v673, %v673
      %v706 = vmul.f32 %v674, %v674
      %v707 = vmul.f32 %v675, %v675
      %v708 = vmul.f32 %v676, %v676
      %v709 = vmul.f32 %v677, %v677
      %v710 = vmul.f32 %v678, %v678
      %v711 = vmul.f32 %v679, %v679
      %v712 = vmul.f32 %v680, %v680
      %v713 = vmul.f32 %v681, %v681
      %v714 = vmul.f32 %v682, %v682
      %v715 = vmul.f32 %v683, %v683
      %v716 = vmul.f32 %v684, %v684
      %v717 = vmul.f32 %v685, %v685
      %v718 = vmul.f32 %v686, %v686
      %v719 = vmul.f32 %v687, %v687
      %v720 = vmul.f32 %v688, %v688
      %v721 = vmul.f32 %v689, %v689
      %v722 = vmul.f32 %v690, %v690
      %v723 = vmul.f32 %v691, %v691
      %v724 = vmul.f32 %v692, %v692
      %v725 = vmul.f32 %v693, %v693
      %v726 = vmul.f32 %v694, %v694
      %v727 = vmul.f32 %v695, %v695
      %v728 = vmul.f32 %v696, %v696
      %v729 = vmul.f32 %v697, %v697
      %v730 = vmul.f32 %v698, %v698
      %731 = vadd.xlane.f32.xlu0 %v699
      %v732 = vpop.xlane.xlu0 %731
      %733 = vadd.xlane.f32.xlu0 %v700
      %v734 = vpop.xlane.xlu0 %733
      %735 = vadd.xlane.f32.xlu0 %v701
      %v736 = vpop.xlane.xlu0 %735
      %737 = vadd.xlane.f32.xlu0 %v702
      %v738 = vpop.xlane.xlu0 %737
      %739 = vadd.xlane.f32.xlu0 %v703
      %v740 = vpop.xlane.xlu0 %739
      %741 = vadd.xlane.f32.xlu0 %v704
      %v742 = vpop.xlane.xlu0 %741
      %743 = vadd.xlane.f32.xlu0 %v705
      %v744 = vpop.xlane.xlu0 %743
      %745 = vadd.xlane.f32.xlu0 %v706
      %v746 = vpop.xlane.xlu0 %745
      %747 = vadd.xlane.f32.xlu0 %v707
      %v748 = vpop.xlane.xlu0 %747
      %749 = vadd.xlane.f32.xlu0 %v708
      %v750 = vpop.xlane.xlu0 %749
      %751 = vadd.xlane.f32.xlu0 %v709
      %v752 = vpop.xlane.xlu0 %751
      %753 = vadd.xlane.f32.xlu0 %v710
      %v754 = vpop.xlane.xlu0 %753
      %755 = vadd.xlane.f32.xlu0 %v711
      %v756 = vpop.xlane.xlu0 %755
      %757 = vadd.xlane.f32.xlu0 %v712
      %v758 = vpop.xlane.xlu0 %757
      %759 = vadd.xlane.f32.xlu0 %v713
      %v760 = vpop.xlane.xlu0 %759
      %761 = vadd.xlane.f32.xlu0 %v714
      %v762 = vpop.xlane.xlu0 %761
      %763 = vadd.xlane.f32.xlu0 %v715
      %v764 = vpop.xlane.xlu0 %763
      %765 = vadd.xlane.f32.xlu0 %v716
      %v766 = vpop.xlane.xlu0 %765
      %767 = vadd.xlane.f32.xlu0 %v717
      %v768 = vpop.xlane.xlu0 %767
      %769 = vadd.xlane.f32.xlu0 %v718
      %v770 = vpop.xlane.xlu0 %769
      %771 = vadd.xlane.f32.xlu0 %v719
      %v772 = vpop.xlane.xlu0 %771
      %773 = vadd.xlane.f32.xlu0 %v720
      %v774 = vpop.xlane.xlu0 %773
      %775 = vadd.xlane.f32.xlu0 %v721
      %v776 = vpop.xlane.xlu0 %775
      %777 = vadd.xlane.f32.xlu0 %v722
      %v778 = vpop.xlane.xlu0 %777
      %779 = vadd.xlane.f32.xlu0 %v723
      %v780 = vpop.xlane.xlu0 %779
      %781 = vadd.xlane.f32.xlu0 %v724
      %v782 = vpop.xlane.xlu0 %781
      %783 = vadd.xlane.f32.xlu0 %v725
      %v784 = vpop.xlane.xlu0 %783
      %785 = vadd.xlane.f32.xlu0 %v726
      %v786 = vpop.xlane.xlu0 %785
      %787 = vadd.xlane.f32.xlu0 %v727
      %v788 = vpop.xlane.xlu0 %787
      %789 = vadd.xlane.f32.xlu0 %v728
      %v790 = vpop.xlane.xlu0 %789
      %791 = vadd.xlane.f32.xlu0 %v729
      %v792 = vpop.xlane.xlu0 %791
      %793 = vadd.xlane.f32.xlu0 %v730
      %v794 = vpop.xlane.xlu0 %793
      %v795 = vmul.f32 %v732, %v634
      %v796 = vmul.f32 %v734, %v634
      %v797 = vmul.f32 %v736, %v634
      %v798 = vmul.f32 %v738, %v634
      %v799 = vmul.f32 %v740, %v634
      %v800 = vmul.f32 %v742, %v634
      %v801 = vmul.f32 %v744, %v634
      %v802 = vmul.f32 %v746, %v634
      %v803 = vmul.f32 %v748, %v634
      %v804 = vmul.f32 %v750, %v634
      %v805 = vmul.f32 %v752, %v634
      %v806 = vmul.f32 %v754, %v634
      %v807 = vmul.f32 %v756, %v634
      %v808 = vmul.f32 %v758, %v634
      %v809 = vmul.f32 %v760, %v634
      %v810 = vmul.f32 %v762, %v634
      %v811 = vmul.f32 %v764, %v634
      %v812 = vmul.f32 %v766, %v634
      %v813 = vmul.f32 %v768, %v634
      %v814 = vmul.f32 %v770, %v634
      %v815 = vmul.f32 %v772, %v634
      %v816 = vmul.f32 %v774, %v634
      %v817 = vmul.f32 %v776, %v634
      %v818 = vmul.f32 %v778, %v634
      %v819 = vmul.f32 %v780, %v634
      %v820 = vmul.f32 %v782, %v634
      %v821 = vmul.f32 %v784, %v634
      %v822 = vmul.f32 %v786, %v634
      %v823 = vmul.f32 %v788, %v634
      %v824 = vmul.f32 %v790, %v634
      %v825 = vmul.f32 %v792, %v634
      %v826 = vmul.f32 %v794, %v634
      %v827 = vadd.f32 %v795, 1e-05
      %v828 = vadd.f32 %v796, 1e-05
      %v829 = vadd.f32 %v797, 1e-05
      %v830 = vadd.f32 %v798, 1e-05
      %v831 = vadd.f32 %v799, 1e-05
      %v832 = vadd.f32 %v800, 1e-05
      %v833 = vadd.f32 %v801, 1e-05
      %v834 = vadd.f32 %v802, 1e-05
      %v835 = vadd.f32 %v803, 1e-05
      %v836 = vadd.f32 %v804, 1e-05
      %v837 = vadd.f32 %v805, 1e-05
      %v838 = vadd.f32 %v806, 1e-05
      %v839 = vadd.f32 %v807, 1e-05
      %v840 = vadd.f32 %v808, 1e-05
      %v841 = vadd.f32 %v809, 1e-05
      %v842 = vadd.f32 %v810, 1e-05
      %v843 = vadd.f32 %v811, 1e-05
      %v844 = vadd.f32 %v812, 1e-05
      %v845 = vadd.f32 %v813, 1e-05
      %v846 = vadd.f32 %v814, 1e-05
      %v847 = vadd.f32 %v815, 1e-05
      %v848 = vadd.f32 %v816, 1e-05
      %v849 = vadd.f32 %v817, 1e-05
      %v850 = vadd.f32 %v818, 1e-05
      %v851 = vadd.f32 %v819, 1e-05
      %v852 = vadd.f32 %v820, 1e-05
      %v853 = vadd.f32 %v821, 1e-05
      %v854 = vadd.f32 %v822, 1e-05
      %v855 = vadd.f32 %v823, 1e-05
      %v856 = vadd.f32 %v824, 1e-05
      %v857 = vadd.f32 %v825, 1e-05
      %v858 = vadd.f32 %v826, 1e-05
      %v859 = vrsqrt.pop %v827
      %v860 = vrsqrt.pop %v828
      %v861 = vrsqrt.pop %v829
      %v862 = vrsqrt.pop %v830
      %v863 = vrsqrt.pop %v831
      %v864 = vrsqrt.pop %v832
      %v865 = vrsqrt.pop %v833
      %v866 = vrsqrt.pop %v834
      %v867 = vrsqrt.pop %v835
      %v868 = vrsqrt.pop %v836
      %v869 = vrsqrt.pop %v837
      %v870 = vrsqrt.pop %v838
      %v871 = vrsqrt.pop %v839
      %v872 = vrsqrt.pop %v840
      %v873 = vrsqrt.pop %v841
      %v874 = vrsqrt.pop %v842
      %v875 = vrsqrt.pop %v843
      %v876 = vrsqrt.pop %v844
      %v877 = vrsqrt.pop %v845
      %v878 = vrsqrt.pop %v846
      %v879 = vrsqrt.pop %v847
      %v880 = vrsqrt.pop %v848
      %v881 = vrsqrt.pop %v849
      %v882 = vrsqrt.pop %v850
      %v883 = vrsqrt.pop %v851
      %v884 = vrsqrt.pop %v852
      %v885 = vrsqrt.pop %v853
      %v886 = vrsqrt.pop %v854
      %v887 = vrsqrt.pop %v855
      %v888 = vrsqrt.pop %v856
      %v889 = vrsqrt.pop %v857
      %v890 = vrsqrt.pop %v858
      %v891 = vmul.f32 %v667, %v859
      %v892 = vmul.f32 %v668, %v860
      %v893 = vmul.f32 %v669, %v861
      %v894 = vmul.f32 %v670, %v862
      %v895 = vmul.f32 %v671, %v863
      %v896 = vmul.f32 %v672, %v864
      %v897 = vmul.f32 %v673, %v865
      %v898 = vmul.f32 %v674, %v866
      %v899 = vmul.f32 %v675, %v867
      %v900 = vmul.f32 %v676, %v868
      %v901 = vmul.f32 %v677, %v869
      %v902 = vmul.f32 %v678, %v870
      %v903 = vmul.f32 %v679, %v871
      %v904 = vmul.f32 %v680, %v872
      %v905 = vmul.f32 %v681, %v873
      %v906 = vmul.f32 %v682, %v874
      %v907 = vmul.f32 %v683, %v875
      %v908 = vmul.f32 %v684, %v876
      %v909 = vmul.f32 %v685, %v877
      %v910 = vmul.f32 %v686, %v878
      %v911 = vmul.f32 %v687, %v879
      %v912 = vmul.f32 %v688, %v880
      %v913 = vmul.f32 %v689, %v881
      %v914 = vmul.f32 %v690, %v882
      %v915 = vmul.f32 %v691, %v883
      %v916 = vmul.f32 %v692, %v884
      %v917 = vmul.f32 %v693, %v885
      %v918 = vmul.f32 %v694, %v886
      %v919 = vmul.f32 %v695, %v887
      %v920 = vmul.f32 %v696, %v888
      %v921 = vmul.f32 %v697, %v889
      %v922 = vmul.f32 %v698, %v890
      %v923 = vld [vmem:[%s2] sm:$0x1]
      %v925 = vlaneseq
      %v926 = vshrl.u32 %v925, 7
      %v927 = vsub.s32 0, %v926
      %v928 = vrot.slane %v923, %v927
      %v930 = vmul.f32 %v891, %v928
      %v931 = vmul.f32 %v892, %v928
      %v932 = vmul.f32 %v893, %v928
      %v933 = vmul.f32 %v894, %v928
      %v934 = vmul.f32 %v895, %v928
      %v935 = vmul.f32 %v896, %v928
      %v936 = vmul.f32 %v897, %v928
      %v937 = vmul.f32 %v898, %v928
      %v938 = vmul.f32 %v899, %v928
      %v939 = vmul.f32 %v900, %v928
      %v940 = vmul.f32 %v901, %v928
      %v941 = vmul.f32 %v902, %v928
      %v942 = vmul.f32 %v903, %v928
      %v943 = vmul.f32 %v904, %v928
      %v944 = vmul.f32 %v905, %v928
      %v945 = vmul.f32 %v906, %v928
      %v946 = vmul.f32 %v907, %v928
      %v947 = vmul.f32 %v908, %v928
      %v948 = vmul.f32 %v909, %v928
      %v949 = vmul.f32 %v910, %v928
      %v950 = vmul.f32 %v911, %v928
      %v951 = vmul.f32 %v912, %v928
      %v952 = vmul.f32 %v913, %v928
      %v953 = vmul.f32 %v914, %v928
      %v954 = vmul.f32 %v915, %v928
      %v955 = vmul.f32 %v916, %v928
      %v956 = vmul.f32 %v917, %v928
      %v957 = vmul.f32 %v918, %v928
      %v958 = vmul.f32 %v919, %v928
      %v959 = vmul.f32 %v920, %v928
      %v960 = vmul.f32 %v921, %v928
      %v961 = vmul.f32 %v922, %v928
      %v962 = vld [vmem:[%s3] sm:$0x1]
      %v964 = vlaneseq
      %v965 = vshrl.u32 %v964, 7
      %v966 = vsub.s32 0, %v965
      %v967 = vrot.slane %v962, %v966
      %v969 = vadd.f32 %v930, %v967
      %v970 = vadd.f32 %v931, %v967
      %v971 = vadd.f32 %v932, %v967
      %v972 = vadd.f32 %v933, %v967
      %v973 = vadd.f32 %v934, %v967
      %v974 = vadd.f32 %v935, %v967
      %v975 = vadd.f32 %v936, %v967
      %v976 = vadd.f32 %v937, %v967
      %v977 = vadd.f32 %v938, %v967
      %v978 = vadd.f32 %v939, %v967
      %v979 = vadd.f32 %v940, %v967
      %v980 = vadd.f32 %v941, %v967
      %v981 = vadd.f32 %v942, %v967
      %v982 = vadd.f32 %v943, %v967
      %v983 = vadd.f32 %v944, %v967
      %v984 = vadd.f32 %v945, %v967
      %v985 = vadd.f32 %v946, %v967
      %v986 = vadd.f32 %v947, %v967
      %v987 = vadd.f32 %v948, %v967
      %v988 = vadd.f32 %v949, %v967
      %v989 = vadd.f32 %v950, %v967
      %v990 = vadd.f32 %v951, %v967
      %v991 = vadd.f32 %v952, %v967
      %v992 = vadd.f32 %v953, %v967
      %v993 = vadd.f32 %v954, %v967
      %v994 = vadd.f32 %v955, %v967
      %v995 = vadd.f32 %v956, %v967
      %v996 = vadd.f32 %v957, %v967
      %v997 = vadd.f32 %v958, %v967
      %v998 = vadd.f32 %v959, %v967
      %v999 = vadd.f32 %v960, %v967
      %v1000 = vadd.f32 %v961, %v967
      %v1001 = vpack.c.bf16 %v970, %v969
      %v1002 = vpack.c.bf16 %v972, %v971
      %v1003 = vpack.c.bf16 %v974, %v973
      %v1004 = vpack.c.bf16 %v976, %v975
      %v1005 = vpack.c.bf16 %v978, %v977
      %v1006 = vpack.c.bf16 %v980, %v979
      %v1007 = vpack.c.bf16 %v982, %v981
      %v1008 = vpack.c.bf16 %v984, %v983
      %v1009 = vpack.c.bf16 %v986, %v985
      %v1010 = vpack.c.bf16 %v988, %v987
      %v1011 = vpack.c.bf16 %v990, %v989
      %v1012 = vpack.c.bf16 %v992, %v991
      %v1013 = vpack.c.bf16 %v994, %v993
      %v1014 = vpack.c.bf16 %v996, %v995
      %v1015 = vpack.c.bf16 %v998, %v997
      %v1016 = vpack.c.bf16 %v1000, %v999
      %v1017 = vld [vmem:[%s4] sm:$0xff]
      %v1018 = vld [vmem:[%s4 + $0x8] sm:$0xf]
      %v1019 = vld [vmem:[%s4 + $0xc] sm:$0xff]
      %v1020 = vld [vmem:[%s4 + $0x14] sm:$0xf]
      %v1021 = vld [vmem:[%s4 + $0x18] sm:$0xff]
      %v1022 = vld [vmem:[%s4 + $0x20] sm:$0xf]
      %v1023 = vld [vmem:[%s4 + $0x24] sm:$0xff]
      %v1024 = vld [vmem:[%s4 + $0x2c] sm:$0xf]
      %v1025 = vld [vmem:[%s4 + $0x30] sm:$0xff]
      %v1026 = vld [vmem:[%s4 + $0x38] sm:$0xf]
      %v1027 = vld [vmem:[%s4 + $0x3c] sm:$0xff]
      %v1028 = vld [vmem:[%s4 + $0x44] sm:$0xf]
      %v1029 = vld [vmem:[%s4 + $0x48] sm:$0xff]
      %v1030 = vld [vmem:[%s4 + $0x50] sm:$0xf]
      %v1031 = vld [vmem:[%s4 + $0x54] sm:$0xff]
      %v1032 = vld [vmem:[%s4 + $0x5c] sm:$0xf]
      %v1033 = vld [vmem:[%s4 + $0x60] sm:$0xff]
      %v1034 = vld [vmem:[%s4 + $0x68] sm:$0xf]
      %v1035 = vld [vmem:[%s4 + $0x6c] sm:$0xff]
      %v1036 = vld [vmem:[%s4 + $0x74] sm:$0xf]
      %v1037 = vld [vmem:[%s4 + $0x78] sm:$0xff]
      %v1038 = vld [vmem:[%s4 + $0x80] sm:$0xf]
      %v1039 = vld [vmem:[%s4 + $0x84] sm:$0xff]
      %v1040 = vld [vmem:[%s4 + $0x8c] sm:$0xf]
      %v1041 = vld [vmem:[%s4 + $0x90] sm:$0xff]
      %v1042 = vld [vmem:[%s4 + $0x98] sm:$0xf]
      %v1043 = vld [vmem:[%s4 + $0x9c] sm:$0xff]
      %v1044 = vld [vmem:[%s4 + $0xa4] sm:$0xf]
      %v1045 = vld [vmem:[%s4 + $0xa8] sm:$0xff]
      %v1046 = vld [vmem:[%s4 + $0xb0] sm:$0xf]
      %v1047 = vld [vmem:[%s4 + $0xb4] sm:$0xff]
      %v1048 = vld [vmem:[%s4 + $0xbc] sm:$0xf]
      %v1049 = vld [vmem:[%s5] sm:$0x7]
      %v1051 = vlaneseq
      %v1052 = vshrl.u32 %v1051, 7
      %v1053 = vsub.s32 0, %v1052
      %v1054 = vrot.slane %v1049, %v1053
      %v1055 = vlaneseq
      %v1056 = vshrl.u32 %v1055, 7
      %v1057 = vsub.s32 1, %v1056
      %v1058 = vrot.slane %v1049, %v1057
      %v1059 = vlaneseq
      %v1060 = vshrl.u32 %v1059, 7
      %v1061 = vsub.s32 2, %v1060
      %v1062 = vrot.slane %v1049, %v1061
      %v1098 = vunpack.c.l.b16 %v1017
      %v1099 = vunpack.c.h.b16 %v1017
      %v1100 = vunpack.c.l.b16 %v1018
      %v1101 = vunpack.c.l.b16 %v1019
      %v1102 = vunpack.c.h.b16 %v1019
      %v1103 = vunpack.c.l.b16 %v1020
      %v1104 = vunpack.c.l.b16 %v1021
      %v1105 = vunpack.c.h.b16 %v1021
      %v1106 = vunpack.c.l.b16 %v1022
      %v1107 = vunpack.c.l.b16 %v1023
      %v1108 = vunpack.c.h.b16 %v1023
      %v1109 = vunpack.c.l.b16 %v1024
      %v1110 = vunpack.c.l.b16 %v1025
      %v1111 = vunpack.c.h.b16 %v1025
      %v1112 = vunpack.c.l.b16 %v1026
      %v1113 = vunpack.c.l.b16 %v1027
      %v1114 = vunpack.c.h.b16 %v1027
      %v1115 = vunpack.c.l.b16 %v1028
      %v1116 = vunpack.c.l.b16 %v1029
      %v1117 = vunpack.c.h.b16 %v1029
      %v1118 = vunpack.c.l.b16 %v1030
      %v1119 = vunpack.c.l.b16 %v1031
      %v1120 = vunpack.c.h.b16 %v1031
      %v1121 = vunpack.c.l.b16 %v1032
      %v1122 = vunpack.c.l.b16 %v1033
      %v1123 = vunpack.c.h.b16 %v1033
      %v1124 = vunpack.c.l.b16 %v1034
      %v1125 = vunpack.c.l.b16 %v1035
      %v1126 = vunpack.c.h.b16 %v1035
      %v1127 = vunpack.c.l.b16 %v1036
      %v1128 = vunpack.c.l.b16 %v1037
      %v1129 = vunpack.c.h.b16 %v1037
      %v1130 = vunpack.c.l.b16 %v1038
      %v1131 = vunpack.c.l.b16 %v1039
      %v1132 = vunpack.c.h.b16 %v1039
      %v1133 = vunpack.c.l.b16 %v1040
      %v1134 = vunpack.c.l.b16 %v1041
      %v1135 = vunpack.c.h.b16 %v1041
      %v1136 = vunpack.c.l.b16 %v1042
      %v1137 = vunpack.c.l.b16 %v1043
      %v1138 = vunpack.c.h.b16 %v1043
      %v1139 = vunpack.c.l.b16 %v1044
      %v1140 = vunpack.c.l.b16 %v1045
      %v1141 = vunpack.c.h.b16 %v1045
      %v1142 = vunpack.c.l.b16 %v1046
      %v1143 = vunpack.c.l.b16 %v1047
      %v1144 = vunpack.c.h.b16 %v1047
      %v1145 = vunpack.c.l.b16 %v1048
      %v1146 = vpack.c.b16 %v1101, %v1098
      %v1147 = vpack.c.b16 %v1102, %v1099
      %v1148 = vpack.c.b16 %v1103, %v1100
      %v1149 = vpack.c.b16 %v1107, %v1104
      %v1150 = vpack.c.b16 %v1108, %v1105
      %v1151 = vpack.c.b16 %v1109, %v1106
      %v1152 = vpack.c.b16 %v1113, %v1110
      %v1153 = vpack.c.b16 %v1114, %v1111
      %v1154 = vpack.c.b16 %v1115, %v1112
      %v1155 = vpack.c.b16 %v1119, %v1116
      %v1156 = vpack.c.b16 %v1120, %v1117
      %v1157 = vpack.c.b16 %v1121, %v1118
      %v1158 = vpack.c.b16 %v1125, %v1122
      %v1159 = vpack.c.b16 %v1126, %v1123
      %v1160 = vpack.c.b16 %v1127, %v1124
      %v1161 = vpack.c.b16 %v1131, %v1128
      %v1162 = vpack.c.b16 %v1132, %v1129
      %v1163 = vpack.c.b16 %v1133, %v1130
      %v1164 = vpack.c.b16 %v1137, %v1134
      %v1165 = vpack.c.b16 %v1138, %v1135
      %v1166 = vpack.c.b16 %v1139, %v1136
      %v1167 = vpack.c.b16 %v1143, %v1140
      %v1168 = vpack.c.b16 %v1144, %v1141
      %v1169 = vpack.c.b16 %v1145, %v1142
      %1194 = vmatprep.subr.bf16.mxu0 %v1168
      %1195 = vmatpush1.bf16.msra.mxu0 %v1167
      %1196 = vmatprep.subr.bf16.mxu0 %v1165
      %1197 = vmatpush1.bf16.msra.mxu0 %v1164
      %1198 = vmatprep.subr.bf16.mxu0 %v1162
      %1199 = vmatpush1.bf16.msra.mxu0 %v1161
      %1200 = vmatprep.subr.bf16.mxu0 %v1159
      %1201 = vmatpush1.bf16.msra.mxu0 %v1158
      %1202 = vmatprep.subr.bf16.mxu0 %v1156
      %1203 = vmatpush1.bf16.msra.mxu0 %v1155
      %1204 = vmatprep.subr.bf16.mxu0 %v1153
      %1205 = vmatpush1.bf16.msra.mxu0 %v1152
      %1206 = vmatprep.subr.bf16.mxu0 %v1150
      %1207 = vmatpush1.bf16.msra.mxu0 %v1149
      %1208 = vmatprep.subr.bf16.mxu0 %v1147
      %1209 = vmatpush1.bf16.msra.mxu0 %v1146
      %1210 = vmatprep.subr.bf16.mxu0 0
      %1211 = vmatpush2.bf16.msra.mxu0 0
      %1212 = vmatprep.subr.bf16.mxu0 0
      %1213 = vmatpush2.bf16.msra.mxu0 0
      %1214 = vmatprep.subr.bf16.mxu0 0
      %1215 = vmatpush2.bf16.msra.mxu0 0
      %1216 = vmatprep.subr.bf16.mxu0 0
      %1217 = vmatpush2.bf16.msra.mxu0 0
      %1218 = vmatprep.subr.bf16.mxu0 0
      %1219 = vmatpush2.bf16.msra.mxu0 0
      %1220 = vmatprep.subr.bf16.mxu0 0
      %1221 = vmatpush2.bf16.msra.mxu0 0
      %1222 = vmatprep.subr.bf16.mxu0 0
      %1223 = vmatpush2.bf16.msra.mxu0 0
      %1224 = vmatprep.subr.bf16.mxu0 0
      %1225 = vmatpush2.bf16.msra.mxu0 0
      %1226 = vmatprep.mubr.bf16.mxu0 0
      %1227 = vmatmul.mubr.bf16.gmra.mxu0 %v1001
      %v1228 = vpop.f32.mrf.mxu0
      %v1229 = vadd.f32 %v1054, %v1228
      %v1230 = vpop.f32.mrf.mxu0
      %v1231 = vadd.f32 %v1058, %v1230
      %v1232 = vpop.f32.mrf.mxu0
      %v1233 = vadd.f32 %v1054, %v1232
      %v1234 = vpop.f32.mrf.mxu0
      %v1235 = vadd.f32 %v1058, %v1234
      %1236 = vmatprep.mubr.bf16.mxu0 0
      %1237 = vmatmul.mubr.bf16.gmra.mxu0 %v1002
      %v1238 = vpop.f32.mrf.mxu0
      %v1239 = vadd.f32 %v1054, %v1238
      %v1240 = vpop.f32.mrf.mxu0
      %v1241 = vadd.f32 %v1058, %v1240
      %v1242 = vpop.f32.mrf.mxu0
      %v1243 = vadd.f32 %v1054, %v1242
      %v1244 = vpop.f32.mrf.mxu0
      %v1245 = vadd.f32 %v1058, %v1244
      %1246 = vmatprep.mubr.bf16.mxu0 0
      %1247 = vmatmul.mubr.bf16.gmra.mxu0 %v1003
      %v1248 = vpop.f32.mrf.mxu0
      %v1249 = vadd.f32 %v1054, %v1248
      %v1250 = vpop.f32.mrf.mxu0
      %v1251 = vadd.f32 %v1058, %v1250
      %v1252 = vpop.f32.mrf.mxu0
      %v1253 = vadd.f32 %v1054, %v1252
      %v1254 = vpop.f32.mrf.mxu0
      %v1255 = vadd.f32 %v1058, %v1254
      %1256 = vmatprep.mubr.bf16.mxu0 0
      %1257 = vmatmul.mubr.bf16.gmra.mxu0 %v1004
      %v1258 = vpop.f32.mrf.mxu0
      %v1259 = vadd.f32 %v1054, %v1258
      %v1260 = vpop.f32.mrf.mxu0
      %v1261 = vadd.f32 %v1058, %v1260
      %v1262 = vpop.f32.mrf.mxu0
      %v1263 = vadd.f32 %v1054, %v1262
      %v1264 = vpop.f32.mrf.mxu0
      %v1265 = vadd.f32 %v1058, %v1264
      %1266 = vmatprep.mubr.bf16.mxu0 0
      %1267 = vmatmul.mubr.bf16.gmra.mxu0 %v1005
      %v1268 = vpop.f32.mrf.mxu0
      %v1269 = vadd.f32 %v1054, %v1268
      %v1270 = vpop.f32.mrf.mxu0
      %v1271 = vadd.f32 %v1058, %v1270
      %v1272 = vpop.f32.mrf.mxu0
      %v1273 = vadd.f32 %v1054, %v1272
      %v1274 = vpop.f32.mrf.mxu0
      %v1275 = vadd.f32 %v1058, %v1274
      %1276 = vmatprep.mubr.bf16.mxu0 0
      %1277 = vmatmul.mubr.bf16.gmra.mxu0 %v1006
      %v1278 = vpop.f32.mrf.mxu0
      %v1279 = vadd.f32 %v1054, %v1278
      %v1280 = vpop.f32.mrf.mxu0
      %v1281 = vadd.f32 %v1058, %v1280
      %v1282 = vpop.f32.mrf.mxu0
      %v1283 = vadd.f32 %v1054, %v1282
      %v1284 = vpop.f32.mrf.mxu0
      %v1285 = vadd.f32 %v1058, %v1284
      %1286 = vmatprep.mubr.bf16.mxu0 0
      %1287 = vmatmul.mubr.bf16.gmra.mxu0 %v1007
      %v1288 = vpop.f32.mrf.mxu0
      %v1289 = vadd.f32 %v1054, %v1288
      %v1290 = vpop.f32.mrf.mxu0
      %v1291 = vadd.f32 %v1058, %v1290
      %v1292 = vpop.f32.mrf.mxu0
      %v1293 = vadd.f32 %v1054, %v1292
      %v1294 = vpop.f32.mrf.mxu0
      %v1295 = vadd.f32 %v1058, %v1294
      %1296 = vmatprep.mubr.bf16.mxu0 0
      %1297 = vmatmul.mubr.bf16.gmra.mxu0 %v1008
      %v1298 = vpop.f32.mrf.mxu0
      %v1299 = vadd.f32 %v1054, %v1298
      %v1300 = vpop.f32.mrf.mxu0
      %v1301 = vadd.f32 %v1058, %v1300
      %v1302 = vpop.f32.mrf.mxu0
      %v1303 = vadd.f32 %v1054, %v1302
      %v1304 = vpop.f32.mrf.mxu0
      %v1305 = vadd.f32 %v1058, %v1304
      %1306 = vmatprep.mubr.bf16.mxu0 0
      %1307 = vmatmul.mubr.bf16.gmra.mxu0 %v1009
      %v1308 = vpop.f32.mrf.mxu0
      %v1309 = vadd.f32 %v1054, %v1308
      %v1310 = vpop.f32.mrf.mxu0
      %v1311 = vadd.f32 %v1058, %v1310
      %v1312 = vpop.f32.mrf.mxu0
      %v1313 = vadd.f32 %v1054, %v1312
      %v1314 = vpop.f32.mrf.mxu0
      %v1315 = vadd.f32 %v1058, %v1314
      %1316 = vmatprep.mubr.bf16.mxu0 0
      %1317 = vmatmul.mubr.bf16.gmra.mxu0 %v1010
      %v1318 = vpop.f32.mrf.mxu0
      %v1319 = vadd.f32 %v1054, %v1318
      %v1320 = vpop.f32.mrf.mxu0
      %v1321 = vadd.f32 %v1058, %v1320
      %v1322 = vpop.f32.mrf.mxu0
      %v1323 = vadd.f32 %v1054, %v1322
      %v1324 = vpop.f32.mrf.mxu0
      %v1325 = vadd.f32 %v1058, %v1324
      %1326 = vmatprep.mubr.bf16.mxu0 0
      %1327 = vmatmul.mubr.bf16.gmra.mxu0 %v1011
      %v1328 = vpop.f32.mrf.mxu0
      %v1329 = vadd.f32 %v1054, %v1328
      %v1330 = vpop.f32.mrf.mxu0
      %v1331 = vadd.f32 %v1058, %v1330
      %v1332 = vpop.f32.mrf.mxu0
      %v1333 = vadd.f32 %v1054, %v1332
      %v1334 = vpop.f32.mrf.mxu0
      %v1335 = vadd.f32 %v1058, %v1334
      %1336 = vmatprep.mubr.bf16.mxu0 0
      %1337 = vmatmul.mubr.bf16.gmra.mxu0 %v1012
      %v1338 = vpop.f32.mrf.mxu0
      %v1339 = vadd.f32 %v1054, %v1338
      %v1340 = vpop.f32.mrf.mxu0
      %v1341 = vadd.f32 %v1058, %v1340
      %v1342 = vpop.f32.mrf.mxu0
      %v1343 = vadd.f32 %v1054, %v1342
      %v1344 = vpop.f32.mrf.mxu0
      %v1345 = vadd.f32 %v1058, %v1344
      %1346 = vmatprep.mubr.bf16.mxu0 0
      %1347 = vmatmul.mubr.bf16.gmra.mxu0 %v1013
      %v1348 = vpop.f32.mrf.mxu0
      %v1349 = vadd.f32 %v1054, %v1348
      %v1350 = vpop.f32.mrf.mxu0
      %v1351 = vadd.f32 %v1058, %v1350
      %v1352 = vpop.f32.mrf.mxu0
      %v1353 = vadd.f32 %v1054, %v1352
      %v1354 = vpop.f32.mrf.mxu0
      %v1355 = vadd.f32 %v1058, %v1354
      %1356 = vmatprep.mubr.bf16.mxu0 0
      %1357 = vmatmul.mubr.bf16.gmra.mxu0 %v1014
      %v1358 = vpop.f32.mrf.mxu0
      %v1359 = vadd.f32 %v1054, %v1358
      %v1360 = vpop.f32.mrf.mxu0
      %v1361 = vadd.f32 %v1058, %v1360
      %v1362 = vpop.f32.mrf.mxu0
      %v1363 = vadd.f32 %v1054, %v1362
      %v1364 = vpop.f32.mrf.mxu0
      %v1365 = vadd.f32 %v1058, %v1364
      %1366 = vmatprep.mubr.bf16.mxu0 0
      %1367 = vmatmul.mubr.bf16.gmra.mxu0 %v1015
      %v1368 = vpop.f32.mrf.mxu0
      %v1369 = vadd.f32 %v1054, %v1368
      %v1370 = vpop.f32.mrf.mxu0
      %v1371 = vadd.f32 %v1058, %v1370
      %v1372 = vpop.f32.mrf.mxu0
      %v1373 = vadd.f32 %v1054, %v1372
      %v1374 = vpop.f32.mrf.mxu0
      %v1375 = vadd.f32 %v1058, %v1374
      %1376 = vmatprep.mubr.bf16.mxu0 0
      %1377 = vmatmul.mubr.bf16.gmra.mxu0 %v1016
      %v1378 = vpop.f32.mrf.mxu0
      %v1379 = vadd.f32 %v1054, %v1378
      %v1380 = vpop.f32.mrf.mxu0
      %v1381 = vadd.f32 %v1058, %v1380
      %v1382 = vpop.f32.mrf.mxu0
      %v1383 = vadd.f32 %v1054, %v1382
      %v1384 = vpop.f32.mrf.mxu0
      %v1385 = vadd.f32 %v1058, %v1384
      %1386 = vdwg.mxu0
      %1387 = vmatprep.subr.bf16.mxu0 0
      %1388 = vmatpush1.bf16.msra.mxu0 %v1169
      %1389 = vmatprep.subr.bf16.mxu0 0
      %1390 = vmatpush1.bf16.msra.mxu0 %v1166
      %1391 = vmatprep.subr.bf16.mxu0 0
      %1392 = vmatpush1.bf16.msra.mxu0 %v1163
      %1393 = vmatprep.subr.bf16.mxu0 0
      %1394 = vmatpush1.bf16.msra.mxu0 %v1160
      %1395 = vmatprep.subr.bf16.mxu0 0
      %1396 = vmatpush1.bf16.msra.mxu0 %v1157
      %1397 = vmatprep.subr.bf16.mxu0 0
      %1398 = vmatpush1.bf16.msra.mxu0 %v1154
      %1399 = vmatprep.subr.bf16.mxu0 0
      %1400 = vmatpush1.bf16.msra.mxu0 %v1151
      %1401 = vmatprep.subr.bf16.mxu0 0
      %1402 = vmatpush1.bf16.msra.mxu0 %v1148
      %1403 = vmatprep.subr.bf16.mxu0 0
      %1404 = vmatpush2.bf16.msra.mxu0 0
      %1405 = vmatprep.subr.bf16.mxu0 0
      %1406 = vmatpush2.bf16.msra.mxu0 0
      %1407 = vmatprep.subr.bf16.mxu0 0
      %1408 = vmatpush2.bf16.msra.mxu0 0
      %1409 = vmatprep.subr.bf16.mxu0 0
      %1410 = vmatpush2.bf16.msra.mxu0 0
      %1411 = vmatprep.subr.bf16.mxu0 0
      %1412 = vmatpush2.bf16.msra.mxu0 0
      %1413 = vmatprep.subr.bf16.mxu0 0
      %1414 = vmatpush2.bf16.msra.mxu0 0
      %1415 = vmatprep.subr.bf16.mxu0 0
      %1416 = vmatpush2.bf16.msra.mxu0 0
      %1417 = vmatprep.subr.bf16.mxu0 0
      %1418 = vmatpush2.bf16.msra.mxu0 0
      %1419 = vmatprep.mubr.bf16.mxu0 0
      %1420 = vmatmul.mubr.bf16.gmra.mxu0 %v1001
      %v1421 = vpop.f32.mrf.mxu0
      %v1422 = vadd.f32 %v1062, %v1421
      %v1423 = vpop.f32.mrf.mxu0
      %v1424 = vpop.f32.mrf.mxu0
      %v1425 = vadd.f32 %v1062, %v1424
      %v1426 = vpop.f32.mrf.mxu0
      %1427 = vmatprep.mubr.bf16.mxu0 0
      %1428 = vmatmul.mubr.bf16.gmra.mxu0 %v1002
      %v1429 = vpop.f32.mrf.mxu0
      %v1430 = vadd.f32 %v1062, %v1429
      %v1431 = vpop.f32.mrf.mxu0
      %v1432 = vpop.f32.mrf.mxu0
      %v1433 = vadd.f32 %v1062, %v1432
      %v1434 = vpop.f32.mrf.mxu0
      %1435 = vmatprep.mubr.bf16.mxu0 0
      %1436 = vmatmul.mubr.bf16.gmra.mxu0 %v1003
      %v1437 = vpop.f32.mrf.mxu0
      %v1438 = vadd.f32 %v1062, %v1437
      %v1439 = vpop.f32.mrf.mxu0
      %v1440 = vpop.f32.mrf.mxu0
      %v1441 = vadd.f32 %v1062, %v1440
      %v1442 = vpop.f32.mrf.mxu0
      %1443 = vmatprep.mubr.bf16.mxu0 0
      %1444 = vmatmul.mubr.bf16.gmra.mxu0 %v1004
      %v1445 = vpop.f32.mrf.mxu0
      %v1446 = vadd.f32 %v1062, %v1445
      %v1447 = vpop.f32.mrf.mxu0
      %v1448 = vpop.f32.mrf.mxu0
      %v1449 = vadd.f32 %v1062, %v1448
      %v1450 = vpop.f32.mrf.mxu0
      %1451 = vmatprep.mubr.bf16.mxu0 0
      %1452 = vmatmul.mubr.bf16.gmra.mxu0 %v1005
      %v1453 = vpop.f32.mrf.mxu0
      %v1454 = vadd.f32 %v1062, %v1453
      %v1455 = vpop.f32.mrf.mxu0
      %v1456 = vpop.f32.mrf.mxu0
      %v1457 = vadd.f32 %v1062, %v1456
      %v1458 = vpop.f32.mrf.mxu0
      %1459 = vmatprep.mubr.bf16.mxu0 0
      %1460 = vmatmul.mubr.bf16.gmra.mxu0 %v1006
      %v1461 = vpop.f32.mrf.mxu0
      %v1462 = vadd.f32 %v1062, %v1461
      %v1463 = vpop.f32.mrf.mxu0
      %v1464 = vpop.f32.mrf.mxu0
      %v1465 = vadd.f32 %v1062, %v1464
      %v1466 = vpop.f32.mrf.mxu0
      %1467 = vmatprep.mubr.bf16.mxu0 0
      %1468 = vmatmul.mubr.bf16.gmra.mxu0 %v1007
      %v1469 = vpop.f32.mrf.mxu0
      %v1470 = vadd.f32 %v1062, %v1469
      %v1471 = vpop.f32.mrf.mxu0
      %v1472 = vpop.f32.mrf.mxu0
      %v1473 = vadd.f32 %v1062, %v1472
      %v1474 = vpop.f32.mrf.mxu0
      %1475 = vmatprep.mubr.bf16.mxu0 0
      %1476 = vmatmul.mubr.bf16.gmra.mxu0 %v1008
      %v1477 = vpop.f32.mrf.mxu0
      %v1478 = vadd.f32 %v1062, %v1477
      %v1479 = vpop.f32.mrf.mxu0
      %v1480 = vpop.f32.mrf.mxu0
      %v1481 = vadd.f32 %v1062, %v1480
      %v1482 = vpop.f32.mrf.mxu0
      %1483 = vmatprep.mubr.bf16.mxu0 0
      %1484 = vmatmul.mubr.bf16.gmra.mxu0 %v1009
      %v1485 = vpop.f32.mrf.mxu0
      %v1486 = vadd.f32 %v1062, %v1485
      %v1487 = vpop.f32.mrf.mxu0
      %v1488 = vpop.f32.mrf.mxu0
      %v1489 = vadd.f32 %v1062, %v1488
      %v1490 = vpop.f32.mrf.mxu0
      %1491 = vmatprep.mubr.bf16.mxu0 0
      %1492 = vmatmul.mubr.bf16.gmra.mxu0 %v1010
      %v1493 = vpop.f32.mrf.mxu0
      %v1494 = vadd.f32 %v1062, %v1493
      %v1495 = vpop.f32.mrf.mxu0
      %v1496 = vpop.f32.mrf.mxu0
      %v1497 = vadd.f32 %v1062, %v1496
      %v1498 = vpop.f32.mrf.mxu0
      %1499 = vmatprep.mubr.bf16.mxu0 0
      %1500 = vmatmul.mubr.bf16.gmra.mxu0 %v1011
      %v1501 = vpop.f32.mrf.mxu0
      %v1502 = vadd.f32 %v1062, %v1501
      %v1503 = vpop.f32.mrf.mxu0
      %v1504 = vpop.f32.mrf.mxu0
      %v1505 = vadd.f32 %v1062, %v1504
      %v1506 = vpop.f32.mrf.mxu0
      %1507 = vmatprep.mubr.bf16.mxu0 0
      %1508 = vmatmul.mubr.bf16.gmra.mxu0 %v1012
      %v1509 = vpop.f32.mrf.mxu0
      %v1510 = vadd.f32 %v1062, %v1509
      %v1511 = vpop.f32.mrf.mxu0
      %v1512 = vpop.f32.mrf.mxu0
      %v1513 = vadd.f32 %v1062, %v1512
      %v1514 = vpop.f32.mrf.mxu0
      %1515 = vmatprep.mubr.bf16.mxu0 0
      %1516 = vmatmul.mubr.bf16.gmra.mxu0 %v1013
      %v1517 = vpop.f32.mrf.mxu0
      %v1518 = vadd.f32 %v1062, %v1517
      %v1519 = vpop.f32.mrf.mxu0
      %v1520 = vpop.f32.mrf.mxu0
      %v1521 = vadd.f32 %v1062, %v1520
      %v1522 = vpop.f32.mrf.mxu0
      %1523 = vmatprep.mubr.bf16.mxu0 0
      %1524 = vmatmul.mubr.bf16.gmra.mxu0 %v1014
      %v1525 = vpop.f32.mrf.mxu0
      %v1526 = vadd.f32 %v1062, %v1525
      %v1527 = vpop.f32.mrf.mxu0
      %v1528 = vpop.f32.mrf.mxu0
      %v1529 = vadd.f32 %v1062, %v1528
      %v1530 = vpop.f32.mrf.mxu0
      %1531 = vmatprep.mubr.bf16.mxu0 0
      %1532 = vmatmul.mubr.bf16.gmra.mxu0 %v1015
      %v1533 = vpop.f32.mrf.mxu0
      %v1534 = vadd.f32 %v1062, %v1533
      %v1535 = vpop.f32.mrf.mxu0
      %v1536 = vpop.f32.mrf.mxu0
      %v1537 = vadd.f32 %v1062, %v1536
      %v1538 = vpop.f32.mrf.mxu0
      %1539 = vmatprep.mubr.bf16.mxu0 0
      %1540 = vmatmul.mubr.bf16.gmra.mxu0 %v1016
      %v1541 = vpop.f32.mrf.mxu0
      %v1542 = vadd.f32 %v1062, %v1541
      %v1543 = vpop.f32.mrf.mxu0
      %v1544 = vpop.f32.mrf.mxu0
      %v1545 = vadd.f32 %v1062, %v1544
      %v1546 = vpop.f32.mrf.mxu0
      %1547 = vdwg.mxu0
      %v1548 = vmul.f32 %v1229, 0.17677669
      %v1549 = vmul.f32 %v1233, 0.17677669
      %v1550 = vmul.f32 %v1239, 0.17677669
      %v1551 = vmul.f32 %v1243, 0.17677669
      %v1552 = vmul.f32 %v1249, 0.17677669
      %v1553 = vmul.f32 %v1253, 0.17677669
      %v1554 = vmul.f32 %v1259, 0.17677669
      %v1555 = vmul.f32 %v1263, 0.17677669
      %v1556 = vmul.f32 %v1269, 0.17677669
      %v1557 = vmul.f32 %v1273, 0.17677669
      %v1558 = vmul.f32 %v1279, 0.17677669
      %v1559 = vmul.f32 %v1283, 0.17677669
      %v1560 = vmul.f32 %v1289, 0.17677669
      %v1561 = vmul.f32 %v1293, 0.17677669
      %v1562 = vmul.f32 %v1299, 0.17677669
      %v1563 = vmul.f32 %v1303, 0.17677669
      %v1564 = vmul.f32 %v1309, 0.17677669
      %v1565 = vmul.f32 %v1313, 0.17677669
      %v1566 = vmul.f32 %v1319, 0.17677669
      %v1567 = vmul.f32 %v1323, 0.17677669
      %v1568 = vmul.f32 %v1329, 0.17677669
      %v1569 = vmul.f32 %v1333, 0.17677669
      %v1570 = vmul.f32 %v1339, 0.17677669
      %v1571 = vmul.f32 %v1343, 0.17677669
      %v1572 = vmul.f32 %v1349, 0.17677669
      %v1573 = vmul.f32 %v1353, 0.17677669
      %v1574 = vmul.f32 %v1359, 0.17677669
      %v1575 = vmul.f32 %v1363, 0.17677669
      %v1576 = vmul.f32 %v1369, 0.17677669
      %v1577 = vmul.f32 %v1373, 0.17677669
      %v1578 = vmul.f32 %v1379, 0.17677669
      %v1579 = vmul.f32 %v1383, 0.17677669
      %1612 = vrot.lane.b32.xlu0 %v1548, 96
      %v1613 = vpop.permute.xlu0 %1612
      %1614 = vrot.lane.b32.xlu0 %v1549, 96
      %v1615 = vpop.permute.xlu0 %1614
      %1616 = vrot.lane.b32.xlu0 %v1550, 96
      %v1617 = vpop.permute.xlu0 %1616
      %1618 = vrot.lane.b32.xlu0 %v1551, 96
      %v1619 = vpop.permute.xlu0 %1618
      %1620 = vrot.lane.b32.xlu0 %v1552, 96
      %v1621 = vpop.permute.xlu0 %1620
      %1622 = vrot.lane.b32.xlu0 %v1553, 96
      %v1623 = vpop.permute.xlu0 %1622
      %1624 = vrot.lane.b32.xlu0 %v1554, 96
      %v1625 = vpop.permute.xlu0 %1624
      %1626 = vrot.lane.b32.xlu0 %v1555, 96
      %v1627 = vpop.permute.xlu0 %1626
      %1628 = vrot.lane.b32.xlu0 %v1556, 96
      %v1629 = vpop.permute.xlu0 %1628
      %1630 = vrot.lane.b32.xlu0 %v1557, 96
      %v1631 = vpop.permute.xlu0 %1630
      %1632 = vrot.lane.b32.xlu0 %v1558, 96
      %v1633 = vpop.permute.xlu0 %1632
      %1634 = vrot.lane.b32.xlu0 %v1559, 96
      %v1635 = vpop.permute.xlu0 %1634
      %1636 = vrot.lane.b32.xlu0 %v1560, 96
      %v1637 = vpop.permute.xlu0 %1636
      %1638 = vrot.lane.b32.xlu0 %v1561, 96
      %v1639 = vpop.permute.xlu0 %1638
      %1640 = vrot.lane.b32.xlu0 %v1562, 96
      %v1641 = vpop.permute.xlu0 %1640
      %1642 = vrot.lane.b32.xlu0 %v1563, 96
      %v1643 = vpop.permute.xlu0 %1642
      %1644 = vrot.lane.b32.xlu0 %v1564, 96
      %v1645 = vpop.permute.xlu0 %1644
      %1646 = vrot.lane.b32.xlu0 %v1565, 96
      %v1647 = vpop.permute.xlu0 %1646
      %1648 = vrot.lane.b32.xlu0 %v1566, 96
      %v1649 = vpop.permute.xlu0 %1648
      %1650 = vrot.lane.b32.xlu0 %v1567, 96
      %v1651 = vpop.permute.xlu0 %1650
      %1652 = vrot.lane.b32.xlu0 %v1568, 96
      %v1653 = vpop.permute.xlu0 %1652
      %1654 = vrot.lane.b32.xlu0 %v1569, 96
      %v1655 = vpop.permute.xlu0 %1654
      %1656 = vrot.lane.b32.xlu0 %v1570, 96
      %v1657 = vpop.permute.xlu0 %1656
      %1658 = vrot.lane.b32.xlu0 %v1571, 96
      %v1659 = vpop.permute.xlu0 %1658
      %1660 = vrot.lane.b32.xlu0 %v1572, 96
      %v1661 = vpop.permute.xlu0 %1660
      %1662 = vrot.lane.b32.xlu0 %v1573, 96
      %v1663 = vpop.permute.xlu0 %1662
      %1664 = vrot.lane.b32.xlu0 %v1574, 96
      %v1665 = vpop.permute.xlu0 %1664
      %1666 = vrot.lane.b32.xlu0 %v1575, 96
      %v1667 = vpop.permute.xlu0 %1666
      %1668 = vrot.lane.b32.xlu0 %v1576, 96
      %v1669 = vpop.permute.xlu0 %1668
      %1670 = vrot.lane.b32.xlu0 %v1577, 96
      %v1671 = vpop.permute.xlu0 %1670
      %1672 = vrot.lane.b32.xlu0 %v1578, 96
      %v1673 = vpop.permute.xlu0 %1672
      %1674 = vrot.lane.b32.xlu0 %v1579, 96
      %v1675 = vpop.permute.xlu0 %1674
      %1708 = vrot.lane.b32.xlu0 %v1548, 64
      %v1709 = vpop.permute.xlu0 %1708
      %1710 = vrot.lane.b32.xlu0 %v1549, 64
      %v1711 = vpop.permute.xlu0 %1710
      %1712 = vrot.lane.b32.xlu0 %v1550, 64
      %v1713 = vpop.permute.xlu0 %1712
      %1714 = vrot.lane.b32.xlu0 %v1551, 64
      %v1715 = vpop.permute.xlu0 %1714
      %1716 = vrot.lane.b32.xlu0 %v1552, 64
      %v1717 = vpop.permute.xlu0 %1716
      %1718 = vrot.lane.b32.xlu0 %v1553, 64
      %v1719 = vpop.permute.xlu0 %1718
      %1720 = vrot.lane.b32.xlu0 %v1554, 64
      %v1721 = vpop.permute.xlu0 %1720
      %1722 = vrot.lane.b32.xlu0 %v1555, 64
      %v1723 = vpop.permute.xlu0 %1722
      %1724 = vrot.lane.b32.xlu0 %v1556, 64
      %v1725 = vpop.permute.xlu0 %1724
      %1726 = vrot.lane.b32.xlu0 %v1557, 64
      %v1727 = vpop.permute.xlu0 %1726
      %1728 = vrot.lane.b32.xlu0 %v1558, 64
      %v1729 = vpop.permute.xlu0 %1728
      %1730 = vrot.lane.b32.xlu0 %v1559, 64
      %v1731 = vpop.permute.xlu0 %1730
      %1732 = vrot.lane.b32.xlu0 %v1560, 64
      %v1733 = vpop.permute.xlu0 %1732
      %1734 = vrot.lane.b32.xlu0 %v1561, 64
      %v1735 = vpop.permute.xlu0 %1734
      %1736 = vrot.lane.b32.xlu0 %v1562, 64
      %v1737 = vpop.permute.xlu0 %1736
      %1738 = vrot.lane.b32.xlu0 %v1563, 64
      %v1739 = vpop.permute.xlu0 %1738
      %1740 = vrot.lane.b32.xlu0 %v1564, 64
      %v1741 = vpop.permute.xlu0 %1740
      %1742 = vrot.lane.b32.xlu0 %v1565, 64
      %v1743 = vpop.permute.xlu0 %1742
      %1744 = vrot.lane.b32.xlu0 %v1566, 64
      %v1745 = vpop.permute.xlu0 %1744
      %1746 = vrot.lane.b32.xlu0 %v1567, 64
      %v1747 = vpop.permute.xlu0 %1746
      %1748 = vrot.lane.b32.xlu0 %v1568, 64
      %v1749 = vpop.permute.xlu0 %1748
      %1750 = vrot.lane.b32.xlu0 %v1569, 64
      %v1751 = vpop.permute.xlu0 %1750
      %1752 = vrot.lane.b32.xlu0 %v1570, 64
      %v1753 = vpop.permute.xlu0 %1752
      %1754 = vrot.lane.b32.xlu0 %v1571, 64
      %v1755 = vpop.permute.xlu0 %1754
      %1756 = vrot.lane.b32.xlu0 %v1572, 64
      %v1757 = vpop.permute.xlu0 %1756
      %1758 = vrot.lane.b32.xlu0 %v1573, 64
      %v1759 = vpop.permute.xlu0 %1758
      %1760 = vrot.lane.b32.xlu0 %v1574, 64
      %v1761 = vpop.permute.xlu0 %1760
      %1762 = vrot.lane.b32.xlu0 %v1575, 64
      %v1763 = vpop.permute.xlu0 %1762
      %1764 = vrot.lane.b32.xlu0 %v1576, 64
      %v1765 = vpop.permute.xlu0 %1764
      %1766 = vrot.lane.b32.xlu0 %v1577, 64
      %v1767 = vpop.permute.xlu0 %1766
      %1768 = vrot.lane.b32.xlu0 %v1578, 64
      %v1769 = vpop.permute.xlu0 %1768
      %1770 = vrot.lane.b32.xlu0 %v1579, 64
      %v1771 = vpop.permute.xlu0 %1770
      %1804 = vrot.lane.b32.xlu0 %v1548, 32
      %v1805 = vpop.permute.xlu0 %1804
      %1806 = vrot.lane.b32.xlu0 %v1549, 32
      %v1807 = vpop.permute.xlu0 %1806
      %1808 = vrot.lane.b32.xlu0 %v1550, 32
      %v1809 = vpop.permute.xlu0 %1808
      %1810 = vrot.lane.b32.xlu0 %v1551, 32
      %v1811 = vpop.permute.xlu0 %1810
      %1812 = vrot.lane.b32.xlu0 %v1552, 32
      %v1813 = vpop.permute.xlu0 %1812
      %1814 = vrot.lane.b32.xlu0 %v1553, 32
      %v1815 = vpop.permute.xlu0 %1814
      %1816 = vrot.lane.b32.xlu0 %v1554, 32
      %v1817 = vpop.permute.xlu0 %1816
      %1818 = vrot.lane.b32.xlu0 %v1555, 32
      %v1819 = vpop.permute.xlu0 %1818
      %1820 = vrot.lane.b32.xlu0 %v1556, 32
      %v1821 = vpop.permute.xlu0 %1820
      %1822 = vrot.lane.b32.xlu0 %v1557, 32
      %v1823 = vpop.permute.xlu0 %1822
      %1824 = vrot.lane.b32.xlu0 %v1558, 32
      %v1825 = vpop.permute.xlu0 %1824
      %1826 = vrot.lane.b32.xlu0 %v1559, 32
      %v1827 = vpop.permute.xlu0 %1826
      %1828 = vrot.lane.b32.xlu0 %v1560, 32
      %v1829 = vpop.permute.xlu0 %1828
      %1830 = vrot.lane.b32.xlu0 %v1561, 32
      %v1831 = vpop.permute.xlu0 %1830
      %1832 = vrot.lane.b32.xlu0 %v1562, 32
      %v1833 = vpop.permute.xlu0 %1832
      %1834 = vrot.lane.b32.xlu0 %v1563, 32
      %v1835 = vpop.permute.xlu0 %1834
      %1836 = vrot.lane.b32.xlu0 %v1564, 32
      %v1837 = vpop.permute.xlu0 %1836
      %1838 = vrot.lane.b32.xlu0 %v1565, 32
      %v1839 = vpop.permute.xlu0 %1838
      %1840 = vrot.lane.b32.xlu0 %v1566, 32
      %v1841 = vpop.permute.xlu0 %1840
      %1842 = vrot.lane.b32.xlu0 %v1567, 32
      %v1843 = vpop.permute.xlu0 %1842
      %1844 = vrot.lane.b32.xlu0 %v1568, 32
      %v1845 = vpop.permute.xlu0 %1844
      %1846 = vrot.lane.b32.xlu0 %v1569, 32
      %v1847 = vpop.permute.xlu0 %1846
      %1848 = vrot.lane.b32.xlu0 %v1570, 32
      %v1849 = vpop.permute.xlu0 %1848
      %1850 = vrot.lane.b32.xlu0 %v1571, 32
      %v1851 = vpop.permute.xlu0 %1850
      %1852 = vrot.lane.b32.xlu0 %v1572, 32
      %v1853 = vpop.permute.xlu0 %1852
      %1854 = vrot.lane.b32.xlu0 %v1573, 32
      %v1855 = vpop.permute.xlu0 %1854
      %1856 = vrot.lane.b32.xlu0 %v1574, 32
      %v1857 = vpop.permute.xlu0 %1856
      %1858 = vrot.lane.b32.xlu0 %v1575, 32
      %v1859 = vpop.permute.xlu0 %1858
      %1860 = vrot.lane.b32.xlu0 %v1576, 32
      %v1861 = vpop.permute.xlu0 %1860
      %1862 = vrot.lane.b32.xlu0 %v1577, 32
      %v1863 = vpop.permute.xlu0 %1862
      %1864 = vrot.lane.b32.xlu0 %v1578, 32
      %v1865 = vpop.permute.xlu0 %1864
      %1866 = vrot.lane.b32.xlu0 %v1579, 32
      %v1867 = vpop.permute.xlu0 %1866
      %v1900 = vpack.c.bf16 %v1549, %v1548
      %v1901 = vpack.c.bf16 %v1551, %v1550
      %v1902 = vpack.c.bf16 %v1553, %v1552
      %v1903 = vpack.c.bf16 %v1555, %v1554
      %v1904 = vpack.c.bf16 %v1615, %v1613
      %v1905 = vpack.c.bf16 %v1619, %v1617
      %v1906 = vpack.c.bf16 %v1623, %v1621
      %v1907 = vpack.c.bf16 %v1627, %v1625
      %v1908 = vpack.c.bf16 %v1711, %v1709
      %v1909 = vpack.c.bf16 %v1715, %v1713
      %v1910 = vpack.c.bf16 %v1719, %v1717
      %v1911 = vpack.c.bf16 %v1723, %v1721
      %v1912 = vpack.c.bf16 %v1807, %v1805
      %v1913 = vpack.c.bf16 %v1811, %v1809
      %v1914 = vpack.c.bf16 %v1815, %v1813
      %v1915 = vpack.c.bf16 %v1819, %v1817
      %v1916 = vpack.c.bf16 %v1557, %v1556
      %v1917 = vpack.c.bf16 %v1559, %v1558
      %v1918 = vpack.c.bf16 %v1561, %v1560
      %v1919 = vpack.c.bf16 %v1563, %v1562
      %v1920 = vpack.c.bf16 %v1631, %v1629
      %v1921 = vpack.c.bf16 %v1635, %v1633
      %v1922 = vpack.c.bf16 %v1639, %v1637
      %v1923 = vpack.c.bf16 %v1643, %v1641
      %v1924 = vpack.c.bf16 %v1727, %v1725
      %v1925 = vpack.c.bf16 %v1731, %v1729
      %v1926 = vpack.c.bf16 %v1735, %v1733
      %v1927 = vpack.c.bf16 %v1739, %v1737
      %v1928 = vpack.c.bf16 %v1823, %v1821
      %v1929 = vpack.c.bf16 %v1827, %v1825
      %v1930 = vpack.c.bf16 %v1831, %v1829
      %v1931 = vpack.c.bf16 %v1835, %v1833
      %v1932 = vpack.c.bf16 %v1565, %v1564
      %v1933 = vpack.c.bf16 %v1567, %v1566
      %v1934 = vpack.c.bf16 %v1569, %v1568
      %v1935 = vpack.c.bf16 %v1571, %v1570
      %v1936 = vpack.c.bf16 %v1647, %v1645
      %v1937 = vpack.c.bf16 %v1651, %v1649
      %v1938 = vpack.c.bf16 %v1655, %v1653
      %v1939 = vpack.c.bf16 %v1659, %v1657
      %v1940 = vpack.c.bf16 %v1743, %v1741
      %v1941 = vpack.c.bf16 %v1747, %v1745
      %v1942 = vpack.c.bf16 %v1751, %v1749
      %v1943 = vpack.c.bf16 %v1755, %v1753
      %v1944 = vpack.c.bf16 %v1839, %v1837
      %v1945 = vpack.c.bf16 %v1843, %v1841
      %v1946 = vpack.c.bf16 %v1847, %v1845
      %v1947 = vpack.c.bf16 %v1851, %v1849
      %v1948 = vpack.c.bf16 %v1573, %v1572
      %v1949 = vpack.c.bf16 %v1575, %v1574
      %v1950 = vpack.c.bf16 %v1577, %v1576
      %v1951 = vpack.c.bf16 %v1579, %v1578
      %v1952 = vpack.c.bf16 %v1663, %v1661
      %v1953 = vpack.c.bf16 %v1667, %v1665
      %v1954 = vpack.c.bf16 %v1671, %v1669
      %v1955 = vpack.c.bf16 %v1675, %v1673
      %v1956 = vpack.c.bf16 %v1759, %v1757
      %v1957 = vpack.c.bf16 %v1763, %v1761
      %v1958 = vpack.c.bf16 %v1767, %v1765
      %v1959 = vpack.c.bf16 %v1771, %v1769
      %v1960 = vpack.c.bf16 %v1855, %v1853
      %v1961 = vpack.c.bf16 %v1859, %v1857
      %v1962 = vpack.c.bf16 %v1863, %v1861
      %v1963 = vpack.c.bf16 %v1867, %v1865
      %1996 = vrot.lane.b32.xlu0 %v1231, 96
      %v1997 = vpop.permute.xlu0 %1996
      %1998 = vrot.lane.b32.xlu0 %v1235, 96
      %v1999 = vpop.permute.xlu0 %1998
      %2000 = vrot.lane.b32.xlu0 %v1241, 96
      %v2001 = vpop.permute.xlu0 %2000
      %2002 = vrot.lane.b32.xlu0 %v1245, 96
      %v2003 = vpop.permute.xlu0 %2002
      %2004 = vrot.lane.b32.xlu0 %v1251, 96
      %v2005 = vpop.permute.xlu0 %2004
      %2006 = vrot.lane.b32.xlu0 %v1255, 96
      %v2007 = vpop.permute.xlu0 %2006
      %2008 = vrot.lane.b32.xlu0 %v1261, 96
      %v2009 = vpop.permute.xlu0 %2008
      %2010 = vrot.lane.b32.xlu0 %v1265, 96
      %v2011 = vpop.permute.xlu0 %2010
      %2012 = vrot.lane.b32.xlu0 %v1271, 96
      %v2013 = vpop.permute.xlu0 %2012
      %2014 = vrot.lane.b32.xlu0 %v1275, 96
      %v2015 = vpop.permute.xlu0 %2014
      %2016 = vrot.lane.b32.xlu0 %v1281, 96
      %v2017 = vpop.permute.xlu0 %2016
      %2018 = vrot.lane.b32.xlu0 %v1285, 96
      %v2019 = vpop.permute.xlu0 %2018
      %2020 = vrot.lane.b32.xlu0 %v1291, 96
      %v2021 = vpop.permute.xlu0 %2020
      %2022 = vrot.lane.b32.xlu0 %v1295, 96
      %v2023 = vpop.permute.xlu0 %2022
      %2024 = vrot.lane.b32.xlu0 %v1301, 96
      %v2025 = vpop.permute.xlu0 %2024
      %2026 = vrot.lane.b32.xlu0 %v1305, 96
      %v2027 = vpop.permute.xlu0 %2026
      %2028 = vrot.lane.b32.xlu0 %v1311, 96
      %v2029 = vpop.permute.xlu0 %2028
      %2030 = vrot.lane.b32.xlu0 %v1315, 96
      %v2031 = vpop.permute.xlu0 %2030
      %2032 = vrot.lane.b32.xlu0 %v1321, 96
      %v2033 = vpop.permute.xlu0 %2032
      %2034 = vrot.lane.b32.xlu0 %v1325, 96
      %v2035 = vpop.permute.xlu0 %2034
      %2036 = vrot.lane.b32.xlu0 %v1331, 96
      %v2037 = vpop.permute.xlu0 %2036
      %2038 = vrot.lane.b32.xlu0 %v1335, 96
      %v2039 = vpop.permute.xlu0 %2038
      %2040 = vrot.lane.b32.xlu0 %v1341, 96
      %v2041 = vpop.permute.xlu0 %2040
      %2042 = vrot.lane.b32.xlu0 %v1345, 96
      %v2043 = vpop.permute.xlu0 %2042
      %2044 = vrot.lane.b32.xlu0 %v1351, 96
      %v2045 = vpop.permute.xlu0 %2044
      %2046 = vrot.lane.b32.xlu0 %v1355, 96
      %v2047 = vpop.permute.xlu0 %2046
      %2048 = vrot.lane.b32.xlu0 %v1361, 96
      %v2049 = vpop.permute.xlu0 %2048
      %2050 = vrot.lane.b32.xlu0 %v1365, 96
      %v2051 = vpop.permute.xlu0 %2050
      %2052 = vrot.lane.b32.xlu0 %v1371, 96
      %v2053 = vpop.permute.xlu0 %2052
      %2054 = vrot.lane.b32.xlu0 %v1375, 96
      %v2055 = vpop.permute.xlu0 %2054
      %2056 = vrot.lane.b32.xlu0 %v1381, 96
      %v2057 = vpop.permute.xlu0 %2056
      %2058 = vrot.lane.b32.xlu0 %v1385, 96
      %v2059 = vpop.permute.xlu0 %2058
      %2092 = vrot.lane.b32.xlu0 %v1231, 64
      %v2093 = vpop.permute.xlu0 %2092
      %2094 = vrot.lane.b32.xlu0 %v1235, 64
      %v2095 = vpop.permute.xlu0 %2094
      %2096 = vrot.lane.b32.xlu0 %v1241, 64
      %v2097 = vpop.permute.xlu0 %2096
      %2098 = vrot.lane.b32.xlu0 %v1245, 64
      %v2099 = vpop.permute.xlu0 %2098
      %2100 = vrot.lane.b32.xlu0 %v1251, 64
      %v2101 = vpop.permute.xlu0 %2100
      %2102 = vrot.lane.b32.xlu0 %v1255, 64
      %v2103 = vpop.permute.xlu0 %2102
      %2104 = vrot.lane.b32.xlu0 %v1261, 64
      %v2105 = vpop.permute.xlu0 %2104
      %2106 = vrot.lane.b32.xlu0 %v1265, 64
      %v2107 = vpop.permute.xlu0 %2106
      %2108 = vrot.lane.b32.xlu0 %v1271, 64
      %v2109 = vpop.permute.xlu0 %2108
      %2110 = vrot.lane.b32.xlu0 %v1275, 64
      %v2111 = vpop.permute.xlu0 %2110
      %2112 = vrot.lane.b32.xlu0 %v1281, 64
      %v2113 = vpop.permute.xlu0 %2112
      %2114 = vrot.lane.b32.xlu0 %v1285, 64
      %v2115 = vpop.permute.xlu0 %2114
      %2116 = vrot.lane.b32.xlu0 %v1291, 64
      %v2117 = vpop.permute.xlu0 %2116
      %2118 = vrot.lane.b32.xlu0 %v1295, 64
      %v2119 = vpop.permute.xlu0 %2118
      %2120 = vrot.lane.b32.xlu0 %v1301, 64
      %v2121 = vpop.permute.xlu0 %2120
      %2122 = vrot.lane.b32.xlu0 %v1305, 64
      %v2123 = vpop.permute.xlu0 %2122
      %2124 = vrot.lane.b32.xlu0 %v1311, 64
      %v2125 = vpop.permute.xlu0 %2124
      %2126 = vrot.lane.b32.xlu0 %v1315, 64
      %v2127 = vpop.permute.xlu0 %2126
      %2128 = vrot.lane.b32.xlu0 %v1321, 64
      %v2129 = vpop.permute.xlu0 %2128
      %2130 = vrot.lane.b32.xlu0 %v1325, 64
      %v2131 = vpop.permute.xlu0 %2130
      %2132 = vrot.lane.b32.xlu0 %v1331, 64
      %v2133 = vpop.permute.xlu0 %2132
      %2134 = vrot.lane.b32.xlu0 %v1335, 64
      %v2135 = vpop.permute.xlu0 %2134
      %2136 = vrot.lane.b32.xlu0 %v1341, 64
      %v2137 = vpop.permute.xlu0 %2136
      %2138 = vrot.lane.b32.xlu0 %v1345, 64
      %v2139 = vpop.permute.xlu0 %2138
      %2140 = vrot.lane.b32.xlu0 %v1351, 64
      %v2141 = vpop.permute.xlu0 %2140
      %2142 = vrot.lane.b32.xlu0 %v1355, 64
      %v2143 = vpop.permute.xlu0 %2142
      %2144 = vrot.lane.b32.xlu0 %v1361, 64
      %v2145 = vpop.permute.xlu0 %2144
      %2146 = vrot.lane.b32.xlu0 %v1365, 64
      %v2147 = vpop.permute.xlu0 %2146
      %2148 = vrot.lane.b32.xlu0 %v1371, 64
      %v2149 = vpop.permute.xlu0 %2148
      %2150 = vrot.lane.b32.xlu0 %v1375, 64
      %v2151 = vpop.permute.xlu0 %2150
      %2152 = vrot.lane.b32.xlu0 %v1381, 64
      %v2153 = vpop.permute.xlu0 %2152
      %2154 = vrot.lane.b32.xlu0 %v1385, 64
      %v2155 = vpop.permute.xlu0 %2154
      %2188 = vrot.lane.b32.xlu0 %v1231, 32
      %v2189 = vpop.permute.xlu0 %2188
      %2190 = vrot.lane.b32.xlu0 %v1235, 32
      %v2191 = vpop.permute.xlu0 %2190
      %2192 = vrot.lane.b32.xlu0 %v1241, 32
      %v2193 = vpop.permute.xlu0 %2192
      %2194 = vrot.lane.b32.xlu0 %v1245, 32
      %v2195 = vpop.permute.xlu0 %2194
      %2196 = vrot.lane.b32.xlu0 %v1251, 32
      %v2197 = vpop.permute.xlu0 %2196
      %2198 = vrot.lane.b32.xlu0 %v1255, 32
      %v2199 = vpop.permute.xlu0 %2198
      %2200 = vrot.lane.b32.xlu0 %v1261, 32
      %v2201 = vpop.permute.xlu0 %2200
      %2202 = vrot.lane.b32.xlu0 %v1265, 32
      %v2203 = vpop.permute.xlu0 %2202
      %2204 = vrot.lane.b32.xlu0 %v1271, 32
      %v2205 = vpop.permute.xlu0 %2204
      %2206 = vrot.lane.b32.xlu0 %v1275, 32
      %v2207 = vpop.permute.xlu0 %2206
      %2208 = vrot.lane.b32.xlu0 %v1281, 32
      %v2209 = vpop.permute.xlu0 %2208
      %2210 = vrot.lane.b32.xlu0 %v1285, 32
      %v2211 = vpop.permute.xlu0 %2210
      %2212 = vrot.lane.b32.xlu0 %v1291, 32
      %v2213 = vpop.permute.xlu0 %2212
      %2214 = vrot.lane.b32.xlu0 %v1295, 32
      %v2215 = vpop.permute.xlu0 %2214
      %2216 = vrot.lane.b32.xlu0 %v1301, 32
      %v2217 = vpop.permute.xlu0 %2216
      %2218 = vrot.lane.b32.xlu0 %v1305, 32
      %v2219 = vpop.permute.xlu0 %2218
      %2220 = vrot.lane.b32.xlu0 %v1311, 32
      %v2221 = vpop.permute.xlu0 %2220
      %2222 = vrot.lane.b32.xlu0 %v1315, 32
      %v2223 = vpop.permute.xlu0 %2222
      %2224 = vrot.lane.b32.xlu0 %v1321, 32
      %v2225 = vpop.permute.xlu0 %2224
      %2226 = vrot.lane.b32.xlu0 %v1325, 32
      %v2227 = vpop.permute.xlu0 %2226
      %2228 = vrot.lane.b32.xlu0 %v1331, 32
      %v2229 = vpop.permute.xlu0 %2228
      %2230 = vrot.lane.b32.xlu0 %v1335, 32
      %v2231 = vpop.permute.xlu0 %2230
      %2232 = vrot.lane.b32.xlu0 %v1341, 32
      %v2233 = vpop.permute.xlu0 %2232
      %2234 = vrot.lane.b32.xlu0 %v1345, 32
      %v2235 = vpop.permute.xlu0 %2234
      %2236 = vrot.lane.b32.xlu0 %v1351, 32
      %v2237 = vpop.permute.xlu0 %2236
      %2238 = vrot.lane.b32.xlu0 %v1355, 32
      %v2239 = vpop.permute.xlu0 %2238
      %2240 = vrot.lane.b32.xlu0 %v1361, 32
      %v2241 = vpop.permute.xlu0 %2240
      %2242 = vrot.lane.b32.xlu0 %v1365, 32
      %v2243 = vpop.permute.xlu0 %2242
      %2244 = vrot.lane.b32.xlu0 %v1371, 32
      %v2245 = vpop.permute.xlu0 %2244
      %2246 = vrot.lane.b32.xlu0 %v1375, 32
      %v2247 = vpop.permute.xlu0 %2246
      %2248 = vrot.lane.b32.xlu0 %v1381, 32
      %v2249 = vpop.permute.xlu0 %2248
      %2250 = vrot.lane.b32.xlu0 %v1385, 32
      %v2251 = vpop.permute.xlu0 %2250
      %v2284 = vpack.c.bf16 %v1235, %v1231
      %v2285 = vpack.c.bf16 %v1245, %v1241
      %v2286 = vpack.c.bf16 %v1255, %v1251
      %v2287 = vpack.c.bf16 %v1265, %v1261
      %v2288 = vpack.c.bf16 %v1999, %v1997
      %v2289 = vpack.c.bf16 %v2003, %v2001
      %v2290 = vpack.c.bf16 %v2007, %v2005
      %v2291 = vpack.c.bf16 %v2011, %v2009
      %v2292 = vpack.c.bf16 %v2095, %v2093
      %v2293 = vpack.c.bf16 %v2099, %v2097
      %v2294 = vpack.c.bf16 %v2103, %v2101
      %v2295 = vpack.c.bf16 %v2107, %v2105
      %v2296 = vpack.c.bf16 %v2191, %v2189
      %v2297 = vpack.c.bf16 %v2195, %v2193
      %v2298 = vpack.c.bf16 %v2199, %v2197
      %v2299 = vpack.c.bf16 %v2203, %v2201
      %v2300 = vpack.c.bf16 %v1275, %v1271
      %v2301 = vpack.c.bf16 %v1285, %v1281
      %v2302 = vpack.c.bf16 %v1295, %v1291
      %v2303 = vpack.c.bf16 %v1305, %v1301
      %v2304 = vpack.c.bf16 %v2015, %v2013
      %v2305 = vpack.c.bf16 %v2019, %v2017
      %v2306 = vpack.c.bf16 %v2023, %v2021
      %v2307 = vpack.c.bf16 %v2027, %v2025
      %v2308 = vpack.c.bf16 %v2111, %v2109
      %v2309 = vpack.c.bf16 %v2115, %v2113
      %v2310 = vpack.c.bf16 %v2119, %v2117
      %v2311 = vpack.c.bf16 %v2123, %v2121
      %v2312 = vpack.c.bf16 %v2207, %v2205
      %v2313 = vpack.c.bf16 %v2211, %v2209
      %v2314 = vpack.c.bf16 %v2215, %v2213
      %v2315 = vpack.c.bf16 %v2219, %v2217
      %v2316 = vpack.c.bf16 %v1315, %v1311
      %v2317 = vpack.c.bf16 %v1325, %v1321
      %v2318 = vpack.c.bf16 %v1335, %v1331
      %v2319 = vpack.c.bf16 %v1345, %v1341
      %v2320 = vpack.c.bf16 %v2031, %v2029
      %v2321 = vpack.c.bf16 %v2035, %v2033
      %v2322 = vpack.c.bf16 %v2039, %v2037
      %v2323 = vpack.c.bf16 %v2043, %v2041
      %v2324 = vpack.c.bf16 %v2127, %v2125
      %v2325 = vpack.c.bf16 %v2131, %v2129
      %v2326 = vpack.c.bf16 %v2135, %v2133
      %v2327 = vpack.c.bf16 %v2139, %v2137
      %v2328 = vpack.c.bf16 %v2223, %v2221
      %v2329 = vpack.c.bf16 %v2227, %v2225
      %v2330 = vpack.c.bf16 %v2231, %v2229
      %v2331 = vpack.c.bf16 %v2235, %v2233
      %v2332 = vpack.c.bf16 %v1355, %v1351
      %v2333 = vpack.c.bf16 %v1365, %v1361
      %v2334 = vpack.c.bf16 %v1375, %v1371
      %v2335 = vpack.c.bf16 %v1385, %v1381
      %v2336 = vpack.c.bf16 %v2047, %v2045
      %v2337 = vpack.c.bf16 %v2051, %v2049
      %v2338 = vpack.c.bf16 %v2055, %v2053
      %v2339 = vpack.c.bf16 %v2059, %v2057
      %v2340 = vpack.c.bf16 %v2143, %v2141
      %v2341 = vpack.c.bf16 %v2147, %v2145
      %v2342 = vpack.c.bf16 %v2151, %v2149
      %v2343 = vpack.c.bf16 %v2155, %v2153
      %v2344 = vpack.c.bf16 %v2239, %v2237
      %v2345 = vpack.c.bf16 %v2243, %v2241
      %v2346 = vpack.c.bf16 %v2247, %v2245
      %v2347 = vpack.c.bf16 %v2251, %v2249
      %2380 = vrot.lane.b32.xlu0 %v1422, 96
      %v2381 = vpop.permute.xlu0 %2380
      %2382 = vrot.lane.b32.xlu0 %v1425, 96
      %v2383 = vpop.permute.xlu0 %2382
      %2384 = vrot.lane.b32.xlu0 %v1430, 96
      %v2385 = vpop.permute.xlu0 %2384
      %2386 = vrot.lane.b32.xlu0 %v1433, 96
      %v2387 = vpop.permute.xlu0 %2386
      %2388 = vrot.lane.b32.xlu0 %v1438, 96
      %v2389 = vpop.permute.xlu0 %2388
      %2390 = vrot.lane.b32.xlu0 %v1441, 96
      %v2391 = vpop.permute.xlu0 %2390
      %2392 = vrot.lane.b32.xlu0 %v1446, 96
      %v2393 = vpop.permute.xlu0 %2392
      %2394 = vrot.lane.b32.xlu0 %v1449, 96
      %v2395 = vpop.permute.xlu0 %2394
      %2396 = vrot.lane.b32.xlu0 %v1454, 96
      %v2397 = vpop.permute.xlu0 %2396
      %2398 = vrot.lane.b32.xlu0 %v1457, 96
      %v2399 = vpop.permute.xlu0 %2398
      %2400 = vrot.lane.b32.xlu0 %v1462, 96
      %v2401 = vpop.permute.xlu0 %2400
      %2402 = vrot.lane.b32.xlu0 %v1465, 96
      %v2403 = vpop.permute.xlu0 %2402
      %2404 = vrot.lane.b32.xlu0 %v1470, 96
      %v2405 = vpop.permute.xlu0 %2404
      %2406 = vrot.lane.b32.xlu0 %v1473, 96
      %v2407 = vpop.permute.xlu0 %2406
      %2408 = vrot.lane.b32.xlu0 %v1478, 96
      %v2409 = vpop.permute.xlu0 %2408
      %2410 = vrot.lane.b32.xlu0 %v1481, 96
      %v2411 = vpop.permute.xlu0 %2410
      %2412 = vrot.lane.b32.xlu0 %v1486, 96
      %v2413 = vpop.permute.xlu0 %2412
      %2414 = vrot.lane.b32.xlu0 %v1489, 96
      %v2415 = vpop.permute.xlu0 %2414
      %2416 = vrot.lane.b32.xlu0 %v1494, 96
      %v2417 = vpop.permute.xlu0 %2416
      %2418 = vrot.lane.b32.xlu0 %v1497, 96
      %v2419 = vpop.permute.xlu0 %2418
      %2420 = vrot.lane.b32.xlu0 %v1502, 96
      %v2421 = vpop.permute.xlu0 %2420
      %2422 = vrot.lane.b32.xlu0 %v1505, 96
      %v2423 = vpop.permute.xlu0 %2422
      %2424 = vrot.lane.b32.xlu0 %v1510, 96
      %v2425 = vpop.permute.xlu0 %2424
      %2426 = vrot.lane.b32.xlu0 %v1513, 96
      %v2427 = vpop.permute.xlu0 %2426
      %2428 = vrot.lane.b32.xlu0 %v1518, 96
      %v2429 = vpop.permute.xlu0 %2428
      %2430 = vrot.lane.b32.xlu0 %v1521, 96
      %v2431 = vpop.permute.xlu0 %2430
      %2432 = vrot.lane.b32.xlu0 %v1526, 96
      %v2433 = vpop.permute.xlu0 %2432
      %2434 = vrot.lane.b32.xlu0 %v1529, 96
      %v2435 = vpop.permute.xlu0 %2434
      %2436 = vrot.lane.b32.xlu0 %v1534, 96
      %v2437 = vpop.permute.xlu0 %2436
      %2438 = vrot.lane.b32.xlu0 %v1537, 96
      %v2439 = vpop.permute.xlu0 %2438
      %2440 = vrot.lane.b32.xlu0 %v1542, 96
      %v2441 = vpop.permute.xlu0 %2440
      %2442 = vrot.lane.b32.xlu0 %v1545, 96
      %v2443 = vpop.permute.xlu0 %2442
      %2476 = vrot.lane.b32.xlu0 %v1422, 64
      %v2477 = vpop.permute.xlu0 %2476
      %2478 = vrot.lane.b32.xlu0 %v1425, 64
      %v2479 = vpop.permute.xlu0 %2478
      %2480 = vrot.lane.b32.xlu0 %v1430, 64
      %v2481 = vpop.permute.xlu0 %2480
      %2482 = vrot.lane.b32.xlu0 %v1433, 64
      %v2483 = vpop.permute.xlu0 %2482
      %2484 = vrot.lane.b32.xlu0 %v1438, 64
      %v2485 = vpop.permute.xlu0 %2484
      %2486 = vrot.lane.b32.xlu0 %v1441, 64
      %v2487 = vpop.permute.xlu0 %2486
      %2488 = vrot.lane.b32.xlu0 %v1446, 64
      %v2489 = vpop.permute.xlu0 %2488
      %2490 = vrot.lane.b32.xlu0 %v1449, 64
      %v2491 = vpop.permute.xlu0 %2490
      %2492 = vrot.lane.b32.xlu0 %v1454, 64
      %v2493 = vpop.permute.xlu0 %2492
      %2494 = vrot.lane.b32.xlu0 %v1457, 64
      %v2495 = vpop.permute.xlu0 %2494
      %2496 = vrot.lane.b32.xlu0 %v1462, 64
      %v2497 = vpop.permute.xlu0 %2496
      %2498 = vrot.lane.b32.xlu0 %v1465, 64
      %v2499 = vpop.permute.xlu0 %2498
      %2500 = vrot.lane.b32.xlu0 %v1470, 64
      %v2501 = vpop.permute.xlu0 %2500
      %2502 = vrot.lane.b32.xlu0 %v1473, 64
      %v2503 = vpop.permute.xlu0 %2502
      %2504 = vrot.lane.b32.xlu0 %v1478, 64
      %v2505 = vpop.permute.xlu0 %2504
      %2506 = vrot.lane.b32.xlu0 %v1481, 64
      %v2507 = vpop.permute.xlu0 %2506
      %2508 = vrot.lane.b32.xlu0 %v1486, 64
      %v2509 = vpop.permute.xlu0 %2508
      %2510 = vrot.lane.b32.xlu0 %v1489, 64
      %v2511 = vpop.permute.xlu0 %2510
      %2512 = vrot.lane.b32.xlu0 %v1494, 64
      %v2513 = vpop.permute.xlu0 %2512
      %2514 = vrot.lane.b32.xlu0 %v1497, 64
      %v2515 = vpop.permute.xlu0 %2514
      %2516 = vrot.lane.b32.xlu0 %v1502, 64
      %v2517 = vpop.permute.xlu0 %2516
      %2518 = vrot.lane.b32.xlu0 %v1505, 64
      %v2519 = vpop.permute.xlu0 %2518
      %2520 = vrot.lane.b32.xlu0 %v1510, 64
      %v2521 = vpop.permute.xlu0 %2520
      %2522 = vrot.lane.b32.xlu0 %v1513, 64
      %v2523 = vpop.permute.xlu0 %2522
      %2524 = vrot.lane.b32.xlu0 %v1518, 64
      %v2525 = vpop.permute.xlu0 %2524
      %2526 = vrot.lane.b32.xlu0 %v1521, 64
      %v2527 = vpop.permute.xlu0 %2526
      %2528 = vrot.lane.b32.xlu0 %v1526, 64
      %v2529 = vpop.permute.xlu0 %2528
      %2530 = vrot.lane.b32.xlu0 %v1529, 64
      %v2531 = vpop.permute.xlu0 %2530
      %2532 = vrot.lane.b32.xlu0 %v1534, 64
      %v2533 = vpop.permute.xlu0 %2532
      %2534 = vrot.lane.b32.xlu0 %v1537, 64
      %v2535 = vpop.permute.xlu0 %2534
      %2536 = vrot.lane.b32.xlu0 %v1542, 64
      %v2537 = vpop.permute.xlu0 %2536
      %2538 = vrot.lane.b32.xlu0 %v1545, 64
      %v2539 = vpop.permute.xlu0 %2538
      %2572 = vrot.lane.b32.xlu0 %v1422, 32
      %v2573 = vpop.permute.xlu0 %2572
      %2574 = vrot.lane.b32.xlu0 %v1425, 32
      %v2575 = vpop.permute.xlu0 %2574
      %2576 = vrot.lane.b32.xlu0 %v1430, 32
      %v2577 = vpop.permute.xlu0 %2576
      %2578 = vrot.lane.b32.xlu0 %v1433, 32
      %v2579 = vpop.permute.xlu0 %2578
      %2580 = vrot.lane.b32.xlu0 %v1438, 32
      %v2581 = vpop.permute.xlu0 %2580
      %2582 = vrot.lane.b32.xlu0 %v1441, 32
      %v2583 = vpop.permute.xlu0 %2582
      %2584 = vrot.lane.b32.xlu0 %v1446, 32
      %v2585 = vpop.permute.xlu0 %2584
      %2586 = vrot.lane.b32.xlu0 %v1449, 32
      %v2587 = vpop.permute.xlu0 %2586
      %2588 = vrot.lane.b32.xlu0 %v1454, 32
      %v2589 = vpop.permute.xlu0 %2588
      %2590 = vrot.lane.b32.xlu0 %v1457, 32
      %v2591 = vpop.permute.xlu0 %2590
      %2592 = vrot.lane.b32.xlu0 %v1462, 32
      %v2593 = vpop.permute.xlu0 %2592
      %2594 = vrot.lane.b32.xlu0 %v1465, 32
      %v2595 = vpop.permute.xlu0 %2594
      %2596 = vrot.lane.b32.xlu0 %v1470, 32
      %v2597 = vpop.permute.xlu0 %2596
      %2598 = vrot.lane.b32.xlu0 %v1473, 32
      %v2599 = vpop.permute.xlu0 %2598
      %2600 = vrot.lane.b32.xlu0 %v1478, 32
      %v2601 = vpop.permute.xlu0 %2600
      %2602 = vrot.lane.b32.xlu0 %v1481, 32
      %v2603 = vpop.permute.xlu0 %2602
      %2604 = vrot.lane.b32.xlu0 %v1486, 32
      %v2605 = vpop.permute.xlu0 %2604
      %2606 = vrot.lane.b32.xlu0 %v1489, 32
      %v2607 = vpop.permute.xlu0 %2606
      %2608 = vrot.lane.b32.xlu0 %v1494, 32
      %v2609 = vpop.permute.xlu0 %2608
      %2610 = vrot.lane.b32.xlu0 %v1497, 32
      %v2611 = vpop.permute.xlu0 %2610
      %2612 = vrot.lane.b32.xlu0 %v1502, 32
      %v2613 = vpop.permute.xlu0 %2612
      %2614 = vrot.lane.b32.xlu0 %v1505, 32
      %v2615 = vpop.permute.xlu0 %2614
      %2616 = vrot.lane.b32.xlu0 %v1510, 32
      %v2617 = vpop.permute.xlu0 %2616
      %2618 = vrot.lane.b32.xlu0 %v1513, 32
      %v2619 = vpop.permute.xlu0 %2618
      %2620 = vrot.lane.b32.xlu0 %v1518, 32
      %v2621 = vpop.permute.xlu0 %2620
      %2622 = vrot.lane.b32.xlu0 %v1521, 32
      %v2623 = vpop.permute.xlu0 %2622
      %2624 = vrot.lane.b32.xlu0 %v1526, 32
      %v2625 = vpop.permute.xlu0 %2624
      %2626 = vrot.lane.b32.xlu0 %v1529, 32
      %v2627 = vpop.permute.xlu0 %2626
      %2628 = vrot.lane.b32.xlu0 %v1534, 32
      %v2629 = vpop.permute.xlu0 %2628
      %2630 = vrot.lane.b32.xlu0 %v1537, 32
      %v2631 = vpop.permute.xlu0 %2630
      %2632 = vrot.lane.b32.xlu0 %v1542, 32
      %v2633 = vpop.permute.xlu0 %2632
      %2634 = vrot.lane.b32.xlu0 %v1545, 32
      %v2635 = vpop.permute.xlu0 %2634
      %v2668 = vpack.c.bf16 %v1425, %v1422
      %v2669 = vpack.c.bf16 %v1433, %v1430
      %v2670 = vpack.c.bf16 %v1441, %v1438
      %v2671 = vpack.c.bf16 %v1449, %v1446
      %v2672 = vpack.c.bf16 %v2383, %v2381
      %v2673 = vpack.c.bf16 %v2387, %v2385
      %v2674 = vpack.c.bf16 %v2391, %v2389
      %v2675 = vpack.c.bf16 %v2395, %v2393
      %v2676 = vpack.c.bf16 %v2479, %v2477
      %v2677 = vpack.c.bf16 %v2483, %v2481
      %v2678 = vpack.c.bf16 %v2487, %v2485
      %v2679 = vpack.c.bf16 %v2491, %v2489
      %v2680 = vpack.c.bf16 %v2575, %v2573
      %v2681 = vpack.c.bf16 %v2579, %v2577
      %v2682 = vpack.c.bf16 %v2583, %v2581
      %v2683 = vpack.c.bf16 %v2587, %v2585
      %v2684 = vpack.c.bf16 %v1457, %v1454
      %v2685 = vpack.c.bf16 %v1465, %v1462
      %v2686 = vpack.c.bf16 %v1473, %v1470
      %v2687 = vpack.c.bf16 %v1481, %v1478
      %v2688 = vpack.c.bf16 %v2399, %v2397
      %v2689 = vpack.c.bf16 %v2403, %v2401
      %v2690 = vpack.c.bf16 %v2407, %v2405
      %v2691 = vpack.c.bf16 %v2411, %v2409
      %v2692 = vpack.c.bf16 %v2495, %v2493
      %v2693 = vpack.c.bf16 %v2499, %v2497
      %v2694 = vpack.c.bf16 %v2503, %v2501
      %v2695 = vpack.c.bf16 %v2507, %v2505
      %v2696 = vpack.c.bf16 %v2591, %v2589
      %v2697 = vpack.c.bf16 %v2595, %v2593
      %v2698 = vpack.c.bf16 %v2599, %v2597
      %v2699 = vpack.c.bf16 %v2603, %v2601
      %v2700 = vpack.c.bf16 %v1489, %v1486
      %v2701 = vpack.c.bf16 %v1497, %v1494
      %v2702 = vpack.c.bf16 %v1505, %v1502
      %v2703 = vpack.c.bf16 %v1513, %v1510
      %v2704 = vpack.c.bf16 %v2415, %v2413
      %v2705 = vpack.c.bf16 %v2419, %v2417
      %v2706 = vpack.c.bf16 %v2423, %v2421
      %v2707 = vpack.c.bf16 %v2427, %v2425
      %v2708 = vpack.c.bf16 %v2511, %v2509
      %v2709 = vpack.c.bf16 %v2515, %v2513
      %v2710 = vpack.c.bf16 %v2519, %v2517
      %v2711 = vpack.c.bf16 %v2523, %v2521
      %v2712 = vpack.c.bf16 %v2607, %v2605
      %v2713 = vpack.c.bf16 %v2611, %v2609
      %v2714 = vpack.c.bf16 %v2615, %v2613
      %v2715 = vpack.c.bf16 %v2619, %v2617
      %v2716 = vpack.c.bf16 %v1521, %v1518
      %v2717 = vpack.c.bf16 %v1529, %v1526
      %v2718 = vpack.c.bf16 %v1537, %v1534
      %v2719 = vpack.c.bf16 %v1545, %v1542
      %v2720 = vpack.c.bf16 %v2431, %v2429
      %v2721 = vpack.c.bf16 %v2435, %v2433
      %v2722 = vpack.c.bf16 %v2439, %v2437
      %v2723 = vpack.c.bf16 %v2443, %v2441
      %v2724 = vpack.c.bf16 %v2527, %v2525
      %v2725 = vpack.c.bf16 %v2531, %v2529
      %v2726 = vpack.c.bf16 %v2535, %v2533
      %v2727 = vpack.c.bf16 %v2539, %v2537
      %v2728 = vpack.c.bf16 %v2623, %v2621
      %v2729 = vpack.c.bf16 %v2627, %v2625
      %v2730 = vpack.c.bf16 %v2631, %v2629
      %v2731 = vpack.c.bf16 %v2635, %v2633
      %vm2732 = vcmask 261120
      %v2734 = vsel %vm2732, %v1900, 0
      %v2737 = vsel %vm2732, %v1901, 0
      %v2740 = vsel %vm2732, %v1902, 0
      %v2743 = vsel %vm2732, %v1903, 0
      %v2746 = vsel %vm2732, %v2284, 0
      %v2749 = vsel %vm2732, %v2285, 0
      %v2752 = vsel %vm2732, %v2286, 0
      %v2755 = vsel %vm2732, %v2287, 0
      %2757 = vmatprep.subr.bf16.mxu0 0
      %2758 = vmatpush1.bf16.xpose.msra.mxu0 0
      %2759 = vmatprep.subr.bf16.mxu0 0
      %2760 = vmatpush1.bf16.xpose.msra.mxu0 0
      %2761 = vmatprep.subr.bf16.mxu0 0
      %2762 = vmatpush1.bf16.xpose.msra.mxu0 0
      %2763 = vmatprep.subr.bf16.mxu0 0
      %2764 = vmatpush1.bf16.xpose.msra.mxu0 0
      %2765 = vmatprep.subr.bf16.mxu0 0
      %2766 = vmatpush1.bf16.xpose.msra.mxu0 %v2755
      %2767 = vmatprep.subr.bf16.mxu0 0
      %2768 = vmatpush1.bf16.xpose.msra.mxu0 %v2752
      %2769 = vmatprep.subr.bf16.mxu0 0
      %2770 = vmatpush1.bf16.xpose.msra.mxu0 %v2749
      %2771 = vmatprep.subr.bf16.mxu0 0
      %2772 = vmatpush1.bf16.xpose.msra.mxu0 %v2746
      %2773 = vmatprep.subr.bf16.mxu0 0
      %2774 = vmatpush2.bf16.xpose.msra.mxu0 0
      %2775 = vmatprep.subr.bf16.mxu0 0
      %2776 = vmatpush2.bf16.xpose.msra.mxu0 0
      %2777 = vmatprep.subr.bf16.mxu0 0
      %2778 = vmatpush2.bf16.xpose.msra.mxu0 0
      %2779 = vmatprep.subr.bf16.mxu0 0
      %2780 = vmatpush2.bf16.xpose.msra.mxu0 0
      %2781 = vmatprep.subr.bf16.mxu0 0
      %2782 = vmatpush2.bf16.xpose.msra.mxu0 0
      %2783 = vmatprep.subr.bf16.mxu0 0
      %2784 = vmatpush2.bf16.xpose.msra.mxu0 0
      %2785 = vmatprep.subr.bf16.mxu0 0
      %2786 = vmatpush2.bf16.xpose.msra.mxu0 0
      %2787 = vmatprep.subr.bf16.mxu0 0
      %2788 = vmatpush2.bf16.xpose.msra.mxu0 0
      %2789 = vmatprep.mubr.bf16.mxu0 0
      %2790 = vmatmul.mubr.bf16.gmra.mxu0 %v2734
      %v2791 = vpop.f32.mrf.mxu0
      %v2792 = vadd.f32 0.0, %v2791
      %v2793 = vpop.f32.mrf.mxu0
      %v2794 = vpop.f32.mrf.mxu0
      %v2795 = vadd.f32 0.0, %v2794
      %v2796 = vpop.f32.mrf.mxu0
      %2797 = vmatprep.mubr.bf16.mxu0 0
      %2798 = vmatmul.mubr.bf16.gmra.mxu0 %v2737
      %v2799 = vpop.f32.mrf.mxu0
      %v2800 = vadd.f32 0.0, %v2799
      %v2801 = vpop.f32.mrf.mxu0
      %v2802 = vpop.f32.mrf.mxu0
      %v2803 = vadd.f32 0.0, %v2802
      %v2804 = vpop.f32.mrf.mxu0
      %2805 = vmatprep.mubr.bf16.mxu0 0
      %2806 = vmatmul.mubr.bf16.gmra.mxu0 %v2740
      %v2807 = vpop.f32.mrf.mxu0
      %v2808 = vadd.f32 0.0, %v2807
      %v2809 = vpop.f32.mrf.mxu0
      %v2810 = vpop.f32.mrf.mxu0
      %v2811 = vadd.f32 0.0, %v2810
      %v2812 = vpop.f32.mrf.mxu0
      %2813 = vmatprep.mubr.bf16.mxu0 0
      %2814 = vmatmul.mubr.bf16.gmra.mxu0 %v2743
      %v2815 = vpop.f32.mrf.mxu0
      %v2816 = vadd.f32 0.0, %v2815
      %v2817 = vpop.f32.mrf.mxu0
      %v2818 = vpop.f32.mrf.mxu0
      %v2819 = vadd.f32 0.0, %v2818
      %v2820 = vpop.f32.mrf.mxu0
      %2821 = vdwg.mxu0
      %v2823 = vsel %vm2732, %v1904, 0
      %v2826 = vsel %vm2732, %v1905, 0
      %v2829 = vsel %vm2732, %v1906, 0
      %v2832 = vsel %vm2732, %v1907, 0
      %v2835 = vsel %vm2732, %v2288, 0
      %v2838 = vsel %vm2732, %v2289, 0
      %v2841 = vsel %vm2732, %v2290, 0
      %v2844 = vsel %vm2732, %v2291, 0
      %2846 = vmatprep.subr.bf16.mxu0 0
      %2847 = vmatpush1.bf16.xpose.msra.mxu0 0
      %2848 = vmatprep.subr.bf16.mxu0 0
      %2849 = vmatpush1.bf16.xpose.msra.mxu0 0
      %2850 = vmatprep.subr.bf16.mxu0 0
      %2851 = vmatpush1.bf16.xpose.msra.mxu0 0
      %2852 = vmatprep.subr.bf16.mxu0 0
      %2853 = vmatpush1.bf16.xpose.msra.mxu0 0
      %2854 = vmatprep.subr.bf16.mxu0 0
      %2855 = vmatpush1.bf16.xpose.msra.mxu0 %v2844
      %2856 = vmatprep.subr.bf16.mxu0 0
      %2857 = vmatpush1.bf16.xpose.msra.mxu0 %v2841
      %2858 = vmatprep.subr.bf16.mxu0 0
      %2859 = vmatpush1.bf16.xpose.msra.mxu0 %v2838
      %2860 = vmatprep.subr.bf16.mxu0 0
      %2861 = vmatpush1.bf16.xpose.msra.mxu0 %v2835
      %2862 = vmatprep.subr.bf16.mxu0 0
      %2863 = vmatpush2.bf16.xpose.msra.mxu0 0
      %2864 = vmatprep.subr.bf16.mxu0 0
      %2865 = vmatpush2.bf16.xpose.msra.mxu0 0
      %2866 = vmatprep.subr.bf16.mxu0 0
      %2867 = vmatpush2.bf16.xpose.msra.mxu0 0
      %2868 = vmatprep.subr.bf16.mxu0 0
      %2869 = vmatpush2.bf16.xpose.msra.mxu0 0
      %2870 = vmatprep.subr.bf16.mxu0 0
      %2871 = vmatpush2.bf16.xpose.msra.mxu0 0
      %2872 = vmatprep.subr.bf16.mxu0 0
      %2873 = vmatpush2.bf16.xpose.msra.mxu0 0
      %2874 = vmatprep.subr.bf16.mxu0 0
      %2875 = vmatpush2.bf16.xpose.msra.mxu0 0
      %2876 = vmatprep.subr.bf16.mxu0 0
      %2877 = vmatpush2.bf16.xpose.msra.mxu0 0
      %2878 = vmatprep.mubr.bf16.mxu0 0
      %2879 = vmatmul.mubr.bf16.gmra.mxu0 %v2823
      %v2880 = vpop.f32.mrf.mxu0
      %v2881 = vadd.f32 0.0, %v2880
      %v2882 = vpop.f32.mrf.mxu0
      %v2883 = vpop.f32.mrf.mxu0
      %v2884 = vadd.f32 0.0, %v2883
      %v2885 = vpop.f32.mrf.mxu0
      %2886 = vmatprep.mubr.bf16.mxu0 0
      %2887 = vmatmul.mubr.bf16.gmra.mxu0 %v2826
      %v2888 = vpop.f32.mrf.mxu0
      %v2889 = vadd.f32 0.0, %v2888
      %v2890 = vpop.f32.mrf.mxu0
      %v2891 = vpop.f32.mrf.mxu0
      %v2892 = vadd.f32 0.0, %v2891
      %v2893 = vpop.f32.mrf.mxu0
      %2894 = vmatprep.mubr.bf16.mxu0 0
      %2895 = vmatmul.mubr.bf16.gmra.mxu0 %v2829
      %v2896 = vpop.f32.mrf.mxu0
      %v2897 = vadd.f32 0.0, %v2896
      %v2898 = vpop.f32.mrf.mxu0
      %v2899 = vpop.f32.mrf.mxu0
      %v2900 = vadd.f32 0.0, %v2899
      %v2901 = vpop.f32.mrf.mxu0
      %2902 = vmatprep.mubr.bf16.mxu0 0
      %2903 = vmatmul.mubr.bf16.gmra.mxu0 %v2832
      %v2904 = vpop.f32.mrf.mxu0
      %v2905 = vadd.f32 0.0, %v2904
      %v2906 = vpop.f32.mrf.mxu0
      %v2907 = vpop.f32.mrf.mxu0
      %v2908 = vadd.f32 0.0, %v2907
      %v2909 = vpop.f32.mrf.mxu0
      %2910 = vdwg.mxu0
      %v2912 = vsel %vm2732, %v1908, 0
      %v2915 = vsel %vm2732, %v1909, 0
      %v2918 = vsel %vm2732, %v1910, 0
      %v2921 = vsel %vm2732, %v1911, 0
      %v2924 = vsel %vm2732, %v2292, 0
      %v2927 = vsel %vm2732, %v2293, 0
      %v2930 = vsel %vm2732, %v2294, 0
      %v2933 = vsel %vm2732, %v2295, 0
      %2935 = vmatprep.subr.bf16.mxu0 0
      %2936 = vmatpush1.bf16.xpose.msra.mxu0 0
      %2937 = vmatprep.subr.bf16.mxu0 0
      %2938 = vmatpush1.bf16.xpose.msra.mxu0 0
      %2939 = vmatprep.subr.bf16.mxu0 0
      %2940 = vmatpush1.bf16.xpose.msra.mxu0 0
      %2941 = vmatprep.subr.bf16.mxu0 0
      %2942 = vmatpush1.bf16.xpose.msra.mxu0 0
      %2943 = vmatprep.subr.bf16.mxu0 0
      %2944 = vmatpush1.bf16.xpose.msra.mxu0 %v2933
      %2945 = vmatprep.subr.bf16.mxu0 0
      %2946 = vmatpush1.bf16.xpose.msra.mxu0 %v2930
      %2947 = vmatprep.subr.bf16.mxu0 0
      %2948 = vmatpush1.bf16.xpose.msra.mxu0 %v2927
      %2949 = vmatprep.subr.bf16.mxu0 0
      %2950 = vmatpush1.bf16.xpose.msra.mxu0 %v2924
      %2951 = vmatprep.subr.bf16.mxu0 0
      %2952 = vmatpush2.bf16.xpose.msra.mxu0 0
      %2953 = vmatprep.subr.bf16.mxu0 0
      %2954 = vmatpush2.bf16.xpose.msra.mxu0 0
      %2955 = vmatprep.subr.bf16.mxu0 0
      %2956 = vmatpush2.bf16.xpose.msra.mxu0 0
      %2957 = vmatprep.subr.bf16.mxu0 0
      %2958 = vmatpush2.bf16.xpose.msra.mxu0 0
      %2959 = vmatprep.subr.bf16.mxu0 0
      %2960 = vmatpush2.bf16.xpose.msra.mxu0 0
      %2961 = vmatprep.subr.bf16.mxu0 0
      %2962 = vmatpush2.bf16.xpose.msra.mxu0 0
      %2963 = vmatprep.subr.bf16.mxu0 0
      %2964 = vmatpush2.bf16.xpose.msra.mxu0 0
      %2965 = vmatprep.subr.bf16.mxu0 0
      %2966 = vmatpush2.bf16.xpose.msra.mxu0 0
      %2967 = vmatprep.mubr.bf16.mxu0 0
      %2968 = vmatmul.mubr.bf16.gmra.mxu0 %v2912
      %v2969 = vpop.f32.mrf.mxu0
      %v2970 = vadd.f32 0.0, %v2969
      %v2971 = vpop.f32.mrf.mxu0
      %v2972 = vpop.f32.mrf.mxu0
      %v2973 = vadd.f32 0.0, %v2972
      %v2974 = vpop.f32.mrf.mxu0
      %2975 = vmatprep.mubr.bf16.mxu0 0
      %2976 = vmatmul.mubr.bf16.gmra.mxu0 %v2915
      %v2977 = vpop.f32.mrf.mxu0
      %v2978 = vadd.f32 0.0, %v2977
      %v2979 = vpop.f32.mrf.mxu0
      %v2980 = vpop.f32.mrf.mxu0
      %v2981 = vadd.f32 0.0, %v2980
      %v2982 = vpop.f32.mrf.mxu0
      %2983 = vmatprep.mubr.bf16.mxu0 0
      %2984 = vmatmul.mubr.bf16.gmra.mxu0 %v2918
      %v2985 = vpop.f32.mrf.mxu0
      %v2986 = vadd.f32 0.0, %v2985
      %v2987 = vpop.f32.mrf.mxu0
      %v2988 = vpop.f32.mrf.mxu0
      %v2989 = vadd.f32 0.0, %v2988
      %v2990 = vpop.f32.mrf.mxu0
      %2991 = vmatprep.mubr.bf16.mxu0 0
      %2992 = vmatmul.mubr.bf16.gmra.mxu0 %v2921
      %v2993 = vpop.f32.mrf.mxu0
      %v2994 = vadd.f32 0.0, %v2993
      %v2995 = vpop.f32.mrf.mxu0
      %v2996 = vpop.f32.mrf.mxu0
      %v2997 = vadd.f32 0.0, %v2996
      %v2998 = vpop.f32.mrf.mxu0
      %2999 = vdwg.mxu0
      %v3001 = vsel %vm2732, %v1912, 0
      %v3004 = vsel %vm2732, %v1913, 0
      %v3007 = vsel %vm2732, %v1914, 0
      %v3010 = vsel %vm2732, %v1915, 0
      %v3013 = vsel %vm2732, %v2296, 0
      %v3016 = vsel %vm2732, %v2297, 0
      %v3019 = vsel %vm2732, %v2298, 0
      %v3022 = vsel %vm2732, %v2299, 0
      %3024 = vmatprep.subr.bf16.mxu0 0
      %3025 = vmatpush1.bf16.xpose.msra.mxu0 0
      %3026 = vmatprep.subr.bf16.mxu0 0
      %3027 = vmatpush1.bf16.xpose.msra.mxu0 0
      %3028 = vmatprep.subr.bf16.mxu0 0
      %3029 = vmatpush1.bf16.xpose.msra.mxu0 0
      %3030 = vmatprep.subr.bf16.mxu0 0
      %3031 = vmatpush1.bf16.xpose.msra.mxu0 0
      %3032 = vmatprep.subr.bf16.mxu0 0
      %3033 = vmatpush1.bf16.xpose.msra.mxu0 %v3022
      %3034 = vmatprep.subr.bf16.mxu0 0
      %3035 = vmatpush1.bf16.xpose.msra.mxu0 %v3019
      %3036 = vmatprep.subr.bf16.mxu0 0
      %3037 = vmatpush1.bf16.xpose.msra.mxu0 %v3016
      %3038 = vmatprep.subr.bf16.mxu0 0
      %3039 = vmatpush1.bf16.xpose.msra.mxu0 %v3013
      %3040 = vmatprep.subr.bf16.mxu0 0
      %3041 = vmatpush2.bf16.xpose.msra.mxu0 0
      %3042 = vmatprep.subr.bf16.mxu0 0
      %3043 = vmatpush2.bf16.xpose.msra.mxu0 0
      %3044 = vmatprep.subr.bf16.mxu0 0
      %3045 = vmatpush2.bf16.xpose.msra.mxu0 0
      %3046 = vmatprep.subr.bf16.mxu0 0
      %3047 = vmatpush2.bf16.xpose.msra.mxu0 0
      %3048 = vmatprep.subr.bf16.mxu0 0
      %3049 = vmatpush2.bf16.xpose.msra.mxu0 0
      %3050 = vmatprep.subr.bf16.mxu0 0
      %3051 = vmatpush2.bf16.xpose.msra.mxu0 0
      %3052 = vmatprep.subr.bf16.mxu0 0
      %3053 = vmatpush2.bf16.xpose.msra.mxu0 0
      %3054 = vmatprep.subr.bf16.mxu0 0
      %3055 = vmatpush2.bf16.xpose.msra.mxu0 0
      %3056 = vmatprep.mubr.bf16.mxu0 0
      %3057 = vmatmul.mubr.bf16.gmra.mxu0 %v3001
      %v3058 = vpop.f32.mrf.mxu0
      %v3059 = vadd.f32 0.0, %v3058
      %v3060 = vpop.f32.mrf.mxu0
      %v3061 = vpop.f32.mrf.mxu0
      %v3062 = vadd.f32 0.0, %v3061
      %v3063 = vpop.f32.mrf.mxu0
      %3064 = vmatprep.mubr.bf16.mxu0 0
      %3065 = vmatmul.mubr.bf16.gmra.mxu0 %v3004
      %v3066 = vpop.f32.mrf.mxu0
      %v3067 = vadd.f32 0.0, %v3066
      %v3068 = vpop.f32.mrf.mxu0
      %v3069 = vpop.f32.mrf.mxu0
      %v3070 = vadd.f32 0.0, %v3069
      %v3071 = vpop.f32.mrf.mxu0
      %3072 = vmatprep.mubr.bf16.mxu0 0
      %3073 = vmatmul.mubr.bf16.gmra.mxu0 %v3007
      %v3074 = vpop.f32.mrf.mxu0
      %v3075 = vadd.f32 0.0, %v3074
      %v3076 = vpop.f32.mrf.mxu0
      %v3077 = vpop.f32.mrf.mxu0
      %v3078 = vadd.f32 0.0, %v3077
      %v3079 = vpop.f32.mrf.mxu0
      %3080 = vmatprep.mubr.bf16.mxu0 0
      %3081 = vmatmul.mubr.bf16.gmra.mxu0 %v3010
      %v3082 = vpop.f32.mrf.mxu0
      %v3083 = vadd.f32 0.0, %v3082
      %v3084 = vpop.f32.mrf.mxu0
      %v3085 = vpop.f32.mrf.mxu0
      %v3086 = vadd.f32 0.0, %v3085
      %v3087 = vpop.f32.mrf.mxu0
      %3088 = vdwg.mxu0
      %v3090 = vsel %vm2732, %v1916, 0
      %v3093 = vsel %vm2732, %v1917, 0
      %v3096 = vsel %vm2732, %v1918, 0
      %v3099 = vsel %vm2732, %v1919, 0
      %v3102 = vsel %vm2732, %v2300, 0
      %v3105 = vsel %vm2732, %v2301, 0
      %v3108 = vsel %vm2732, %v2302, 0
      %v3111 = vsel %vm2732, %v2303, 0
      %3113 = vmatprep.subr.bf16.mxu0 0
      %3114 = vmatpush1.bf16.xpose.msra.mxu0 0
      %3115 = vmatprep.subr.bf16.mxu0 0
      %3116 = vmatpush1.bf16.xpose.msra.mxu0 0
      %3117 = vmatprep.subr.bf16.mxu0 0
      %3118 = vmatpush1.bf16.xpose.msra.mxu0 0
      %3119 = vmatprep.subr.bf16.mxu0 0
      %3120 = vmatpush1.bf16.xpose.msra.mxu0 0
      %3121 = vmatprep.subr.bf16.mxu0 0
      %3122 = vmatpush1.bf16.xpose.msra.mxu0 %v3111
      %3123 = vmatprep.subr.bf16.mxu0 0
      %3124 = vmatpush1.bf16.xpose.msra.mxu0 %v3108
      %3125 = vmatprep.subr.bf16.mxu0 0
      %3126 = vmatpush1.bf16.xpose.msra.mxu0 %v3105
      %3127 = vmatprep.subr.bf16.mxu0 0
      %3128 = vmatpush1.bf16.xpose.msra.mxu0 %v3102
      %3129 = vmatprep.subr.bf16.mxu0 0
      %3130 = vmatpush2.bf16.xpose.msra.mxu0 0
      %3131 = vmatprep.subr.bf16.mxu0 0
      %3132 = vmatpush2.bf16.xpose.msra.mxu0 0
      %3133 = vmatprep.subr.bf16.mxu0 0
      %3134 = vmatpush2.bf16.xpose.msra.mxu0 0
      %3135 = vmatprep.subr.bf16.mxu0 0
      %3136 = vmatpush2.bf16.xpose.msra.mxu0 0
      %3137 = vmatprep.subr.bf16.mxu0 0
      %3138 = vmatpush2.bf16.xpose.msra.mxu0 0
      %3139 = vmatprep.subr.bf16.mxu0 0
      %3140 = vmatpush2.bf16.xpose.msra.mxu0 0
      %3141 = vmatprep.subr.bf16.mxu0 0
      %3142 = vmatpush2.bf16.xpose.msra.mxu0 0
      %3143 = vmatprep.subr.bf16.mxu0 0
      %3144 = vmatpush2.bf16.xpose.msra.mxu0 0
      %3145 = vmatprep.mubr.bf16.mxu0 0
      %3146 = vmatmul.mubr.bf16.gmra.mxu0 %v3090
      %v3147 = vpop.f32.mrf.mxu0
      %v3148 = vadd.f32 0.0, %v3147
      %v3149 = vpop.f32.mrf.mxu0
      %v3150 = vpop.f32.mrf.mxu0
      %v3151 = vadd.f32 0.0, %v3150
      %v3152 = vpop.f32.mrf.mxu0
      %3153 = vmatprep.mubr.bf16.mxu0 0
      %3154 = vmatmul.mubr.bf16.gmra.mxu0 %v3093
      %v3155 = vpop.f32.mrf.mxu0
      %v3156 = vadd.f32 0.0, %v3155
      %v3157 = vpop.f32.mrf.mxu0
      %v3158 = vpop.f32.mrf.mxu0
      %v3159 = vadd.f32 0.0, %v3158
      %v3160 = vpop.f32.mrf.mxu0
      %3161 = vmatprep.mubr.bf16.mxu0 0
      %3162 = vmatmul.mubr.bf16.gmra.mxu0 %v3096
      %v3163 = vpop.f32.mrf.mxu0
      %v3164 = vadd.f32 0.0, %v3163
      %v3165 = vpop.f32.mrf.mxu0
      %v3166 = vpop.f32.mrf.mxu0
      %v3167 = vadd.f32 0.0, %v3166
      %v3168 = vpop.f32.mrf.mxu0
      %3169 = vmatprep.mubr.bf16.mxu0 0
      %3170 = vmatmul.mubr.bf16.gmra.mxu0 %v3099
      %v3171 = vpop.f32.mrf.mxu0
      %v3172 = vadd.f32 0.0, %v3171
      %v3173 = vpop.f32.mrf.mxu0
      %v3174 = vpop.f32.mrf.mxu0
      %v3175 = vadd.f32 0.0, %v3174
      %v3176 = vpop.f32.mrf.mxu0
      %3177 = vdwg.mxu0
      %v3179 = vsel %vm2732, %v1920, 0
      %v3182 = vsel %vm2732, %v1921, 0
      %v3185 = vsel %vm2732, %v1922, 0
      %v3188 = vsel %vm2732, %v1923, 0
      %v3191 = vsel %vm2732, %v2304, 0
      %v3194 = vsel %vm2732, %v2305, 0
      %v3197 = vsel %vm2732, %v2306, 0
      %v3200 = vsel %vm2732, %v2307, 0
      %3202 = vmatprep.subr.bf16.mxu0 0
      %3203 = vmatpush1.bf16.xpose.msra.mxu0 0
      %3204 = vmatprep.subr.bf16.mxu0 0
      %3205 = vmatpush1.bf16.xpose.msra.mxu0 0
      %3206 = vmatprep.subr.bf16.mxu0 0
      %3207 = vmatpush1.bf16.xpose.msra.mxu0 0
      %3208 = vmatprep.subr.bf16.mxu0 0
      %3209 = vmatpush1.bf16.xpose.msra.mxu0 0
      %3210 = vmatprep.subr.bf16.mxu0 0
      %3211 = vmatpush1.bf16.xpose.msra.mxu0 %v3200
      %3212 = vmatprep.subr.bf16.mxu0 0
      %3213 = vmatpush1.bf16.xpose.msra.mxu0 %v3197
      %3214 = vmatprep.subr.bf16.mxu0 0
      %3215 = vmatpush1.bf16.xpose.msra.mxu0 %v3194
      %3216 = vmatprep.subr.bf16.mxu0 0
      %3217 = vmatpush1.bf16.xpose.msra.mxu0 %v3191
      %3218 = vmatprep.subr.bf16.mxu0 0
      %3219 = vmatpush2.bf16.xpose.msra.mxu0 0
      %3220 = vmatprep.subr.bf16.mxu0 0
      %3221 = vmatpush2.bf16.xpose.msra.mxu0 0
      %3222 = vmatprep.subr.bf16.mxu0 0
      %3223 = vmatpush2.bf16.xpose.msra.mxu0 0
      %3224 = vmatprep.subr.bf16.mxu0 0
      %3225 = vmatpush2.bf16.xpose.msra.mxu0 0
      %3226 = vmatprep.subr.bf16.mxu0 0
      %3227 = vmatpush2.bf16.xpose.msra.mxu0 0
      %3228 = vmatprep.subr.bf16.mxu0 0
      %3229 = vmatpush2.bf16.xpose.msra.mxu0 0
      %3230 = vmatprep.subr.bf16.mxu0 0
      %3231 = vmatpush2.bf16.xpose.msra.mxu0 0
      %3232 = vmatprep.subr.bf16.mxu0 0
      %3233 = vmatpush2.bf16.xpose.msra.mxu0 0
      %3234 = vmatprep.mubr.bf16.mxu0 0
      %3235 = vmatmul.mubr.bf16.gmra.mxu0 %v3179
      %v3236 = vpop.f32.mrf.mxu0
      %v3237 = vadd.f32 0.0, %v3236
      %v3238 = vpop.f32.mrf.mxu0
      %v3239 = vpop.f32.mrf.mxu0
      %v3240 = vadd.f32 0.0, %v3239
      %v3241 = vpop.f32.mrf.mxu0
      %3242 = vmatprep.mubr.bf16.mxu0 0
      %3243 = vmatmul.mubr.bf16.gmra.mxu0 %v3182
      %v3244 = vpop.f32.mrf.mxu0
      %v3245 = vadd.f32 0.0, %v3244
      %v3246 = vpop.f32.mrf.mxu0
      %v3247 = vpop.f32.mrf.mxu0
      %v3248 = vadd.f32 0.0, %v3247
      %v3249 = vpop.f32.mrf.mxu0
      %3250 = vmatprep.mubr.bf16.mxu0 0
      %3251 = vmatmul.mubr.bf16.gmra.mxu0 %v3185
      %v3252 = vpop.f32.mrf.mxu0
      %v3253 = vadd.f32 0.0, %v3252
      %v3254 = vpop.f32.mrf.mxu0
      %v3255 = vpop.f32.mrf.mxu0
      %v3256 = vadd.f32 0.0, %v3255
      %v3257 = vpop.f32.mrf.mxu0
      %3258 = vmatprep.mubr.bf16.mxu0 0
      %3259 = vmatmul.mubr.bf16.gmra.mxu0 %v3188
      %v3260 = vpop.f32.mrf.mxu0
      %v3261 = vadd.f32 0.0, %v3260
      %v3262 = vpop.f32.mrf.mxu0
      %v3263 = vpop.f32.mrf.mxu0
      %v3264 = vadd.f32 0.0, %v3263
      %v3265 = vpop.f32.mrf.mxu0
      %3266 = vdwg.mxu0
      %v3268 = vsel %vm2732, %v1924, 0
      %v3271 = vsel %vm2732, %v1925, 0
      %v3274 = vsel %vm2732, %v1926, 0
      %v3277 = vsel %vm2732, %v1927, 0
      %v3280 = vsel %vm2732, %v2308, 0
      %v3283 = vsel %vm2732, %v2309, 0
      %v3286 = vsel %vm2732, %v2310, 0
      %v3289 = vsel %vm2732, %v2311, 0
      %3291 = vmatprep.subr.bf16.mxu0 0
      %3292 = vmatpush1.bf16.xpose.msra.mxu0 0
      %3293 = vmatprep.subr.bf16.mxu0 0
      %3294 = vmatpush1.bf16.xpose.msra.mxu0 0
      %3295 = vmatprep.subr.bf16.mxu0 0
      %3296 = vmatpush1.bf16.xpose.msra.mxu0 0
      %3297 = vmatprep.subr.bf16.mxu0 0
      %3298 = vmatpush1.bf16.xpose.msra.mxu0 0
      %3299 = vmatprep.subr.bf16.mxu0 0
      %3300 = vmatpush1.bf16.xpose.msra.mxu0 %v3289
      %3301 = vmatprep.subr.bf16.mxu0 0
      %3302 = vmatpush1.bf16.xpose.msra.mxu0 %v3286
      %3303 = vmatprep.subr.bf16.mxu0 0
      %3304 = vmatpush1.bf16.xpose.msra.mxu0 %v3283
      %3305 = vmatprep.subr.bf16.mxu0 0
      %3306 = vmatpush1.bf16.xpose.msra.mxu0 %v3280
      %3307 = vmatprep.subr.bf16.mxu0 0
      %3308 = vmatpush2.bf16.xpose.msra.mxu0 0
      %3309 = vmatprep.subr.bf16.mxu0 0
      %3310 = vmatpush2.bf16.xpose.msra.mxu0 0
      %3311 = vmatprep.subr.bf16.mxu0 0
      %3312 = vmatpush2.bf16.xpose.msra.mxu0 0
      %3313 = vmatprep.subr.bf16.mxu0 0
      %3314 = vmatpush2.bf16.xpose.msra.mxu0 0
      %3315 = vmatprep.subr.bf16.mxu0 0
      %3316 = vmatpush2.bf16.xpose.msra.mxu0 0
      %3317 = vmatprep.subr.bf16.mxu0 0
      %3318 = vmatpush2.bf16.xpose.msra.mxu0 0
      %3319 = vmatprep.subr.bf16.mxu0 0
      %3320 = vmatpush2.bf16.xpose.msra.mxu0 0
      %3321 = vmatprep.subr.bf16.mxu0 0
      %3322 = vmatpush2.bf16.xpose.msra.mxu0 0
      %3323 = vmatprep.mubr.bf16.mxu0 0
      %3324 = vmatmul.mubr.bf16.gmra.mxu0 %v3268
      %v3325 = vpop.f32.mrf.mxu0
      %v3326 = vadd.f32 0.0, %v3325
      %v3327 = vpop.f32.mrf.mxu0
      %v3328 = vpop.f32.mrf.mxu0
      %v3329 = vadd.f32 0.0, %v3328
      %v3330 = vpop.f32.mrf.mxu0
      %3331 = vmatprep.mubr.bf16.mxu0 0
      %3332 = vmatmul.mubr.bf16.gmra.mxu0 %v3271
      %v3333 = vpop.f32.mrf.mxu0
      %v3334 = vadd.f32 0.0, %v3333
      %v3335 = vpop.f32.mrf.mxu0
      %v3336 = vpop.f32.mrf.mxu0
      %v3337 = vadd.f32 0.0, %v3336
      %v3338 = vpop.f32.mrf.mxu0
      %3339 = vmatprep.mubr.bf16.mxu0 0
      %3340 = vmatmul.mubr.bf16.gmra.mxu0 %v3274
      %v3341 = vpop.f32.mrf.mxu0
      %v3342 = vadd.f32 0.0, %v3341
      %v3343 = vpop.f32.mrf.mxu0
      %v3344 = vpop.f32.mrf.mxu0
      %v3345 = vadd.f32 0.0, %v3344
      %v3346 = vpop.f32.mrf.mxu0
      %3347 = vmatprep.mubr.bf16.mxu0 0
      %3348 = vmatmul.mubr.bf16.gmra.mxu0 %v3277
      %v3349 = vpop.f32.mrf.mxu0
      %v3350 = vadd.f32 0.0, %v3349
      %v3351 = vpop.f32.mrf.mxu0
      %v3352 = vpop.f32.mrf.mxu0
      %v3353 = vadd.f32 0.0, %v3352
      %v3354 = vpop.f32.mrf.mxu0
      %3355 = vdwg.mxu0
      %v3357 = vsel %vm2732, %v1928, 0
      %v3360 = vsel %vm2732, %v1929, 0
      %v3363 = vsel %vm2732, %v1930, 0
      %v3366 = vsel %vm2732, %v1931, 0
      %v3369 = vsel %vm2732, %v2312, 0
      %v3372 = vsel %vm2732, %v2313, 0
      %v3375 = vsel %vm2732, %v2314, 0
      %v3378 = vsel %vm2732, %v2315, 0
      %3380 = vmatprep.subr.bf16.mxu0 0
      %3381 = vmatpush1.bf16.xpose.msra.mxu0 0
      %3382 = vmatprep.subr.bf16.mxu0 0
      %3383 = vmatpush1.bf16.xpose.msra.mxu0 0
      %3384 = vmatprep.subr.bf16.mxu0 0
      %3385 = vmatpush1.bf16.xpose.msra.mxu0 0
      %3386 = vmatprep.subr.bf16.mxu0 0
      %3387 = vmatpush1.bf16.xpose.msra.mxu0 0
      %3388 = vmatprep.subr.bf16.mxu0 0
      %3389 = vmatpush1.bf16.xpose.msra.mxu0 %v3378
      %3390 = vmatprep.subr.bf16.mxu0 0
      %3391 = vmatpush1.bf16.xpose.msra.mxu0 %v3375
      %3392 = vmatprep.subr.bf16.mxu0 0
      %3393 = vmatpush1.bf16.xpose.msra.mxu0 %v3372
      %3394 = vmatprep.subr.bf16.mxu0 0
      %3395 = vmatpush1.bf16.xpose.msra.mxu0 %v3369
      %3396 = vmatprep.subr.bf16.mxu0 0
      %3397 = vmatpush2.bf16.xpose.msra.mxu0 0
      %3398 = vmatprep.subr.bf16.mxu0 0
      %3399 = vmatpush2.bf16.xpose.msra.mxu0 0
      %3400 = vmatprep.subr.bf16.mxu0 0
      %3401 = vmatpush2.bf16.xpose.msra.mxu0 0
      %3402 = vmatprep.subr.bf16.mxu0 0
      %3403 = vmatpush2.bf16.xpose.msra.mxu0 0
      %3404 = vmatprep.subr.bf16.mxu0 0
      %3405 = vmatpush2.bf16.xpose.msra.mxu0 0
      %3406 = vmatprep.subr.bf16.mxu0 0
      %3407 = vmatpush2.bf16.xpose.msra.mxu0 0
      %3408 = vmatprep.subr.bf16.mxu0 0
      %3409 = vmatpush2.bf16.xpose.msra.mxu0 0
      %3410 = vmatprep.subr.bf16.mxu0 0
      %3411 = vmatpush2.bf16.xpose.msra.mxu0 0
      %3412 = vmatprep.mubr.bf16.mxu0 0
      %3413 = vmatmul.mubr.bf16.gmra.mxu0 %v3357
      %v3414 = vpop.f32.mrf.mxu0
      %v3415 = vadd.f32 0.0, %v3414
      %v3416 = vpop.f32.mrf.mxu0
      %v3417 = vpop.f32.mrf.mxu0
      %v3418 = vadd.f32 0.0, %v3417
      %v3419 = vpop.f32.mrf.mxu0
      %3420 = vmatprep.mubr.bf16.mxu0 0
      %3421 = vmatmul.mubr.bf16.gmra.mxu0 %v3360
      %v3422 = vpop.f32.mrf.mxu0
      %v3423 = vadd.f32 0.0, %v3422
      %v3424 = vpop.f32.mrf.mxu0
      %v3425 = vpop.f32.mrf.mxu0
      %v3426 = vadd.f32 0.0, %v3425
      %v3427 = vpop.f32.mrf.mxu0
      %3428 = vmatprep.mubr.bf16.mxu0 0
      %3429 = vmatmul.mubr.bf16.gmra.mxu0 %v3363
      %v3430 = vpop.f32.mrf.mxu0
      %v3431 = vadd.f32 0.0, %v3430
      %v3432 = vpop.f32.mrf.mxu0
      %v3433 = vpop.f32.mrf.mxu0
      %v3434 = vadd.f32 0.0, %v3433
      %v3435 = vpop.f32.mrf.mxu0
      %3436 = vmatprep.mubr.bf16.mxu0 0
      %3437 = vmatmul.mubr.bf16.gmra.mxu0 %v3366
      %v3438 = vpop.f32.mrf.mxu0
      %v3439 = vadd.f32 0.0, %v3438
      %v3440 = vpop.f32.mrf.mxu0
      %v3441 = vpop.f32.mrf.mxu0
      %v3442 = vadd.f32 0.0, %v3441
      %v3443 = vpop.f32.mrf.mxu0
      %3444 = vdwg.mxu0
      %v3446 = vsel %vm2732, %v1932, 0
      %v3449 = vsel %vm2732, %v1933, 0
      %v3452 = vsel %vm2732, %v1934, 0
      %v3455 = vsel %vm2732, %v1935, 0
      %v3458 = vsel %vm2732, %v2316, 0
      %v3461 = vsel %vm2732, %v2317, 0
      %v3464 = vsel %vm2732, %v2318, 0
      %v3467 = vsel %vm2732, %v2319, 0
      %3469 = vmatprep.subr.bf16.mxu0 0
      %3470 = vmatpush1.bf16.xpose.msra.mxu0 0
      %3471 = vmatprep.subr.bf16.mxu0 0
      %3472 = vmatpush1.bf16.xpose.msra.mxu0 0
      %3473 = vmatprep.subr.bf16.mxu0 0
      %3474 = vmatpush1.bf16.xpose.msra.mxu0 0
      %3475 = vmatprep.subr.bf16.mxu0 0
      %3476 = vmatpush1.bf16.xpose.msra.mxu0 0
      %3477 = vmatprep.subr.bf16.mxu0 0
      %3478 = vmatpush1.bf16.xpose.msra.mxu0 %v3467
      %3479 = vmatprep.subr.bf16.mxu0 0
      %3480 = vmatpush1.bf16.xpose.msra.mxu0 %v3464
      %3481 = vmatprep.subr.bf16.mxu0 0
      %3482 = vmatpush1.bf16.xpose.msra.mxu0 %v3461
      %3483 = vmatprep.subr.bf16.mxu0 0
      %3484 = vmatpush1.bf16.xpose.msra.mxu0 %v3458
      %3485 = vmatprep.subr.bf16.mxu0 0
      %3486 = vmatpush2.bf16.xpose.msra.mxu0 0
      %3487 = vmatprep.subr.bf16.mxu0 0
      %3488 = vmatpush2.bf16.xpose.msra.mxu0 0
      %3489 = vmatprep.subr.bf16.mxu0 0
      %3490 = vmatpush2.bf16.xpose.msra.mxu0 0
      %3491 = vmatprep.subr.bf16.mxu0 0
      %3492 = vmatpush2.bf16.xpose.msra.mxu0 0
      %3493 = vmatprep.subr.bf16.mxu0 0
      %3494 = vmatpush2.bf16.xpose.msra.mxu0 0
      %3495 = vmatprep.subr.bf16.mxu0 0
      %3496 = vmatpush2.bf16.xpose.msra.mxu0 0
      %3497 = vmatprep.subr.bf16.mxu0 0
      %3498 = vmatpush2.bf16.xpose.msra.mxu0 0
      %3499 = vmatprep.subr.bf16.mxu0 0
      %3500 = vmatpush2.bf16.xpose.msra.mxu0 0
      %3501 = vmatprep.mubr.bf16.mxu0 0
      %3502 = vmatmul.mubr.bf16.gmra.mxu0 %v3446
      %v3503 = vpop.f32.mrf.mxu0
      %v3504 = vadd.f32 0.0, %v3503
      %v3505 = vpop.f32.mrf.mxu0
      %v3506 = vpop.f32.mrf.mxu0
      %v3507 = vadd.f32 0.0, %v3506
      %v3508 = vpop.f32.mrf.mxu0
      %3509 = vmatprep.mubr.bf16.mxu0 0
      %3510 = vmatmul.mubr.bf16.gmra.mxu0 %v3449
      %v3511 = vpop.f32.mrf.mxu0
      %v3512 = vadd.f32 0.0, %v3511
      %v3513 = vpop.f32.mrf.mxu0
      %v3514 = vpop.f32.mrf.mxu0
      %v3515 = vadd.f32 0.0, %v3514
      %v3516 = vpop.f32.mrf.mxu0
      %3517 = vmatprep.mubr.bf16.mxu0 0
      %3518 = vmatmul.mubr.bf16.gmra.mxu0 %v3452
      %v3519 = vpop.f32.mrf.mxu0
      %v3520 = vadd.f32 0.0, %v3519
      %v3521 = vpop.f32.mrf.mxu0
      %v3522 = vpop.f32.mrf.mxu0
      %v3523 = vadd.f32 0.0, %v3522
      %v3524 = vpop.f32.mrf.mxu0
      %3525 = vmatprep.mubr.bf16.mxu0 0
      %3526 = vmatmul.mubr.bf16.gmra.mxu0 %v3455
      %v3527 = vpop.f32.mrf.mxu0
      %v3528 = vadd.f32 0.0, %v3527
      %v3529 = vpop.f32.mrf.mxu0
      %v3530 = vpop.f32.mrf.mxu0
      %v3531 = vadd.f32 0.0, %v3530
      %v3532 = vpop.f32.mrf.mxu0
      %3533 = vdwg.mxu0
      %v3535 = vsel %vm2732, %v1936, 0
      %v3538 = vsel %vm2732, %v1937, 0
      %v3541 = vsel %vm2732, %v1938, 0
      %v3544 = vsel %vm2732, %v1939, 0
      %v3547 = vsel %vm2732, %v2320, 0
      %v3550 = vsel %vm2732, %v2321, 0
      %v3553 = vsel %vm2732, %v2322, 0
      %v3556 = vsel %vm2732, %v2323, 0
      %3558 = vmatprep.subr.bf16.mxu0 0
      %3559 = vmatpush1.bf16.xpose.msra.mxu0 0
      %3560 = vmatprep.subr.bf16.mxu0 0
      %3561 = vmatpush1.bf16.xpose.msra.mxu0 0
      %3562 = vmatprep.subr.bf16.mxu0 0
      %3563 = vmatpush1.bf16.xpose.msra.mxu0 0
      %3564 = vmatprep.subr.bf16.mxu0 0
      %3565 = vmatpush1.bf16.xpose.msra.mxu0 0
      %3566 = vmatprep.subr.bf16.mxu0 0
      %3567 = vmatpush1.bf16.xpose.msra.mxu0 %v3556
      %3568 = vmatprep.subr.bf16.mxu0 0
      %3569 = vmatpush1.bf16.xpose.msra.mxu0 %v3553
      %3570 = vmatprep.subr.bf16.mxu0 0
      %3571 = vmatpush1.bf16.xpose.msra.mxu0 %v3550
      %3572 = vmatprep.subr.bf16.mxu0 0
      %3573 = vmatpush1.bf16.xpose.msra.mxu0 %v3547
      %3574 = vmatprep.subr.bf16.mxu0 0
      %3575 = vmatpush2.bf16.xpose.msra.mxu0 0
      %3576 = vmatprep.subr.bf16.mxu0 0
      %3577 = vmatpush2.bf16.xpose.msra.mxu0 0
      %3578 = vmatprep.subr.bf16.mxu0 0
      %3579 = vmatpush2.bf16.xpose.msra.mxu0 0
      %3580 = vmatprep.subr.bf16.mxu0 0
      %3581 = vmatpush2.bf16.xpose.msra.mxu0 0
      %3582 = vmatprep.subr.bf16.mxu0 0
      %3583 = vmatpush2.bf16.xpose.msra.mxu0 0
      %3584 = vmatprep.subr.bf16.mxu0 0
      %3585 = vmatpush2.bf16.xpose.msra.mxu0 0
      %3586 = vmatprep.subr.bf16.mxu0 0
      %3587 = vmatpush2.bf16.xpose.msra.mxu0 0
      %3588 = vmatprep.subr.bf16.mxu0 0
      %3589 = vmatpush2.bf16.xpose.msra.mxu0 0
      %3590 = vmatprep.mubr.bf16.mxu0 0
      %3591 = vmatmul.mubr.bf16.gmra.mxu0 %v3535
      %v3592 = vpop.f32.mrf.mxu0
      %v3593 = vadd.f32 0.0, %v3592
      %v3594 = vpop.f32.mrf.mxu0
      %v3595 = vpop.f32.mrf.mxu0
      %v3596 = vadd.f32 0.0, %v3595
      %v3597 = vpop.f32.mrf.mxu0
      %3598 = vmatprep.mubr.bf16.mxu0 0
      %3599 = vmatmul.mubr.bf16.gmra.mxu0 %v3538
      %v3600 = vpop.f32.mrf.mxu0
      %v3601 = vadd.f32 0.0, %v3600
      %v3602 = vpop.f32.mrf.mxu0
      %v3603 = vpop.f32.mrf.mxu0
      %v3604 = vadd.f32 0.0, %v3603
      %v3605 = vpop.f32.mrf.mxu0
      %3606 = vmatprep.mubr.bf16.mxu0 0
      %3607 = vmatmul.mubr.bf16.gmra.mxu0 %v3541
      %v3608 = vpop.f32.mrf.mxu0
      %v3609 = vadd.f32 0.0, %v3608
      %v3610 = vpop.f32.mrf.mxu0
      %v3611 = vpop.f32.mrf.mxu0
      %v3612 = vadd.f32 0.0, %v3611
      %v3613 = vpop.f32.mrf.mxu0
      %3614 = vmatprep.mubr.bf16.mxu0 0
      %3615 = vmatmul.mubr.bf16.gmra.mxu0 %v3544
      %v3616 = vpop.f32.mrf.mxu0
      %v3617 = vadd.f32 0.0, %v3616
      %v3618 = vpop.f32.mrf.mxu0
      %v3619 = vpop.f32.mrf.mxu0
      %v3620 = vadd.f32 0.0, %v3619
      %v3621 = vpop.f32.mrf.mxu0
      %3622 = vdwg.mxu0
      %v3624 = vsel %vm2732, %v1940, 0
      %v3627 = vsel %vm2732, %v1941, 0
      %v3630 = vsel %vm2732, %v1942, 0
      %v3633 = vsel %vm2732, %v1943, 0
      %v3636 = vsel %vm2732, %v2324, 0
      %v3639 = vsel %vm2732, %v2325, 0
      %v3642 = vsel %vm2732, %v2326, 0
      %v3645 = vsel %vm2732, %v2327, 0
      %3647 = vmatprep.subr.bf16.mxu0 0
      %3648 = vmatpush1.bf16.xpose.msra.mxu0 0
      %3649 = vmatprep.subr.bf16.mxu0 0
      %3650 = vmatpush1.bf16.xpose.msra.mxu0 0
      %3651 = vmatprep.subr.bf16.mxu0 0
      %3652 = vmatpush1.bf16.xpose.msra.mxu0 0
      %3653 = vmatprep.subr.bf16.mxu0 0
      %3654 = vmatpush1.bf16.xpose.msra.mxu0 0
      %3655 = vmatprep.subr.bf16.mxu0 0
      %3656 = vmatpush1.bf16.xpose.msra.mxu0 %v3645
      %3657 = vmatprep.subr.bf16.mxu0 0
      %3658 = vmatpush1.bf16.xpose.msra.mxu0 %v3642
      %3659 = vmatprep.subr.bf16.mxu0 0
      %3660 = vmatpush1.bf16.xpose.msra.mxu0 %v3639
      %3661 = vmatprep.subr.bf16.mxu0 0
      %3662 = vmatpush1.bf16.xpose.msra.mxu0 %v3636
      %3663 = vmatprep.subr.bf16.mxu0 0
      %3664 = vmatpush2.bf16.xpose.msra.mxu0 0
      %3665 = vmatprep.subr.bf16.mxu0 0
      %3666 = vmatpush2.bf16.xpose.msra.mxu0 0
      %3667 = vmatprep.subr.bf16.mxu0 0
      %3668 = vmatpush2.bf16.xpose.msra.mxu0 0
      %3669 = vmatprep.subr.bf16.mxu0 0
      %3670 = vmatpush2.bf16.xpose.msra.mxu0 0
      %3671 = vmatprep.subr.bf16.mxu0 0
      %3672 = vmatpush2.bf16.xpose.msra.mxu0 0
      %3673 = vmatprep.subr.bf16.mxu0 0
      %3674 = vmatpush2.bf16.xpose.msra.mxu0 0
      %3675 = vmatprep.subr.bf16.mxu0 0
      %3676 = vmatpush2.bf16.xpose.msra.mxu0 0
      %3677 = vmatprep.subr.bf16.mxu0 0
      %3678 = vmatpush2.bf16.xpose.msra.mxu0 0
      %3679 = vmatprep.mubr.bf16.mxu0 0
      %3680 = vmatmul.mubr.bf16.gmra.mxu0 %v3624
      %v3681 = vpop.f32.mrf.mxu0
      %v3682 = vadd.f32 0.0, %v3681
      %v3683 = vpop.f32.mrf.mxu0
      %v3684 = vpop.f32.mrf.mxu0
      %v3685 = vadd.f32 0.0, %v3684
      %v3686 = vpop.f32.mrf.mxu0
      %3687 = vmatprep.mubr.bf16.mxu0 0
      %3688 = vmatmul.mubr.bf16.gmra.mxu0 %v3627
      %v3689 = vpop.f32.mrf.mxu0
      %v3690 = vadd.f32 0.0, %v3689
      %v3691 = vpop.f32.mrf.mxu0
      %v3692 = vpop.f32.mrf.mxu0
      %v3693 = vadd.f32 0.0, %v3692
      %v3694 = vpop.f32.mrf.mxu0
      %3695 = vmatprep.mubr.bf16.mxu0 0
      %3696 = vmatmul.mubr.bf16.gmra.mxu0 %v3630
      %v3697 = vpop.f32.mrf.mxu0
      %v3698 = vadd.f32 0.0, %v3697
      %v3699 = vpop.f32.mrf.mxu0
      %v3700 = vpop.f32.mrf.mxu0
      %v3701 = vadd.f32 0.0, %v3700
      %v3702 = vpop.f32.mrf.mxu0
      %3703 = vmatprep.mubr.bf16.mxu0 0
      %3704 = vmatmul.mubr.bf16.gmra.mxu0 %v3633
      %v3705 = vpop.f32.mrf.mxu0
      %v3706 = vadd.f32 0.0, %v3705
      %v3707 = vpop.f32.mrf.mxu0
      %v3708 = vpop.f32.mrf.mxu0
      %v3709 = vadd.f32 0.0, %v3708
      %v3710 = vpop.f32.mrf.mxu0
      %3711 = vdwg.mxu0
      %v3713 = vsel %vm2732, %v1944, 0
      %v3716 = vsel %vm2732, %v1945, 0
      %v3719 = vsel %vm2732, %v1946, 0
      %v3722 = vsel %vm2732, %v1947, 0
      %v3725 = vsel %vm2732, %v2328, 0
      %v3728 = vsel %vm2732, %v2329, 0
      %v3731 = vsel %vm2732, %v2330, 0
      %v3734 = vsel %vm2732, %v2331, 0
      %3736 = vmatprep.subr.bf16.mxu0 0
      %3737 = vmatpush1.bf16.xpose.msra.mxu0 0
      %3738 = vmatprep.subr.bf16.mxu0 0
      %3739 = vmatpush1.bf16.xpose.msra.mxu0 0
      %3740 = vmatprep.subr.bf16.mxu0 0
      %3741 = vmatpush1.bf16.xpose.msra.mxu0 0
      %3742 = vmatprep.subr.bf16.mxu0 0
      %3743 = vmatpush1.bf16.xpose.msra.mxu0 0
      %3744 = vmatprep.subr.bf16.mxu0 0
      %3745 = vmatpush1.bf16.xpose.msra.mxu0 %v3734
      %3746 = vmatprep.subr.bf16.mxu0 0
      %3747 = vmatpush1.bf16.xpose.msra.mxu0 %v3731
      %3748 = vmatprep.subr.bf16.mxu0 0
      %3749 = vmatpush1.bf16.xpose.msra.mxu0 %v3728
      %3750 = vmatprep.subr.bf16.mxu0 0
      %3751 = vmatpush1.bf16.xpose.msra.mxu0 %v3725
      %3752 = vmatprep.subr.bf16.mxu0 0
      %3753 = vmatpush2.bf16.xpose.msra.mxu0 0
      %3754 = vmatprep.subr.bf16.mxu0 0
      %3755 = vmatpush2.bf16.xpose.msra.mxu0 0
      %3756 = vmatprep.subr.bf16.mxu0 0
      %3757 = vmatpush2.bf16.xpose.msra.mxu0 0
      %3758 = vmatprep.subr.bf16.mxu0 0
      %3759 = vmatpush2.bf16.xpose.msra.mxu0 0
      %3760 = vmatprep.subr.bf16.mxu0 0
      %3761 = vmatpush2.bf16.xpose.msra.mxu0 0
      %3762 = vmatprep.subr.bf16.mxu0 0
      %3763 = vmatpush2.bf16.xpose.msra.mxu0 0
      %3764 = vmatprep.subr.bf16.mxu0 0
      %3765 = vmatpush2.bf16.xpose.msra.mxu0 0
      %3766 = vmatprep.subr.bf16.mxu0 0
      %3767 = vmatpush2.bf16.xpose.msra.mxu0 0
      %3768 = vmatprep.mubr.bf16.mxu0 0
      %3769 = vmatmul.mubr.bf16.gmra.mxu0 %v3713
      %v3770 = vpop.f32.mrf.mxu0
      %v3771 = vadd.f32 0.0, %v3770
      %v3772 = vpop.f32.mrf.mxu0
      %v3773 = vpop.f32.mrf.mxu0
      %v3774 = vadd.f32 0.0, %v3773
      %v3775 = vpop.f32.mrf.mxu0
      %3776 = vmatprep.mubr.bf16.mxu0 0
      %3777 = vmatmul.mubr.bf16.gmra.mxu0 %v3716
      %v3778 = vpop.f32.mrf.mxu0
      %v3779 = vadd.f32 0.0, %v3778
      %v3780 = vpop.f32.mrf.mxu0
      %v3781 = vpop.f32.mrf.mxu0
      %v3782 = vadd.f32 0.0, %v3781
      %v3783 = vpop.f32.mrf.mxu0
      %3784 = vmatprep.mubr.bf16.mxu0 0
      %3785 = vmatmul.mubr.bf16.gmra.mxu0 %v3719
      %v3786 = vpop.f32.mrf.mxu0
      %v3787 = vadd.f32 0.0, %v3786
      %v3788 = vpop.f32.mrf.mxu0
      %v3789 = vpop.f32.mrf.mxu0
      %v3790 = vadd.f32 0.0, %v3789
      %v3791 = vpop.f32.mrf.mxu0
      %3792 = vmatprep.mubr.bf16.mxu0 0
      %3793 = vmatmul.mubr.bf16.gmra.mxu0 %v3722
      %v3794 = vpop.f32.mrf.mxu0
      %v3795 = vadd.f32 0.0, %v3794
      %v3796 = vpop.f32.mrf.mxu0
      %v3797 = vpop.f32.mrf.mxu0
      %v3798 = vadd.f32 0.0, %v3797
      %v3799 = vpop.f32.mrf.mxu0
      %3800 = vdwg.mxu0
      %v3802 = vsel %vm2732, %v1948, 0
      %v3805 = vsel %vm2732, %v1949, 0
      %v3808 = vsel %vm2732, %v1950, 0
      %v3811 = vsel %vm2732, %v1951, 0
      %v3814 = vsel %vm2732, %v2332, 0
      %v3817 = vsel %vm2732, %v2333, 0
      %v3820 = vsel %vm2732, %v2334, 0
      %v3823 = vsel %vm2732, %v2335, 0
      %3825 = vmatprep.subr.bf16.mxu0 0
      %3826 = vmatpush1.bf16.xpose.msra.mxu0 0
      %3827 = vmatprep.subr.bf16.mxu0 0
      %3828 = vmatpush1.bf16.xpose.msra.mxu0 0
      %3829 = vmatprep.subr.bf16.mxu0 0
      %3830 = vmatpush1.bf16.xpose.msra.mxu0 0
      %3831 = vmatprep.subr.bf16.mxu0 0
      %3832 = vmatpush1.bf16.xpose.msra.mxu0 0
      %3833 = vmatprep.subr.bf16.mxu0 0
      %3834 = vmatpush1.bf16.xpose.msra.mxu0 %v3823
      %3835 = vmatprep.subr.bf16.mxu0 0
      %3836 = vmatpush1.bf16.xpose.msra.mxu0 %v3820
      %3837 = vmatprep.subr.bf16.mxu0 0
      %3838 = vmatpush1.bf16.xpose.msra.mxu0 %v3817
      %3839 = vmatprep.subr.bf16.mxu0 0
      %3840 = vmatpush1.bf16.xpose.msra.mxu0 %v3814
      %3841 = vmatprep.subr.bf16.mxu0 0
      %3842 = vmatpush2.bf16.xpose.msra.mxu0 0
      %3843 = vmatprep.subr.bf16.mxu0 0
      %3844 = vmatpush2.bf16.xpose.msra.mxu0 0
      %3845 = vmatprep.subr.bf16.mxu0 0
      %3846 = vmatpush2.bf16.xpose.msra.mxu0 0
      %3847 = vmatprep.subr.bf16.mxu0 0
      %3848 = vmatpush2.bf16.xpose.msra.mxu0 0
      %3849 = vmatprep.subr.bf16.mxu0 0
      %3850 = vmatpush2.bf16.xpose.msra.mxu0 0
      %3851 = vmatprep.subr.bf16.mxu0 0
      %3852 = vmatpush2.bf16.xpose.msra.mxu0 0
      %3853 = vmatprep.subr.bf16.mxu0 0
      %3854 = vmatpush2.bf16.xpose.msra.mxu0 0
      %3855 = vmatprep.subr.bf16.mxu0 0
      %3856 = vmatpush2.bf16.xpose.msra.mxu0 0
      %3857 = vmatprep.mubr.bf16.mxu0 0
      %3858 = vmatmul.mubr.bf16.gmra.mxu0 %v3802
      %v3859 = vpop.f32.mrf.mxu0
      %v3860 = vadd.f32 0.0, %v3859
      %v3861 = vpop.f32.mrf.mxu0
      %v3862 = vpop.f32.mrf.mxu0
      %v3863 = vadd.f32 0.0, %v3862
      %v3864 = vpop.f32.mrf.mxu0
      %3865 = vmatprep.mubr.bf16.mxu0 0
      %3866 = vmatmul.mubr.bf16.gmra.mxu0 %v3805
      %v3867 = vpop.f32.mrf.mxu0
      %v3868 = vadd.f32 0.0, %v3867
      %v3869 = vpop.f32.mrf.mxu0
      %v3870 = vpop.f32.mrf.mxu0
      %v3871 = vadd.f32 0.0, %v3870
      %v3872 = vpop.f32.mrf.mxu0
      %3873 = vmatprep.mubr.bf16.mxu0 0
      %3874 = vmatmul.mubr.bf16.gmra.mxu0 %v3808
      %v3875 = vpop.f32.mrf.mxu0
      %v3876 = vadd.f32 0.0, %v3875
      %v3877 = vpop.f32.mrf.mxu0
      %v3878 = vpop.f32.mrf.mxu0
      %v3879 = vadd.f32 0.0, %v3878
      %v3880 = vpop.f32.mrf.mxu0
      %3881 = vmatprep.mubr.bf16.mxu0 0
      %3882 = vmatmul.mubr.bf16.gmra.mxu0 %v3811
      %v3883 = vpop.f32.mrf.mxu0
      %v3884 = vadd.f32 0.0, %v3883
      %v3885 = vpop.f32.mrf.mxu0
      %v3886 = vpop.f32.mrf.mxu0
      %v3887 = vadd.f32 0.0, %v3886
      %v3888 = vpop.f32.mrf.mxu0
      %3889 = vdwg.mxu0
      %v3891 = vsel %vm2732, %v1952, 0
      %v3894 = vsel %vm2732, %v1953, 0
      %v3897 = vsel %vm2732, %v1954, 0
      %v3900 = vsel %vm2732, %v1955, 0
      %v3903 = vsel %vm2732, %v2336, 0
      %v3906 = vsel %vm2732, %v2337, 0
      %v3909 = vsel %vm2732, %v2338, 0
      %v3912 = vsel %vm2732, %v2339, 0
      %3914 = vmatprep.subr.bf16.mxu0 0
      %3915 = vmatpush1.bf16.xpose.msra.mxu0 0
      %3916 = vmatprep.subr.bf16.mxu0 0
      %3917 = vmatpush1.bf16.xpose.msra.mxu0 0
      %3918 = vmatprep.subr.bf16.mxu0 0
      %3919 = vmatpush1.bf16.xpose.msra.mxu0 0
      %3920 = vmatprep.subr.bf16.mxu0 0
      %3921 = vmatpush1.bf16.xpose.msra.mxu0 0
      %3922 = vmatprep.subr.bf16.mxu0 0
      %3923 = vmatpush1.bf16.xpose.msra.mxu0 %v3912
      %3924 = vmatprep.subr.bf16.mxu0 0
      %3925 = vmatpush1.bf16.xpose.msra.mxu0 %v3909
      %3926 = vmatprep.subr.bf16.mxu0 0
      %3927 = vmatpush1.bf16.xpose.msra.mxu0 %v3906
      %3928 = vmatprep.subr.bf16.mxu0 0
      %3929 = vmatpush1.bf16.xpose.msra.mxu0 %v3903
      %3930 = vmatprep.subr.bf16.mxu0 0
      %3931 = vmatpush2.bf16.xpose.msra.mxu0 0
      %3932 = vmatprep.subr.bf16.mxu0 0
      %3933 = vmatpush2.bf16.xpose.msra.mxu0 0
      %3934 = vmatprep.subr.bf16.mxu0 0
      %3935 = vmatpush2.bf16.xpose.msra.mxu0 0
      %3936 = vmatprep.subr.bf16.mxu0 0
      %3937 = vmatpush2.bf16.xpose.msra.mxu0 0
      %3938 = vmatprep.subr.bf16.mxu0 0
      %3939 = vmatpush2.bf16.xpose.msra.mxu0 0
      %3940 = vmatprep.subr.bf16.mxu0 0
      %3941 = vmatpush2.bf16.xpose.msra.mxu0 0
      %3942 = vmatprep.subr.bf16.mxu0 0
      %3943 = vmatpush2.bf16.xpose.msra.mxu0 0
      %3944 = vmatprep.subr.bf16.mxu0 0
      %3945 = vmatpush2.bf16.xpose.msra.mxu0 0
      %3946 = vmatprep.mubr.bf16.mxu0 0
      %3947 = vmatmul.mubr.bf16.gmra.mxu0 %v3891
      %v3948 = vpop.f32.mrf.mxu0
      %v3949 = vadd.f32 0.0, %v3948
      %v3950 = vpop.f32.mrf.mxu0
      %v3951 = vpop.f32.mrf.mxu0
      %v3952 = vadd.f32 0.0, %v3951
      %v3953 = vpop.f32.mrf.mxu0
      %3954 = vmatprep.mubr.bf16.mxu0 0
      %3955 = vmatmul.mubr.bf16.gmra.mxu0 %v3894
      %v3956 = vpop.f32.mrf.mxu0
      %v3957 = vadd.f32 0.0, %v3956
      %v3958 = vpop.f32.mrf.mxu0
      %v3959 = vpop.f32.mrf.mxu0
      %v3960 = vadd.f32 0.0, %v3959
      %v3961 = vpop.f32.mrf.mxu0
      %3962 = vmatprep.mubr.bf16.mxu0 0
      %3963 = vmatmul.mubr.bf16.gmra.mxu0 %v3897
      %v3964 = vpop.f32.mrf.mxu0
      %v3965 = vadd.f32 0.0, %v3964
      %v3966 = vpop.f32.mrf.mxu0
      %v3967 = vpop.f32.mrf.mxu0
      %v3968 = vadd.f32 0.0, %v3967
      %v3969 = vpop.f32.mrf.mxu0
      %3970 = vmatprep.mubr.bf16.mxu0 0
      %3971 = vmatmul.mubr.bf16.gmra.mxu0 %v3900
      %v3972 = vpop.f32.mrf.mxu0
      %v3973 = vadd.f32 0.0, %v3972
      %v3974 = vpop.f32.mrf.mxu0
      %v3975 = vpop.f32.mrf.mxu0
      %v3976 = vadd.f32 0.0, %v3975
      %v3977 = vpop.f32.mrf.mxu0
      %3978 = vdwg.mxu0
      %v3980 = vsel %vm2732, %v1956, 0
      %v3983 = vsel %vm2732, %v1957, 0
      %v3986 = vsel %vm2732, %v1958, 0
      %v3989 = vsel %vm2732, %v1959, 0
      %v3992 = vsel %vm2732, %v2340, 0
      %v3995 = vsel %vm2732, %v2341, 0
      %v3998 = vsel %vm2732, %v2342, 0
      %v4001 = vsel %vm2732, %v2343, 0
      %4003 = vmatprep.subr.bf16.mxu0 0
      %4004 = vmatpush1.bf16.xpose.msra.mxu0 0
      %4005 = vmatprep.subr.bf16.mxu0 0
      %4006 = vmatpush1.bf16.xpose.msra.mxu0 0
      %4007 = vmatprep.subr.bf16.mxu0 0
      %4008 = vmatpush1.bf16.xpose.msra.mxu0 0
      %4009 = vmatprep.subr.bf16.mxu0 0
      %4010 = vmatpush1.bf16.xpose.msra.mxu0 0
      %4011 = vmatprep.subr.bf16.mxu0 0
      %4012 = vmatpush1.bf16.xpose.msra.mxu0 %v4001
      %4013 = vmatprep.subr.bf16.mxu0 0
      %4014 = vmatpush1.bf16.xpose.msra.mxu0 %v3998
      %4015 = vmatprep.subr.bf16.mxu0 0
      %4016 = vmatpush1.bf16.xpose.msra.mxu0 %v3995
      %4017 = vmatprep.subr.bf16.mxu0 0
      %4018 = vmatpush1.bf16.xpose.msra.mxu0 %v3992
      %4019 = vmatprep.subr.bf16.mxu0 0
      %4020 = vmatpush2.bf16.xpose.msra.mxu0 0
      %4021 = vmatprep.subr.bf16.mxu0 0
      %4022 = vmatpush2.bf16.xpose.msra.mxu0 0
      %4023 = vmatprep.subr.bf16.mxu0 0
      %4024 = vmatpush2.bf16.xpose.msra.mxu0 0
      %4025 = vmatprep.subr.bf16.mxu0 0
      %4026 = vmatpush2.bf16.xpose.msra.mxu0 0
      %4027 = vmatprep.subr.bf16.mxu0 0
      %4028 = vmatpush2.bf16.xpose.msra.mxu0 0
      %4029 = vmatprep.subr.bf16.mxu0 0
      %4030 = vmatpush2.bf16.xpose.msra.mxu0 0
      %4031 = vmatprep.subr.bf16.mxu0 0
      %4032 = vmatpush2.bf16.xpose.msra.mxu0 0
      %4033 = vmatprep.subr.bf16.mxu0 0
      %4034 = vmatpush2.bf16.xpose.msra.mxu0 0
      %4035 = vmatprep.mubr.bf16.mxu0 0
      %4036 = vmatmul.mubr.bf16.gmra.mxu0 %v3980
      %v4037 = vpop.f32.mrf.mxu0
      %v4038 = vadd.f32 0.0, %v4037
      %v4039 = vpop.f32.mrf.mxu0
      %v4040 = vpop.f32.mrf.mxu0
      %v4041 = vadd.f32 0.0, %v4040
      %v4042 = vpop.f32.mrf.mxu0
      %4043 = vmatprep.mubr.bf16.mxu0 0
      %4044 = vmatmul.mubr.bf16.gmra.mxu0 %v3983
      %v4045 = vpop.f32.mrf.mxu0
      %v4046 = vadd.f32 0.0, %v4045
      %v4047 = vpop.f32.mrf.mxu0
      %v4048 = vpop.f32.mrf.mxu0
      %v4049 = vadd.f32 0.0, %v4048
      %v4050 = vpop.f32.mrf.mxu0
      %4051 = vmatprep.mubr.bf16.mxu0 0
      %4052 = vmatmul.mubr.bf16.gmra.mxu0 %v3986
      %v4053 = vpop.f32.mrf.mxu0
      %v4054 = vadd.f32 0.0, %v4053
      %v4055 = vpop.f32.mrf.mxu0
      %v4056 = vpop.f32.mrf.mxu0
      %v4057 = vadd.f32 0.0, %v4056
      %v4058 = vpop.f32.mrf.mxu0
      %4059 = vmatprep.mubr.bf16.mxu0 0
      %4060 = vmatmul.mubr.bf16.gmra.mxu0 %v3989
      %v4061 = vpop.f32.mrf.mxu0
      %v4062 = vadd.f32 0.0, %v4061
      %v4063 = vpop.f32.mrf.mxu0
      %v4064 = vpop.f32.mrf.mxu0
      %v4065 = vadd.f32 0.0, %v4064
      %v4066 = vpop.f32.mrf.mxu0
      %4067 = vdwg.mxu0
      %v4069 = vsel %vm2732, %v1960, 0
      %v4072 = vsel %vm2732, %v1961, 0
      %v4075 = vsel %vm2732, %v1962, 0
      %v4078 = vsel %vm2732, %v1963, 0
      %v4081 = vsel %vm2732, %v2344, 0
      %v4084 = vsel %vm2732, %v2345, 0
      %v4087 = vsel %vm2732, %v2346, 0
      %v4090 = vsel %vm2732, %v2347, 0
      %4092 = vmatprep.subr.bf16.mxu0 0
      %4093 = vmatpush1.bf16.xpose.msra.mxu0 0
      %4094 = vmatprep.subr.bf16.mxu0 0
      %4095 = vmatpush1.bf16.xpose.msra.mxu0 0
      %4096 = vmatprep.subr.bf16.mxu0 0
      %4097 = vmatpush1.bf16.xpose.msra.mxu0 0
      %4098 = vmatprep.subr.bf16.mxu0 0
      %4099 = vmatpush1.bf16.xpose.msra.mxu0 0
      %4100 = vmatprep.subr.bf16.mxu0 0
      %4101 = vmatpush1.bf16.xpose.msra.mxu0 %v4090
      %4102 = vmatprep.subr.bf16.mxu0 0
      %4103 = vmatpush1.bf16.xpose.msra.mxu0 %v4087
      %4104 = vmatprep.subr.bf16.mxu0 0
      %4105 = vmatpush1.bf16.xpose.msra.mxu0 %v4084
      %4106 = vmatprep.subr.bf16.mxu0 0
      %4107 = vmatpush1.bf16.xpose.msra.mxu0 %v4081
      %4108 = vmatprep.subr.bf16.mxu0 0
      %4109 = vmatpush2.bf16.xpose.msra.mxu0 0
      %4110 = vmatprep.subr.bf16.mxu0 0
      %4111 = vmatpush2.bf16.xpose.msra.mxu0 0
      %4112 = vmatprep.subr.bf16.mxu0 0
      %4113 = vmatpush2.bf16.xpose.msra.mxu0 0
      %4114 = vmatprep.subr.bf16.mxu0 0
      %4115 = vmatpush2.bf16.xpose.msra.mxu0 0
      %4116 = vmatprep.subr.bf16.mxu0 0
      %4117 = vmatpush2.bf16.xpose.msra.mxu0 0
      %4118 = vmatprep.subr.bf16.mxu0 0
      %4119 = vmatpush2.bf16.xpose.msra.mxu0 0
      %4120 = vmatprep.subr.bf16.mxu0 0
      %4121 = vmatpush2.bf16.xpose.msra.mxu0 0
      %4122 = vmatprep.subr.bf16.mxu0 0
      %4123 = vmatpush2.bf16.xpose.msra.mxu0 0
      %4124 = vmatprep.mubr.bf16.mxu0 0
      %4125 = vmatmul.mubr.bf16.gmra.mxu0 %v4069
      %v4126 = vpop.f32.mrf.mxu0
      %v4127 = vadd.f32 0.0, %v4126
      %v4128 = vpop.f32.mrf.mxu0
      %v4129 = vpop.f32.mrf.mxu0
      %v4130 = vadd.f32 0.0, %v4129
      %v4131 = vpop.f32.mrf.mxu0
      %4132 = vmatprep.mubr.bf16.mxu0 0
      %4133 = vmatmul.mubr.bf16.gmra.mxu0 %v4072
      %v4134 = vpop.f32.mrf.mxu0
      %v4135 = vadd.f32 0.0, %v4134
      %v4136 = vpop.f32.mrf.mxu0
      %v4137 = vpop.f32.mrf.mxu0
      %v4138 = vadd.f32 0.0, %v4137
      %v4139 = vpop.f32.mrf.mxu0
      %4140 = vmatprep.mubr.bf16.mxu0 0
      %4141 = vmatmul.mubr.bf16.gmra.mxu0 %v4075
      %v4142 = vpop.f32.mrf.mxu0
      %v4143 = vadd.f32 0.0, %v4142
      %v4144 = vpop.f32.mrf.mxu0
      %v4145 = vpop.f32.mrf.mxu0
      %v4146 = vadd.f32 0.0, %v4145
      %v4147 = vpop.f32.mrf.mxu0
      %4148 = vmatprep.mubr.bf16.mxu0 0
      %4149 = vmatmul.mubr.bf16.gmra.mxu0 %v4078
      %v4150 = vpop.f32.mrf.mxu0
      %v4151 = vadd.f32 0.0, %v4150
      %v4152 = vpop.f32.mrf.mxu0
      %v4153 = vpop.f32.mrf.mxu0
      %v4154 = vadd.f32 0.0, %v4153
      %v4155 = vpop.f32.mrf.mxu0
      %4156 = vdwg.mxu0
      %v4157 = vld [vmem:[%s524] sm:$0xff]
      %v4158 = vld [vmem:[%s524 + $0x8] sm:$0xff]
      %v4159 = vld [vmem:[%s524 + $0x10] sm:$0xff]
      %v4160 = vld [vmem:[%s524 + $0x18] sm:$0xff]
      %v4161 = vld [vmem:[%s524 + $0x20] sm:$0xff]
      %v4162 = vld [vmem:[%s524 + $0x28] sm:$0xff]
      %v4163 = vld [vmem:[%s524 + $0x30] sm:$0xff]
      %v4164 = vld [vmem:[%s524 + $0x38] sm:$0xff]
      %v4165 = vld [vmem:[%s524 + $0x40] sm:$0xff]
      %v4166 = vld [vmem:[%s524 + $0x48] sm:$0xff]
      %v4167 = vld [vmem:[%s524 + $0x50] sm:$0xff]
      %v4168 = vld [vmem:[%s524 + $0x58] sm:$0xff]
      %v4169 = vld [vmem:[%s524 + $0x60] sm:$0xff]
      %v4170 = vld [vmem:[%s524 + $0x68] sm:$0xff]
      %v4171 = vld [vmem:[%s524 + $0x70] sm:$0xff]
      %v4172 = vld [vmem:[%s524 + $0x78] sm:$0xff]
      %v4173 = vld [vmem:[%s524 + $0x80] sm:$0xff]
      %v4174 = vld [vmem:[%s524 + $0x88] sm:$0xff]
      %v4175 = vld [vmem:[%s524 + $0x90] sm:$0xff]
      %v4176 = vld [vmem:[%s524 + $0x98] sm:$0xff]
      %v4177 = vld [vmem:[%s524 + $0xa0] sm:$0xff]
      %v4178 = vld [vmem:[%s524 + $0xa8] sm:$0xff]
      %v4179 = vld [vmem:[%s524 + $0xb0] sm:$0xff]
      %v4180 = vld [vmem:[%s524 + $0xb8] sm:$0xff]
      %v4181 = vld [vmem:[%s524 + $0xc0] sm:$0xff]
      %v4182 = vld [vmem:[%s524 + $0xc8] sm:$0xff]
      %v4183 = vld [vmem:[%s524 + $0xd0] sm:$0xff]
      %v4184 = vld [vmem:[%s524 + $0xd8] sm:$0xff]
      %v4185 = vld [vmem:[%s524 + $0xe0] sm:$0xff]
      %v4186 = vld [vmem:[%s524 + $0xe8] sm:$0xff]
      %v4187 = vld [vmem:[%s524 + $0xf0] sm:$0xff]
      %v4188 = vld [vmem:[%s524 + $0xf8] sm:$0xff]
      %v4189 = vld [vmem:[%s524 + $0x100] sm:$0xff]
      %v4190 = vld [vmem:[%s524 + $0x108] sm:$0xff]
      %v4191 = vld [vmem:[%s524 + $0x110] sm:$0xff]
      %v4192 = vld [vmem:[%s524 + $0x118] sm:$0xff]
      %v4193 = vld [vmem:[%s524 + $0x120] sm:$0xff]
      %v4194 = vld [vmem:[%s524 + $0x128] sm:$0xff]
      %v4195 = vld [vmem:[%s524 + $0x130] sm:$0xff]
      %v4196 = vld [vmem:[%s524 + $0x138] sm:$0xff]
      %v4197 = vld [vmem:[%s524 + $0x140] sm:$0xff]
      %v4198 = vld [vmem:[%s524 + $0x148] sm:$0xff]
      %v4199 = vld [vmem:[%s524 + $0x150] sm:$0xff]
      %v4200 = vld [vmem:[%s524 + $0x158] sm:$0xff]
      %v4201 = vld [vmem:[%s524 + $0x160] sm:$0xff]
      %v4202 = vld [vmem:[%s524 + $0x168] sm:$0xff]
      %v4203 = vld [vmem:[%s524 + $0x170] sm:$0xff]
      %v4204 = vld [vmem:[%s524 + $0x178] sm:$0xff]
      %v4205 = vld [vmem:[%s524 + $0x180] sm:$0xff]
      %v4206 = vld [vmem:[%s524 + $0x188] sm:$0xff]
      %v4207 = vld [vmem:[%s524 + $0x190] sm:$0xff]
      %v4208 = vld [vmem:[%s524 + $0x198] sm:$0xff]
      %v4209 = vld [vmem:[%s524 + $0x1a0] sm:$0xff]
      %v4210 = vld [vmem:[%s524 + $0x1a8] sm:$0xff]
      %v4211 = vld [vmem:[%s524 + $0x1b0] sm:$0xff]
      %v4212 = vld [vmem:[%s524 + $0x1b8] sm:$0xff]
      %v4213 = vld [vmem:[%s524 + $0x1c0] sm:$0xff]
      %v4214 = vld [vmem:[%s524 + $0x1c8] sm:$0xff]
      %v4215 = vld [vmem:[%s524 + $0x1d0] sm:$0xff]
      %v4216 = vld [vmem:[%s524 + $0x1d8] sm:$0xff]
      %v4217 = vld [vmem:[%s524 + $0x1e0] sm:$0xff]
      %v4218 = vld [vmem:[%s524 + $0x1e8] sm:$0xff]
      %v4219 = vld [vmem:[%s524 + $0x1f0] sm:$0xff]
      %v4220 = vld [vmem:[%s524 + $0x1f8] sm:$0xff]
      %v4221 = vld [vmem:[%s524 + $0x200] sm:$0xff]
      %v4222 = vld [vmem:[%s524 + $0x208] sm:$0xff]
      %v4223 = vld [vmem:[%s524 + $0x210] sm:$0xff]
      %v4224 = vld [vmem:[%s524 + $0x218] sm:$0xff]
      %v4225 = vld [vmem:[%s524 + $0x220] sm:$0xff]
      %v4226 = vld [vmem:[%s524 + $0x228] sm:$0xff]
      %v4227 = vld [vmem:[%s524 + $0x230] sm:$0xff]
      %v4228 = vld [vmem:[%s524 + $0x238] sm:$0xff]
      %v4229 = vld [vmem:[%s524 + $0x240] sm:$0xff]
      %v4230 = vld [vmem:[%s524 + $0x248] sm:$0xff]
      %v4231 = vld [vmem:[%s524 + $0x250] sm:$0xff]
      %v4232 = vld [vmem:[%s524 + $0x258] sm:$0xff]
      %v4233 = vld [vmem:[%s524 + $0x260] sm:$0xff]
      %v4234 = vld [vmem:[%s524 + $0x268] sm:$0xff]
      %v4235 = vld [vmem:[%s524 + $0x270] sm:$0xff]
      %v4236 = vld [vmem:[%s524 + $0x278] sm:$0xff]
      %v4237 = vld [vmem:[%s524 + $0x280] sm:$0xff]
      %v4238 = vld [vmem:[%s524 + $0x288] sm:$0xff]
      %v4239 = vld [vmem:[%s524 + $0x290] sm:$0xff]
      %v4240 = vld [vmem:[%s524 + $0x298] sm:$0xff]
      %v4241 = vld [vmem:[%s524 + $0x2a0] sm:$0xff]
      %v4242 = vld [vmem:[%s524 + $0x2a8] sm:$0xff]
      %v4243 = vld [vmem:[%s524 + $0x2b0] sm:$0xff]
      %v4244 = vld [vmem:[%s524 + $0x2b8] sm:$0xff]
      %v4245 = vld [vmem:[%s524 + $0x2c0] sm:$0xff]
      %v4246 = vld [vmem:[%s524 + $0x2c8] sm:$0xff]
      %v4247 = vld [vmem:[%s524 + $0x2d0] sm:$0xff]
      %v4248 = vld [vmem:[%s524 + $0x2d8] sm:$0xff]
      %v4249 = vld [vmem:[%s524 + $0x2e0] sm:$0xff]
      %v4250 = vld [vmem:[%s524 + $0x2e8] sm:$0xff]
      %v4251 = vld [vmem:[%s524 + $0x2f0] sm:$0xff]
      %v4252 = vld [vmem:[%s524 + $0x2f8] sm:$0xff]
      %v4253 = vld [vmem:[%s524 + $0x300] sm:$0xff]
      %v4254 = vld [vmem:[%s524 + $0x308] sm:$0xff]
      %v4255 = vld [vmem:[%s524 + $0x310] sm:$0xff]
      %v4256 = vld [vmem:[%s524 + $0x318] sm:$0xff]
      %v4257 = vld [vmem:[%s524 + $0x320] sm:$0xff]
      %v4258 = vld [vmem:[%s524 + $0x328] sm:$0xff]
      %v4259 = vld [vmem:[%s524 + $0x330] sm:$0xff]
      %v4260 = vld [vmem:[%s524 + $0x338] sm:$0xff]
      %v4261 = vld [vmem:[%s524 + $0x340] sm:$0xff]
      %v4262 = vld [vmem:[%s524 + $0x348] sm:$0xff]
      %v4263 = vld [vmem:[%s524 + $0x350] sm:$0xff]
      %v4264 = vld [vmem:[%s524 + $0x358] sm:$0xff]
      %v4265 = vld [vmem:[%s524 + $0x360] sm:$0xff]
      %v4266 = vld [vmem:[%s524 + $0x368] sm:$0xff]
      %v4267 = vld [vmem:[%s524 + $0x370] sm:$0xff]
      %v4268 = vld [vmem:[%s524 + $0x378] sm:$0xff]
      %v4269 = vld [vmem:[%s524 + $0x380] sm:$0xff]
      %v4270 = vld [vmem:[%s524 + $0x388] sm:$0xff]
      %v4271 = vld [vmem:[%s524 + $0x390] sm:$0xff]
      %v4272 = vld [vmem:[%s524 + $0x398] sm:$0xff]
      %v4273 = vld [vmem:[%s524 + $0x3a0] sm:$0xff]
      %v4274 = vld [vmem:[%s524 + $0x3a8] sm:$0xff]
      %v4275 = vld [vmem:[%s524 + $0x3b0] sm:$0xff]
      %v4276 = vld [vmem:[%s524 + $0x3b8] sm:$0xff]
      %v4277 = vld [vmem:[%s524 + $0x3c0] sm:$0xff]
      %v4278 = vld [vmem:[%s524 + $0x3c8] sm:$0xff]
      %v4279 = vld [vmem:[%s524 + $0x3d0] sm:$0xff]
      %v4280 = vld [vmem:[%s524 + $0x3d8] sm:$0xff]
      %v4281 = vld [vmem:[%s524 + $0x3e0] sm:$0xff]
      %v4282 = vld [vmem:[%s524 + $0x3e8] sm:$0xff]
      %v4283 = vld [vmem:[%s524 + $0x3f0] sm:$0xff]
      %v4284 = vld [vmem:[%s524 + $0x3f8] sm:$0xff]
      %v4285 = vadd.f32 %v2792, %v4157
      %v4286 = vadd.f32 %v2795, %v4158
      %v4287 = vadd.f32 %v2800, %v4159
      %v4288 = vadd.f32 %v2803, %v4160
      %v4289 = vadd.f32 %v2808, %v4161
      %v4290 = vadd.f32 %v2811, %v4162
      %v4291 = vadd.f32 %v2816, %v4163
      %v4292 = vadd.f32 %v2819, %v4164
      %v4293 = vadd.f32 %v2881, %v4165
      %v4294 = vadd.f32 %v2884, %v4166
      %v4295 = vadd.f32 %v2889, %v4167
      %v4296 = vadd.f32 %v2892, %v4168
      %v4297 = vadd.f32 %v2897, %v4169
      %v4298 = vadd.f32 %v2900, %v4170
      %v4299 = vadd.f32 %v2905, %v4171
      %v4300 = vadd.f32 %v2908, %v4172
      %v4301 = vadd.f32 %v2970, %v4173
      %v4302 = vadd.f32 %v2973, %v4174
      %v4303 = vadd.f32 %v2978, %v4175
      %v4304 = vadd.f32 %v2981, %v4176
      %v4305 = vadd.f32 %v2986, %v4177
      %v4306 = vadd.f32 %v2989, %v4178
      %v4307 = vadd.f32 %v2994, %v4179
      %v4308 = vadd.f32 %v2997, %v4180
      %v4309 = vadd.f32 %v3059, %v4181
      %v4310 = vadd.f32 %v3062, %v4182
      %v4311 = vadd.f32 %v3067, %v4183
      %v4312 = vadd.f32 %v3070, %v4184
      %v4313 = vadd.f32 %v3075, %v4185
      %v4314 = vadd.f32 %v3078, %v4186
      %v4315 = vadd.f32 %v3083, %v4187
      %v4316 = vadd.f32 %v3086, %v4188
      %v4317 = vadd.f32 %v3148, %v4189
      %v4318 = vadd.f32 %v3151, %v4190
      %v4319 = vadd.f32 %v3156, %v4191
      %v4320 = vadd.f32 %v3159, %v4192
      %v4321 = vadd.f32 %v3164, %v4193
      %v4322 = vadd.f32 %v3167, %v4194
      %v4323 = vadd.f32 %v3172, %v4195
      %v4324 = vadd.f32 %v3175, %v4196
      %v4325 = vadd.f32 %v3237, %v4197
      %v4326 = vadd.f32 %v3240, %v4198
      %v4327 = vadd.f32 %v3245, %v4199
      %v4328 = vadd.f32 %v3248, %v4200
      %v4329 = vadd.f32 %v3253, %v4201
      %v4330 = vadd.f32 %v3256, %v4202
      %v4331 = vadd.f32 %v3261, %v4203
      %v4332 = vadd.f32 %v3264, %v4204
      %v4333 = vadd.f32 %v3326, %v4205
      %v4334 = vadd.f32 %v3329, %v4206
      %v4335 = vadd.f32 %v3334, %v4207
      %v4336 = vadd.f32 %v3337, %v4208
      %v4337 = vadd.f32 %v3342, %v4209
      %v4338 = vadd.f32 %v3345, %v4210
      %v4339 = vadd.f32 %v3350, %v4211
      %v4340 = vadd.f32 %v3353, %v4212
      %v4341 = vadd.f32 %v3415, %v4213
      %v4342 = vadd.f32 %v3418, %v4214
      %v4343 = vadd.f32 %v3423, %v4215
      %v4344 = vadd.f32 %v3426, %v4216
      %v4345 = vadd.f32 %v3431, %v4217
      %v4346 = vadd.f32 %v3434, %v4218
      %v4347 = vadd.f32 %v3439, %v4219
      %v4348 = vadd.f32 %v3442, %v4220
      %v4349 = vadd.f32 %v3504, %v4221
      %v4350 = vadd.f32 %v3507, %v4222
      %v4351 = vadd.f32 %v3512, %v4223
      %v4352 = vadd.f32 %v3515, %v4224
      %v4353 = vadd.f32 %v3520, %v4225
      %v4354 = vadd.f32 %v3523, %v4226
      %v4355 = vadd.f32 %v3528, %v4227
      %v4356 = vadd.f32 %v3531, %v4228
      %v4357 = vadd.f32 %v3593, %v4229
      %v4358 = vadd.f32 %v3596, %v4230
      %v4359 = vadd.f32 %v3601, %v4231
      %v4360 = vadd.f32 %v3604, %v4232
      %v4361 = vadd.f32 %v3609, %v4233
      %v4362 = vadd.f32 %v3612, %v4234
      %v4363 = vadd.f32 %v3617, %v4235
      %v4364 = vadd.f32 %v3620, %v4236
      %v4365 = vadd.f32 %v3682, %v4237
      %v4366 = vadd.f32 %v3685, %v4238
      %v4367 = vadd.f32 %v3690, %v4239
      %v4368 = vadd.f32 %v3693, %v4240
      %v4369 = vadd.f32 %v3698, %v4241
      %v4370 = vadd.f32 %v3701, %v4242
      %v4371 = vadd.f32 %v3706, %v4243
      %v4372 = vadd.f32 %v3709, %v4244
      %v4373 = vadd.f32 %v3771, %v4245
      %v4374 = vadd.f32 %v3774, %v4246
      %v4375 = vadd.f32 %v3779, %v4247
      %v4376 = vadd.f32 %v3782, %v4248
      %v4377 = vadd.f32 %v3787, %v4249
      %v4378 = vadd.f32 %v3790, %v4250
      %v4379 = vadd.f32 %v3795, %v4251
      %v4380 = vadd.f32 %v3798, %v4252
      %v4381 = vadd.f32 %v3860, %v4253
      %v4382 = vadd.f32 %v3863, %v4254
      %v4383 = vadd.f32 %v3868, %v4255
      %v4384 = vadd.f32 %v3871, %v4256
      %v4385 = vadd.f32 %v3876, %v4257
      %v4386 = vadd.f32 %v3879, %v4258
      %v4387 = vadd.f32 %v3884, %v4259
      %v4388 = vadd.f32 %v3887, %v4260
      %v4389 = vadd.f32 %v3949, %v4261
      %v4390 = vadd.f32 %v3952, %v4262
      %v4391 = vadd.f32 %v3957, %v4263
      %v4392 = vadd.f32 %v3960, %v4264
      %v4393 = vadd.f32 %v3965, %v4265
      %v4394 = vadd.f32 %v3968, %v4266
      %v4395 = vadd.f32 %v3973, %v4267
      %v4396 = vadd.f32 %v3976, %v4268
      %v4397 = vadd.f32 %v4038, %v4269
      %v4398 = vadd.f32 %v4041, %v4270
      %v4399 = vadd.f32 %v4046, %v4271
      %v4400 = vadd.f32 %v4049, %v4272
      %v4401 = vadd.f32 %v4054, %v4273
      %v4402 = vadd.f32 %v4057, %v4274
      %v4403 = vadd.f32 %v4062, %v4275
      %v4404 = vadd.f32 %v4065, %v4276
      %v4405 = vadd.f32 %v4127, %v4277
      %v4406 = vadd.f32 %v4130, %v4278
      %v4407 = vadd.f32 %v4135, %v4279
      %v4408 = vadd.f32 %v4138, %v4280
      %v4409 = vadd.f32 %v4143, %v4281
      %v4410 = vadd.f32 %v4146, %v4282
      %v4411 = vadd.f32 %v4151, %v4283
      %v4412 = vadd.f32 %v4154, %v4284
      %vm4413 = vcmask 523264
      %v4414 = vsel %vm4413, %v4285, -inf
      %4415 = vmax.xlane.f32.xlu0 %v4414
      %v4416 = vpop.xlane.xlu0 %4415
      %v4417 = vsel %vm4413, %v4286, -inf
      %4418 = vmax.xlane.f32.xlu0 %v4417
      %v4419 = vpop.xlane.xlu0 %4418
      %v4420 = vsel %vm4413, %v4287, -inf
      %4421 = vmax.xlane.f32.xlu0 %v4420
      %v4422 = vpop.xlane.xlu0 %4421
      %v4423 = vsel %vm4413, %v4288, -inf
      %4424 = vmax.xlane.f32.xlu0 %v4423
      %v4425 = vpop.xlane.xlu0 %4424
      %v4426 = vsel %vm4413, %v4289, -inf
      %4427 = vmax.xlane.f32.xlu0 %v4426
      %v4428 = vpop.xlane.xlu0 %4427
      %v4429 = vsel %vm4413, %v4290, -inf
      %4430 = vmax.xlane.f32.xlu0 %v4429
      %v4431 = vpop.xlane.xlu0 %4430
      %v4432 = vsel %vm4413, %v4291, -inf
      %4433 = vmax.xlane.f32.xlu0 %v4432
      %v4434 = vpop.xlane.xlu0 %4433
      %v4435 = vsel %vm4413, %v4292, -inf
      %4436 = vmax.xlane.f32.xlu0 %v4435
      %v4437 = vpop.xlane.xlu0 %4436
      %v4438 = vsel %vm4413, %v4293, -inf
      %4439 = vmax.xlane.f32.xlu0 %v4438
      %v4440 = vpop.xlane.xlu0 %4439
      %v4441 = vsel %vm4413, %v4294, -inf
      %4442 = vmax.xlane.f32.xlu0 %v4441
      %v4443 = vpop.xlane.xlu0 %4442
      %v4444 = vsel %vm4413, %v4295, -inf
      %4445 = vmax.xlane.f32.xlu0 %v4444
      %v4446 = vpop.xlane.xlu0 %4445
      %v4447 = vsel %vm4413, %v4296, -inf
      %4448 = vmax.xlane.f32.xlu0 %v4447
      %v4449 = vpop.xlane.xlu0 %4448
      %v4450 = vsel %vm4413, %v4297, -inf
      %4451 = vmax.xlane.f32.xlu0 %v4450
      %v4452 = vpop.xlane.xlu0 %4451
      %v4453 = vsel %vm4413, %v4298, -inf
      %4454 = vmax.xlane.f32.xlu0 %v4453
      %v4455 = vpop.xlane.xlu0 %4454
      %v4456 = vsel %vm4413, %v4299, -inf
      %4457 = vmax.xlane.f32.xlu0 %v4456
      %v4458 = vpop.xlane.xlu0 %4457
      %v4459 = vsel %vm4413, %v4300, -inf
      %4460 = vmax.xlane.f32.xlu0 %v4459
      %v4461 = vpop.xlane.xlu0 %4460
      %v4462 = vsel %vm4413, %v4301, -inf
      %4463 = vmax.xlane.f32.xlu0 %v4462
      %v4464 = vpop.xlane.xlu0 %4463
      %v4465 = vsel %vm4413, %v4302, -inf
      %4466 = vmax.xlane.f32.xlu0 %v4465
      %v4467 = vpop.xlane.xlu0 %4466
      %v4468 = vsel %vm4413, %v4303, -inf
      %4469 = vmax.xlane.f32.xlu0 %v4468
      %v4470 = vpop.xlane.xlu0 %4469
      %v4471 = vsel %vm4413, %v4304, -inf
      %4472 = vmax.xlane.f32.xlu0 %v4471
      %v4473 = vpop.xlane.xlu0 %4472
      %v4474 = vsel %vm4413, %v4305, -inf
      %4475 = vmax.xlane.f32.xlu0 %v4474
      %v4476 = vpop.xlane.xlu0 %4475
      %v4477 = vsel %vm4413, %v4306, -inf
      %4478 = vmax.xlane.f32.xlu0 %v4477
      %v4479 = vpop.xlane.xlu0 %4478
      %v4480 = vsel %vm4413, %v4307, -inf
      %4481 = vmax.xlane.f32.xlu0 %v4480
      %v4482 = vpop.xlane.xlu0 %4481
      %v4483 = vsel %vm4413, %v4308, -inf
      %4484 = vmax.xlane.f32.xlu0 %v4483
      %v4485 = vpop.xlane.xlu0 %4484
      %v4486 = vsel %vm4413, %v4309, -inf
      %4487 = vmax.xlane.f32.xlu0 %v4486
      %v4488 = vpop.xlane.xlu0 %4487
      %v4489 = vsel %vm4413, %v4310, -inf
      %4490 = vmax.xlane.f32.xlu0 %v4489
      %v4491 = vpop.xlane.xlu0 %4490
      %v4492 = vsel %vm4413, %v4311, -inf
      %4493 = vmax.xlane.f32.xlu0 %v4492
      %v4494 = vpop.xlane.xlu0 %4493
      %v4495 = vsel %vm4413, %v4312, -inf
      %4496 = vmax.xlane.f32.xlu0 %v4495
      %v4497 = vpop.xlane.xlu0 %4496
      %v4498 = vsel %vm4413, %v4313, -inf
      %4499 = vmax.xlane.f32.xlu0 %v4498
      %v4500 = vpop.xlane.xlu0 %4499
      %v4501 = vsel %vm4413, %v4314, -inf
      %4502 = vmax.xlane.f32.xlu0 %v4501
      %v4503 = vpop.xlane.xlu0 %4502
      %v4504 = vsel %vm4413, %v4315, -inf
      %4505 = vmax.xlane.f32.xlu0 %v4504
      %v4506 = vpop.xlane.xlu0 %4505
      %v4507 = vsel %vm4413, %v4316, -inf
      %4508 = vmax.xlane.f32.xlu0 %v4507
      %v4509 = vpop.xlane.xlu0 %4508
      %v4510 = vsel %vm4413, %v4317, -inf
      %4511 = vmax.xlane.f32.xlu0 %v4510
      %v4512 = vpop.xlane.xlu0 %4511
      %v4513 = vsel %vm4413, %v4318, -inf
      %4514 = vmax.xlane.f32.xlu0 %v4513
      %v4515 = vpop.xlane.xlu0 %4514
      %v4516 = vsel %vm4413, %v4319, -inf
      %4517 = vmax.xlane.f32.xlu0 %v4516
      %v4518 = vpop.xlane.xlu0 %4517
      %v4519 = vsel %vm4413, %v4320, -inf
      %4520 = vmax.xlane.f32.xlu0 %v4519
      %v4521 = vpop.xlane.xlu0 %4520
      %v4522 = vsel %vm4413, %v4321, -inf
      %4523 = vmax.xlane.f32.xlu0 %v4522
      %v4524 = vpop.xlane.xlu0 %4523
      %v4525 = vsel %vm4413, %v4322, -inf
      %4526 = vmax.xlane.f32.xlu0 %v4525
      %v4527 = vpop.xlane.xlu0 %4526
      %v4528 = vsel %vm4413, %v4323, -inf
      %4529 = vmax.xlane.f32.xlu0 %v4528
      %v4530 = vpop.xlane.xlu0 %4529
      %v4531 = vsel %vm4413, %v4324, -inf
      %4532 = vmax.xlane.f32.xlu0 %v4531
      %v4533 = vpop.xlane.xlu0 %4532
      %v4534 = vsel %vm4413, %v4325, -inf
      %4535 = vmax.xlane.f32.xlu0 %v4534
      %v4536 = vpop.xlane.xlu0 %4535
      %v4537 = vsel %vm4413, %v4326, -inf
      %4538 = vmax.xlane.f32.xlu0 %v4537
      %v4539 = vpop.xlane.xlu0 %4538
      %v4540 = vsel %vm4413, %v4327, -inf
      %4541 = vmax.xlane.f32.xlu0 %v4540
      %v4542 = vpop.xlane.xlu0 %4541
      %v4543 = vsel %vm4413, %v4328, -inf
      %4544 = vmax.xlane.f32.xlu0 %v4543
      %v4545 = vpop.xlane.xlu0 %4544
      %v4546 = vsel %vm4413, %v4329, -inf
      %4547 = vmax.xlane.f32.xlu0 %v4546
      %v4548 = vpop.xlane.xlu0 %4547
      %v4549 = vsel %vm4413, %v4330, -inf
      %4550 = vmax.xlane.f32.xlu0 %v4549
      %v4551 = vpop.xlane.xlu0 %4550
      %v4552 = vsel %vm4413, %v4331, -inf
      %4553 = vmax.xlane.f32.xlu0 %v4552
      %v4554 = vpop.xlane.xlu0 %4553
      %v4555 = vsel %vm4413, %v4332, -inf
      %4556 = vmax.xlane.f32.xlu0 %v4555
      %v4557 = vpop.xlane.xlu0 %4556
      %v4558 = vsel %vm4413, %v4333, -inf
      %4559 = vmax.xlane.f32.xlu0 %v4558
      %v4560 = vpop.xlane.xlu0 %4559
      %v4561 = vsel %vm4413, %v4334, -inf
      %4562 = vmax.xlane.f32.xlu0 %v4561
      %v4563 = vpop.xlane.xlu0 %4562
      %v4564 = vsel %vm4413, %v4335, -inf
      %4565 = vmax.xlane.f32.xlu0 %v4564
      %v4566 = vpop.xlane.xlu0 %4565
      %v4567 = vsel %vm4413, %v4336, -inf
      %4568 = vmax.xlane.f32.xlu0 %v4567
      %v4569 = vpop.xlane.xlu0 %4568
      %v4570 = vsel %vm4413, %v4337, -inf
      %4571 = vmax.xlane.f32.xlu0 %v4570
      %v4572 = vpop.xlane.xlu0 %4571
      %v4573 = vsel %vm4413, %v4338, -inf
      %4574 = vmax.xlane.f32.xlu0 %v4573
      %v4575 = vpop.xlane.xlu0 %4574
      %v4576 = vsel %vm4413, %v4339, -inf
      %4577 = vmax.xlane.f32.xlu0 %v4576
      %v4578 = vpop.xlane.xlu0 %4577
      %v4579 = vsel %vm4413, %v4340, -inf
      %4580 = vmax.xlane.f32.xlu0 %v4579
      %v4581 = vpop.xlane.xlu0 %4580
      %v4582 = vsel %vm4413, %v4341, -inf
      %4583 = vmax.xlane.f32.xlu0 %v4582
      %v4584 = vpop.xlane.xlu0 %4583
      %v4585 = vsel %vm4413, %v4342, -inf
      %4586 = vmax.xlane.f32.xlu0 %v4585
      %v4587 = vpop.xlane.xlu0 %4586
      %v4588 = vsel %vm4413, %v4343, -inf
      %4589 = vmax.xlane.f32.xlu0 %v4588
      %v4590 = vpop.xlane.xlu0 %4589
      %v4591 = vsel %vm4413, %v4344, -inf
      %4592 = vmax.xlane.f32.xlu0 %v4591
      %v4593 = vpop.xlane.xlu0 %4592
      %v4594 = vsel %vm4413, %v4345, -inf
      %4595 = vmax.xlane.f32.xlu0 %v4594
      %v4596 = vpop.xlane.xlu0 %4595
      %v4597 = vsel %vm4413, %v4346, -inf
      %4598 = vmax.xlane.f32.xlu0 %v4597
      %v4599 = vpop.xlane.xlu0 %4598
      %v4600 = vsel %vm4413, %v4347, -inf
      %4601 = vmax.xlane.f32.xlu0 %v4600
      %v4602 = vpop.xlane.xlu0 %4601
      %v4603 = vsel %vm4413, %v4348, -inf
      %4604 = vmax.xlane.f32.xlu0 %v4603
      %v4605 = vpop.xlane.xlu0 %4604
      %v4606 = vsel %vm4413, %v4349, -inf
      %4607 = vmax.xlane.f32.xlu0 %v4606
      %v4608 = vpop.xlane.xlu0 %4607
      %v4609 = vsel %vm4413, %v4350, -inf
      %4610 = vmax.xlane.f32.xlu0 %v4609
      %v4611 = vpop.xlane.xlu0 %4610
      %v4612 = vsel %vm4413, %v4351, -inf
      %4613 = vmax.xlane.f32.xlu0 %v4612
      %v4614 = vpop.xlane.xlu0 %4613
      %v4615 = vsel %vm4413, %v4352, -inf
      %4616 = vmax.xlane.f32.xlu0 %v4615
      %v4617 = vpop.xlane.xlu0 %4616
      %v4618 = vsel %vm4413, %v4353, -inf
      %4619 = vmax.xlane.f32.xlu0 %v4618
      %v4620 = vpop.xlane.xlu0 %4619
      %v4621 = vsel %vm4413, %v4354, -inf
      %4622 = vmax.xlane.f32.xlu0 %v4621
      %v4623 = vpop.xlane.xlu0 %4622
      %v4624 = vsel %vm4413, %v4355, -inf
      %4625 = vmax.xlane.f32.xlu0 %v4624
      %v4626 = vpop.xlane.xlu0 %4625
      %v4627 = vsel %vm4413, %v4356, -inf
      %4628 = vmax.xlane.f32.xlu0 %v4627
      %v4629 = vpop.xlane.xlu0 %4628
      %v4630 = vsel %vm4413, %v4357, -inf
      %4631 = vmax.xlane.f32.xlu0 %v4630
      %v4632 = vpop.xlane.xlu0 %4631
      %v4633 = vsel %vm4413, %v4358, -inf
      %4634 = vmax.xlane.f32.xlu0 %v4633
      %v4635 = vpop.xlane.xlu0 %4634
      %v4636 = vsel %vm4413, %v4359, -inf
      %4637 = vmax.xlane.f32.xlu0 %v4636
      %v4638 = vpop.xlane.xlu0 %4637
      %v4639 = vsel %vm4413, %v4360, -inf
      %4640 = vmax.xlane.f32.xlu0 %v4639
      %v4641 = vpop.xlane.xlu0 %4640
      %v4642 = vsel %vm4413, %v4361, -inf
      %4643 = vmax.xlane.f32.xlu0 %v4642
      %v4644 = vpop.xlane.xlu0 %4643
      %v4645 = vsel %vm4413, %v4362, -inf
      %4646 = vmax.xlane.f32.xlu0 %v4645
      %v4647 = vpop.xlane.xlu0 %4646
      %v4648 = vsel %vm4413, %v4363, -inf
      %4649 = vmax.xlane.f32.xlu0 %v4648
      %v4650 = vpop.xlane.xlu0 %4649
      %v4651 = vsel %vm4413, %v4364, -inf
      %4652 = vmax.xlane.f32.xlu0 %v4651
      %v4653 = vpop.xlane.xlu0 %4652
      %v4654 = vsel %vm4413, %v4365, -inf
      %4655 = vmax.xlane.f32.xlu0 %v4654
      %v4656 = vpop.xlane.xlu0 %4655
      %v4657 = vsel %vm4413, %v4366, -inf
      %4658 = vmax.xlane.f32.xlu0 %v4657
      %v4659 = vpop.xlane.xlu0 %4658
      %v4660 = vsel %vm4413, %v4367, -inf
      %4661 = vmax.xlane.f32.xlu0 %v4660
      %v4662 = vpop.xlane.xlu0 %4661
      %v4663 = vsel %vm4413, %v4368, -inf
      %4664 = vmax.xlane.f32.xlu0 %v4663
      %v4665 = vpop.xlane.xlu0 %4664
      %v4666 = vsel %vm4413, %v4369, -inf
      %4667 = vmax.xlane.f32.xlu0 %v4666
      %v4668 = vpop.xlane.xlu0 %4667
      %v4669 = vsel %vm4413, %v4370, -inf
      %4670 = vmax.xlane.f32.xlu0 %v4669
      %v4671 = vpop.xlane.xlu0 %4670
      %v4672 = vsel %vm4413, %v4371, -inf
      %4673 = vmax.xlane.f32.xlu0 %v4672
      %v4674 = vpop.xlane.xlu0 %4673
      %v4675 = vsel %vm4413, %v4372, -inf
      %4676 = vmax.xlane.f32.xlu0 %v4675
      %v4677 = vpop.xlane.xlu0 %4676
      %v4678 = vsel %vm4413, %v4373, -inf
      %4679 = vmax.xlane.f32.xlu0 %v4678
      %v4680 = vpop.xlane.xlu0 %4679
      %v4681 = vsel %vm4413, %v4374, -inf
      %4682 = vmax.xlane.f32.xlu0 %v4681
      %v4683 = vpop.xlane.xlu0 %4682
      %v4684 = vsel %vm4413, %v4375, -inf
      %4685 = vmax.xlane.f32.xlu0 %v4684
      %v4686 = vpop.xlane.xlu0 %4685
      %v4687 = vsel %vm4413, %v4376, -inf
      %4688 = vmax.xlane.f32.xlu0 %v4687
      %v4689 = vpop.xlane.xlu0 %4688
      %v4690 = vsel %vm4413, %v4377, -inf
      %4691 = vmax.xlane.f32.xlu0 %v4690
      %v4692 = vpop.xlane.xlu0 %4691
      %v4693 = vsel %vm4413, %v4378, -inf
      %4694 = vmax.xlane.f32.xlu0 %v4693
      %v4695 = vpop.xlane.xlu0 %4694
      %v4696 = vsel %vm4413, %v4379, -inf
      %4697 = vmax.xlane.f32.xlu0 %v4696
      %v4698 = vpop.xlane.xlu0 %4697
      %v4699 = vsel %vm4413, %v4380, -inf
      %4700 = vmax.xlane.f32.xlu0 %v4699
      %v4701 = vpop.xlane.xlu0 %4700
      %v4702 = vsel %vm4413, %v4381, -inf
      %4703 = vmax.xlane.f32.xlu0 %v4702
      %v4704 = vpop.xlane.xlu0 %4703
      %v4705 = vsel %vm4413, %v4382, -inf
      %4706 = vmax.xlane.f32.xlu0 %v4705
      %v4707 = vpop.xlane.xlu0 %4706
      %v4708 = vsel %vm4413, %v4383, -inf
      %4709 = vmax.xlane.f32.xlu0 %v4708
      %v4710 = vpop.xlane.xlu0 %4709
      %v4711 = vsel %vm4413, %v4384, -inf
      %4712 = vmax.xlane.f32.xlu0 %v4711
      %v4713 = vpop.xlane.xlu0 %4712
      %v4714 = vsel %vm4413, %v4385, -inf
      %4715 = vmax.xlane.f32.xlu0 %v4714
      %v4716 = vpop.xlane.xlu0 %4715
      %v4717 = vsel %vm4413, %v4386, -inf
      %4718 = vmax.xlane.f32.xlu0 %v4717
      %v4719 = vpop.xlane.xlu0 %4718
      %v4720 = vsel %vm4413, %v4387, -inf
      %4721 = vmax.xlane.f32.xlu0 %v4720
      %v4722 = vpop.xlane.xlu0 %4721
      %v4723 = vsel %vm4413, %v4388, -inf
      %4724 = vmax.xlane.f32.xlu0 %v4723
      %v4725 = vpop.xlane.xlu0 %4724
      %v4726 = vsel %vm4413, %v4389, -inf
      %4727 = vmax.xlane.f32.xlu0 %v4726
      %v4728 = vpop.xlane.xlu0 %4727
      %v4729 = vsel %vm4413, %v4390, -inf
      %4730 = vmax.xlane.f32.xlu0 %v4729
      %v4731 = vpop.xlane.xlu0 %4730
      %v4732 = vsel %vm4413, %v4391, -inf
      %4733 = vmax.xlane.f32.xlu0 %v4732
      %v4734 = vpop.xlane.xlu0 %4733
      %v4735 = vsel %vm4413, %v4392, -inf
      %4736 = vmax.xlane.f32.xlu0 %v4735
      %v4737 = vpop.xlane.xlu0 %4736
      %v4738 = vsel %vm4413, %v4393, -inf
      %4739 = vmax.xlane.f32.xlu0 %v4738
      %v4740 = vpop.xlane.xlu0 %4739
      %v4741 = vsel %vm4413, %v4394, -inf
      %4742 = vmax.xlane.f32.xlu0 %v4741
      %v4743 = vpop.xlane.xlu0 %4742
      %v4744 = vsel %vm4413, %v4395, -inf
      %4745 = vmax.xlane.f32.xlu0 %v4744
      %v4746 = vpop.xlane.xlu0 %4745
      %v4747 = vsel %vm4413, %v4396, -inf
      %4748 = vmax.xlane.f32.xlu0 %v4747
      %v4749 = vpop.xlane.xlu0 %4748
      %v4750 = vsel %vm4413, %v4397, -inf
      %4751 = vmax.xlane.f32.xlu0 %v4750
      %v4752 = vpop.xlane.xlu0 %4751
      %v4753 = vsel %vm4413, %v4398, -inf
      %4754 = vmax.xlane.f32.xlu0 %v4753
      %v4755 = vpop.xlane.xlu0 %4754
      %v4756 = vsel %vm4413, %v4399, -inf
      %4757 = vmax.xlane.f32.xlu0 %v4756
      %v4758 = vpop.xlane.xlu0 %4757
      %v4759 = vsel %vm4413, %v4400, -inf
      %4760 = vmax.xlane.f32.xlu0 %v4759
      %v4761 = vpop.xlane.xlu0 %4760
      %v4762 = vsel %vm4413, %v4401, -inf
      %4763 = vmax.xlane.f32.xlu0 %v4762
      %v4764 = vpop.xlane.xlu0 %4763
      %v4765 = vsel %vm4413, %v4402, -inf
      %4766 = vmax.xlane.f32.xlu0 %v4765
      %v4767 = vpop.xlane.xlu0 %4766
      %v4768 = vsel %vm4413, %v4403, -inf
      %4769 = vmax.xlane.f32.xlu0 %v4768
      %v4770 = vpop.xlane.xlu0 %4769
      %v4771 = vsel %vm4413, %v4404, -inf
      %4772 = vmax.xlane.f32.xlu0 %v4771
      %v4773 = vpop.xlane.xlu0 %4772
      %v4774 = vsel %vm4413, %v4405, -inf
      %4775 = vmax.xlane.f32.xlu0 %v4774
      %v4776 = vpop.xlane.xlu0 %4775
      %v4777 = vsel %vm4413, %v4406, -inf
      %4778 = vmax.xlane.f32.xlu0 %v4777
      %v4779 = vpop.xlane.xlu0 %4778
      %v4780 = vsel %vm4413, %v4407, -inf
      %4781 = vmax.xlane.f32.xlu0 %v4780
      %v4782 = vpop.xlane.xlu0 %4781
      %v4783 = vsel %vm4413, %v4408, -inf
      %4784 = vmax.xlane.f32.xlu0 %v4783
      %v4785 = vpop.xlane.xlu0 %4784
      %v4786 = vsel %vm4413, %v4409, -inf
      %4787 = vmax.xlane.f32.xlu0 %v4786
      %v4788 = vpop.xlane.xlu0 %4787
      %v4789 = vsel %vm4413, %v4410, -inf
      %4790 = vmax.xlane.f32.xlu0 %v4789
      %v4791 = vpop.xlane.xlu0 %4790
      %v4792 = vsel %vm4413, %v4411, -inf
      %4793 = vmax.xlane.f32.xlu0 %v4792
      %v4794 = vpop.xlane.xlu0 %4793
      %v4795 = vsel %vm4413, %v4412, -inf
      %4796 = vmax.xlane.f32.xlu0 %v4795
      %v4797 = vpop.xlane.xlu0 %4796
      %v4798 = vsub.f32 %v4285, %v4416
      %v4799 = vsub.f32 %v4286, %v4419
      %v4800 = vsub.f32 %v4287, %v4422
      %v4801 = vsub.f32 %v4288, %v4425
      %v4802 = vsub.f32 %v4289, %v4428
      %v4803 = vsub.f32 %v4290, %v4431
      %v4804 = vsub.f32 %v4291, %v4434
      %v4805 = vsub.f32 %v4292, %v4437
      %v4806 = vsub.f32 %v4293, %v4440
      %v4807 = vsub.f32 %v4294, %v4443
      %v4808 = vsub.f32 %v4295, %v4446
      %v4809 = vsub.f32 %v4296, %v4449
      %v4810 = vsub.f32 %v4297, %v4452
      %v4811 = vsub.f32 %v4298, %v4455
      %v4812 = vsub.f32 %v4299, %v4458
      %v4813 = vsub.f32 %v4300, %v4461
      %v4814 = vsub.f32 %v4301, %v4464
      %v4815 = vsub.f32 %v4302, %v4467
      %v4816 = vsub.f32 %v4303, %v4470
      %v4817 = vsub.f32 %v4304, %v4473
      %v4818 = vsub.f32 %v4305, %v4476
      %v4819 = vsub.f32 %v4306, %v4479
      %v4820 = vsub.f32 %v4307, %v4482
      %v4821 = vsub.f32 %v4308, %v4485
      %v4822 = vsub.f32 %v4309, %v4488
      %v4823 = vsub.f32 %v4310, %v4491
      %v4824 = vsub.f32 %v4311, %v4494
      %v4825 = vsub.f32 %v4312, %v4497
      %v4826 = vsub.f32 %v4313, %v4500
      %v4827 = vsub.f32 %v4314, %v4503
      %v4828 = vsub.f32 %v4315, %v4506
      %v4829 = vsub.f32 %v4316, %v4509
      %v4830 = vsub.f32 %v4317, %v4512
      %v4831 = vsub.f32 %v4318, %v4515
      %v4832 = vsub.f32 %v4319, %v4518
      %v4833 = vsub.f32 %v4320, %v4521
      %v4834 = vsub.f32 %v4321, %v4524
      %v4835 = vsub.f32 %v4322, %v4527
      %v4836 = vsub.f32 %v4323, %v4530
      %v4837 = vsub.f32 %v4324, %v4533
      %v4838 = vsub.f32 %v4325, %v4536
      %v4839 = vsub.f32 %v4326, %v4539
      %v4840 = vsub.f32 %v4327, %v4542
      %v4841 = vsub.f32 %v4328, %v4545
      %v4842 = vsub.f32 %v4329, %v4548
      %v4843 = vsub.f32 %v4330, %v4551
      %v4844 = vsub.f32 %v4331, %v4554
      %v4845 = vsub.f32 %v4332, %v4557
      %v4846 = vsub.f32 %v4333, %v4560
      %v4847 = vsub.f32 %v4334, %v4563
      %v4848 = vsub.f32 %v4335, %v4566
      %v4849 = vsub.f32 %v4336, %v4569
      %v4850 = vsub.f32 %v4337, %v4572
      %v4851 = vsub.f32 %v4338, %v4575
      %v4852 = vsub.f32 %v4339, %v4578
      %v4853 = vsub.f32 %v4340, %v4581
      %v4854 = vsub.f32 %v4341, %v4584
      %v4855 = vsub.f32 %v4342, %v4587
      %v4856 = vsub.f32 %v4343, %v4590
      %v4857 = vsub.f32 %v4344, %v4593
      %v4858 = vsub.f32 %v4345, %v4596
      %v4859 = vsub.f32 %v4346, %v4599
      %v4860 = vsub.f32 %v4347, %v4602
      %v4861 = vsub.f32 %v4348, %v4605
      %v4862 = vsub.f32 %v4349, %v4608
      %v4863 = vsub.f32 %v4350, %v4611
      %v4864 = vsub.f32 %v4351, %v4614
      %v4865 = vsub.f32 %v4352, %v4617
      %v4866 = vsub.f32 %v4353, %v4620
      %v4867 = vsub.f32 %v4354, %v4623
      %v4868 = vsub.f32 %v4355, %v4626
      %v4869 = vsub.f32 %v4356, %v4629
      %v4870 = vsub.f32 %v4357, %v4632
      %v4871 = vsub.f32 %v4358, %v4635
      %v4872 = vsub.f32 %v4359, %v4638
      %v4873 = vsub.f32 %v4360, %v4641
      %v4874 = vsub.f32 %v4361, %v4644
      %v4875 = vsub.f32 %v4362, %v4647
      %v4876 = vsub.f32 %v4363, %v4650
      %v4877 = vsub.f32 %v4364, %v4653
      %v4878 = vsub.f32 %v4365, %v4656
      %v4879 = vsub.f32 %v4366, %v4659
      %v4880 = vsub.f32 %v4367, %v4662
      %v4881 = vsub.f32 %v4368, %v4665
      %v4882 = vsub.f32 %v4369, %v4668
      %v4883 = vsub.f32 %v4370, %v4671
      %v4884 = vsub.f32 %v4371, %v4674
      %v4885 = vsub.f32 %v4372, %v4677
      %v4886 = vsub.f32 %v4373, %v4680
      %v4887 = vsub.f32 %v4374, %v4683
      %v4888 = vsub.f32 %v4375, %v4686
      %v4889 = vsub.f32 %v4376, %v4689
      %v4890 = vsub.f32 %v4377, %v4692
      %v4891 = vsub.f32 %v4378, %v4695
      %v4892 = vsub.f32 %v4379, %v4698
      %v4893 = vsub.f32 %v4380, %v4701
      %v4894 = vsub.f32 %v4381, %v4704
      %v4895 = vsub.f32 %v4382, %v4707
      %v4896 = vsub.f32 %v4383, %v4710
      %v4897 = vsub.f32 %v4384, %v4713
      %v4898 = vsub.f32 %v4385, %v4716
      %v4899 = vsub.f32 %v4386, %v4719
      %v4900 = vsub.f32 %v4387, %v4722
      %v4901 = vsub.f32 %v4388, %v4725
      %v4902 = vsub.f32 %v4389, %v4728
      %v4903 = vsub.f32 %v4390, %v4731
      %v4904 = vsub.f32 %v4391, %v4734
      %v4905 = vsub.f32 %v4392, %v4737
      %v4906 = vsub.f32 %v4393, %v4740
      %v4907 = vsub.f32 %v4394, %v4743
      %v4908 = vsub.f32 %v4395, %v4746
      %v4909 = vsub.f32 %v4396, %v4749
      %v4910 = vsub.f32 %v4397, %v4752
      %v4911 = vsub.f32 %v4398, %v4755
      %v4912 = vsub.f32 %v4399, %v4758
      %v4913 = vsub.f32 %v4400, %v4761
      %v4914 = vsub.f32 %v4401, %v4764
      %v4915 = vsub.f32 %v4402, %v4767
      %v4916 = vsub.f32 %v4403, %v4770
      %v4917 = vsub.f32 %v4404, %v4773
      %v4918 = vsub.f32 %v4405, %v4776
      %v4919 = vsub.f32 %v4406, %v4779
      %v4920 = vsub.f32 %v4407, %v4782
      %v4921 = vsub.f32 %v4408, %v4785
      %v4922 = vsub.f32 %v4409, %v4788
      %v4923 = vsub.f32 %v4410, %v4791
      %v4924 = vsub.f32 %v4411, %v4794
      %v4925 = vsub.f32 %v4412, %v4797
      %v4926 = vmul.f32 %v4798, 1.442695
      %v4927 = vpow.pop %v4926
      %v4928 = vmul.f32 %v4799, 1.442695
      %v4929 = vpow.pop %v4928
      %v4930 = vmul.f32 %v4800, 1.442695
      %v4931 = vpow.pop %v4930
      %v4932 = vmul.f32 %v4801, 1.442695
      %v4933 = vpow.pop %v4932
      %v4934 = vmul.f32 %v4802, 1.442695
      %v4935 = vpow.pop %v4934
      %v4936 = vmul.f32 %v4803, 1.442695
      %v4937 = vpow.pop %v4936
      %v4938 = vmul.f32 %v4804, 1.442695
      %v4939 = vpow.pop %v4938
      %v4940 = vmul.f32 %v4805, 1.442695
      %v4941 = vpow.pop %v4940
      %v4942 = vmul.f32 %v4806, 1.442695
      %v4943 = vpow.pop %v4942
      %v4944 = vmul.f32 %v4807, 1.442695
      %v4945 = vpow.pop %v4944
      %v4946 = vmul.f32 %v4808, 1.442695
      %v4947 = vpow.pop %v4946
      %v4948 = vmul.f32 %v4809, 1.442695
      %v4949 = vpow.pop %v4948
      %v4950 = vmul.f32 %v4810, 1.442695
      %v4951 = vpow.pop %v4950
      %v4952 = vmul.f32 %v4811, 1.442695
      %v4953 = vpow.pop %v4952
      %v4954 = vmul.f32 %v4812, 1.442695
      %v4955 = vpow.pop %v4954
      %v4956 = vmul.f32 %v4813, 1.442695
      %v4957 = vpow.pop %v4956
      %v4958 = vmul.f32 %v4814, 1.442695
      %v4959 = vpow.pop %v4958
      %v4960 = vmul.f32 %v4815, 1.442695
      %v4961 = vpow.pop %v4960
      %v4962 = vmul.f32 %v4816, 1.442695
      %v4963 = vpow.pop %v4962
      %v4964 = vmul.f32 %v4817, 1.442695
      %v4965 = vpow.pop %v4964
      %v4966 = vmul.f32 %v4818, 1.442695
      %v4967 = vpow.pop %v4966
      %v4968 = vmul.f32 %v4819, 1.442695
      %v4969 = vpow.pop %v4968
      %v4970 = vmul.f32 %v4820, 1.442695
      %v4971 = vpow.pop %v4970
      %v4972 = vmul.f32 %v4821, 1.442695
      %v4973 = vpow.pop %v4972
      %v4974 = vmul.f32 %v4822, 1.442695
      %v4975 = vpow.pop %v4974
      %v4976 = vmul.f32 %v4823, 1.442695
      %v4977 = vpow.pop %v4976
      %v4978 = vmul.f32 %v4824, 1.442695
      %v4979 = vpow.pop %v4978
      %v4980 = vmul.f32 %v4825, 1.442695
      %v4981 = vpow.pop %v4980
      %v4982 = vmul.f32 %v4826, 1.442695
      %v4983 = vpow.pop %v4982
      %v4984 = vmul.f32 %v4827, 1.442695
      %v4985 = vpow.pop %v4984
      %v4986 = vmul.f32 %v4828, 1.442695
      %v4987 = vpow.pop %v4986
      %v4988 = vmul.f32 %v4829, 1.442695
      %v4989 = vpow.pop %v4988
      %v4990 = vmul.f32 %v4830, 1.442695
      %v4991 = vpow.pop %v4990
      %v4992 = vmul.f32 %v4831, 1.442695
      %v4993 = vpow.pop %v4992
      %v4994 = vmul.f32 %v4832, 1.442695
      %v4995 = vpow.pop %v4994
      %v4996 = vmul.f32 %v4833, 1.442695
      %v4997 = vpow.pop %v4996
      %v4998 = vmul.f32 %v4834, 1.442695
      %v4999 = vpow.pop %v4998
      %v5000 = vmul.f32 %v4835, 1.442695
      %v5001 = vpow.pop %v5000
      %v5002 = vmul.f32 %v4836, 1.442695
      %v5003 = vpow.pop %v5002
      %v5004 = vmul.f32 %v4837, 1.442695
      %v5005 = vpow.pop %v5004
      %v5006 = vmul.f32 %v4838, 1.442695
      %v5007 = vpow.pop %v5006
      %v5008 = vmul.f32 %v4839, 1.442695
      %v5009 = vpow.pop %v5008
      %v5010 = vmul.f32 %v4840, 1.442695
      %v5011 = vpow.pop %v5010
      %v5012 = vmul.f32 %v4841, 1.442695
      %v5013 = vpow.pop %v5012
      %v5014 = vmul.f32 %v4842, 1.442695
      %v5015 = vpow.pop %v5014
      %v5016 = vmul.f32 %v4843, 1.442695
      %v5017 = vpow.pop %v5016
      %v5018 = vmul.f32 %v4844, 1.442695
      %v5019 = vpow.pop %v5018
      %v5020 = vmul.f32 %v4845, 1.442695
      %v5021 = vpow.pop %v5020
      %v5022 = vmul.f32 %v4846, 1.442695
      %v5023 = vpow.pop %v5022
      %v5024 = vmul.f32 %v4847, 1.442695
      %v5025 = vpow.pop %v5024
      %v5026 = vmul.f32 %v4848, 1.442695
      %v5027 = vpow.pop %v5026
      %v5028 = vmul.f32 %v4849, 1.442695
      %v5029 = vpow.pop %v5028
      %v5030 = vmul.f32 %v4850, 1.442695
      %v5031 = vpow.pop %v5030
      %v5032 = vmul.f32 %v4851, 1.442695
      %v5033 = vpow.pop %v5032
      %v5034 = vmul.f32 %v4852, 1.442695
      %v5035 = vpow.pop %v5034
      %v5036 = vmul.f32 %v4853, 1.442695
      %v5037 = vpow.pop %v5036
      %v5038 = vmul.f32 %v4854, 1.442695
      %v5039 = vpow.pop %v5038
      %v5040 = vmul.f32 %v4855, 1.442695
      %v5041 = vpow.pop %v5040
      %v5042 = vmul.f32 %v4856, 1.442695
      %v5043 = vpow.pop %v5042
      %v5044 = vmul.f32 %v4857, 1.442695
      %v5045 = vpow.pop %v5044
      %v5046 = vmul.f32 %v4858, 1.442695
      %v5047 = vpow.pop %v5046
      %v5048 = vmul.f32 %v4859, 1.442695
      %v5049 = vpow.pop %v5048
      %v5050 = vmul.f32 %v4860, 1.442695
      %v5051 = vpow.pop %v5050
      %v5052 = vmul.f32 %v4861, 1.442695
      %v5053 = vpow.pop %v5052
      %v5054 = vmul.f32 %v4862, 1.442695
      %v5055 = vpow.pop %v5054
      %v5056 = vmul.f32 %v4863, 1.442695
      %v5057 = vpow.pop %v5056
      %v5058 = vmul.f32 %v4864, 1.442695
      %v5059 = vpow.pop %v5058
      %v5060 = vmul.f32 %v4865, 1.442695
      %v5061 = vpow.pop %v5060
      %v5062 = vmul.f32 %v4866, 1.442695
      %v5063 = vpow.pop %v5062
      %v5064 = vmul.f32 %v4867, 1.442695
      %v5065 = vpow.pop %v5064
      %v5066 = vmul.f32 %v4868, 1.442695
      %v5067 = vpow.pop %v5066
      %v5068 = vmul.f32 %v4869, 1.442695
      %v5069 = vpow.pop %v5068
      %v5070 = vmul.f32 %v4870, 1.442695
      %v5071 = vpow.pop %v5070
      %v5072 = vmul.f32 %v4871, 1.442695
      %v5073 = vpow.pop %v5072
      %v5074 = vmul.f32 %v4872, 1.442695
      %v5075 = vpow.pop %v5074
      %v5076 = vmul.f32 %v4873, 1.442695
      %v5077 = vpow.pop %v5076
      %v5078 = vmul.f32 %v4874, 1.442695
      %v5079 = vpow.pop %v5078
      %v5080 = vmul.f32 %v4875, 1.442695
      %v5081 = vpow.pop %v5080
      %v5082 = vmul.f32 %v4876, 1.442695
      %v5083 = vpow.pop %v5082
      %v5084 = vmul.f32 %v4877, 1.442695
      %v5085 = vpow.pop %v5084
      %v5086 = vmul.f32 %v4878, 1.442695
      %v5087 = vpow.pop %v5086
      %v5088 = vmul.f32 %v4879, 1.442695
      %v5089 = vpow.pop %v5088
      %v5090 = vmul.f32 %v4880, 1.442695
      %v5091 = vpow.pop %v5090
      %v5092 = vmul.f32 %v4881, 1.442695
      %v5093 = vpow.pop %v5092
      %v5094 = vmul.f32 %v4882, 1.442695
      %v5095 = vpow.pop %v5094
      %v5096 = vmul.f32 %v4883, 1.442695
      %v5097 = vpow.pop %v5096
      %v5098 = vmul.f32 %v4884, 1.442695
      %v5099 = vpow.pop %v5098
      %v5100 = vmul.f32 %v4885, 1.442695
      %v5101 = vpow.pop %v5100
      %v5102 = vmul.f32 %v4886, 1.442695
      %v5103 = vpow.pop %v5102
      %v5104 = vmul.f32 %v4887, 1.442695
      %v5105 = vpow.pop %v5104
      %v5106 = vmul.f32 %v4888, 1.442695
      %v5107 = vpow.pop %v5106
      %v5108 = vmul.f32 %v4889, 1.442695
      %v5109 = vpow.pop %v5108
      %v5110 = vmul.f32 %v4890, 1.442695
      %v5111 = vpow.pop %v5110
      %v5112 = vmul.f32 %v4891, 1.442695
      %v5113 = vpow.pop %v5112
      %v5114 = vmul.f32 %v4892, 1.442695
      %v5115 = vpow.pop %v5114
      %v5116 = vmul.f32 %v4893, 1.442695
      %v5117 = vpow.pop %v5116
      %v5118 = vmul.f32 %v4894, 1.442695
      %v5119 = vpow.pop %v5118
      %v5120 = vmul.f32 %v4895, 1.442695
      %v5121 = vpow.pop %v5120
      %v5122 = vmul.f32 %v4896, 1.442695
      %v5123 = vpow.pop %v5122
      %v5124 = vmul.f32 %v4897, 1.442695
      %v5125 = vpow.pop %v5124
      %v5126 = vmul.f32 %v4898, 1.442695
      %v5127 = vpow.pop %v5126
      %v5128 = vmul.f32 %v4899, 1.442695
      %v5129 = vpow.pop %v5128
      %v5130 = vmul.f32 %v4900, 1.442695
      %v5131 = vpow.pop %v5130
      %v5132 = vmul.f32 %v4901, 1.442695
      %v5133 = vpow.pop %v5132
      %v5134 = vmul.f32 %v4902, 1.442695
      %v5135 = vpow.pop %v5134
      %v5136 = vmul.f32 %v4903, 1.442695
      %v5137 = vpow.pop %v5136
      %v5138 = vmul.f32 %v4904, 1.442695
      %v5139 = vpow.pop %v5138
      %v5140 = vmul.f32 %v4905, 1.442695
      %v5141 = vpow.pop %v5140
      %v5142 = vmul.f32 %v4906, 1.442695
      %v5143 = vpow.pop %v5142
      %v5144 = vmul.f32 %v4907, 1.442695
      %v5145 = vpow.pop %v5144
      %v5146 = vmul.f32 %v4908, 1.442695
      %v5147 = vpow.pop %v5146
      %v5148 = vmul.f32 %v4909, 1.442695
      %v5149 = vpow.pop %v5148
      %v5150 = vmul.f32 %v4910, 1.442695
      %v5151 = vpow.pop %v5150
      %v5152 = vmul.f32 %v4911, 1.442695
      %v5153 = vpow.pop %v5152
      %v5154 = vmul.f32 %v4912, 1.442695
      %v5155 = vpow.pop %v5154
      %v5156 = vmul.f32 %v4913, 1.442695
      %v5157 = vpow.pop %v5156
      %v5158 = vmul.f32 %v4914, 1.442695
      %v5159 = vpow.pop %v5158
      %v5160 = vmul.f32 %v4915, 1.442695
      %v5161 = vpow.pop %v5160
      %v5162 = vmul.f32 %v4916, 1.442695
      %v5163 = vpow.pop %v5162
      %v5164 = vmul.f32 %v4917, 1.442695
      %v5165 = vpow.pop %v5164
      %v5166 = vmul.f32 %v4918, 1.442695
      %v5167 = vpow.pop %v5166
      %v5168 = vmul.f32 %v4919, 1.442695
      %v5169 = vpow.pop %v5168
      %v5170 = vmul.f32 %v4920, 1.442695
      %v5171 = vpow.pop %v5170
      %v5172 = vmul.f32 %v4921, 1.442695
      %v5173 = vpow.pop %v5172
      %v5174 = vmul.f32 %v4922, 1.442695
      %v5175 = vpow.pop %v5174
      %v5176 = vmul.f32 %v4923, 1.442695
      %v5177 = vpow.pop %v5176
      %v5178 = vmul.f32 %v4924, 1.442695
      %v5179 = vpow.pop %v5178
      %v5180 = vmul.f32 %v4925, 1.442695
      %v5181 = vpow.pop %v5180
      %v5182 = vsel %vm4413, %v4927, 0.0
      %5183 = vadd.xlane.f32.xlu0 %v5182
      %v5184 = vpop.xlane.xlu0 %5183
      %v5185 = vsel %vm4413, %v4929, 0.0
      %5186 = vadd.xlane.f32.xlu0 %v5185
      %v5187 = vpop.xlane.xlu0 %5186
      %v5188 = vsel %vm4413, %v4931, 0.0
      %5189 = vadd.xlane.f32.xlu0 %v5188
      %v5190 = vpop.xlane.xlu0 %5189
      %v5191 = vsel %vm4413, %v4933, 0.0
      %5192 = vadd.xlane.f32.xlu0 %v5191
      %v5193 = vpop.xlane.xlu0 %5192
      %v5194 = vsel %vm4413, %v4935, 0.0
      %5195 = vadd.xlane.f32.xlu0 %v5194
      %v5196 = vpop.xlane.xlu0 %5195
      %v5197 = vsel %vm4413, %v4937, 0.0
      %5198 = vadd.xlane.f32.xlu0 %v5197
      %v5199 = vpop.xlane.xlu0 %5198
      %v5200 = vsel %vm4413, %v4939, 0.0
      %5201 = vadd.xlane.f32.xlu0 %v5200
      %v5202 = vpop.xlane.xlu0 %5201
      %v5203 = vsel %vm4413, %v4941, 0.0
      %5204 = vadd.xlane.f32.xlu0 %v5203
      %v5205 = vpop.xlane.xlu0 %5204
      %v5206 = vsel %vm4413, %v4943, 0.0
      %5207 = vadd.xlane.f32.xlu0 %v5206
      %v5208 = vpop.xlane.xlu0 %5207
      %v5209 = vsel %vm4413, %v4945, 0.0
      %5210 = vadd.xlane.f32.xlu0 %v5209
      %v5211 = vpop.xlane.xlu0 %5210
      %v5212 = vsel %vm4413, %v4947, 0.0
      %5213 = vadd.xlane.f32.xlu0 %v5212
      %v5214 = vpop.xlane.xlu0 %5213
      %v5215 = vsel %vm4413, %v4949, 0.0
      %5216 = vadd.xlane.f32.xlu0 %v5215
      %v5217 = vpop.xlane.xlu0 %5216
      %v5218 = vsel %vm4413, %v4951, 0.0
      %5219 = vadd.xlane.f32.xlu0 %v5218
      %v5220 = vpop.xlane.xlu0 %5219
      %v5221 = vsel %vm4413, %v4953, 0.0
      %5222 = vadd.xlane.f32.xlu0 %v5221
      %v5223 = vpop.xlane.xlu0 %5222
      %v5224 = vsel %vm4413, %v4955, 0.0
      %5225 = vadd.xlane.f32.xlu0 %v5224
      %v5226 = vpop.xlane.xlu0 %5225
      %v5227 = vsel %vm4413, %v4957, 0.0
      %5228 = vadd.xlane.f32.xlu0 %v5227
      %v5229 = vpop.xlane.xlu0 %5228
      %v5230 = vsel %vm4413, %v4959, 0.0
      %5231 = vadd.xlane.f32.xlu0 %v5230
      %v5232 = vpop.xlane.xlu0 %5231
      %v5233 = vsel %vm4413, %v4961, 0.0
      %5234 = vadd.xlane.f32.xlu0 %v5233
      %v5235 = vpop.xlane.xlu0 %5234
      %v5236 = vsel %vm4413, %v4963, 0.0
      %5237 = vadd.xlane.f32.xlu0 %v5236
      %v5238 = vpop.xlane.xlu0 %5237
      %v5239 = vsel %vm4413, %v4965, 0.0
      %5240 = vadd.xlane.f32.xlu0 %v5239
      %v5241 = vpop.xlane.xlu0 %5240
      %v5242 = vsel %vm4413, %v4967, 0.0
      %5243 = vadd.xlane.f32.xlu0 %v5242
      %v5244 = vpop.xlane.xlu0 %5243
      %v5245 = vsel %vm4413, %v4969, 0.0
      %5246 = vadd.xlane.f32.xlu0 %v5245
      %v5247 = vpop.xlane.xlu0 %5246
      %v5248 = vsel %vm4413, %v4971, 0.0
      %5249 = vadd.xlane.f32.xlu0 %v5248
      %v5250 = vpop.xlane.xlu0 %5249
      %v5251 = vsel %vm4413, %v4973, 0.0
      %5252 = vadd.xlane.f32.xlu0 %v5251
      %v5253 = vpop.xlane.xlu0 %5252
      %v5254 = vsel %vm4413, %v4975, 0.0
      %5255 = vadd.xlane.f32.xlu0 %v5254
      %v5256 = vpop.xlane.xlu0 %5255
      %v5257 = vsel %vm4413, %v4977, 0.0
      %5258 = vadd.xlane.f32.xlu0 %v5257
      %v5259 = vpop.xlane.xlu0 %5258
      %v5260 = vsel %vm4413, %v4979, 0.0
      %5261 = vadd.xlane.f32.xlu0 %v5260
      %v5262 = vpop.xlane.xlu0 %5261
      %v5263 = vsel %vm4413, %v4981, 0.0
      %5264 = vadd.xlane.f32.xlu0 %v5263
      %v5265 = vpop.xlane.xlu0 %5264
      %v5266 = vsel %vm4413, %v4983, 0.0
      %5267 = vadd.xlane.f32.xlu0 %v5266
      %v5268 = vpop.xlane.xlu0 %5267
      %v5269 = vsel %vm4413, %v4985, 0.0
      %5270 = vadd.xlane.f32.xlu0 %v5269
      %v5271 = vpop.xlane.xlu0 %5270
      %v5272 = vsel %vm4413, %v4987, 0.0
      %5273 = vadd.xlane.f32.xlu0 %v5272
      %v5274 = vpop.xlane.xlu0 %5273
      %v5275 = vsel %vm4413, %v4989, 0.0
      %5276 = vadd.xlane.f32.xlu0 %v5275
      %v5277 = vpop.xlane.xlu0 %5276
      %v5278 = vsel %vm4413, %v4991, 0.0
      %5279 = vadd.xlane.f32.xlu0 %v5278
      %v5280 = vpop.xlane.xlu0 %5279
      %v5281 = vsel %vm4413, %v4993, 0.0
      %5282 = vadd.xlane.f32.xlu0 %v5281
      %v5283 = vpop.xlane.xlu0 %5282
      %v5284 = vsel %vm4413, %v4995, 0.0
      %5285 = vadd.xlane.f32.xlu0 %v5284
      %v5286 = vpop.xlane.xlu0 %5285
      %v5287 = vsel %vm4413, %v4997, 0.0
      %5288 = vadd.xlane.f32.xlu0 %v5287
      %v5289 = vpop.xlane.xlu0 %5288
      %v5290 = vsel %vm4413, %v4999, 0.0
      %5291 = vadd.xlane.f32.xlu0 %v5290
      %v5292 = vpop.xlane.xlu0 %5291
      %v5293 = vsel %vm4413, %v5001, 0.0
      %5294 = vadd.xlane.f32.xlu0 %v5293
      %v5295 = vpop.xlane.xlu0 %5294
      %v5296 = vsel %vm4413, %v5003, 0.0
      %5297 = vadd.xlane.f32.xlu0 %v5296
      %v5298 = vpop.xlane.xlu0 %5297
      %v5299 = vsel %vm4413, %v5005, 0.0
      %5300 = vadd.xlane.f32.xlu0 %v5299
      %v5301 = vpop.xlane.xlu0 %5300
      %v5302 = vsel %vm4413, %v5007, 0.0
      %5303 = vadd.xlane.f32.xlu0 %v5302
      %v5304 = vpop.xlane.xlu0 %5303
      %v5305 = vsel %vm4413, %v5009, 0.0
      %5306 = vadd.xlane.f32.xlu0 %v5305
      %v5307 = vpop.xlane.xlu0 %5306
      %v5308 = vsel %vm4413, %v5011, 0.0
      %5309 = vadd.xlane.f32.xlu0 %v5308
      %v5310 = vpop.xlane.xlu0 %5309
      %v5311 = vsel %vm4413, %v5013, 0.0
      %5312 = vadd.xlane.f32.xlu0 %v5311
      %v5313 = vpop.xlane.xlu0 %5312
      %v5314 = vsel %vm4413, %v5015, 0.0
      %5315 = vadd.xlane.f32.xlu0 %v5314
      %v5316 = vpop.xlane.xlu0 %5315
      %v5317 = vsel %vm4413, %v5017, 0.0
      %5318 = vadd.xlane.f32.xlu0 %v5317
      %v5319 = vpop.xlane.xlu0 %5318
      %v5320 = vsel %vm4413, %v5019, 0.0
      %5321 = vadd.xlane.f32.xlu0 %v5320
      %v5322 = vpop.xlane.xlu0 %5321
      %v5323 = vsel %vm4413, %v5021, 0.0
      %5324 = vadd.xlane.f32.xlu0 %v5323
      %v5325 = vpop.xlane.xlu0 %5324
      %v5326 = vsel %vm4413, %v5023, 0.0
      %5327 = vadd.xlane.f32.xlu0 %v5326
      %v5328 = vpop.xlane.xlu0 %5327
      %v5329 = vsel %vm4413, %v5025, 0.0
      %5330 = vadd.xlane.f32.xlu0 %v5329
      %v5331 = vpop.xlane.xlu0 %5330
      %v5332 = vsel %vm4413, %v5027, 0.0
      %5333 = vadd.xlane.f32.xlu0 %v5332
      %v5334 = vpop.xlane.xlu0 %5333
      %v5335 = vsel %vm4413, %v5029, 0.0
      %5336 = vadd.xlane.f32.xlu0 %v5335
      %v5337 = vpop.xlane.xlu0 %5336
      %v5338 = vsel %vm4413, %v5031, 0.0
      %5339 = vadd.xlane.f32.xlu0 %v5338
      %v5340 = vpop.xlane.xlu0 %5339
      %v5341 = vsel %vm4413, %v5033, 0.0
      %5342 = vadd.xlane.f32.xlu0 %v5341
      %v5343 = vpop.xlane.xlu0 %5342
      %v5344 = vsel %vm4413, %v5035, 0.0
      %5345 = vadd.xlane.f32.xlu0 %v5344
      %v5346 = vpop.xlane.xlu0 %5345
      %v5347 = vsel %vm4413, %v5037, 0.0
      %5348 = vadd.xlane.f32.xlu0 %v5347
      %v5349 = vpop.xlane.xlu0 %5348
      %v5350 = vsel %vm4413, %v5039, 0.0
      %5351 = vadd.xlane.f32.xlu0 %v5350
      %v5352 = vpop.xlane.xlu0 %5351
      %v5353 = vsel %vm4413, %v5041, 0.0
      %5354 = vadd.xlane.f32.xlu0 %v5353
      %v5355 = vpop.xlane.xlu0 %5354
      %v5356 = vsel %vm4413, %v5043, 0.0
      %5357 = vadd.xlane.f32.xlu0 %v5356
      %v5358 = vpop.xlane.xlu0 %5357
      %v5359 = vsel %vm4413, %v5045, 0.0
      %5360 = vadd.xlane.f32.xlu0 %v5359
      %v5361 = vpop.xlane.xlu0 %5360
      %v5362 = vsel %vm4413, %v5047, 0.0
      %5363 = vadd.xlane.f32.xlu0 %v5362
      %v5364 = vpop.xlane.xlu0 %5363
      %v5365 = vsel %vm4413, %v5049, 0.0
      %5366 = vadd.xlane.f32.xlu0 %v5365
      %v5367 = vpop.xlane.xlu0 %5366
      %v5368 = vsel %vm4413, %v5051, 0.0
      %5369 = vadd.xlane.f32.xlu0 %v5368
      %v5370 = vpop.xlane.xlu0 %5369
      %v5371 = vsel %vm4413, %v5053, 0.0
      %5372 = vadd.xlane.f32.xlu0 %v5371
      %v5373 = vpop.xlane.xlu0 %5372
      %v5374 = vsel %vm4413, %v5055, 0.0
      %5375 = vadd.xlane.f32.xlu0 %v5374
      %v5376 = vpop.xlane.xlu0 %5375
      %v5377 = vsel %vm4413, %v5057, 0.0
      %5378 = vadd.xlane.f32.xlu0 %v5377
      %v5379 = vpop.xlane.xlu0 %5378
      %v5380 = vsel %vm4413, %v5059, 0.0
      %5381 = vadd.xlane.f32.xlu0 %v5380
      %v5382 = vpop.xlane.xlu0 %5381
      %v5383 = vsel %vm4413, %v5061, 0.0
      %5384 = vadd.xlane.f32.xlu0 %v5383
      %v5385 = vpop.xlane.xlu0 %5384
      %v5386 = vsel %vm4413, %v5063, 0.0
      %5387 = vadd.xlane.f32.xlu0 %v5386
      %v5388 = vpop.xlane.xlu0 %5387
      %v5389 = vsel %vm4413, %v5065, 0.0
      %5390 = vadd.xlane.f32.xlu0 %v5389
      %v5391 = vpop.xlane.xlu0 %5390
      %v5392 = vsel %vm4413, %v5067, 0.0
      %5393 = vadd.xlane.f32.xlu0 %v5392
      %v5394 = vpop.xlane.xlu0 %5393
      %v5395 = vsel %vm4413, %v5069, 0.0
      %5396 = vadd.xlane.f32.xlu0 %v5395
      %v5397 = vpop.xlane.xlu0 %5396
      %v5398 = vsel %vm4413, %v5071, 0.0
      %5399 = vadd.xlane.f32.xlu0 %v5398
      %v5400 = vpop.xlane.xlu0 %5399
      %v5401 = vsel %vm4413, %v5073, 0.0
      %5402 = vadd.xlane.f32.xlu0 %v5401
      %v5403 = vpop.xlane.xlu0 %5402
      %v5404 = vsel %vm4413, %v5075, 0.0
      %5405 = vadd.xlane.f32.xlu0 %v5404
      %v5406 = vpop.xlane.xlu0 %5405
      %v5407 = vsel %vm4413, %v5077, 0.0
      %5408 = vadd.xlane.f32.xlu0 %v5407
      %v5409 = vpop.xlane.xlu0 %5408
      %v5410 = vsel %vm4413, %v5079, 0.0
      %5411 = vadd.xlane.f32.xlu0 %v5410
      %v5412 = vpop.xlane.xlu0 %5411
      %v5413 = vsel %vm4413, %v5081, 0.0
      %5414 = vadd.xlane.f32.xlu0 %v5413
      %v5415 = vpop.xlane.xlu0 %5414
      %v5416 = vsel %vm4413, %v5083, 0.0
      %5417 = vadd.xlane.f32.xlu0 %v5416
      %v5418 = vpop.xlane.xlu0 %5417
      %v5419 = vsel %vm4413, %v5085, 0.0
      %5420 = vadd.xlane.f32.xlu0 %v5419
      %v5421 = vpop.xlane.xlu0 %5420
      %v5422 = vsel %vm4413, %v5087, 0.0
      %5423 = vadd.xlane.f32.xlu0 %v5422
      %v5424 = vpop.xlane.xlu0 %5423
      %v5425 = vsel %vm4413, %v5089, 0.0
      %5426 = vadd.xlane.f32.xlu0 %v5425
      %v5427 = vpop.xlane.xlu0 %5426
      %v5428 = vsel %vm4413, %v5091, 0.0
      %5429 = vadd.xlane.f32.xlu0 %v5428
      %v5430 = vpop.xlane.xlu0 %5429
      %v5431 = vsel %vm4413, %v5093, 0.0
      %5432 = vadd.xlane.f32.xlu0 %v5431
      %v5433 = vpop.xlane.xlu0 %5432
      %v5434 = vsel %vm4413, %v5095, 0.0
      %5435 = vadd.xlane.f32.xlu0 %v5434
      %v5436 = vpop.xlane.xlu0 %5435
      %v5437 = vsel %vm4413, %v5097, 0.0
      %5438 = vadd.xlane.f32.xlu0 %v5437
      %v5439 = vpop.xlane.xlu0 %5438
      %v5440 = vsel %vm4413, %v5099, 0.0
      %5441 = vadd.xlane.f32.xlu0 %v5440
      %v5442 = vpop.xlane.xlu0 %5441
      %v5443 = vsel %vm4413, %v5101, 0.0
      %5444 = vadd.xlane.f32.xlu0 %v5443
      %v5445 = vpop.xlane.xlu0 %5444
      %v5446 = vsel %vm4413, %v5103, 0.0
      %5447 = vadd.xlane.f32.xlu0 %v5446
      %v5448 = vpop.xlane.xlu0 %5447
      %v5449 = vsel %vm4413, %v5105, 0.0
      %5450 = vadd.xlane.f32.xlu0 %v5449
      %v5451 = vpop.xlane.xlu0 %5450
      %v5452 = vsel %vm4413, %v5107, 0.0
      %5453 = vadd.xlane.f32.xlu0 %v5452
      %v5454 = vpop.xlane.xlu0 %5453
      %v5455 = vsel %vm4413, %v5109, 0.0
      %5456 = vadd.xlane.f32.xlu0 %v5455
      %v5457 = vpop.xlane.xlu0 %5456
      %v5458 = vsel %vm4413, %v5111, 0.0
      %5459 = vadd.xlane.f32.xlu0 %v5458
      %v5460 = vpop.xlane.xlu0 %5459
      %v5461 = vsel %vm4413, %v5113, 0.0
      %5462 = vadd.xlane.f32.xlu0 %v5461
      %v5463 = vpop.xlane.xlu0 %5462
      %v5464 = vsel %vm4413, %v5115, 0.0
      %5465 = vadd.xlane.f32.xlu0 %v5464
      %v5466 = vpop.xlane.xlu0 %5465
      %v5467 = vsel %vm4413, %v5117, 0.0
      %5468 = vadd.xlane.f32.xlu0 %v5467
      %v5469 = vpop.xlane.xlu0 %5468
      %v5470 = vsel %vm4413, %v5119, 0.0
      %5471 = vadd.xlane.f32.xlu0 %v5470
      %v5472 = vpop.xlane.xlu0 %5471
      %v5473 = vsel %vm4413, %v5121, 0.0
      %5474 = vadd.xlane.f32.xlu0 %v5473
      %v5475 = vpop.xlane.xlu0 %5474
      %v5476 = vsel %vm4413, %v5123, 0.0
      %5477 = vadd.xlane.f32.xlu0 %v5476
      %v5478 = vpop.xlane.xlu0 %5477
      %v5479 = vsel %vm4413, %v5125, 0.0
      %5480 = vadd.xlane.f32.xlu0 %v5479
      %v5481 = vpop.xlane.xlu0 %5480
      %v5482 = vsel %vm4413, %v5127, 0.0
      %5483 = vadd.xlane.f32.xlu0 %v5482
      %v5484 = vpop.xlane.xlu0 %5483
      %v5485 = vsel %vm4413, %v5129, 0.0
      %5486 = vadd.xlane.f32.xlu0 %v5485
      %v5487 = vpop.xlane.xlu0 %5486
      %v5488 = vsel %vm4413, %v5131, 0.0
      %5489 = vadd.xlane.f32.xlu0 %v5488
      %v5490 = vpop.xlane.xlu0 %5489
      %v5491 = vsel %vm4413, %v5133, 0.0
      %5492 = vadd.xlane.f32.xlu0 %v5491
      %v5493 = vpop.xlane.xlu0 %5492
      %v5494 = vsel %vm4413, %v5135, 0.0
      %5495 = vadd.xlane.f32.xlu0 %v5494
      %v5496 = vpop.xlane.xlu0 %5495
      %v5497 = vsel %vm4413, %v5137, 0.0
      %5498 = vadd.xlane.f32.xlu0 %v5497
      %v5499 = vpop.xlane.xlu0 %5498
      %v5500 = vsel %vm4413, %v5139, 0.0
      %5501 = vadd.xlane.f32.xlu0 %v5500
      %v5502 = vpop.xlane.xlu0 %5501
      %v5503 = vsel %vm4413, %v5141, 0.0
      %5504 = vadd.xlane.f32.xlu0 %v5503
      %v5505 = vpop.xlane.xlu0 %5504
      %v5506 = vsel %vm4413, %v5143, 0.0
      %5507 = vadd.xlane.f32.xlu0 %v5506
      %v5508 = vpop.xlane.xlu0 %5507
      %v5509 = vsel %vm4413, %v5145, 0.0
      %5510 = vadd.xlane.f32.xlu0 %v5509
      %v5511 = vpop.xlane.xlu0 %5510
      %v5512 = vsel %vm4413, %v5147, 0.0
      %5513 = vadd.xlane.f32.xlu0 %v5512
      %v5514 = vpop.xlane.xlu0 %5513
      %v5515 = vsel %vm4413, %v5149, 0.0
      %5516 = vadd.xlane.f32.xlu0 %v5515
      %v5517 = vpop.xlane.xlu0 %5516
      %v5518 = vsel %vm4413, %v5151, 0.0
      %5519 = vadd.xlane.f32.xlu0 %v5518
      %v5520 = vpop.xlane.xlu0 %5519
      %v5521 = vsel %vm4413, %v5153, 0.0
      %5522 = vadd.xlane.f32.xlu0 %v5521
      %v5523 = vpop.xlane.xlu0 %5522
      %v5524 = vsel %vm4413, %v5155, 0.0
      %5525 = vadd.xlane.f32.xlu0 %v5524
      %v5526 = vpop.xlane.xlu0 %5525
      %v5527 = vsel %vm4413, %v5157, 0.0
      %5528 = vadd.xlane.f32.xlu0 %v5527
      %v5529 = vpop.xlane.xlu0 %5528
      %v5530 = vsel %vm4413, %v5159, 0.0
      %5531 = vadd.xlane.f32.xlu0 %v5530
      %v5532 = vpop.xlane.xlu0 %5531
      %v5533 = vsel %vm4413, %v5161, 0.0
      %5534 = vadd.xlane.f32.xlu0 %v5533
      %v5535 = vpop.xlane.xlu0 %5534
      %v5536 = vsel %vm4413, %v5163, 0.0
      %5537 = vadd.xlane.f32.xlu0 %v5536
      %v5538 = vpop.xlane.xlu0 %5537
      %v5539 = vsel %vm4413, %v5165, 0.0
      %5540 = vadd.xlane.f32.xlu0 %v5539
      %v5541 = vpop.xlane.xlu0 %5540
      %v5542 = vsel %vm4413, %v5167, 0.0
      %5543 = vadd.xlane.f32.xlu0 %v5542
      %v5544 = vpop.xlane.xlu0 %5543
      %v5545 = vsel %vm4413, %v5169, 0.0
      %5546 = vadd.xlane.f32.xlu0 %v5545
      %v5547 = vpop.xlane.xlu0 %5546
      %v5548 = vsel %vm4413, %v5171, 0.0
      %5549 = vadd.xlane.f32.xlu0 %v5548
      %v5550 = vpop.xlane.xlu0 %5549
      %v5551 = vsel %vm4413, %v5173, 0.0
      %5552 = vadd.xlane.f32.xlu0 %v5551
      %v5553 = vpop.xlane.xlu0 %5552
      %v5554 = vsel %vm4413, %v5175, 0.0
      %5555 = vadd.xlane.f32.xlu0 %v5554
      %v5556 = vpop.xlane.xlu0 %5555
      %v5557 = vsel %vm4413, %v5177, 0.0
      %5558 = vadd.xlane.f32.xlu0 %v5557
      %v5559 = vpop.xlane.xlu0 %5558
      %v5560 = vsel %vm4413, %v5179, 0.0
      %5561 = vadd.xlane.f32.xlu0 %v5560
      %v5562 = vpop.xlane.xlu0 %5561
      %v5563 = vsel %vm4413, %v5181, 0.0
      %5564 = vadd.xlane.f32.xlu0 %v5563
      %v5565 = vpop.xlane.xlu0 %5564
      %v5566 = vrcp.pop %v5184
      %v5567 = vrcp.pop %v5187
      %v5568 = vrcp.pop %v5190
      %v5569 = vrcp.pop %v5193
      %v5570 = vrcp.pop %v5196
      %v5571 = vrcp.pop %v5199
      %v5572 = vrcp.pop %v5202
      %v5573 = vrcp.pop %v5205
      %v5574 = vrcp.pop %v5208
      %v5575 = vrcp.pop %v5211
      %v5576 = vrcp.pop %v5214
      %v5577 = vrcp.pop %v5217
      %v5578 = vrcp.pop %v5220
      %v5579 = vrcp.pop %v5223
      %v5580 = vrcp.pop %v5226
      %v5581 = vrcp.pop %v5229
      %v5582 = vrcp.pop %v5232
      %v5583 = vrcp.pop %v5235
      %v5584 = vrcp.pop %v5238
      %v5585 = vrcp.pop %v5241
      %v5586 = vrcp.pop %v5244
      %v5587 = vrcp.pop %v5247
      %v5588 = vrcp.pop %v5250
      %v5589 = vrcp.pop %v5253
      %v5590 = vrcp.pop %v5256
      %v5591 = vrcp.pop %v5259
      %v5592 = vrcp.pop %v5262
      %v5593 = vrcp.pop %v5265
      %v5594 = vrcp.pop %v5268
      %v5595 = vrcp.pop %v5271
      %v5596 = vrcp.pop %v5274
      %v5597 = vrcp.pop %v5277
      %v5598 = vrcp.pop %v5280
      %v5599 = vrcp.pop %v5283
      %v5600 = vrcp.pop %v5286
      %v5601 = vrcp.pop %v5289
      %v5602 = vrcp.pop %v5292
      %v5603 = vrcp.pop %v5295
      %v5604 = vrcp.pop %v5298
      %v5605 = vrcp.pop %v5301
      %v5606 = vrcp.pop %v5304
      %v5607 = vrcp.pop %v5307
      %v5608 = vrcp.pop %v5310
      %v5609 = vrcp.pop %v5313
      %v5610 = vrcp.pop %v5316
      %v5611 = vrcp.pop %v5319
      %v5612 = vrcp.pop %v5322
      %v5613 = vrcp.pop %v5325
      %v5614 = vrcp.pop %v5328
      %v5615 = vrcp.pop %v5331
      %v5616 = vrcp.pop %v5334
      %v5617 = vrcp.pop %v5337
      %v5618 = vrcp.pop %v5340
      %v5619 = vrcp.pop %v5343
      %v5620 = vrcp.pop %v5346
      %v5621 = vrcp.pop %v5349
      %v5622 = vrcp.pop %v5352
      %v5623 = vrcp.pop %v5355
      %v5624 = vrcp.pop %v5358
      %v5625 = vrcp.pop %v5361
      %v5626 = vrcp.pop %v5364
      %v5627 = vrcp.pop %v5367
      %v5628 = vrcp.pop %v5370
      %v5629 = vrcp.pop %v5373
      %v5630 = vrcp.pop %v5376
      %v5631 = vrcp.pop %v5379
      %v5632 = vrcp.pop %v5382
      %v5633 = vrcp.pop %v5385
      %v5634 = vrcp.pop %v5388
      %v5635 = vrcp.pop %v5391
      %v5636 = vrcp.pop %v5394
      %v5637 = vrcp.pop %v5397
      %v5638 = vrcp.pop %v5400
      %v5639 = vrcp.pop %v5403
      %v5640 = vrcp.pop %v5406
      %v5641 = vrcp.pop %v5409
      %v5642 = vrcp.pop %v5412
      %v5643 = vrcp.pop %v5415
      %v5644 = vrcp.pop %v5418
      %v5645 = vrcp.pop %v5421
      %v5646 = vrcp.pop %v5424
      %v5647 = vrcp.pop %v5427
      %v5648 = vrcp.pop %v5430
      %v5649 = vrcp.pop %v5433
      %v5650 = vrcp.pop %v5436
      %v5651 = vrcp.pop %v5439
      %v5652 = vrcp.pop %v5442
      %v5653 = vrcp.pop %v5445
      %v5654 = vrcp.pop %v5448
      %v5655 = vrcp.pop %v5451
      %v5656 = vrcp.pop %v5454
      %v5657 = vrcp.pop %v5457
      %v5658 = vrcp.pop %v5460
      %v5659 = vrcp.pop %v5463
      %v5660 = vrcp.pop %v5466
      %v5661 = vrcp.pop %v5469
      %v5662 = vrcp.pop %v5472
      %v5663 = vrcp.pop %v5475
      %v5664 = vrcp.pop %v5478
      %v5665 = vrcp.pop %v5481
      %v5666 = vrcp.pop %v5484
      %v5667 = vrcp.pop %v5487
      %v5668 = vrcp.pop %v5490
      %v5669 = vrcp.pop %v5493
      %v5670 = vrcp.pop %v5496
      %v5671 = vrcp.pop %v5499
      %v5672 = vrcp.pop %v5502
      %v5673 = vrcp.pop %v5505
      %v5674 = vrcp.pop %v5508
      %v5675 = vrcp.pop %v5511
      %v5676 = vrcp.pop %v5514
      %v5677 = vrcp.pop %v5517
      %v5678 = vrcp.pop %v5520
      %v5679 = vrcp.pop %v5523
      %v5680 = vrcp.pop %v5526
      %v5681 = vrcp.pop %v5529
      %v5682 = vrcp.pop %v5532
      %v5683 = vrcp.pop %v5535
      %v5684 = vrcp.pop %v5538
      %v5685 = vrcp.pop %v5541
      %v5686 = vrcp.pop %v5544
      %v5687 = vrcp.pop %v5547
      %v5688 = vrcp.pop %v5550
      %v5689 = vrcp.pop %v5553
      %v5690 = vrcp.pop %v5556
      %v5691 = vrcp.pop %v5559
      %v5692 = vrcp.pop %v5562
      %v5693 = vrcp.pop %v5565
      %v5694 = vmul.f32 %v4927, %v5566
      %v5695 = vmul.f32 %v4929, %v5567
      %v5696 = vmul.f32 %v4931, %v5568
      %v5697 = vmul.f32 %v4933, %v5569
      %v5698 = vmul.f32 %v4935, %v5570
      %v5699 = vmul.f32 %v4937, %v5571
      %v5700 = vmul.f32 %v4939, %v5572
      %v5701 = vmul.f32 %v4941, %v5573
      %v5702 = vmul.f32 %v4943, %v5574
      %v5703 = vmul.f32 %v4945, %v5575
      %v5704 = vmul.f32 %v4947, %v5576
      %v5705 = vmul.f32 %v4949, %v5577
      %v5706 = vmul.f32 %v4951, %v5578
      %v5707 = vmul.f32 %v4953, %v5579
      %v5708 = vmul.f32 %v4955, %v5580
      %v5709 = vmul.f32 %v4957, %v5581
      %v5710 = vmul.f32 %v4959, %v5582
      %v5711 = vmul.f32 %v4961, %v5583
      %v5712 = vmul.f32 %v4963, %v5584
      %v5713 = vmul.f32 %v4965, %v5585
      %v5714 = vmul.f32 %v4967, %v5586
      %v5715 = vmul.f32 %v4969, %v5587
      %v5716 = vmul.f32 %v4971, %v5588
      %v5717 = vmul.f32 %v4973, %v5589
      %v5718 = vmul.f32 %v4975, %v5590
      %v5719 = vmul.f32 %v4977, %v5591
      %v5720 = vmul.f32 %v4979, %v5592
      %v5721 = vmul.f32 %v4981, %v5593
      %v5722 = vmul.f32 %v4983, %v5594
      %v5723 = vmul.f32 %v4985, %v5595
      %v5724 = vmul.f32 %v4987, %v5596
      %v5725 = vmul.f32 %v4989, %v5597
      %v5726 = vmul.f32 %v4991, %v5598
      %v5727 = vmul.f32 %v4993, %v5599
      %v5728 = vmul.f32 %v4995, %v5600
      %v5729 = vmul.f32 %v4997, %v5601
      %v5730 = vmul.f32 %v4999, %v5602
      %v5731 = vmul.f32 %v5001, %v5603
      %v5732 = vmul.f32 %v5003, %v5604
      %v5733 = vmul.f32 %v5005, %v5605
      %v5734 = vmul.f32 %v5007, %v5606
      %v5735 = vmul.f32 %v5009, %v5607
      %v5736 = vmul.f32 %v5011, %v5608
      %v5737 = vmul.f32 %v5013, %v5609
      %v5738 = vmul.f32 %v5015, %v5610
      %v5739 = vmul.f32 %v5017, %v5611
      %v5740 = vmul.f32 %v5019, %v5612
      %v5741 = vmul.f32 %v5021, %v5613
      %v5742 = vmul.f32 %v5023, %v5614
      %v5743 = vmul.f32 %v5025, %v5615
      %v5744 = vmul.f32 %v5027, %v5616
      %v5745 = vmul.f32 %v5029, %v5617
      %v5746 = vmul.f32 %v5031, %v5618
      %v5747 = vmul.f32 %v5033, %v5619
      %v5748 = vmul.f32 %v5035, %v5620
      %v5749 = vmul.f32 %v5037, %v5621
      %v5750 = vmul.f32 %v5039, %v5622
      %v5751 = vmul.f32 %v5041, %v5623
      %v5752 = vmul.f32 %v5043, %v5624
      %v5753 = vmul.f32 %v5045, %v5625
      %v5754 = vmul.f32 %v5047, %v5626
      %v5755 = vmul.f32 %v5049, %v5627
      %v5756 = vmul.f32 %v5051, %v5628
      %v5757 = vmul.f32 %v5053, %v5629
      %v5758 = vmul.f32 %v5055, %v5630
      %v5759 = vmul.f32 %v5057, %v5631
      %v5760 = vmul.f32 %v5059, %v5632
      %v5761 = vmul.f32 %v5061, %v5633
      %v5762 = vmul.f32 %v5063, %v5634
      %v5763 = vmul.f32 %v5065, %v5635
      %v5764 = vmul.f32 %v5067, %v5636
      %v5765 = vmul.f32 %v5069, %v5637
      %v5766 = vmul.f32 %v5071, %v5638
      %v5767 = vmul.f32 %v5073, %v5639
      %v5768 = vmul.f32 %v5075, %v5640
      %v5769 = vmul.f32 %v5077, %v5641
      %v5770 = vmul.f32 %v5079, %v5642
      %v5771 = vmul.f32 %v5081, %v5643
      %v5772 = vmul.f32 %v5083, %v5644
      %v5773 = vmul.f32 %v5085, %v5645
      %v5774 = vmul.f32 %v5087, %v5646
      %v5775 = vmul.f32 %v5089, %v5647
      %v5776 = vmul.f32 %v5091, %v5648
      %v5777 = vmul.f32 %v5093, %v5649
      %v5778 = vmul.f32 %v5095, %v5650
      %v5779 = vmul.f32 %v5097, %v5651
      %v5780 = vmul.f32 %v5099, %v5652
      %v5781 = vmul.f32 %v5101, %v5653
      %v5782 = vmul.f32 %v5103, %v5654
      %v5783 = vmul.f32 %v5105, %v5655
      %v5784 = vmul.f32 %v5107, %v5656
      %v5785 = vmul.f32 %v5109, %v5657
      %v5786 = vmul.f32 %v5111, %v5658
      %v5787 = vmul.f32 %v5113, %v5659
      %v5788 = vmul.f32 %v5115, %v5660
      %v5789 = vmul.f32 %v5117, %v5661
      %v5790 = vmul.f32 %v5119, %v5662
      %v5791 = vmul.f32 %v5121, %v5663
      %v5792 = vmul.f32 %v5123, %v5664
      %v5793 = vmul.f32 %v5125, %v5665
      %v5794 = vmul.f32 %v5127, %v5666
      %v5795 = vmul.f32 %v5129, %v5667
      %v5796 = vmul.f32 %v5131, %v5668
      %v5797 = vmul.f32 %v5133, %v5669
      %v5798 = vmul.f32 %v5135, %v5670
      %v5799 = vmul.f32 %v5137, %v5671
      %v5800 = vmul.f32 %v5139, %v5672
      %v5801 = vmul.f32 %v5141, %v5673
      %v5802 = vmul.f32 %v5143, %v5674
      %v5803 = vmul.f32 %v5145, %v5675
      %v5804 = vmul.f32 %v5147, %v5676
      %v5805 = vmul.f32 %v5149, %v5677
      %v5806 = vmul.f32 %v5151, %v5678
      %v5807 = vmul.f32 %v5153, %v5679
      %v5808 = vmul.f32 %v5155, %v5680
      %v5809 = vmul.f32 %v5157, %v5681
      %v5810 = vmul.f32 %v5159, %v5682
      %v5811 = vmul.f32 %v5161, %v5683
      %v5812 = vmul.f32 %v5163, %v5684
      %v5813 = vmul.f32 %v5165, %v5685
      %v5814 = vmul.f32 %v5167, %v5686
      %v5815 = vmul.f32 %v5169, %v5687
      %v5816 = vmul.f32 %v5171, %v5688
      %v5817 = vmul.f32 %v5173, %v5689
      %v5818 = vmul.f32 %v5175, %v5690
      %v5819 = vmul.f32 %v5177, %v5691
      %v5820 = vmul.f32 %v5179, %v5692
      %v5821 = vmul.f32 %v5181, %v5693
      %v5822 = vpack.c.bf16 %v5695, %v5694
      %v5823 = vpack.c.bf16 %v5697, %v5696
      %v5824 = vpack.c.bf16 %v5699, %v5698
      %v5825 = vpack.c.bf16 %v5701, %v5700
      %v5826 = vpack.c.bf16 %v5703, %v5702
      %v5827 = vpack.c.bf16 %v5705, %v5704
      %v5828 = vpack.c.bf16 %v5707, %v5706
      %v5829 = vpack.c.bf16 %v5709, %v5708
      %v5830 = vpack.c.bf16 %v5711, %v5710
      %v5831 = vpack.c.bf16 %v5713, %v5712
      %v5832 = vpack.c.bf16 %v5715, %v5714
      %v5833 = vpack.c.bf16 %v5717, %v5716
      %v5834 = vpack.c.bf16 %v5719, %v5718
      %v5835 = vpack.c.bf16 %v5721, %v5720
      %v5836 = vpack.c.bf16 %v5723, %v5722
      %v5837 = vpack.c.bf16 %v5725, %v5724
      %v5838 = vpack.c.bf16 %v5727, %v5726
      %v5839 = vpack.c.bf16 %v5729, %v5728
      %v5840 = vpack.c.bf16 %v5731, %v5730
      %v5841 = vpack.c.bf16 %v5733, %v5732
      %v5842 = vpack.c.bf16 %v5735, %v5734
      %v5843 = vpack.c.bf16 %v5737, %v5736
      %v5844 = vpack.c.bf16 %v5739, %v5738
      %v5845 = vpack.c.bf16 %v5741, %v5740
      %v5846 = vpack.c.bf16 %v5743, %v5742
      %v5847 = vpack.c.bf16 %v5745, %v5744
      %v5848 = vpack.c.bf16 %v5747, %v5746
      %v5849 = vpack.c.bf16 %v5749, %v5748
      %v5850 = vpack.c.bf16 %v5751, %v5750
      %v5851 = vpack.c.bf16 %v5753, %v5752
      %v5852 = vpack.c.bf16 %v5755, %v5754
      %v5853 = vpack.c.bf16 %v5757, %v5756
      %v5854 = vpack.c.bf16 %v5759, %v5758
      %v5855 = vpack.c.bf16 %v5761, %v5760
      %v5856 = vpack.c.bf16 %v5763, %v5762
      %v5857 = vpack.c.bf16 %v5765, %v5764
      %v5858 = vpack.c.bf16 %v5767, %v5766
      %v5859 = vpack.c.bf16 %v5769, %v5768
      %v5860 = vpack.c.bf16 %v5771, %v5770
      %v5861 = vpack.c.bf16 %v5773, %v5772
      %v5862 = vpack.c.bf16 %v5775, %v5774
      %v5863 = vpack.c.bf16 %v5777, %v5776
      %v5864 = vpack.c.bf16 %v5779, %v5778
      %v5865 = vpack.c.bf16 %v5781, %v5780
      %v5866 = vpack.c.bf16 %v5783, %v5782
      %v5867 = vpack.c.bf16 %v5785, %v5784
      %v5868 = vpack.c.bf16 %v5787, %v5786
      %v5869 = vpack.c.bf16 %v5789, %v5788
      %v5870 = vpack.c.bf16 %v5791, %v5790
      %v5871 = vpack.c.bf16 %v5793, %v5792
      %v5872 = vpack.c.bf16 %v5795, %v5794
      %v5873 = vpack.c.bf16 %v5797, %v5796
      %v5874 = vpack.c.bf16 %v5799, %v5798
      %v5875 = vpack.c.bf16 %v5801, %v5800
      %v5876 = vpack.c.bf16 %v5803, %v5802
      %v5877 = vpack.c.bf16 %v5805, %v5804
      %v5878 = vpack.c.bf16 %v5807, %v5806
      %v5879 = vpack.c.bf16 %v5809, %v5808
      %v5880 = vpack.c.bf16 %v5811, %v5810
      %v5881 = vpack.c.bf16 %v5813, %v5812
      %v5882 = vpack.c.bf16 %v5815, %v5814
      %v5883 = vpack.c.bf16 %v5817, %v5816
      %v5884 = vpack.c.bf16 %v5819, %v5818
      %v5885 = vpack.c.bf16 %v5821, %v5820
      %v5887 = vsel %vm4413, %v5822, 0
      %v5890 = vsel %vm4413, %v5823, 0
      %v5893 = vsel %vm4413, %v5824, 0
      %v5896 = vsel %vm4413, %v5825, 0
      %5898 = vmatprep.subr.bf16.mxu0 0
      %5899 = vmatpush1.bf16.msra.mxu0 0
      %5900 = vmatprep.subr.bf16.mxu0 0
      %5901 = vmatpush1.bf16.msra.mxu0 0
      %5902 = vmatprep.subr.bf16.mxu0 0
      %5903 = vmatpush1.bf16.msra.mxu0 0
      %5904 = vmatprep.subr.bf16.mxu0 0
      %5905 = vmatpush1.bf16.msra.mxu0 0
      %5906 = vmatprep.subr.bf16.mxu0 0
      %5907 = vmatpush1.bf16.msra.mxu0 %v2671
      %5908 = vmatprep.subr.bf16.mxu0 0
      %5909 = vmatpush1.bf16.msra.mxu0 %v2670
      %5910 = vmatprep.subr.bf16.mxu0 0
      %5911 = vmatpush1.bf16.msra.mxu0 %v2669
      %5912 = vmatprep.subr.bf16.mxu0 0
      %5913 = vmatpush1.bf16.msra.mxu0 %v2668
      %5914 = vmatprep.subr.bf16.mxu0 0
      %5915 = vmatpush2.bf16.msra.mxu0 0
      %5916 = vmatprep.subr.bf16.mxu0 0
      %5917 = vmatpush2.bf16.msra.mxu0 0
      %5918 = vmatprep.subr.bf16.mxu0 0
      %5919 = vmatpush2.bf16.msra.mxu0 0
      %5920 = vmatprep.subr.bf16.mxu0 0
      %5921 = vmatpush2.bf16.msra.mxu0 0
      %5922 = vmatprep.subr.bf16.mxu0 0
      %5923 = vmatpush2.bf16.msra.mxu0 0
      %5924 = vmatprep.subr.bf16.mxu0 0
      %5925 = vmatpush2.bf16.msra.mxu0 0
      %5926 = vmatprep.subr.bf16.mxu0 0
      %5927 = vmatpush2.bf16.msra.mxu0 0
      %5928 = vmatprep.subr.bf16.mxu0 0
      %5929 = vmatpush2.bf16.msra.mxu0 0
      %5930 = vmatprep.mubr.bf16.mxu0 0
      %5931 = vmatmul.mubr.bf16.gmra.mxu0 %v5887
      %v5932 = vpop.f32.mrf.mxu0
      %v5933 = vadd.f32 0.0, %v5932
      %v5934 = vpop.f32.mrf.mxu0
      %v5935 = vpop.f32.mrf.mxu0
      %v5936 = vadd.f32 0.0, %v5935
      %v5937 = vpop.f32.mrf.mxu0
      %5938 = vmatprep.mubr.bf16.mxu0 0
      %5939 = vmatmul.mubr.bf16.gmra.mxu0 %v5890
      %v5940 = vpop.f32.mrf.mxu0
      %v5941 = vadd.f32 0.0, %v5940
      %v5942 = vpop.f32.mrf.mxu0
      %v5943 = vpop.f32.mrf.mxu0
      %v5944 = vadd.f32 0.0, %v5943
      %v5945 = vpop.f32.mrf.mxu0
      %5946 = vmatprep.mubr.bf16.mxu0 0
      %5947 = vmatmul.mubr.bf16.gmra.mxu0 %v5893
      %v5948 = vpop.f32.mrf.mxu0
      %v5949 = vadd.f32 0.0, %v5948
      %v5950 = vpop.f32.mrf.mxu0
      %v5951 = vpop.f32.mrf.mxu0
      %v5952 = vadd.f32 0.0, %v5951
      %v5953 = vpop.f32.mrf.mxu0
      %5954 = vmatprep.mubr.bf16.mxu0 0
      %5955 = vmatmul.mubr.bf16.gmra.mxu0 %v5896
      %v5956 = vpop.f32.mrf.mxu0
      %v5957 = vadd.f32 0.0, %v5956
      %v5958 = vpop.f32.mrf.mxu0
      %v5959 = vpop.f32.mrf.mxu0
      %v5960 = vadd.f32 0.0, %v5959
      %v5961 = vpop.f32.mrf.mxu0
      %5962 = vdwg.mxu0
      %v5964 = vsel %vm4413, %v5826, 0
      %v5967 = vsel %vm4413, %v5827, 0
      %v5970 = vsel %vm4413, %v5828, 0
      %v5973 = vsel %vm4413, %v5829, 0
      %5975 = vmatprep.subr.bf16.mxu0 0
      %5976 = vmatpush1.bf16.msra.mxu0 0
      %5977 = vmatprep.subr.bf16.mxu0 0
      %5978 = vmatpush1.bf16.msra.mxu0 0
      %5979 = vmatprep.subr.bf16.mxu0 0
      %5980 = vmatpush1.bf16.msra.mxu0 0
      %5981 = vmatprep.subr.bf16.mxu0 0
      %5982 = vmatpush1.bf16.msra.mxu0 0
      %5983 = vmatprep.subr.bf16.mxu0 0
      %5984 = vmatpush1.bf16.msra.mxu0 %v2675
      %5985 = vmatprep.subr.bf16.mxu0 0
      %5986 = vmatpush1.bf16.msra.mxu0 %v2674
      %5987 = vmatprep.subr.bf16.mxu0 0
      %5988 = vmatpush1.bf16.msra.mxu0 %v2673
      %5989 = vmatprep.subr.bf16.mxu0 0
      %5990 = vmatpush1.bf16.msra.mxu0 %v2672
      %5991 = vmatprep.subr.bf16.mxu0 0
      %5992 = vmatpush2.bf16.msra.mxu0 0
      %5993 = vmatprep.subr.bf16.mxu0 0
      %5994 = vmatpush2.bf16.msra.mxu0 0
      %5995 = vmatprep.subr.bf16.mxu0 0
      %5996 = vmatpush2.bf16.msra.mxu0 0
      %5997 = vmatprep.subr.bf16.mxu0 0
      %5998 = vmatpush2.bf16.msra.mxu0 0
      %5999 = vmatprep.subr.bf16.mxu0 0
      %6000 = vmatpush2.bf16.msra.mxu0 0
      %6001 = vmatprep.subr.bf16.mxu0 0
      %6002 = vmatpush2.bf16.msra.mxu0 0
      %6003 = vmatprep.subr.bf16.mxu0 0
      %6004 = vmatpush2.bf16.msra.mxu0 0
      %6005 = vmatprep.subr.bf16.mxu0 0
      %6006 = vmatpush2.bf16.msra.mxu0 0
      %6007 = vmatprep.mubr.bf16.mxu0 0
      %6008 = vmatmul.mubr.bf16.gmra.mxu0 %v5964
      %v6009 = vpop.f32.mrf.mxu0
      %v6010 = vadd.f32 0.0, %v6009
      %v6011 = vpop.f32.mrf.mxu0
      %v6012 = vpop.f32.mrf.mxu0
      %v6013 = vadd.f32 0.0, %v6012
      %v6014 = vpop.f32.mrf.mxu0
      %6015 = vmatprep.mubr.bf16.mxu0 0
      %6016 = vmatmul.mubr.bf16.gmra.mxu0 %v5967
      %v6017 = vpop.f32.mrf.mxu0
      %v6018 = vadd.f32 0.0, %v6017
      %v6019 = vpop.f32.mrf.mxu0
      %v6020 = vpop.f32.mrf.mxu0
      %v6021 = vadd.f32 0.0, %v6020
      %v6022 = vpop.f32.mrf.mxu0
      %6023 = vmatprep.mubr.bf16.mxu0 0
      %6024 = vmatmul.mubr.bf16.gmra.mxu0 %v5970
      %v6025 = vpop.f32.mrf.mxu0
      %v6026 = vadd.f32 0.0, %v6025
      %v6027 = vpop.f32.mrf.mxu0
      %v6028 = vpop.f32.mrf.mxu0
      %v6029 = vadd.f32 0.0, %v6028
      %v6030 = vpop.f32.mrf.mxu0
      %6031 = vmatprep.mubr.bf16.mxu0 0
      %6032 = vmatmul.mubr.bf16.gmra.mxu0 %v5973
      %v6033 = vpop.f32.mrf.mxu0
      %v6034 = vadd.f32 0.0, %v6033
      %v6035 = vpop.f32.mrf.mxu0
      %v6036 = vpop.f32.mrf.mxu0
      %v6037 = vadd.f32 0.0, %v6036
      %v6038 = vpop.f32.mrf.mxu0
      %6039 = vdwg.mxu0
      %v6041 = vsel %vm4413, %v5830, 0
      %v6044 = vsel %vm4413, %v5831, 0
      %v6047 = vsel %vm4413, %v5832, 0
      %v6050 = vsel %vm4413, %v5833, 0
      %6052 = vmatprep.subr.bf16.mxu0 0
      %6053 = vmatpush1.bf16.msra.mxu0 0
      %6054 = vmatprep.subr.bf16.mxu0 0
      %6055 = vmatpush1.bf16.msra.mxu0 0
      %6056 = vmatprep.subr.bf16.mxu0 0
      %6057 = vmatpush1.bf16.msra.mxu0 0
      %6058 = vmatprep.subr.bf16.mxu0 0
      %6059 = vmatpush1.bf16.msra.mxu0 0
      %6060 = vmatprep.subr.bf16.mxu0 0
      %6061 = vmatpush1.bf16.msra.mxu0 %v2679
      %6062 = vmatprep.subr.bf16.mxu0 0
      %6063 = vmatpush1.bf16.msra.mxu0 %v2678
      %6064 = vmatprep.subr.bf16.mxu0 0
      %6065 = vmatpush1.bf16.msra.mxu0 %v2677
      %6066 = vmatprep.subr.bf16.mxu0 0
      %6067 = vmatpush1.bf16.msra.mxu0 %v2676
      %6068 = vmatprep.subr.bf16.mxu0 0
      %6069 = vmatpush2.bf16.msra.mxu0 0
      %6070 = vmatprep.subr.bf16.mxu0 0
      %6071 = vmatpush2.bf16.msra.mxu0 0
      %6072 = vmatprep.subr.bf16.mxu0 0
      %6073 = vmatpush2.bf16.msra.mxu0 0
      %6074 = vmatprep.subr.bf16.mxu0 0
      %6075 = vmatpush2.bf16.msra.mxu0 0
      %6076 = vmatprep.subr.bf16.mxu0 0
      %6077 = vmatpush2.bf16.msra.mxu0 0
      %6078 = vmatprep.subr.bf16.mxu0 0
      %6079 = vmatpush2.bf16.msra.mxu0 0
      %6080 = vmatprep.subr.bf16.mxu0 0
      %6081 = vmatpush2.bf16.msra.mxu0 0
      %6082 = vmatprep.subr.bf16.mxu0 0
      %6083 = vmatpush2.bf16.msra.mxu0 0
      %6084 = vmatprep.mubr.bf16.mxu0 0
      %6085 = vmatmul.mubr.bf16.gmra.mxu0 %v6041
      %v6086 = vpop.f32.mrf.mxu0
      %v6087 = vadd.f32 0.0, %v6086
      %v6088 = vpop.f32.mrf.mxu0
      %v6089 = vpop.f32.mrf.mxu0
      %v6090 = vadd.f32 0.0, %v6089
      %v6091 = vpop.f32.mrf.mxu0
      %6092 = vmatprep.mubr.bf16.mxu0 0
      %6093 = vmatmul.mubr.bf16.gmra.mxu0 %v6044
      %v6094 = vpop.f32.mrf.mxu0
      %v6095 = vadd.f32 0.0, %v6094
      %v6096 = vpop.f32.mrf.mxu0
      %v6097 = vpop.f32.mrf.mxu0
      %v6098 = vadd.f32 0.0, %v6097
      %v6099 = vpop.f32.mrf.mxu0
      %6100 = vmatprep.mubr.bf16.mxu0 0
      %6101 = vmatmul.mubr.bf16.gmra.mxu0 %v6047
      %v6102 = vpop.f32.mrf.mxu0
      %v6103 = vadd.f32 0.0, %v6102
      %v6104 = vpop.f32.mrf.mxu0
      %v6105 = vpop.f32.mrf.mxu0
      %v6106 = vadd.f32 0.0, %v6105
      %v6107 = vpop.f32.mrf.mxu0
      %6108 = vmatprep.mubr.bf16.mxu0 0
      %6109 = vmatmul.mubr.bf16.gmra.mxu0 %v6050
      %v6110 = vpop.f32.mrf.mxu0
      %v6111 = vadd.f32 0.0, %v6110
      %v6112 = vpop.f32.mrf.mxu0
      %v6113 = vpop.f32.mrf.mxu0
      %v6114 = vadd.f32 0.0, %v6113
      %v6115 = vpop.f32.mrf.mxu0
      %6116 = vdwg.mxu0
      %v6118 = vsel %vm4413, %v5834, 0
      %v6121 = vsel %vm4413, %v5835, 0
      %v6124 = vsel %vm4413, %v5836, 0
      %v6127 = vsel %vm4413, %v5837, 0
      %6129 = vmatprep.subr.bf16.mxu0 0
      %6130 = vmatpush1.bf16.msra.mxu0 0
      %6131 = vmatprep.subr.bf16.mxu0 0
      %6132 = vmatpush1.bf16.msra.mxu0 0
      %6133 = vmatprep.subr.bf16.mxu0 0
      %6134 = vmatpush1.bf16.msra.mxu0 0
      %6135 = vmatprep.subr.bf16.mxu0 0
      %6136 = vmatpush1.bf16.msra.mxu0 0
      %6137 = vmatprep.subr.bf16.mxu0 0
      %6138 = vmatpush1.bf16.msra.mxu0 %v2683
      %6139 = vmatprep.subr.bf16.mxu0 0
      %6140 = vmatpush1.bf16.msra.mxu0 %v2682
      %6141 = vmatprep.subr.bf16.mxu0 0
      %6142 = vmatpush1.bf16.msra.mxu0 %v2681
      %6143 = vmatprep.subr.bf16.mxu0 0
      %6144 = vmatpush1.bf16.msra.mxu0 %v2680
      %6145 = vmatprep.subr.bf16.mxu0 0
      %6146 = vmatpush2.bf16.msra.mxu0 0
      %6147 = vmatprep.subr.bf16.mxu0 0
      %6148 = vmatpush2.bf16.msra.mxu0 0
      %6149 = vmatprep.subr.bf16.mxu0 0
      %6150 = vmatpush2.bf16.msra.mxu0 0
      %6151 = vmatprep.subr.bf16.mxu0 0
      %6152 = vmatpush2.bf16.msra.mxu0 0
      %6153 = vmatprep.subr.bf16.mxu0 0
      %6154 = vmatpush2.bf16.msra.mxu0 0
      %6155 = vmatprep.subr.bf16.mxu0 0
      %6156 = vmatpush2.bf16.msra.mxu0 0
      %6157 = vmatprep.subr.bf16.mxu0 0
      %6158 = vmatpush2.bf16.msra.mxu0 0
      %6159 = vmatprep.subr.bf16.mxu0 0
      %6160 = vmatpush2.bf16.msra.mxu0 0
      %6161 = vmatprep.mubr.bf16.mxu0 0
      %6162 = vmatmul.mubr.bf16.gmra.mxu0 %v6118
      %v6163 = vpop.f32.mrf.mxu0
      %v6164 = vadd.f32 0.0, %v6163
      %v6165 = vpop.f32.mrf.mxu0
      %v6166 = vpop.f32.mrf.mxu0
      %v6167 = vadd.f32 0.0, %v6166
      %v6168 = vpop.f32.mrf.mxu0
      %6169 = vmatprep.mubr.bf16.mxu0 0
      %6170 = vmatmul.mubr.bf16.gmra.mxu0 %v6121
      %v6171 = vpop.f32.mrf.mxu0
      %v6172 = vadd.f32 0.0, %v6171
      %v6173 = vpop.f32.mrf.mxu0
      %v6174 = vpop.f32.mrf.mxu0
      %v6175 = vadd.f32 0.0, %v6174
      %v6176 = vpop.f32.mrf.mxu0
      %6177 = vmatprep.mubr.bf16.mxu0 0
      %6178 = vmatmul.mubr.bf16.gmra.mxu0 %v6124
      %v6179 = vpop.f32.mrf.mxu0
      %v6180 = vadd.f32 0.0, %v6179
      %v6181 = vpop.f32.mrf.mxu0
      %v6182 = vpop.f32.mrf.mxu0
      %v6183 = vadd.f32 0.0, %v6182
      %v6184 = vpop.f32.mrf.mxu0
      %6185 = vmatprep.mubr.bf16.mxu0 0
      %6186 = vmatmul.mubr.bf16.gmra.mxu0 %v6127
      %v6187 = vpop.f32.mrf.mxu0
      %v6188 = vadd.f32 0.0, %v6187
      %v6189 = vpop.f32.mrf.mxu0
      %v6190 = vpop.f32.mrf.mxu0
      %v6191 = vadd.f32 0.0, %v6190
      %v6192 = vpop.f32.mrf.mxu0
      %6193 = vdwg.mxu0
      %v6195 = vsel %vm4413, %v5838, 0
      %v6198 = vsel %vm4413, %v5839, 0
      %v6201 = vsel %vm4413, %v5840, 0
      %v6204 = vsel %vm4413, %v5841, 0
      %6206 = vmatprep.subr.bf16.mxu0 0
      %6207 = vmatpush1.bf16.msra.mxu0 0
      %6208 = vmatprep.subr.bf16.mxu0 0
      %6209 = vmatpush1.bf16.msra.mxu0 0
      %6210 = vmatprep.subr.bf16.mxu0 0
      %6211 = vmatpush1.bf16.msra.mxu0 0
      %6212 = vmatprep.subr.bf16.mxu0 0
      %6213 = vmatpush1.bf16.msra.mxu0 0
      %6214 = vmatprep.subr.bf16.mxu0 0
      %6215 = vmatpush1.bf16.msra.mxu0 %v2687
      %6216 = vmatprep.subr.bf16.mxu0 0
      %6217 = vmatpush1.bf16.msra.mxu0 %v2686
      %6218 = vmatprep.subr.bf16.mxu0 0
      %6219 = vmatpush1.bf16.msra.mxu0 %v2685
      %6220 = vmatprep.subr.bf16.mxu0 0
      %6221 = vmatpush1.bf16.msra.mxu0 %v2684
      %6222 = vmatprep.subr.bf16.mxu0 0
      %6223 = vmatpush2.bf16.msra.mxu0 0
      %6224 = vmatprep.subr.bf16.mxu0 0
      %6225 = vmatpush2.bf16.msra.mxu0 0
      %6226 = vmatprep.subr.bf16.mxu0 0
      %6227 = vmatpush2.bf16.msra.mxu0 0
      %6228 = vmatprep.subr.bf16.mxu0 0
      %6229 = vmatpush2.bf16.msra.mxu0 0
      %6230 = vmatprep.subr.bf16.mxu0 0
      %6231 = vmatpush2.bf16.msra.mxu0 0
      %6232 = vmatprep.subr.bf16.mxu0 0
      %6233 = vmatpush2.bf16.msra.mxu0 0
      %6234 = vmatprep.subr.bf16.mxu0 0
      %6235 = vmatpush2.bf16.msra.mxu0 0
      %6236 = vmatprep.subr.bf16.mxu0 0
      %6237 = vmatpush2.bf16.msra.mxu0 0
      %6238 = vmatprep.mubr.bf16.mxu0 0
      %6239 = vmatmul.mubr.bf16.gmra.mxu0 %v6195
      %v6240 = vpop.f32.mrf.mxu0
      %v6241 = vadd.f32 0.0, %v6240
      %v6242 = vpop.f32.mrf.mxu0
      %v6243 = vpop.f32.mrf.mxu0
      %v6244 = vadd.f32 0.0, %v6243
      %v6245 = vpop.f32.mrf.mxu0
      %6246 = vmatprep.mubr.bf16.mxu0 0
      %6247 = vmatmul.mubr.bf16.gmra.mxu0 %v6198
      %v6248 = vpop.f32.mrf.mxu0
      %v6249 = vadd.f32 0.0, %v6248
      %v6250 = vpop.f32.mrf.mxu0
      %v6251 = vpop.f32.mrf.mxu0
      %v6252 = vadd.f32 0.0, %v6251
      %v6253 = vpop.f32.mrf.mxu0
      %6254 = vmatprep.mubr.bf16.mxu0 0
      %6255 = vmatmul.mubr.bf16.gmra.mxu0 %v6201
      %v6256 = vpop.f32.mrf.mxu0
      %v6257 = vadd.f32 0.0, %v6256
      %v6258 = vpop.f32.mrf.mxu0
      %v6259 = vpop.f32.mrf.mxu0
      %v6260 = vadd.f32 0.0, %v6259
      %v6261 = vpop.f32.mrf.mxu0
      %6262 = vmatprep.mubr.bf16.mxu0 0
      %6263 = vmatmul.mubr.bf16.gmra.mxu0 %v6204
      %v6264 = vpop.f32.mrf.mxu0
      %v6265 = vadd.f32 0.0, %v6264
      %v6266 = vpop.f32.mrf.mxu0
      %v6267 = vpop.f32.mrf.mxu0
      %v6268 = vadd.f32 0.0, %v6267
      %v6269 = vpop.f32.mrf.mxu0
      %6270 = vdwg.mxu0
      %v6272 = vsel %vm4413, %v5842, 0
      %v6275 = vsel %vm4413, %v5843, 0
      %v6278 = vsel %vm4413, %v5844, 0
      %v6281 = vsel %vm4413, %v5845, 0
      %6283 = vmatprep.subr.bf16.mxu0 0
      %6284 = vmatpush1.bf16.msra.mxu0 0
      %6285 = vmatprep.subr.bf16.mxu0 0
      %6286 = vmatpush1.bf16.msra.mxu0 0
      %6287 = vmatprep.subr.bf16.mxu0 0
      %6288 = vmatpush1.bf16.msra.mxu0 0
      %6289 = vmatprep.subr.bf16.mxu0 0
      %6290 = vmatpush1.bf16.msra.mxu0 0
      %6291 = vmatprep.subr.bf16.mxu0 0
      %6292 = vmatpush1.bf16.msra.mxu0 %v2691
      %6293 = vmatprep.subr.bf16.mxu0 0
      %6294 = vmatpush1.bf16.msra.mxu0 %v2690
      %6295 = vmatprep.subr.bf16.mxu0 0
      %6296 = vmatpush1.bf16.msra.mxu0 %v2689
      %6297 = vmatprep.subr.bf16.mxu0 0
      %6298 = vmatpush1.bf16.msra.mxu0 %v2688
      %6299 = vmatprep.subr.bf16.mxu0 0
      %6300 = vmatpush2.bf16.msra.mxu0 0
      %6301 = vmatprep.subr.bf16.mxu0 0
      %6302 = vmatpush2.bf16.msra.mxu0 0
      %6303 = vmatprep.subr.bf16.mxu0 0
      %6304 = vmatpush2.bf16.msra.mxu0 0
      %6305 = vmatprep.subr.bf16.mxu0 0
      %6306 = vmatpush2.bf16.msra.mxu0 0
      %6307 = vmatprep.subr.bf16.mxu0 0
      %6308 = vmatpush2.bf16.msra.mxu0 0
      %6309 = vmatprep.subr.bf16.mxu0 0
      %6310 = vmatpush2.bf16.msra.mxu0 0
      %6311 = vmatprep.subr.bf16.mxu0 0
      %6312 = vmatpush2.bf16.msra.mxu0 0
      %6313 = vmatprep.subr.bf16.mxu0 0
      %6314 = vmatpush2.bf16.msra.mxu0 0
      %6315 = vmatprep.mubr.bf16.mxu0 0
      %6316 = vmatmul.mubr.bf16.gmra.mxu0 %v6272
      %v6317 = vpop.f32.mrf.mxu0
      %v6318 = vadd.f32 0.0, %v6317
      %v6319 = vpop.f32.mrf.mxu0
      %v6320 = vpop.f32.mrf.mxu0
      %v6321 = vadd.f32 0.0, %v6320
      %v6322 = vpop.f32.mrf.mxu0
      %6323 = vmatprep.mubr.bf16.mxu0 0
      %6324 = vmatmul.mubr.bf16.gmra.mxu0 %v6275
      %v6325 = vpop.f32.mrf.mxu0
      %v6326 = vadd.f32 0.0, %v6325
      %v6327 = vpop.f32.mrf.mxu0
      %v6328 = vpop.f32.mrf.mxu0
      %v6329 = vadd.f32 0.0, %v6328
      %v6330 = vpop.f32.mrf.mxu0
      %6331 = vmatprep.mubr.bf16.mxu0 0
      %6332 = vmatmul.mubr.bf16.gmra.mxu0 %v6278
      %v6333 = vpop.f32.mrf.mxu0
      %v6334 = vadd.f32 0.0, %v6333
      %v6335 = vpop.f32.mrf.mxu0
      %v6336 = vpop.f32.mrf.mxu0
      %v6337 = vadd.f32 0.0, %v6336
      %v6338 = vpop.f32.mrf.mxu0
      %6339 = vmatprep.mubr.bf16.mxu0 0
      %6340 = vmatmul.mubr.bf16.gmra.mxu0 %v6281
      %v6341 = vpop.f32.mrf.mxu0
      %v6342 = vadd.f32 0.0, %v6341
      %v6343 = vpop.f32.mrf.mxu0
      %v6344 = vpop.f32.mrf.mxu0
      %v6345 = vadd.f32 0.0, %v6344
      %v6346 = vpop.f32.mrf.mxu0
      %6347 = vdwg.mxu0
      %v6349 = vsel %vm4413, %v5846, 0
      %v6352 = vsel %vm4413, %v5847, 0
      %v6355 = vsel %vm4413, %v5848, 0
      %v6358 = vsel %vm4413, %v5849, 0
      %6360 = vmatprep.subr.bf16.mxu0 0
      %6361 = vmatpush1.bf16.msra.mxu0 0
      %6362 = vmatprep.subr.bf16.mxu0 0
      %6363 = vmatpush1.bf16.msra.mxu0 0
      %6364 = vmatprep.subr.bf16.mxu0 0
      %6365 = vmatpush1.bf16.msra.mxu0 0
      %6366 = vmatprep.subr.bf16.mxu0 0
      %6367 = vmatpush1.bf16.msra.mxu0 0
      %6368 = vmatprep.subr.bf16.mxu0 0
      %6369 = vmatpush1.bf16.msra.mxu0 %v2695
      %6370 = vmatprep.subr.bf16.mxu0 0
      %6371 = vmatpush1.bf16.msra.mxu0 %v2694
      %6372 = vmatprep.subr.bf16.mxu0 0
      %6373 = vmatpush1.bf16.msra.mxu0 %v2693
      %6374 = vmatprep.subr.bf16.mxu0 0
      %6375 = vmatpush1.bf16.msra.mxu0 %v2692
      %6376 = vmatprep.subr.bf16.mxu0 0
      %6377 = vmatpush2.bf16.msra.mxu0 0
      %6378 = vmatprep.subr.bf16.mxu0 0
      %6379 = vmatpush2.bf16.msra.mxu0 0
      %6380 = vmatprep.subr.bf16.mxu0 0
      %6381 = vmatpush2.bf16.msra.mxu0 0
      %6382 = vmatprep.subr.bf16.mxu0 0
      %6383 = vmatpush2.bf16.msra.mxu0 0
      %6384 = vmatprep.subr.bf16.mxu0 0
      %6385 = vmatpush2.bf16.msra.mxu0 0
      %6386 = vmatprep.subr.bf16.mxu0 0
      %6387 = vmatpush2.bf16.msra.mxu0 0
      %6388 = vmatprep.subr.bf16.mxu0 0
      %6389 = vmatpush2.bf16.msra.mxu0 0
      %6390 = vmatprep.subr.bf16.mxu0 0
      %6391 = vmatpush2.bf16.msra.mxu0 0
      %6392 = vmatprep.mubr.bf16.mxu0 0
      %6393 = vmatmul.mubr.bf16.gmra.mxu0 %v6349
      %v6394 = vpop.f32.mrf.mxu0
      %v6395 = vadd.f32 0.0, %v6394
      %v6396 = vpop.f32.mrf.mxu0
      %v6397 = vpop.f32.mrf.mxu0
      %v6398 = vadd.f32 0.0, %v6397
      %v6399 = vpop.f32.mrf.mxu0
      %6400 = vmatprep.mubr.bf16.mxu0 0
      %6401 = vmatmul.mubr.bf16.gmra.mxu0 %v6352
      %v6402 = vpop.f32.mrf.mxu0
      %v6403 = vadd.f32 0.0, %v6402
      %v6404 = vpop.f32.mrf.mxu0
      %v6405 = vpop.f32.mrf.mxu0
      %v6406 = vadd.f32 0.0, %v6405
      %v6407 = vpop.f32.mrf.mxu0
      %6408 = vmatprep.mubr.bf16.mxu0 0
      %6409 = vmatmul.mubr.bf16.gmra.mxu0 %v6355
      %v6410 = vpop.f32.mrf.mxu0
      %v6411 = vadd.f32 0.0, %v6410
      %v6412 = vpop.f32.mrf.mxu0
      %v6413 = vpop.f32.mrf.mxu0
      %v6414 = vadd.f32 0.0, %v6413
      %v6415 = vpop.f32.mrf.mxu0
      %6416 = vmatprep.mubr.bf16.mxu0 0
      %6417 = vmatmul.mubr.bf16.gmra.mxu0 %v6358
      %v6418 = vpop.f32.mrf.mxu0
      %v6419 = vadd.f32 0.0, %v6418
      %v6420 = vpop.f32.mrf.mxu0
      %v6421 = vpop.f32.mrf.mxu0
      %v6422 = vadd.f32 0.0, %v6421
      %v6423 = vpop.f32.mrf.mxu0
      %6424 = vdwg.mxu0
      %v6426 = vsel %vm4413, %v5850, 0
      %v6429 = vsel %vm4413, %v5851, 0
      %v6432 = vsel %vm4413, %v5852, 0
      %v6435 = vsel %vm4413, %v5853, 0
      %6437 = vmatprep.subr.bf16.mxu0 0
      %6438 = vmatpush1.bf16.msra.mxu0 0
      %6439 = vmatprep.subr.bf16.mxu0 0
      %6440 = vmatpush1.bf16.msra.mxu0 0
      %6441 = vmatprep.subr.bf16.mxu0 0
      %6442 = vmatpush1.bf16.msra.mxu0 0
      %6443 = vmatprep.subr.bf16.mxu0 0
      %6444 = vmatpush1.bf16.msra.mxu0 0
      %6445 = vmatprep.subr.bf16.mxu0 0
      %6446 = vmatpush1.bf16.msra.mxu0 %v2699
      %6447 = vmatprep.subr.bf16.mxu0 0
      %6448 = vmatpush1.bf16.msra.mxu0 %v2698
      %6449 = vmatprep.subr.bf16.mxu0 0
      %6450 = vmatpush1.bf16.msra.mxu0 %v2697
      %6451 = vmatprep.subr.bf16.mxu0 0
      %6452 = vmatpush1.bf16.msra.mxu0 %v2696
      %6453 = vmatprep.subr.bf16.mxu0 0
      %6454 = vmatpush2.bf16.msra.mxu0 0
      %6455 = vmatprep.subr.bf16.mxu0 0
      %6456 = vmatpush2.bf16.msra.mxu0 0
      %6457 = vmatprep.subr.bf16.mxu0 0
      %6458 = vmatpush2.bf16.msra.mxu0 0
      %6459 = vmatprep.subr.bf16.mxu0 0
      %6460 = vmatpush2.bf16.msra.mxu0 0
      %6461 = vmatprep.subr.bf16.mxu0 0
      %6462 = vmatpush2.bf16.msra.mxu0 0
      %6463 = vmatprep.subr.bf16.mxu0 0
      %6464 = vmatpush2.bf16.msra.mxu0 0
      %6465 = vmatprep.subr.bf16.mxu0 0
      %6466 = vmatpush2.bf16.msra.mxu0 0
      %6467 = vmatprep.subr.bf16.mxu0 0
      %6468 = vmatpush2.bf16.msra.mxu0 0
      %6469 = vmatprep.mubr.bf16.mxu0 0
      %6470 = vmatmul.mubr.bf16.gmra.mxu0 %v6426
      %v6471 = vpop.f32.mrf.mxu0
      %v6472 = vadd.f32 0.0, %v6471
      %v6473 = vpop.f32.mrf.mxu0
      %v6474 = vpop.f32.mrf.mxu0
      %v6475 = vadd.f32 0.0, %v6474
      %v6476 = vpop.f32.mrf.mxu0
      %6477 = vmatprep.mubr.bf16.mxu0 0
      %6478 = vmatmul.mubr.bf16.gmra.mxu0 %v6429
      %v6479 = vpop.f32.mrf.mxu0
      %v6480 = vadd.f32 0.0, %v6479
      %v6481 = vpop.f32.mrf.mxu0
      %v6482 = vpop.f32.mrf.mxu0
      %v6483 = vadd.f32 0.0, %v6482
      %v6484 = vpop.f32.mrf.mxu0
      %6485 = vmatprep.mubr.bf16.mxu0 0
      %6486 = vmatmul.mubr.bf16.gmra.mxu0 %v6432
      %v6487 = vpop.f32.mrf.mxu0
      %v6488 = vadd.f32 0.0, %v6487
      %v6489 = vpop.f32.mrf.mxu0
      %v6490 = vpop.f32.mrf.mxu0
      %v6491 = vadd.f32 0.0, %v6490
      %v6492 = vpop.f32.mrf.mxu0
      %6493 = vmatprep.mubr.bf16.mxu0 0
      %6494 = vmatmul.mubr.bf16.gmra.mxu0 %v6435
      %v6495 = vpop.f32.mrf.mxu0
      %v6496 = vadd.f32 0.0, %v6495
      %v6497 = vpop.f32.mrf.mxu0
      %v6498 = vpop.f32.mrf.mxu0
      %v6499 = vadd.f32 0.0, %v6498
      %v6500 = vpop.f32.mrf.mxu0
      %6501 = vdwg.mxu0
      %v6503 = vsel %vm4413, %v5854, 0
      %v6506 = vsel %vm4413, %v5855, 0
      %v6509 = vsel %vm4413, %v5856, 0
      %v6512 = vsel %vm4413, %v5857, 0
      %6514 = vmatprep.subr.bf16.mxu0 0
      %6515 = vmatpush1.bf16.msra.mxu0 0
      %6516 = vmatprep.subr.bf16.mxu0 0
      %6517 = vmatpush1.bf16.msra.mxu0 0
      %6518 = vmatprep.subr.bf16.mxu0 0
      %6519 = vmatpush1.bf16.msra.mxu0 0
      %6520 = vmatprep.subr.bf16.mxu0 0
      %6521 = vmatpush1.bf16.msra.mxu0 0
      %6522 = vmatprep.subr.bf16.mxu0 0
      %6523 = vmatpush1.bf16.msra.mxu0 %v2703
      %6524 = vmatprep.subr.bf16.mxu0 0
      %6525 = vmatpush1.bf16.msra.mxu0 %v2702
      %6526 = vmatprep.subr.bf16.mxu0 0
      %6527 = vmatpush1.bf16.msra.mxu0 %v2701
      %6528 = vmatprep.subr.bf16.mxu0 0
      %6529 = vmatpush1.bf16.msra.mxu0 %v2700
      %6530 = vmatprep.subr.bf16.mxu0 0
      %6531 = vmatpush2.bf16.msra.mxu0 0
      %6532 = vmatprep.subr.bf16.mxu0 0
      %6533 = vmatpush2.bf16.msra.mxu0 0
      %6534 = vmatprep.subr.bf16.mxu0 0
      %6535 = vmatpush2.bf16.msra.mxu0 0
      %6536 = vmatprep.subr.bf16.mxu0 0
      %6537 = vmatpush2.bf16.msra.mxu0 0
      %6538 = vmatprep.subr.bf16.mxu0 0
      %6539 = vmatpush2.bf16.msra.mxu0 0
      %6540 = vmatprep.subr.bf16.mxu0 0
      %6541 = vmatpush2.bf16.msra.mxu0 0
      %6542 = vmatprep.subr.bf16.mxu0 0
      %6543 = vmatpush2.bf16.msra.mxu0 0
      %6544 = vmatprep.subr.bf16.mxu0 0
      %6545 = vmatpush2.bf16.msra.mxu0 0
      %6546 = vmatprep.mubr.bf16.mxu0 0
      %6547 = vmatmul.mubr.bf16.gmra.mxu0 %v6503
      %v6548 = vpop.f32.mrf.mxu0
      %v6549 = vadd.f32 0.0, %v6548
      %v6550 = vpop.f32.mrf.mxu0
      %v6551 = vpop.f32.mrf.mxu0
      %v6552 = vadd.f32 0.0, %v6551
      %v6553 = vpop.f32.mrf.mxu0
      %6554 = vmatprep.mubr.bf16.mxu0 0
      %6555 = vmatmul.mubr.bf16.gmra.mxu0 %v6506
      %v6556 = vpop.f32.mrf.mxu0
      %v6557 = vadd.f32 0.0, %v6556
      %v6558 = vpop.f32.mrf.mxu0
      %v6559 = vpop.f32.mrf.mxu0
      %v6560 = vadd.f32 0.0, %v6559
      %v6561 = vpop.f32.mrf.mxu0
      %6562 = vmatprep.mubr.bf16.mxu0 0
      %6563 = vmatmul.mubr.bf16.gmra.mxu0 %v6509
      %v6564 = vpop.f32.mrf.mxu0
      %v6565 = vadd.f32 0.0, %v6564
      %v6566 = vpop.f32.mrf.mxu0
      %v6567 = vpop.f32.mrf.mxu0
      %v6568 = vadd.f32 0.0, %v6567
      %v6569 = vpop.f32.mrf.mxu0
      %6570 = vmatprep.mubr.bf16.mxu0 0
      %6571 = vmatmul.mubr.bf16.gmra.mxu0 %v6512
      %v6572 = vpop.f32.mrf.mxu0
      %v6573 = vadd.f32 0.0, %v6572
      %v6574 = vpop.f32.mrf.mxu0
      %v6575 = vpop.f32.mrf.mxu0
      %v6576 = vadd.f32 0.0, %v6575
      %v6577 = vpop.f32.mrf.mxu0
      %6578 = vdwg.mxu0
      %v6580 = vsel %vm4413, %v5858, 0
      %v6583 = vsel %vm4413, %v5859, 0
      %v6586 = vsel %vm4413, %v5860, 0
      %v6589 = vsel %vm4413, %v5861, 0
      %6591 = vmatprep.subr.bf16.mxu0 0
      %6592 = vmatpush1.bf16.msra.mxu0 0
      %6593 = vmatprep.subr.bf16.mxu0 0
      %6594 = vmatpush1.bf16.msra.mxu0 0
      %6595 = vmatprep.subr.bf16.mxu0 0
      %6596 = vmatpush1.bf16.msra.mxu0 0
      %6597 = vmatprep.subr.bf16.mxu0 0
      %6598 = vmatpush1.bf16.msra.mxu0 0
      %6599 = vmatprep.subr.bf16.mxu0 0
      %6600 = vmatpush1.bf16.msra.mxu0 %v2707
      %6601 = vmatprep.subr.bf16.mxu0 0
      %6602 = vmatpush1.bf16.msra.mxu0 %v2706
      %6603 = vmatprep.subr.bf16.mxu0 0
      %6604 = vmatpush1.bf16.msra.mxu0 %v2705
      %6605 = vmatprep.subr.bf16.mxu0 0
      %6606 = vmatpush1.bf16.msra.mxu0 %v2704
      %6607 = vmatprep.subr.bf16.mxu0 0
      %6608 = vmatpush2.bf16.msra.mxu0 0
      %6609 = vmatprep.subr.bf16.mxu0 0
      %6610 = vmatpush2.bf16.msra.mxu0 0
      %6611 = vmatprep.subr.bf16.mxu0 0
      %6612 = vmatpush2.bf16.msra.mxu0 0
      %6613 = vmatprep.subr.bf16.mxu0 0
      %6614 = vmatpush2.bf16.msra.mxu0 0
      %6615 = vmatprep.subr.bf16.mxu0 0
      %6616 = vmatpush2.bf16.msra.mxu0 0
      %6617 = vmatprep.subr.bf16.mxu0 0
      %6618 = vmatpush2.bf16.msra.mxu0 0
      %6619 = vmatprep.subr.bf16.mxu0 0
      %6620 = vmatpush2.bf16.msra.mxu0 0
      %6621 = vmatprep.subr.bf16.mxu0 0
      %6622 = vmatpush2.bf16.msra.mxu0 0
      %6623 = vmatprep.mubr.bf16.mxu0 0
      %6624 = vmatmul.mubr.bf16.gmra.mxu0 %v6580
      %v6625 = vpop.f32.mrf.mxu0
      %v6626 = vadd.f32 0.0, %v6625
      %v6627 = vpop.f32.mrf.mxu0
      %v6628 = vpop.f32.mrf.mxu0
      %v6629 = vadd.f32 0.0, %v6628
      %v6630 = vpop.f32.mrf.mxu0
      %6631 = vmatprep.mubr.bf16.mxu0 0
      %6632 = vmatmul.mubr.bf16.gmra.mxu0 %v6583
      %v6633 = vpop.f32.mrf.mxu0
      %v6634 = vadd.f32 0.0, %v6633
      %v6635 = vpop.f32.mrf.mxu0
      %v6636 = vpop.f32.mrf.mxu0
      %v6637 = vadd.f32 0.0, %v6636
      %v6638 = vpop.f32.mrf.mxu0
      %6639 = vmatprep.mubr.bf16.mxu0 0
      %6640 = vmatmul.mubr.bf16.gmra.mxu0 %v6586
      %v6641 = vpop.f32.mrf.mxu0
      %v6642 = vadd.f32 0.0, %v6641
      %v6643 = vpop.f32.mrf.mxu0
      %v6644 = vpop.f32.mrf.mxu0
      %v6645 = vadd.f32 0.0, %v6644
      %v6646 = vpop.f32.mrf.mxu0
      %6647 = vmatprep.mubr.bf16.mxu0 0
      %6648 = vmatmul.mubr.bf16.gmra.mxu0 %v6589
      %v6649 = vpop.f32.mrf.mxu0
      %v6650 = vadd.f32 0.0, %v6649
      %v6651 = vpop.f32.mrf.mxu0
      %v6652 = vpop.f32.mrf.mxu0
      %v6653 = vadd.f32 0.0, %v6652
      %v6654 = vpop.f32.mrf.mxu0
      %6655 = vdwg.mxu0
      %v6657 = vsel %vm4413, %v5862, 0
      %v6660 = vsel %vm4413, %v5863, 0
      %v6663 = vsel %vm4413, %v5864, 0
      %v6666 = vsel %vm4413, %v5865, 0
      %6668 = vmatprep.subr.bf16.mxu0 0
      %6669 = vmatpush1.bf16.msra.mxu0 0
      %6670 = vmatprep.subr.bf16.mxu0 0
      %6671 = vmatpush1.bf16.msra.mxu0 0
      %6672 = vmatprep.subr.bf16.mxu0 0
      %6673 = vmatpush1.bf16.msra.mxu0 0
      %6674 = vmatprep.subr.bf16.mxu0 0
      %6675 = vmatpush1.bf16.msra.mxu0 0
      %6676 = vmatprep.subr.bf16.mxu0 0
      %6677 = vmatpush1.bf16.msra.mxu0 %v2711
      %6678 = vmatprep.subr.bf16.mxu0 0
      %6679 = vmatpush1.bf16.msra.mxu0 %v2710
      %6680 = vmatprep.subr.bf16.mxu0 0
      %6681 = vmatpush1.bf16.msra.mxu0 %v2709
      %6682 = vmatprep.subr.bf16.mxu0 0
      %6683 = vmatpush1.bf16.msra.mxu0 %v2708
      %6684 = vmatprep.subr.bf16.mxu0 0
      %6685 = vmatpush2.bf16.msra.mxu0 0
      %6686 = vmatprep.subr.bf16.mxu0 0
      %6687 = vmatpush2.bf16.msra.mxu0 0
      %6688 = vmatprep.subr.bf16.mxu0 0
      %6689 = vmatpush2.bf16.msra.mxu0 0
      %6690 = vmatprep.subr.bf16.mxu0 0
      %6691 = vmatpush2.bf16.msra.mxu0 0
      %6692 = vmatprep.subr.bf16.mxu0 0
      %6693 = vmatpush2.bf16.msra.mxu0 0
      %6694 = vmatprep.subr.bf16.mxu0 0
      %6695 = vmatpush2.bf16.msra.mxu0 0
      %6696 = vmatprep.subr.bf16.mxu0 0
      %6697 = vmatpush2.bf16.msra.mxu0 0
      %6698 = vmatprep.subr.bf16.mxu0 0
      %6699 = vmatpush2.bf16.msra.mxu0 0
      %6700 = vmatprep.mubr.bf16.mxu0 0
      %6701 = vmatmul.mubr.bf16.gmra.mxu0 %v6657
      %v6702 = vpop.f32.mrf.mxu0
      %v6703 = vadd.f32 0.0, %v6702
      %v6704 = vpop.f32.mrf.mxu0
      %v6705 = vpop.f32.mrf.mxu0
      %v6706 = vadd.f32 0.0, %v6705
      %v6707 = vpop.f32.mrf.mxu0
      %6708 = vmatprep.mubr.bf16.mxu0 0
      %6709 = vmatmul.mubr.bf16.gmra.mxu0 %v6660
      %v6710 = vpop.f32.mrf.mxu0
      %v6711 = vadd.f32 0.0, %v6710
      %v6712 = vpop.f32.mrf.mxu0
      %v6713 = vpop.f32.mrf.mxu0
      %v6714 = vadd.f32 0.0, %v6713
      %v6715 = vpop.f32.mrf.mxu0
      %6716 = vmatprep.mubr.bf16.mxu0 0
      %6717 = vmatmul.mubr.bf16.gmra.mxu0 %v6663
      %v6718 = vpop.f32.mrf.mxu0
      %v6719 = vadd.f32 0.0, %v6718
      %v6720 = vpop.f32.mrf.mxu0
      %v6721 = vpop.f32.mrf.mxu0
      %v6722 = vadd.f32 0.0, %v6721
      %v6723 = vpop.f32.mrf.mxu0
      %6724 = vmatprep.mubr.bf16.mxu0 0
      %6725 = vmatmul.mubr.bf16.gmra.mxu0 %v6666
      %v6726 = vpop.f32.mrf.mxu0
      %v6727 = vadd.f32 0.0, %v6726
      %v6728 = vpop.f32.mrf.mxu0
      %v6729 = vpop.f32.mrf.mxu0
      %v6730 = vadd.f32 0.0, %v6729
      %v6731 = vpop.f32.mrf.mxu0
      %6732 = vdwg.mxu0
      %v6734 = vsel %vm4413, %v5866, 0
      %v6737 = vsel %vm4413, %v5867, 0
      %v6740 = vsel %vm4413, %v5868, 0
      %v6743 = vsel %vm4413, %v5869, 0
      %6745 = vmatprep.subr.bf16.mxu0 0
      %6746 = vmatpush1.bf16.msra.mxu0 0
      %6747 = vmatprep.subr.bf16.mxu0 0
      %6748 = vmatpush1.bf16.msra.mxu0 0
      %6749 = vmatprep.subr.bf16.mxu0 0
      %6750 = vmatpush1.bf16.msra.mxu0 0
      %6751 = vmatprep.subr.bf16.mxu0 0
      %6752 = vmatpush1.bf16.msra.mxu0 0
      %6753 = vmatprep.subr.bf16.mxu0 0
      %6754 = vmatpush1.bf16.msra.mxu0 %v2715
      %6755 = vmatprep.subr.bf16.mxu0 0
      %6756 = vmatpush1.bf16.msra.mxu0 %v2714
      %6757 = vmatprep.subr.bf16.mxu0 0
      %6758 = vmatpush1.bf16.msra.mxu0 %v2713
      %6759 = vmatprep.subr.bf16.mxu0 0
      %6760 = vmatpush1.bf16.msra.mxu0 %v2712
      %6761 = vmatprep.subr.bf16.mxu0 0
      %6762 = vmatpush2.bf16.msra.mxu0 0
      %6763 = vmatprep.subr.bf16.mxu0 0
      %6764 = vmatpush2.bf16.msra.mxu0 0
      %6765 = vmatprep.subr.bf16.mxu0 0
      %6766 = vmatpush2.bf16.msra.mxu0 0
      %6767 = vmatprep.subr.bf16.mxu0 0
      %6768 = vmatpush2.bf16.msra.mxu0 0
      %6769 = vmatprep.subr.bf16.mxu0 0
      %6770 = vmatpush2.bf16.msra.mxu0 0
      %6771 = vmatprep.subr.bf16.mxu0 0
      %6772 = vmatpush2.bf16.msra.mxu0 0
      %6773 = vmatprep.subr.bf16.mxu0 0
      %6774 = vmatpush2.bf16.msra.mxu0 0
      %6775 = vmatprep.subr.bf16.mxu0 0
      %6776 = vmatpush2.bf16.msra.mxu0 0
      %6777 = vmatprep.mubr.bf16.mxu0 0
      %6778 = vmatmul.mubr.bf16.gmra.mxu0 %v6734
      %v6779 = vpop.f32.mrf.mxu0
      %v6780 = vadd.f32 0.0, %v6779
      %v6781 = vpop.f32.mrf.mxu0
      %v6782 = vpop.f32.mrf.mxu0
      %v6783 = vadd.f32 0.0, %v6782
      %v6784 = vpop.f32.mrf.mxu0
      %6785 = vmatprep.mubr.bf16.mxu0 0
      %6786 = vmatmul.mubr.bf16.gmra.mxu0 %v6737
      %v6787 = vpop.f32.mrf.mxu0
      %v6788 = vadd.f32 0.0, %v6787
      %v6789 = vpop.f32.mrf.mxu0
      %v6790 = vpop.f32.mrf.mxu0
      %v6791 = vadd.f32 0.0, %v6790
      %v6792 = vpop.f32.mrf.mxu0
      %6793 = vmatprep.mubr.bf16.mxu0 0
      %6794 = vmatmul.mubr.bf16.gmra.mxu0 %v6740
      %v6795 = vpop.f32.mrf.mxu0
      %v6796 = vadd.f32 0.0, %v6795
      %v6797 = vpop.f32.mrf.mxu0
      %v6798 = vpop.f32.mrf.mxu0
      %v6799 = vadd.f32 0.0, %v6798
      %v6800 = vpop.f32.mrf.mxu0
      %6801 = vmatprep.mubr.bf16.mxu0 0
      %6802 = vmatmul.mubr.bf16.gmra.mxu0 %v6743
      %v6803 = vpop.f32.mrf.mxu0
      %v6804 = vadd.f32 0.0, %v6803
      %v6805 = vpop.f32.mrf.mxu0
      %v6806 = vpop.f32.mrf.mxu0
      %v6807 = vadd.f32 0.0, %v6806
      %v6808 = vpop.f32.mrf.mxu0
      %6809 = vdwg.mxu0
      %v6811 = vsel %vm4413, %v5870, 0
      %v6814 = vsel %vm4413, %v5871, 0
      %v6817 = vsel %vm4413, %v5872, 0
      %v6820 = vsel %vm4413, %v5873, 0
      %6822 = vmatprep.subr.bf16.mxu0 0
      %6823 = vmatpush1.bf16.msra.mxu0 0
      %6824 = vmatprep.subr.bf16.mxu0 0
      %6825 = vmatpush1.bf16.msra.mxu0 0
      %6826 = vmatprep.subr.bf16.mxu0 0
      %6827 = vmatpush1.bf16.msra.mxu0 0
      %6828 = vmatprep.subr.bf16.mxu0 0
      %6829 = vmatpush1.bf16.msra.mxu0 0
      %6830 = vmatprep.subr.bf16.mxu0 0
      %6831 = vmatpush1.bf16.msra.mxu0 %v2719
      %6832 = vmatprep.subr.bf16.mxu0 0
      %6833 = vmatpush1.bf16.msra.mxu0 %v2718
      %6834 = vmatprep.subr.bf16.mxu0 0
      %6835 = vmatpush1.bf16.msra.mxu0 %v2717
      %6836 = vmatprep.subr.bf16.mxu0 0
      %6837 = vmatpush1.bf16.msra.mxu0 %v2716
      %6838 = vmatprep.subr.bf16.mxu0 0
      %6839 = vmatpush2.bf16.msra.mxu0 0
      %6840 = vmatprep.subr.bf16.mxu0 0
      %6841 = vmatpush2.bf16.msra.mxu0 0
      %6842 = vmatprep.subr.bf16.mxu0 0
      %6843 = vmatpush2.bf16.msra.mxu0 0
      %6844 = vmatprep.subr.bf16.mxu0 0
      %6845 = vmatpush2.bf16.msra.mxu0 0
      %6846 = vmatprep.subr.bf16.mxu0 0
      %6847 = vmatpush2.bf16.msra.mxu0 0
      %6848 = vmatprep.subr.bf16.mxu0 0
      %6849 = vmatpush2.bf16.msra.mxu0 0
      %6850 = vmatprep.subr.bf16.mxu0 0
      %6851 = vmatpush2.bf16.msra.mxu0 0
      %6852 = vmatprep.subr.bf16.mxu0 0
      %6853 = vmatpush2.bf16.msra.mxu0 0
      %6854 = vmatprep.mubr.bf16.mxu0 0
      %6855 = vmatmul.mubr.bf16.gmra.mxu0 %v6811
      %v6856 = vpop.f32.mrf.mxu0
      %v6857 = vadd.f32 0.0, %v6856
      %v6858 = vpop.f32.mrf.mxu0
      %v6859 = vpop.f32.mrf.mxu0
      %v6860 = vadd.f32 0.0, %v6859
      %v6861 = vpop.f32.mrf.mxu0
      %6862 = vmatprep.mubr.bf16.mxu0 0
      %6863 = vmatmul.mubr.bf16.gmra.mxu0 %v6814
      %v6864 = vpop.f32.mrf.mxu0
      %v6865 = vadd.f32 0.0, %v6864
      %v6866 = vpop.f32.mrf.mxu0
      %v6867 = vpop.f32.mrf.mxu0
      %v6868 = vadd.f32 0.0, %v6867
      %v6869 = vpop.f32.mrf.mxu0
      %6870 = vmatprep.mubr.bf16.mxu0 0
      %6871 = vmatmul.mubr.bf16.gmra.mxu0 %v6817
      %v6872 = vpop.f32.mrf.mxu0
      %v6873 = vadd.f32 0.0, %v6872
      %v6874 = vpop.f32.mrf.mxu0
      %v6875 = vpop.f32.mrf.mxu0
      %v6876 = vadd.f32 0.0, %v6875
      %v6877 = vpop.f32.mrf.mxu0
      %6878 = vmatprep.mubr.bf16.mxu0 0
      %6879 = vmatmul.mubr.bf16.gmra.mxu0 %v6820
      %v6880 = vpop.f32.mrf.mxu0
      %v6881 = vadd.f32 0.0, %v6880
      %v6882 = vpop.f32.mrf.mxu0
      %v6883 = vpop.f32.mrf.mxu0
      %v6884 = vadd.f32 0.0, %v6883
      %v6885 = vpop.f32.mrf.mxu0
      %6886 = vdwg.mxu0
      %v6888 = vsel %vm4413, %v5874, 0
      %v6891 = vsel %vm4413, %v5875, 0
      %v6894 = vsel %vm4413, %v5876, 0
      %v6897 = vsel %vm4413, %v5877, 0
      %6899 = vmatprep.subr.bf16.mxu0 0
      %6900 = vmatpush1.bf16.msra.mxu0 0
      %6901 = vmatprep.subr.bf16.mxu0 0
      %6902 = vmatpush1.bf16.msra.mxu0 0
      %6903 = vmatprep.subr.bf16.mxu0 0
      %6904 = vmatpush1.bf16.msra.mxu0 0
      %6905 = vmatprep.subr.bf16.mxu0 0
      %6906 = vmatpush1.bf16.msra.mxu0 0
      %6907 = vmatprep.subr.bf16.mxu0 0
      %6908 = vmatpush1.bf16.msra.mxu0 %v2723
      %6909 = vmatprep.subr.bf16.mxu0 0
      %6910 = vmatpush1.bf16.msra.mxu0 %v2722
      %6911 = vmatprep.subr.bf16.mxu0 0
      %6912 = vmatpush1.bf16.msra.mxu0 %v2721
      %6913 = vmatprep.subr.bf16.mxu0 0
      %6914 = vmatpush1.bf16.msra.mxu0 %v2720
      %6915 = vmatprep.subr.bf16.mxu0 0
      %6916 = vmatpush2.bf16.msra.mxu0 0
      %6917 = vmatprep.subr.bf16.mxu0 0
      %6918 = vmatpush2.bf16.msra.mxu0 0
      %6919 = vmatprep.subr.bf16.mxu0 0
      %6920 = vmatpush2.bf16.msra.mxu0 0
      %6921 = vmatprep.subr.bf16.mxu0 0
      %6922 = vmatpush2.bf16.msra.mxu0 0
      %6923 = vmatprep.subr.bf16.mxu0 0
      %6924 = vmatpush2.bf16.msra.mxu0 0
      %6925 = vmatprep.subr.bf16.mxu0 0
      %6926 = vmatpush2.bf16.msra.mxu0 0
      %6927 = vmatprep.subr.bf16.mxu0 0
      %6928 = vmatpush2.bf16.msra.mxu0 0
      %6929 = vmatprep.subr.bf16.mxu0 0
      %6930 = vmatpush2.bf16.msra.mxu0 0
      %6931 = vmatprep.mubr.bf16.mxu0 0
      %6932 = vmatmul.mubr.bf16.gmra.mxu0 %v6888
      %v6933 = vpop.f32.mrf.mxu0
      %v6934 = vadd.f32 0.0, %v6933
      %v6935 = vpop.f32.mrf.mxu0
      %v6936 = vpop.f32.mrf.mxu0
      %v6937 = vadd.f32 0.0, %v6936
      %v6938 = vpop.f32.mrf.mxu0
      %6939 = vmatprep.mubr.bf16.mxu0 0
      %6940 = vmatmul.mubr.bf16.gmra.mxu0 %v6891
      %v6941 = vpop.f32.mrf.mxu0
      %v6942 = vadd.f32 0.0, %v6941
      %v6943 = vpop.f32.mrf.mxu0
      %v6944 = vpop.f32.mrf.mxu0
      %v6945 = vadd.f32 0.0, %v6944
      %v6946 = vpop.f32.mrf.mxu0
      %6947 = vmatprep.mubr.bf16.mxu0 0
      %6948 = vmatmul.mubr.bf16.gmra.mxu0 %v6894
      %v6949 = vpop.f32.mrf.mxu0
      %v6950 = vadd.f32 0.0, %v6949
      %v6951 = vpop.f32.mrf.mxu0
      %v6952 = vpop.f32.mrf.mxu0
      %v6953 = vadd.f32 0.0, %v6952
      %v6954 = vpop.f32.mrf.mxu0
      %6955 = vmatprep.mubr.bf16.mxu0 0
      %6956 = vmatmul.mubr.bf16.gmra.mxu0 %v6897
      %v6957 = vpop.f32.mrf.mxu0
      %v6958 = vadd.f32 0.0, %v6957
      %v6959 = vpop.f32.mrf.mxu0
      %v6960 = vpop.f32.mrf.mxu0
      %v6961 = vadd.f32 0.0, %v6960
      %v6962 = vpop.f32.mrf.mxu0
      %6963 = vdwg.mxu0
      %v6965 = vsel %vm4413, %v5878, 0
      %v6968 = vsel %vm4413, %v5879, 0
      %v6971 = vsel %vm4413, %v5880, 0
      %v6974 = vsel %vm4413, %v5881, 0
      %6976 = vmatprep.subr.bf16.mxu0 0
      %6977 = vmatpush1.bf16.msra.mxu0 0
      %6978 = vmatprep.subr.bf16.mxu0 0
      %6979 = vmatpush1.bf16.msra.mxu0 0
      %6980 = vmatprep.subr.bf16.mxu0 0
      %6981 = vmatpush1.bf16.msra.mxu0 0
      %6982 = vmatprep.subr.bf16.mxu0 0
      %6983 = vmatpush1.bf16.msra.mxu0 0
      %6984 = vmatprep.subr.bf16.mxu0 0
      %6985 = vmatpush1.bf16.msra.mxu0 %v2727
      %6986 = vmatprep.subr.bf16.mxu0 0
      %6987 = vmatpush1.bf16.msra.mxu0 %v2726
      %6988 = vmatprep.subr.bf16.mxu0 0
      %6989 = vmatpush1.bf16.msra.mxu0 %v2725
      %6990 = vmatprep.subr.bf16.mxu0 0
      %6991 = vmatpush1.bf16.msra.mxu0 %v2724
      %6992 = vmatprep.subr.bf16.mxu0 0
      %6993 = vmatpush2.bf16.msra.mxu0 0
      %6994 = vmatprep.subr.bf16.mxu0 0
      %6995 = vmatpush2.bf16.msra.mxu0 0
      %6996 = vmatprep.subr.bf16.mxu0 0
      %6997 = vmatpush2.bf16.msra.mxu0 0
      %6998 = vmatprep.subr.bf16.mxu0 0
      %6999 = vmatpush2.bf16.msra.mxu0 0
      %7000 = vmatprep.subr.bf16.mxu0 0
      %7001 = vmatpush2.bf16.msra.mxu0 0
      %7002 = vmatprep.subr.bf16.mxu0 0
      %7003 = vmatpush2.bf16.msra.mxu0 0
      %7004 = vmatprep.subr.bf16.mxu0 0
      %7005 = vmatpush2.bf16.msra.mxu0 0
      %7006 = vmatprep.subr.bf16.mxu0 0
      %7007 = vmatpush2.bf16.msra.mxu0 0
      %7008 = vmatprep.mubr.bf16.mxu0 0
      %7009 = vmatmul.mubr.bf16.gmra.mxu0 %v6965
      %v7010 = vpop.f32.mrf.mxu0
      %v7011 = vadd.f32 0.0, %v7010
      %v7012 = vpop.f32.mrf.mxu0
      %v7013 = vpop.f32.mrf.mxu0
      %v7014 = vadd.f32 0.0, %v7013
      %v7015 = vpop.f32.mrf.mxu0
      %7016 = vmatprep.mubr.bf16.mxu0 0
      %7017 = vmatmul.mubr.bf16.gmra.mxu0 %v6968
      %v7018 = vpop.f32.mrf.mxu0
      %v7019 = vadd.f32 0.0, %v7018
      %v7020 = vpop.f32.mrf.mxu0
      %v7021 = vpop.f32.mrf.mxu0
      %v7022 = vadd.f32 0.0, %v7021
      %v7023 = vpop.f32.mrf.mxu0
      %7024 = vmatprep.mubr.bf16.mxu0 0
      %7025 = vmatmul.mubr.bf16.gmra.mxu0 %v6971
      %v7026 = vpop.f32.mrf.mxu0
      %v7027 = vadd.f32 0.0, %v7026
      %v7028 = vpop.f32.mrf.mxu0
      %v7029 = vpop.f32.mrf.mxu0
      %v7030 = vadd.f32 0.0, %v7029
      %v7031 = vpop.f32.mrf.mxu0
      %7032 = vmatprep.mubr.bf16.mxu0 0
      %7033 = vmatmul.mubr.bf16.gmra.mxu0 %v6974
      %v7034 = vpop.f32.mrf.mxu0
      %v7035 = vadd.f32 0.0, %v7034
      %v7036 = vpop.f32.mrf.mxu0
      %v7037 = vpop.f32.mrf.mxu0
      %v7038 = vadd.f32 0.0, %v7037
      %v7039 = vpop.f32.mrf.mxu0
      %7040 = vdwg.mxu0
      %v7042 = vsel %vm4413, %v5882, 0
      %v7045 = vsel %vm4413, %v5883, 0
      %v7048 = vsel %vm4413, %v5884, 0
      %v7051 = vsel %vm4413, %v5885, 0
      %7053 = vmatprep.subr.bf16.mxu0 0
      %7054 = vmatpush1.bf16.msra.mxu0 0
      %7055 = vmatprep.subr.bf16.mxu0 0
      %7056 = vmatpush1.bf16.msra.mxu0 0
      %7057 = vmatprep.subr.bf16.mxu0 0
      %7058 = vmatpush1.bf16.msra.mxu0 0
      %7059 = vmatprep.subr.bf16.mxu0 0
      %7060 = vmatpush1.bf16.msra.mxu0 0
      %7061 = vmatprep.subr.bf16.mxu0 0
      %7062 = vmatpush1.bf16.msra.mxu0 %v2731
      %7063 = vmatprep.subr.bf16.mxu0 0
      %7064 = vmatpush1.bf16.msra.mxu0 %v2730
      %7065 = vmatprep.subr.bf16.mxu0 0
      %7066 = vmatpush1.bf16.msra.mxu0 %v2729
      %7067 = vmatprep.subr.bf16.mxu0 0
      %7068 = vmatpush1.bf16.msra.mxu0 %v2728
      %7069 = vmatprep.subr.bf16.mxu0 0
      %7070 = vmatpush2.bf16.msra.mxu0 0
      %7071 = vmatprep.subr.bf16.mxu0 0
      %7072 = vmatpush2.bf16.msra.mxu0 0
      %7073 = vmatprep.subr.bf16.mxu0 0
      %7074 = vmatpush2.bf16.msra.mxu0 0
      %7075 = vmatprep.subr.bf16.mxu0 0
      %7076 = vmatpush2.bf16.msra.mxu0 0
      %7077 = vmatprep.subr.bf16.mxu0 0
      %7078 = vmatpush2.bf16.msra.mxu0 0
      %7079 = vmatprep.subr.bf16.mxu0 0
      %7080 = vmatpush2.bf16.msra.mxu0 0
      %7081 = vmatprep.subr.bf16.mxu0 0
      %7082 = vmatpush2.bf16.msra.mxu0 0
      %7083 = vmatprep.subr.bf16.mxu0 0
      %7084 = vmatpush2.bf16.msra.mxu0 0
      %7085 = vmatprep.mubr.bf16.mxu0 0
      %7086 = vmatmul.mubr.bf16.gmra.mxu0 %v7042
      %v7087 = vpop.f32.mrf.mxu0
      %v7088 = vadd.f32 0.0, %v7087
      %v7089 = vpop.f32.mrf.mxu0
      %v7090 = vpop.f32.mrf.mxu0
      %v7091 = vadd.f32 0.0, %v7090
      %v7092 = vpop.f32.mrf.mxu0
      %7093 = vmatprep.mubr.bf16.mxu0 0
      %7094 = vmatmul.mubr.bf16.gmra.mxu0 %v7045
      %v7095 = vpop.f32.mrf.mxu0
      %v7096 = vadd.f32 0.0, %v7095
      %v7097 = vpop.f32.mrf.mxu0
      %v7098 = vpop.f32.mrf.mxu0
      %v7099 = vadd.f32 0.0, %v7098
      %v7100 = vpop.f32.mrf.mxu0
      %7101 = vmatprep.mubr.bf16.mxu0 0
      %7102 = vmatmul.mubr.bf16.gmra.mxu0 %v7048
      %v7103 = vpop.f32.mrf.mxu0
      %v7104 = vadd.f32 0.0, %v7103
      %v7105 = vpop.f32.mrf.mxu0
      %v7106 = vpop.f32.mrf.mxu0
      %v7107 = vadd.f32 0.0, %v7106
      %v7108 = vpop.f32.mrf.mxu0
      %7109 = vmatprep.mubr.bf16.mxu0 0
      %7110 = vmatmul.mubr.bf16.gmra.mxu0 %v7051
      %v7111 = vpop.f32.mrf.mxu0
      %v7112 = vadd.f32 0.0, %v7111
      %v7113 = vpop.f32.mrf.mxu0
      %v7114 = vpop.f32.mrf.mxu0
      %v7115 = vadd.f32 0.0, %v7114
      %v7116 = vpop.f32.mrf.mxu0
      %7117 = vdwg.mxu0
      %7150 = vrot.lane.b32.xlu0 %v6010, 32
      %v7151 = vpop.permute.xlu0 %7150
      %7152 = vrot.lane.b32.xlu0 %v6013, 32
      %v7153 = vpop.permute.xlu0 %7152
      %7154 = vrot.lane.b32.xlu0 %v6018, 32
      %v7155 = vpop.permute.xlu0 %7154
      %7156 = vrot.lane.b32.xlu0 %v6021, 32
      %v7157 = vpop.permute.xlu0 %7156
      %7158 = vrot.lane.b32.xlu0 %v6026, 32
      %v7159 = vpop.permute.xlu0 %7158
      %7160 = vrot.lane.b32.xlu0 %v6029, 32
      %v7161 = vpop.permute.xlu0 %7160
      %7162 = vrot.lane.b32.xlu0 %v6034, 32
      %v7163 = vpop.permute.xlu0 %7162
      %7164 = vrot.lane.b32.xlu0 %v6037, 32
      %v7165 = vpop.permute.xlu0 %7164
      %7166 = vrot.lane.b32.xlu0 %v6318, 32
      %v7167 = vpop.permute.xlu0 %7166
      %7168 = vrot.lane.b32.xlu0 %v6321, 32
      %v7169 = vpop.permute.xlu0 %7168
      %7170 = vrot.lane.b32.xlu0 %v6326, 32
      %v7171 = vpop.permute.xlu0 %7170
      %7172 = vrot.lane.b32.xlu0 %v6329, 32
      %v7173 = vpop.permute.xlu0 %7172
      %7174 = vrot.lane.b32.xlu0 %v6334, 32
      %v7175 = vpop.permute.xlu0 %7174
      %7176 = vrot.lane.b32.xlu0 %v6337, 32
      %v7177 = vpop.permute.xlu0 %7176
      %7178 = vrot.lane.b32.xlu0 %v6342, 32
      %v7179 = vpop.permute.xlu0 %7178
      %7180 = vrot.lane.b32.xlu0 %v6345, 32
      %v7181 = vpop.permute.xlu0 %7180
      %7182 = vrot.lane.b32.xlu0 %v6626, 32
      %v7183 = vpop.permute.xlu0 %7182
      %7184 = vrot.lane.b32.xlu0 %v6629, 32
      %v7185 = vpop.permute.xlu0 %7184
      %7186 = vrot.lane.b32.xlu0 %v6634, 32
      %v7187 = vpop.permute.xlu0 %7186
      %7188 = vrot.lane.b32.xlu0 %v6637, 32
      %v7189 = vpop.permute.xlu0 %7188
      %7190 = vrot.lane.b32.xlu0 %v6642, 32
      %v7191 = vpop.permute.xlu0 %7190
      %7192 = vrot.lane.b32.xlu0 %v6645, 32
      %v7193 = vpop.permute.xlu0 %7192
      %7194 = vrot.lane.b32.xlu0 %v6650, 32
      %v7195 = vpop.permute.xlu0 %7194
      %7196 = vrot.lane.b32.xlu0 %v6653, 32
      %v7197 = vpop.permute.xlu0 %7196
      %7198 = vrot.lane.b32.xlu0 %v6934, 32
      %v7199 = vpop.permute.xlu0 %7198
      %7200 = vrot.lane.b32.xlu0 %v6937, 32
      %v7201 = vpop.permute.xlu0 %7200
      %7202 = vrot.lane.b32.xlu0 %v6942, 32
      %v7203 = vpop.permute.xlu0 %7202
      %7204 = vrot.lane.b32.xlu0 %v6945, 32
      %v7205 = vpop.permute.xlu0 %7204
      %7206 = vrot.lane.b32.xlu0 %v6950, 32
      %v7207 = vpop.permute.xlu0 %7206
      %7208 = vrot.lane.b32.xlu0 %v6953, 32
      %v7209 = vpop.permute.xlu0 %7208
      %7210 = vrot.lane.b32.xlu0 %v6958, 32
      %v7211 = vpop.permute.xlu0 %7210
      %7212 = vrot.lane.b32.xlu0 %v6961, 32
      %v7213 = vpop.permute.xlu0 %7212
      %7278 = vrot.lane.b32.xlu0 %v6087, 64
      %v7279 = vpop.permute.xlu0 %7278
      %7280 = vrot.lane.b32.xlu0 %v6090, 64
      %v7281 = vpop.permute.xlu0 %7280
      %7282 = vrot.lane.b32.xlu0 %v6095, 64
      %v7283 = vpop.permute.xlu0 %7282
      %7284 = vrot.lane.b32.xlu0 %v6098, 64
      %v7285 = vpop.permute.xlu0 %7284
      %7286 = vrot.lane.b32.xlu0 %v6103, 64
      %v7287 = vpop.permute.xlu0 %7286
      %7288 = vrot.lane.b32.xlu0 %v6106, 64
      %v7289 = vpop.permute.xlu0 %7288
      %7290 = vrot.lane.b32.xlu0 %v6111, 64
      %v7291 = vpop.permute.xlu0 %7290
      %7292 = vrot.lane.b32.xlu0 %v6114, 64
      %v7293 = vpop.permute.xlu0 %7292
      %7294 = vrot.lane.b32.xlu0 %v6395, 64
      %v7295 = vpop.permute.xlu0 %7294
      %7296 = vrot.lane.b32.xlu0 %v6398, 64
      %v7297 = vpop.permute.xlu0 %7296
      %7298 = vrot.lane.b32.xlu0 %v6403, 64
      %v7299 = vpop.permute.xlu0 %7298
      %7300 = vrot.lane.b32.xlu0 %v6406, 64
      %v7301 = vpop.permute.xlu0 %7300
      %7302 = vrot.lane.b32.xlu0 %v6411, 64
      %v7303 = vpop.permute.xlu0 %7302
      %7304 = vrot.lane.b32.xlu0 %v6414, 64
      %v7305 = vpop.permute.xlu0 %7304
      %7306 = vrot.lane.b32.xlu0 %v6419, 64
      %v7307 = vpop.permute.xlu0 %7306
      %7308 = vrot.lane.b32.xlu0 %v6422, 64
      %v7309 = vpop.permute.xlu0 %7308
      %7310 = vrot.lane.b32.xlu0 %v6703, 64
      %v7311 = vpop.permute.xlu0 %7310
      %7312 = vrot.lane.b32.xlu0 %v6706, 64
      %v7313 = vpop.permute.xlu0 %7312
      %7314 = vrot.lane.b32.xlu0 %v6711, 64
      %v7315 = vpop.permute.xlu0 %7314
      %7316 = vrot.lane.b32.xlu0 %v6714, 64
      %v7317 = vpop.permute.xlu0 %7316
      %7318 = vrot.lane.b32.xlu0 %v6719, 64
      %v7319 = vpop.permute.xlu0 %7318
      %7320 = vrot.lane.b32.xlu0 %v6722, 64
      %v7321 = vpop.permute.xlu0 %7320
      %7322 = vrot.lane.b32.xlu0 %v6727, 64
      %v7323 = vpop.permute.xlu0 %7322
      %7324 = vrot.lane.b32.xlu0 %v6730, 64
      %v7325 = vpop.permute.xlu0 %7324
      %7326 = vrot.lane.b32.xlu0 %v7011, 64
      %v7327 = vpop.permute.xlu0 %7326
      %7328 = vrot.lane.b32.xlu0 %v7014, 64
      %v7329 = vpop.permute.xlu0 %7328
      %7330 = vrot.lane.b32.xlu0 %v7019, 64
      %v7331 = vpop.permute.xlu0 %7330
      %7332 = vrot.lane.b32.xlu0 %v7022, 64
      %v7333 = vpop.permute.xlu0 %7332
      %7334 = vrot.lane.b32.xlu0 %v7027, 64
      %v7335 = vpop.permute.xlu0 %7334
      %7336 = vrot.lane.b32.xlu0 %v7030, 64
      %v7337 = vpop.permute.xlu0 %7336
      %7338 = vrot.lane.b32.xlu0 %v7035, 64
      %v7339 = vpop.permute.xlu0 %7338
      %7340 = vrot.lane.b32.xlu0 %v7038, 64
      %v7341 = vpop.permute.xlu0 %7340
      %7406 = vrot.lane.b32.xlu0 %v6164, 96
      %v7407 = vpop.permute.xlu0 %7406
      %7408 = vrot.lane.b32.xlu0 %v6167, 96
      %v7409 = vpop.permute.xlu0 %7408
      %7410 = vrot.lane.b32.xlu0 %v6172, 96
      %v7411 = vpop.permute.xlu0 %7410
      %7412 = vrot.lane.b32.xlu0 %v6175, 96
      %v7413 = vpop.permute.xlu0 %7412
      %7414 = vrot.lane.b32.xlu0 %v6180, 96
      %v7415 = vpop.permute.xlu0 %7414
      %7416 = vrot.lane.b32.xlu0 %v6183, 96
      %v7417 = vpop.permute.xlu0 %7416
      %7418 = vrot.lane.b32.xlu0 %v6188, 96
      %v7419 = vpop.permute.xlu0 %7418
      %7420 = vrot.lane.b32.xlu0 %v6191, 96
      %v7421 = vpop.permute.xlu0 %7420
      %7422 = vrot.lane.b32.xlu0 %v6472, 96
      %v7423 = vpop.permute.xlu0 %7422
      %7424 = vrot.lane.b32.xlu0 %v6475, 96
      %v7425 = vpop.permute.xlu0 %7424
      %7426 = vrot.lane.b32.xlu0 %v6480, 96
      %v7427 = vpop.permute.xlu0 %7426
      %7428 = vrot.lane.b32.xlu0 %v6483, 96
      %v7429 = vpop.permute.xlu0 %7428
      %7430 = vrot.lane.b32.xlu0 %v6488, 96
      %v7431 = vpop.permute.xlu0 %7430
      %7432 = vrot.lane.b32.xlu0 %v6491, 96
      %v7433 = vpop.permute.xlu0 %7432
      %7434 = vrot.lane.b32.xlu0 %v6496, 96
      %v7435 = vpop.permute.xlu0 %7434
      %7436 = vrot.lane.b32.xlu0 %v6499, 96
      %v7437 = vpop.permute.xlu0 %7436
      %7438 = vrot.lane.b32.xlu0 %v6780, 96
      %v7439 = vpop.permute.xlu0 %7438
      %7440 = vrot.lane.b32.xlu0 %v6783, 96
      %v7441 = vpop.permute.xlu0 %7440
      %7442 = vrot.lane.b32.xlu0 %v6788, 96
      %v7443 = vpop.permute.xlu0 %7442
      %7444 = vrot.lane.b32.xlu0 %v6791, 96
      %v7445 = vpop.permute.xlu0 %7444
      %7446 = vrot.lane.b32.xlu0 %v6796, 96
      %v7447 = vpop.permute.xlu0 %7446
      %7448 = vrot.lane.b32.xlu0 %v6799, 96
      %v7449 = vpop.permute.xlu0 %7448
      %7450 = vrot.lane.b32.xlu0 %v6804, 96
      %v7451 = vpop.permute.xlu0 %7450
      %7452 = vrot.lane.b32.xlu0 %v6807, 96
      %v7453 = vpop.permute.xlu0 %7452
      %7454 = vrot.lane.b32.xlu0 %v7088, 96
      %v7455 = vpop.permute.xlu0 %7454
      %7456 = vrot.lane.b32.xlu0 %v7091, 96
      %v7457 = vpop.permute.xlu0 %7456
      %7458 = vrot.lane.b32.xlu0 %v7096, 96
      %v7459 = vpop.permute.xlu0 %7458
      %7460 = vrot.lane.b32.xlu0 %v7099, 96
      %v7461 = vpop.permute.xlu0 %7460
      %7462 = vrot.lane.b32.xlu0 %v7104, 96
      %v7463 = vpop.permute.xlu0 %7462
      %7464 = vrot.lane.b32.xlu0 %v7107, 96
      %v7465 = vpop.permute.xlu0 %7464
      %7466 = vrot.lane.b32.xlu0 %v7112, 96
      %v7467 = vpop.permute.xlu0 %7466
      %7468 = vrot.lane.b32.xlu0 %v7115, 96
      %v7469 = vpop.permute.xlu0 %7468
      %v7502 = vsel %vm2732, %v5933, %v7151
      %v7503 = vsel %vm2732, %v5936, %v7153
      %v7504 = vsel %vm2732, %v5941, %v7155
      %v7505 = vsel %vm2732, %v5944, %v7157
      %v7506 = vsel %vm2732, %v5949, %v7159
      %v7507 = vsel %vm2732, %v5952, %v7161
      %v7508 = vsel %vm2732, %v5957, %v7163
      %v7509 = vsel %vm2732, %v5960, %v7165
      %v7510 = vsel %vm2732, %v6241, %v7167
      %v7511 = vsel %vm2732, %v6244, %v7169
      %v7512 = vsel %vm2732, %v6249, %v7171
      %v7513 = vsel %vm2732, %v6252, %v7173
      %v7514 = vsel %vm2732, %v6257, %v7175
      %v7515 = vsel %vm2732, %v6260, %v7177
      %v7516 = vsel %vm2732, %v6265, %v7179
      %v7517 = vsel %vm2732, %v6268, %v7181
      %v7518 = vsel %vm2732, %v6549, %v7183
      %v7519 = vsel %vm2732, %v6552, %v7185
      %v7520 = vsel %vm2732, %v6557, %v7187
      %v7521 = vsel %vm2732, %v6560, %v7189
      %v7522 = vsel %vm2732, %v6565, %v7191
      %v7523 = vsel %vm2732, %v6568, %v7193
      %v7524 = vsel %vm2732, %v6573, %v7195
      %v7525 = vsel %vm2732, %v6576, %v7197
      %v7526 = vsel %vm2732, %v6857, %v7199
      %v7527 = vsel %vm2732, %v6860, %v7201
      %v7528 = vsel %vm2732, %v6865, %v7203
      %v7529 = vsel %vm2732, %v6868, %v7205
      %v7530 = vsel %vm2732, %v6873, %v7207
      %v7531 = vsel %vm2732, %v6876, %v7209
      %v7532 = vsel %vm2732, %v6881, %v7211
      %v7533 = vsel %vm2732, %v6884, %v7213
      %v7534 = vsel %vm4413, %v7502, %v7279
      %v7535 = vsel %vm4413, %v7503, %v7281
      %v7536 = vsel %vm4413, %v7504, %v7283
      %v7537 = vsel %vm4413, %v7505, %v7285
      %v7538 = vsel %vm4413, %v7506, %v7287
      %v7539 = vsel %vm4413, %v7507, %v7289
      %v7540 = vsel %vm4413, %v7508, %v7291
      %v7541 = vsel %vm4413, %v7509, %v7293
      %v7542 = vsel %vm4413, %v7510, %v7295
      %v7543 = vsel %vm4413, %v7511, %v7297
      %v7544 = vsel %vm4413, %v7512, %v7299
      %v7545 = vsel %vm4413, %v7513, %v7301
      %v7546 = vsel %vm4413, %v7514, %v7303
      %v7547 = vsel %vm4413, %v7515, %v7305
      %v7548 = vsel %vm4413, %v7516, %v7307
      %v7549 = vsel %vm4413, %v7517, %v7309
      %v7550 = vsel %vm4413, %v7518, %v7311
      %v7551 = vsel %vm4413, %v7519, %v7313
      %v7552 = vsel %vm4413, %v7520, %v7315
      %v7553 = vsel %vm4413, %v7521, %v7317
      %v7554 = vsel %vm4413, %v7522, %v7319
      %v7555 = vsel %vm4413, %v7523, %v7321
      %v7556 = vsel %vm4413, %v7524, %v7323
      %v7557 = vsel %vm4413, %v7525, %v7325
      %v7558 = vsel %vm4413, %v7526, %v7327
      %v7559 = vsel %vm4413, %v7527, %v7329
      %v7560 = vsel %vm4413, %v7528, %v7331
      %v7561 = vsel %vm4413, %v7529, %v7333
      %v7562 = vsel %vm4413, %v7530, %v7335
      %v7563 = vsel %vm4413, %v7531, %v7337
      %v7564 = vsel %vm4413, %v7532, %v7339
      %v7565 = vsel %vm4413, %v7533, %v7341
      %vm7566 = vcmask 785408
      %v7567 = vsel %vm7566, %v7534, %v7407
      %v7568 = vsel %vm7566, %v7535, %v7409
      %v7569 = vsel %vm7566, %v7536, %v7411
      %v7570 = vsel %vm7566, %v7537, %v7413
      %v7571 = vsel %vm7566, %v7538, %v7415
      %v7572 = vsel %vm7566, %v7539, %v7417
      %v7573 = vsel %vm7566, %v7540, %v7419
      %v7574 = vsel %vm7566, %v7541, %v7421
      %v7575 = vsel %vm7566, %v7542, %v7423
      %v7576 = vsel %vm7566, %v7543, %v7425
      %v7577 = vsel %vm7566, %v7544, %v7427
      %v7578 = vsel %vm7566, %v7545, %v7429
      %v7579 = vsel %vm7566, %v7546, %v7431
      %v7580 = vsel %vm7566, %v7547, %v7433
      %v7581 = vsel %vm7566, %v7548, %v7435
      %v7582 = vsel %vm7566, %v7549, %v7437
      %v7583 = vsel %vm7566, %v7550, %v7439
      %v7584 = vsel %vm7566, %v7551, %v7441
      %v7585 = vsel %vm7566, %v7552, %v7443
      %v7586 = vsel %vm7566, %v7553, %v7445
      %v7587 = vsel %vm7566, %v7554, %v7447
      %v7588 = vsel %vm7566, %v7555, %v7449
      %v7589 = vsel %vm7566, %v7556, %v7451
      %v7590 = vsel %vm7566, %v7557, %v7453
      %v7591 = vsel %vm7566, %v7558, %v7455
      %v7592 = vsel %vm7566, %v7559, %v7457
      %v7593 = vsel %vm7566, %v7560, %v7459
      %v7594 = vsel %vm7566, %v7561, %v7461
      %v7595 = vsel %vm7566, %v7562, %v7463
      %v7596 = vsel %vm7566, %v7563, %v7465
      %v7597 = vsel %vm7566, %v7564, %v7467
      %v7598 = vsel %vm7566, %v7565, %v7469
      %v7599 = vpack.c.bf16 %v7568, %v7567
      %v7600 = vpack.c.bf16 %v7570, %v7569
      %v7601 = vpack.c.bf16 %v7572, %v7571
      %v7602 = vpack.c.bf16 %v7574, %v7573
      %v7603 = vpack.c.bf16 %v7576, %v7575
      %v7604 = vpack.c.bf16 %v7578, %v7577
      %v7605 = vpack.c.bf16 %v7580, %v7579
      %v7606 = vpack.c.bf16 %v7582, %v7581
      %v7607 = vpack.c.bf16 %v7584, %v7583
      %v7608 = vpack.c.bf16 %v7586, %v7585
      %v7609 = vpack.c.bf16 %v7588, %v7587
      %v7610 = vpack.c.bf16 %v7590, %v7589
      %v7611 = vpack.c.bf16 %v7592, %v7591
      %v7612 = vpack.c.bf16 %v7594, %v7593
      %v7613 = vpack.c.bf16 %v7596, %v7595
      %v7614 = vpack.c.bf16 %v7598, %v7597
      %v7615 = vld [vmem:[%s6] sm:$0xf]
      %v7616 = vld [vmem:[%s6 + $0x4] sm:$0xf]
      %v7617 = vld [vmem:[%s6 + $0x8] sm:$0xf]
      %v7618 = vld [vmem:[%s6 + $0xc] sm:$0xf]
      %v7619 = vld [vmem:[%s6 + $0x10] sm:$0xf]
      %v7620 = vld [vmem:[%s6 + $0x14] sm:$0xf]
      %v7621 = vld [vmem:[%s6 + $0x18] sm:$0xf]
      %v7622 = vld [vmem:[%s6 + $0x1c] sm:$0xf]
      %v7623 = vld [vmem:[%s6 + $0x20] sm:$0xf]
      %v7624 = vld [vmem:[%s6 + $0x24] sm:$0xf]
      %v7625 = vld [vmem:[%s6 + $0x28] sm:$0xf]
      %v7626 = vld [vmem:[%s6 + $0x2c] sm:$0xf]
      %v7627 = vld [vmem:[%s6 + $0x30] sm:$0xf]
      %v7628 = vld [vmem:[%s6 + $0x34] sm:$0xf]
      %v7629 = vld [vmem:[%s6 + $0x38] sm:$0xf]
      %v7630 = vld [vmem:[%s6 + $0x3c] sm:$0xf]
      %v7631 = vld [vmem:[%s7] sm:$0x1]
      %v7633 = vlaneseq
      %v7634 = vshrl.u32 %v7633, 7
      %v7635 = vsub.s32 0, %v7634
      %v7636 = vrot.slane %v7631, %v7635
      %v7654 = vunpack.c.l.b16 %v7615
      %v7655 = vunpack.c.l.b16 %v7616
      %v7656 = vunpack.c.l.b16 %v7617
      %v7657 = vunpack.c.l.b16 %v7618
      %v7658 = vunpack.c.l.b16 %v7619
      %v7659 = vunpack.c.l.b16 %v7620
      %v7660 = vunpack.c.l.b16 %v7621
      %v7661 = vunpack.c.l.b16 %v7622
      %v7662 = vunpack.c.l.b16 %v7623
      %v7663 = vunpack.c.l.b16 %v7624
      %v7664 = vunpack.c.l.b16 %v7625
      %v7665 = vunpack.c.l.b16 %v7626
      %v7666 = vunpack.c.l.b16 %v7627
      %v7667 = vunpack.c.l.b16 %v7628
      %v7668 = vunpack.c.l.b16 %v7629
      %v7669 = vunpack.c.l.b16 %v7630
      %v7670 = vpack.c.b16 %v7655, %v7654
      %v7671 = vpack.c.b16 %v7657, %v7656
      %v7672 = vpack.c.b16 %v7659, %v7658
      %v7673 = vpack.c.b16 %v7661, %v7660
      %v7674 = vpack.c.b16 %v7663, %v7662
      %v7675 = vpack.c.b16 %v7665, %v7664
      %v7676 = vpack.c.b16 %v7667, %v7666
      %v7677 = vpack.c.b16 %v7669, %v7668
      %7686 = vmatprep.subr.bf16.mxu0 0
      %7687 = vmatpush1.bf16.msra.mxu0 %v7677
      %7688 = vmatprep.subr.bf16.mxu0 0
      %7689 = vmatpush1.bf16.msra.mxu0 %v7676
      %7690 = vmatprep.subr.bf16.mxu0 0
      %7691 = vmatpush1.bf16.msra.mxu0 %v7675
      %7692 = vmatprep.subr.bf16.mxu0 0
      %7693 = vmatpush1.bf16.msra.mxu0 %v7674
      %7694 = vmatprep.subr.bf16.mxu0 0
      %7695 = vmatpush1.bf16.msra.mxu0 %v7673
      %7696 = vmatprep.subr.bf16.mxu0 0
      %7697 = vmatpush1.bf16.msra.mxu0 %v7672
      %7698 = vmatprep.subr.bf16.mxu0 0
      %7699 = vmatpush1.bf16.msra.mxu0 %v7671
      %7700 = vmatprep.subr.bf16.mxu0 0
      %7701 = vmatpush1.bf16.msra.mxu0 %v7670
      %7702 = vmatprep.subr.bf16.mxu0 0
      %7703 = vmatpush2.bf16.msra.mxu0 0
      %7704 = vmatprep.subr.bf16.mxu0 0
      %7705 = vmatpush2.bf16.msra.mxu0 0
      %7706 = vmatprep.subr.bf16.mxu0 0
      %7707 = vmatpush2.bf16.msra.mxu0 0
      %7708 = vmatprep.subr.bf16.mxu0 0
      %7709 = vmatpush2.bf16.msra.mxu0 0
      %7710 = vmatprep.subr.bf16.mxu0 0
      %7711 = vmatpush2.bf16.msra.mxu0 0
      %7712 = vmatprep.subr.bf16.mxu0 0
      %7713 = vmatpush2.bf16.msra.mxu0 0
      %7714 = vmatprep.subr.bf16.mxu0 0
      %7715 = vmatpush2.bf16.msra.mxu0 0
      %7716 = vmatprep.subr.bf16.mxu0 0
      %7717 = vmatpush2.bf16.msra.mxu0 0
      %7718 = vmatprep.mubr.bf16.mxu0 0
      %7719 = vmatmul.mubr.bf16.gmra.mxu0 %v7599
      %v7720 = vpop.f32.mrf.mxu0
      %v7721 = vadd.f32 %v7636, %v7720
      %v7722 = vpop.f32.mrf.mxu0
      %v7723 = vpop.f32.mrf.mxu0
      %v7724 = vadd.f32 %v7636, %v7723
      %v7725 = vpop.f32.mrf.mxu0
      %7726 = vmatprep.mubr.bf16.mxu0 0
      %7727 = vmatmul.mubr.bf16.gmra.mxu0 %v7600
      %v7728 = vpop.f32.mrf.mxu0
      %v7729 = vadd.f32 %v7636, %v7728
      %v7730 = vpop.f32.mrf.mxu0
      %v7731 = vpop.f32.mrf.mxu0
      %v7732 = vadd.f32 %v7636, %v7731
      %v7733 = vpop.f32.mrf.mxu0
      %7734 = vmatprep.mubr.bf16.mxu0 0
      %7735 = vmatmul.mubr.bf16.gmra.mxu0 %v7601
      %v7736 = vpop.f32.mrf.mxu0
      %v7737 = vadd.f32 %v7636, %v7736
      %v7738 = vpop.f32.mrf.mxu0
      %v7739 = vpop.f32.mrf.mxu0
      %v7740 = vadd.f32 %v7636, %v7739
      %v7741 = vpop.f32.mrf.mxu0
      %7742 = vmatprep.mubr.bf16.mxu0 0
      %7743 = vmatmul.mubr.bf16.gmra.mxu0 %v7602
      %v7744 = vpop.f32.mrf.mxu0
      %v7745 = vadd.f32 %v7636, %v7744
      %v7746 = vpop.f32.mrf.mxu0
      %v7747 = vpop.f32.mrf.mxu0
      %v7748 = vadd.f32 %v7636, %v7747
      %v7749 = vpop.f32.mrf.mxu0
      %7750 = vmatprep.mubr.bf16.mxu0 0
      %7751 = vmatmul.mubr.bf16.gmra.mxu0 %v7603
      %v7752 = vpop.f32.mrf.mxu0
      %v7753 = vadd.f32 %v7636, %v7752
      %v7754 = vpop.f32.mrf.mxu0
      %v7755 = vpop.f32.mrf.mxu0
      %v7756 = vadd.f32 %v7636, %v7755
      %v7757 = vpop.f32.mrf.mxu0
      %7758 = vmatprep.mubr.bf16.mxu0 0
      %7759 = vmatmul.mubr.bf16.gmra.mxu0 %v7604
      %v7760 = vpop.f32.mrf.mxu0
      %v7761 = vadd.f32 %v7636, %v7760
      %v7762 = vpop.f32.mrf.mxu0
      %v7763 = vpop.f32.mrf.mxu0
      %v7764 = vadd.f32 %v7636, %v7763
      %v7765 = vpop.f32.mrf.mxu0
      %7766 = vmatprep.mubr.bf16.mxu0 0
      %7767 = vmatmul.mubr.bf16.gmra.mxu0 %v7605
      %v7768 = vpop.f32.mrf.mxu0
      %v7769 = vadd.f32 %v7636, %v7768
      %v7770 = vpop.f32.mrf.mxu0
      %v7771 = vpop.f32.mrf.mxu0
      %v7772 = vadd.f32 %v7636, %v7771
      %v7773 = vpop.f32.mrf.mxu0
      %7774 = vmatprep.mubr.bf16.mxu0 0
      %7775 = vmatmul.mubr.bf16.gmra.mxu0 %v7606
      %v7776 = vpop.f32.mrf.mxu0
      %v7777 = vadd.f32 %v7636, %v7776
      %v7778 = vpop.f32.mrf.mxu0
      %v7779 = vpop.f32.mrf.mxu0
      %v7780 = vadd.f32 %v7636, %v7779
      %v7781 = vpop.f32.mrf.mxu0
      %7782 = vmatprep.mubr.bf16.mxu0 0
      %7783 = vmatmul.mubr.bf16.gmra.mxu0 %v7607
      %v7784 = vpop.f32.mrf.mxu0
      %v7785 = vadd.f32 %v7636, %v7784
      %v7786 = vpop.f32.mrf.mxu0
      %v7787 = vpop.f32.mrf.mxu0
      %v7788 = vadd.f32 %v7636, %v7787
      %v7789 = vpop.f32.mrf.mxu0
      %7790 = vmatprep.mubr.bf16.mxu0 0
      %7791 = vmatmul.mubr.bf16.gmra.mxu0 %v7608
      %v7792 = vpop.f32.mrf.mxu0
      %v7793 = vadd.f32 %v7636, %v7792
      %v7794 = vpop.f32.mrf.mxu0
      %v7795 = vpop.f32.mrf.mxu0
      %v7796 = vadd.f32 %v7636, %v7795
      %v7797 = vpop.f32.mrf.mxu0
      %7798 = vmatprep.mubr.bf16.mxu0 0
      %7799 = vmatmul.mubr.bf16.gmra.mxu0 %v7609
      %v7800 = vpop.f32.mrf.mxu0
      %v7801 = vadd.f32 %v7636, %v7800
      %v7802 = vpop.f32.mrf.mxu0
      %v7803 = vpop.f32.mrf.mxu0
      %v7804 = vadd.f32 %v7636, %v7803
      %v7805 = vpop.f32.mrf.mxu0
      %7806 = vmatprep.mubr.bf16.mxu0 0
      %7807 = vmatmul.mubr.bf16.gmra.mxu0 %v7610
      %v7808 = vpop.f32.mrf.mxu0
      %v7809 = vadd.f32 %v7636, %v7808
      %v7810 = vpop.f32.mrf.mxu0
      %v7811 = vpop.f32.mrf.mxu0
      %v7812 = vadd.f32 %v7636, %v7811
      %v7813 = vpop.f32.mrf.mxu0
      %7814 = vmatprep.mubr.bf16.mxu0 0
      %7815 = vmatmul.mubr.bf16.gmra.mxu0 %v7611
      %v7816 = vpop.f32.mrf.mxu0
      %v7817 = vadd.f32 %v7636, %v7816
      %v7818 = vpop.f32.mrf.mxu0
      %v7819 = vpop.f32.mrf.mxu0
      %v7820 = vadd.f32 %v7636, %v7819
      %v7821 = vpop.f32.mrf.mxu0
      %7822 = vmatprep.mubr.bf16.mxu0 0
      %7823 = vmatmul.mubr.bf16.gmra.mxu0 %v7612
      %v7824 = vpop.f32.mrf.mxu0
      %v7825 = vadd.f32 %v7636, %v7824
      %v7826 = vpop.f32.mrf.mxu0
      %v7827 = vpop.f32.mrf.mxu0
      %v7828 = vadd.f32 %v7636, %v7827
      %v7829 = vpop.f32.mrf.mxu0
      %7830 = vmatprep.mubr.bf16.mxu0 0
      %7831 = vmatmul.mubr.bf16.gmra.mxu0 %v7613
      %v7832 = vpop.f32.mrf.mxu0
      %v7833 = vadd.f32 %v7636, %v7832
      %v7834 = vpop.f32.mrf.mxu0
      %v7835 = vpop.f32.mrf.mxu0
      %v7836 = vadd.f32 %v7636, %v7835
      %v7837 = vpop.f32.mrf.mxu0
      %7838 = vmatprep.mubr.bf16.mxu0 0
      %7839 = vmatmul.mubr.bf16.gmra.mxu0 %v7614
      %v7840 = vpop.f32.mrf.mxu0
      %v7841 = vadd.f32 %v7636, %v7840
      %v7842 = vpop.f32.mrf.mxu0
      %v7843 = vpop.f32.mrf.mxu0
      %v7844 = vadd.f32 %v7636, %v7843
      %v7845 = vpop.f32.mrf.mxu0
      %7846 = vdwg.mxu0
      %v7847 = vadd.f32 %v538, %v7721
      %v7848 = vadd.f32 %v540, %v7724
      %v7849 = vadd.f32 %v542, %v7729
      %v7850 = vadd.f32 %v544, %v7732
      %v7851 = vadd.f32 %v546, %v7737
      %v7852 = vadd.f32 %v548, %v7740
      %v7853 = vadd.f32 %v550, %v7745
      %v7854 = vadd.f32 %v552, %v7748
      %v7855 = vadd.f32 %v539, %v7753
      %v7856 = vadd.f32 %v541, %v7756
      %v7857 = vadd.f32 %v543, %v7761
      %v7858 = vadd.f32 %v545, %v7764
      %v7859 = vadd.f32 %v547, %v7769
      %v7860 = vadd.f32 %v549, %v7772
      %v7861 = vadd.f32 %v551, %v7777
      %v7862 = vadd.f32 %v553, %v7780
      %v7863 = vadd.f32 %v554, %v7785
      %v7864 = vadd.f32 %v556, %v7788
      %v7865 = vadd.f32 %v558, %v7793
      %v7866 = vadd.f32 %v560, %v7796
      %v7867 = vadd.f32 %v562, %v7801
      %v7868 = vadd.f32 %v564, %v7804
      %v7869 = vadd.f32 %v566, %v7809
      %v7870 = vadd.f32 %v568, %v7812
      %v7871 = vadd.f32 %v555, %v7817
      %v7872 = vadd.f32 %v557, %v7820
      %v7873 = vadd.f32 %v559, %v7825
      %v7874 = vadd.f32 %v561, %v7828
      %v7875 = vadd.f32 %v563, %v7833
      %v7876 = vadd.f32 %v565, %v7836
      %v7877 = vadd.f32 %v567, %v7841
      %v7878 = vadd.f32 %v569, %v7844
      %7879 = vadd.xlane.f32.xlu0 %v7847
      %v7880 = vpop.xlane.xlu0 %7879
      %7881 = vadd.xlane.f32.xlu0 %v7848
      %v7882 = vpop.xlane.xlu0 %7881
      %7883 = vadd.xlane.f32.xlu0 %v7849
      %v7884 = vpop.xlane.xlu0 %7883
      %7885 = vadd.xlane.f32.xlu0 %v7850
      %v7886 = vpop.xlane.xlu0 %7885
      %7887 = vadd.xlane.f32.xlu0 %v7851
      %v7888 = vpop.xlane.xlu0 %7887
      %7889 = vadd.xlane.f32.xlu0 %v7852
      %v7890 = vpop.xlane.xlu0 %7889
      %7891 = vadd.xlane.f32.xlu0 %v7853
      %v7892 = vpop.xlane.xlu0 %7891
      %7893 = vadd.xlane.f32.xlu0 %v7854
      %v7894 = vpop.xlane.xlu0 %7893
      %7895 = vadd.xlane.f32.xlu0 %v7855
      %v7896 = vpop.xlane.xlu0 %7895
      %7897 = vadd.xlane.f32.xlu0 %v7856
      %v7898 = vpop.xlane.xlu0 %7897
      %7899 = vadd.xlane.f32.xlu0 %v7857
      %v7900 = vpop.xlane.xlu0 %7899
      %7901 = vadd.xlane.f32.xlu0 %v7858
      %v7902 = vpop.xlane.xlu0 %7901
      %7903 = vadd.xlane.f32.xlu0 %v7859
      %v7904 = vpop.xlane.xlu0 %7903
      %7905 = vadd.xlane.f32.xlu0 %v7860
      %v7906 = vpop.xlane.xlu0 %7905
      %7907 = vadd.xlane.f32.xlu0 %v7861
      %v7908 = vpop.xlane.xlu0 %7907
      %7909 = vadd.xlane.f32.xlu0 %v7862
      %v7910 = vpop.xlane.xlu0 %7909
      %7911 = vadd.xlane.f32.xlu0 %v7863
      %v7912 = vpop.xlane.xlu0 %7911
      %7913 = vadd.xlane.f32.xlu0 %v7864
      %v7914 = vpop.xlane.xlu0 %7913
      %7915 = vadd.xlane.f32.xlu0 %v7865
      %v7916 = vpop.xlane.xlu0 %7915
      %7917 = vadd.xlane.f32.xlu0 %v7866
      %v7918 = vpop.xlane.xlu0 %7917
      %7919 = vadd.xlane.f32.xlu0 %v7867
      %v7920 = vpop.xlane.xlu0 %7919
      %7921 = vadd.xlane.f32.xlu0 %v7868
      %v7922 = vpop.xlane.xlu0 %7921
      %7923 = vadd.xlane.f32.xlu0 %v7869
      %v7924 = vpop.xlane.xlu0 %7923
      %7925 = vadd.xlane.f32.xlu0 %v7870
      %v7926 = vpop.xlane.xlu0 %7925
      %7927 = vadd.xlane.f32.xlu0 %v7871
      %v7928 = vpop.xlane.xlu0 %7927
      %7929 = vadd.xlane.f32.xlu0 %v7872
      %v7930 = vpop.xlane.xlu0 %7929
      %7931 = vadd.xlane.f32.xlu0 %v7873
      %v7932 = vpop.xlane.xlu0 %7931
      %7933 = vadd.xlane.f32.xlu0 %v7874
      %v7934 = vpop.xlane.xlu0 %7933
      %7935 = vadd.xlane.f32.xlu0 %v7875
      %v7936 = vpop.xlane.xlu0 %7935
      %7937 = vadd.xlane.f32.xlu0 %v7876
      %v7938 = vpop.xlane.xlu0 %7937
      %7939 = vadd.xlane.f32.xlu0 %v7877
      %v7940 = vpop.xlane.xlu0 %7939
      %7941 = vadd.xlane.f32.xlu0 %v7878
      %v7942 = vpop.xlane.xlu0 %7941
      %v7943 = vmul.f32 %v7880, %v634
      %v7944 = vmul.f32 %v7882, %v634
      %v7945 = vmul.f32 %v7884, %v634
      %v7946 = vmul.f32 %v7886, %v634
      %v7947 = vmul.f32 %v7888, %v634
      %v7948 = vmul.f32 %v7890, %v634
      %v7949 = vmul.f32 %v7892, %v634
      %v7950 = vmul.f32 %v7894, %v634
      %v7951 = vmul.f32 %v7896, %v634
      %v7952 = vmul.f32 %v7898, %v634
      %v7953 = vmul.f32 %v7900, %v634
      %v7954 = vmul.f32 %v7902, %v634
      %v7955 = vmul.f32 %v7904, %v634
      %v7956 = vmul.f32 %v7906, %v634
      %v7957 = vmul.f32 %v7908, %v634
      %v7958 = vmul.f32 %v7910, %v634
      %v7959 = vmul.f32 %v7912, %v634
      %v7960 = vmul.f32 %v7914, %v634
      %v7961 = vmul.f32 %v7916, %v634
      %v7962 = vmul.f32 %v7918, %v634
      %v7963 = vmul.f32 %v7920, %v634
      %v7964 = vmul.f32 %v7922, %v634
      %v7965 = vmul.f32 %v7924, %v634
      %v7966 = vmul.f32 %v7926, %v634
      %v7967 = vmul.f32 %v7928, %v634
      %v7968 = vmul.f32 %v7930, %v634
      %v7969 = vmul.f32 %v7932, %v634
      %v7970 = vmul.f32 %v7934, %v634
      %v7971 = vmul.f32 %v7936, %v634
      %v7972 = vmul.f32 %v7938, %v634
      %v7973 = vmul.f32 %v7940, %v634
      %v7974 = vmul.f32 %v7942, %v634
      %v7975 = vsub.f32 %v7847, %v7943
      %v7976 = vsub.f32 %v7848, %v7944
      %v7977 = vsub.f32 %v7849, %v7945
      %v7978 = vsub.f32 %v7850, %v7946
      %v7979 = vsub.f32 %v7851, %v7947
      %v7980 = vsub.f32 %v7852, %v7948
      %v7981 = vsub.f32 %v7853, %v7949
      %v7982 = vsub.f32 %v7854, %v7950
      %v7983 = vsub.f32 %v7855, %v7951
      %v7984 = vsub.f32 %v7856, %v7952
      %v7985 = vsub.f32 %v7857, %v7953
      %v7986 = vsub.f32 %v7858, %v7954
      %v7987 = vsub.f32 %v7859, %v7955
      %v7988 = vsub.f32 %v7860, %v7956
      %v7989 = vsub.f32 %v7861, %v7957
      %v7990 = vsub.f32 %v7862, %v7958
      %v7991 = vsub.f32 %v7863, %v7959
      %v7992 = vsub.f32 %v7864, %v7960
      %v7993 = vsub.f32 %v7865, %v7961
      %v7994 = vsub.f32 %v7866, %v7962
      %v7995 = vsub.f32 %v7867, %v7963
      %v7996 = vsub.f32 %v7868, %v7964
      %v7997 = vsub.f32 %v7869, %v7965
      %v7998 = vsub.f32 %v7870, %v7966
      %v7999 = vsub.f32 %v7871, %v7967
      %v8000 = vsub.f32 %v7872, %v7968
      %v8001 = vsub.f32 %v7873, %v7969
      %v8002 = vsub.f32 %v7874, %v7970
      %v8003 = vsub.f32 %v7875, %v7971
      %v8004 = vsub.f32 %v7876, %v7972
      %v8005 = vsub.f32 %v7877, %v7973
      %v8006 = vsub.f32 %v7878, %v7974
      %v8007 = vmul.f32 %v7975, %v7975
      %v8008 = vmul.f32 %v7976, %v7976
      %v8009 = vmul.f32 %v7977, %v7977
      %v8010 = vmul.f32 %v7978, %v7978
      %v8011 = vmul.f32 %v7979, %v7979
      %v8012 = vmul.f32 %v7980, %v7980
      %v8013 = vmul.f32 %v7981, %v7981
      %v8014 = vmul.f32 %v7982, %v7982
      %v8015 = vmul.f32 %v7983, %v7983
      %v8016 = vmul.f32 %v7984, %v7984
      %v8017 = vmul.f32 %v7985, %v7985
      %v8018 = vmul.f32 %v7986, %v7986
      %v8019 = vmul.f32 %v7987, %v7987
      %v8020 = vmul.f32 %v7988, %v7988
      %v8021 = vmul.f32 %v7989, %v7989
      %v8022 = vmul.f32 %v7990, %v7990
      %v8023 = vmul.f32 %v7991, %v7991
      %v8024 = vmul.f32 %v7992, %v7992
      %v8025 = vmul.f32 %v7993, %v7993
      %v8026 = vmul.f32 %v7994, %v7994
      %v8027 = vmul.f32 %v7995, %v7995
      %v8028 = vmul.f32 %v7996, %v7996
      %v8029 = vmul.f32 %v7997, %v7997
      %v8030 = vmul.f32 %v7998, %v7998
      %v8031 = vmul.f32 %v7999, %v7999
      %v8032 = vmul.f32 %v8000, %v8000
      %v8033 = vmul.f32 %v8001, %v8001
      %v8034 = vmul.f32 %v8002, %v8002
      %v8035 = vmul.f32 %v8003, %v8003
      %v8036 = vmul.f32 %v8004, %v8004
      %v8037 = vmul.f32 %v8005, %v8005
      %v8038 = vmul.f32 %v8006, %v8006
      %8039 = vadd.xlane.f32.xlu0 %v8007
      %v8040 = vpop.xlane.xlu0 %8039
      %8041 = vadd.xlane.f32.xlu0 %v8008
      %v8042 = vpop.xlane.xlu0 %8041
      %8043 = vadd.xlane.f32.xlu0 %v8009
      %v8044 = vpop.xlane.xlu0 %8043
      %8045 = vadd.xlane.f32.xlu0 %v8010
      %v8046 = vpop.xlane.xlu0 %8045
      %8047 = vadd.xlane.f32.xlu0 %v8011
      %v8048 = vpop.xlane.xlu0 %8047
      %8049 = vadd.xlane.f32.xlu0 %v8012
      %v8050 = vpop.xlane.xlu0 %8049
      %8051 = vadd.xlane.f32.xlu0 %v8013
      %v8052 = vpop.xlane.xlu0 %8051
      %8053 = vadd.xlane.f32.xlu0 %v8014
      %v8054 = vpop.xlane.xlu0 %8053
      %8055 = vadd.xlane.f32.xlu0 %v8015
      %v8056 = vpop.xlane.xlu0 %8055
      %8057 = vadd.xlane.f32.xlu0 %v8016
      %v8058 = vpop.xlane.xlu0 %8057
      %8059 = vadd.xlane.f32.xlu0 %v8017
      %v8060 = vpop.xlane.xlu0 %8059
      %8061 = vadd.xlane.f32.xlu0 %v8018
      %v8062 = vpop.xlane.xlu0 %8061
      %8063 = vadd.xlane.f32.xlu0 %v8019
      %v8064 = vpop.xlane.xlu0 %8063
      %8065 = vadd.xlane.f32.xlu0 %v8020
      %v8066 = vpop.xlane.xlu0 %8065
      %8067 = vadd.xlane.f32.xlu0 %v8021
      %v8068 = vpop.xlane.xlu0 %8067
      %8069 = vadd.xlane.f32.xlu0 %v8022
      %v8070 = vpop.xlane.xlu0 %8069
      %8071 = vadd.xlane.f32.xlu0 %v8023
      %v8072 = vpop.xlane.xlu0 %8071
      %8073 = vadd.xlane.f32.xlu0 %v8024
      %v8074 = vpop.xlane.xlu0 %8073
      %8075 = vadd.xlane.f32.xlu0 %v8025
      %v8076 = vpop.xlane.xlu0 %8075
      %8077 = vadd.xlane.f32.xlu0 %v8026
      %v8078 = vpop.xlane.xlu0 %8077
      %8079 = vadd.xlane.f32.xlu0 %v8027
      %v8080 = vpop.xlane.xlu0 %8079
      %8081 = vadd.xlane.f32.xlu0 %v8028
      %v8082 = vpop.xlane.xlu0 %8081
      %8083 = vadd.xlane.f32.xlu0 %v8029
      %v8084 = vpop.xlane.xlu0 %8083
      %8085 = vadd.xlane.f32.xlu0 %v8030
      %v8086 = vpop.xlane.xlu0 %8085
      %8087 = vadd.xlane.f32.xlu0 %v8031
      %v8088 = vpop.xlane.xlu0 %8087
      %8089 = vadd.xlane.f32.xlu0 %v8032
      %v8090 = vpop.xlane.xlu0 %8089
      %8091 = vadd.xlane.f32.xlu0 %v8033
      %v8092 = vpop.xlane.xlu0 %8091
      %8093 = vadd.xlane.f32.xlu0 %v8034
      %v8094 = vpop.xlane.xlu0 %8093
      %8095 = vadd.xlane.f32.xlu0 %v8035
      %v8096 = vpop.xlane.xlu0 %8095
      %8097 = vadd.xlane.f32.xlu0 %v8036
      %v8098 = vpop.xlane.xlu0 %8097
      %8099 = vadd.xlane.f32.xlu0 %v8037
      %v8100 = vpop.xlane.xlu0 %8099
      %8101 = vadd.xlane.f32.xlu0 %v8038
      %v8102 = vpop.xlane.xlu0 %8101
      %v8103 = vmul.f32 %v8040, %v634
      %v8104 = vmul.f32 %v8042, %v634
      %v8105 = vmul.f32 %v8044, %v634
      %v8106 = vmul.f32 %v8046, %v634
      %v8107 = vmul.f32 %v8048, %v634
      %v8108 = vmul.f32 %v8050, %v634
      %v8109 = vmul.f32 %v8052, %v634
      %v8110 = vmul.f32 %v8054, %v634
      %v8111 = vmul.f32 %v8056, %v634
      %v8112 = vmul.f32 %v8058, %v634
      %v8113 = vmul.f32 %v8060, %v634
      %v8114 = vmul.f32 %v8062, %v634
      %v8115 = vmul.f32 %v8064, %v634
      %v8116 = vmul.f32 %v8066, %v634
      %v8117 = vmul.f32 %v8068, %v634
      %v8118 = vmul.f32 %v8070, %v634
      %v8119 = vmul.f32 %v8072, %v634
      %v8120 = vmul.f32 %v8074, %v634
      %v8121 = vmul.f32 %v8076, %v634
      %v8122 = vmul.f32 %v8078, %v634
      %v8123 = vmul.f32 %v8080, %v634
      %v8124 = vmul.f32 %v8082, %v634
      %v8125 = vmul.f32 %v8084, %v634
      %v8126 = vmul.f32 %v8086, %v634
      %v8127 = vmul.f32 %v8088, %v634
      %v8128 = vmul.f32 %v8090, %v634
      %v8129 = vmul.f32 %v8092, %v634
      %v8130 = vmul.f32 %v8094, %v634
      %v8131 = vmul.f32 %v8096, %v634
      %v8132 = vmul.f32 %v8098, %v634
      %v8133 = vmul.f32 %v8100, %v634
      %v8134 = vmul.f32 %v8102, %v634
      %v8135 = vadd.f32 %v8103, 1e-05
      %v8136 = vadd.f32 %v8104, 1e-05
      %v8137 = vadd.f32 %v8105, 1e-05
      %v8138 = vadd.f32 %v8106, 1e-05
      %v8139 = vadd.f32 %v8107, 1e-05
      %v8140 = vadd.f32 %v8108, 1e-05
      %v8141 = vadd.f32 %v8109, 1e-05
      %v8142 = vadd.f32 %v8110, 1e-05
      %v8143 = vadd.f32 %v8111, 1e-05
      %v8144 = vadd.f32 %v8112, 1e-05
      %v8145 = vadd.f32 %v8113, 1e-05
      %v8146 = vadd.f32 %v8114, 1e-05
      %v8147 = vadd.f32 %v8115, 1e-05
      %v8148 = vadd.f32 %v8116, 1e-05
      %v8149 = vadd.f32 %v8117, 1e-05
      %v8150 = vadd.f32 %v8118, 1e-05
      %v8151 = vadd.f32 %v8119, 1e-05
      %v8152 = vadd.f32 %v8120, 1e-05
      %v8153 = vadd.f32 %v8121, 1e-05
      %v8154 = vadd.f32 %v8122, 1e-05
      %v8155 = vadd.f32 %v8123, 1e-05
      %v8156 = vadd.f32 %v8124, 1e-05
      %v8157 = vadd.f32 %v8125, 1e-05
      %v8158 = vadd.f32 %v8126, 1e-05
      %v8159 = vadd.f32 %v8127, 1e-05
      %v8160 = vadd.f32 %v8128, 1e-05
      %v8161 = vadd.f32 %v8129, 1e-05
      %v8162 = vadd.f32 %v8130, 1e-05
      %v8163 = vadd.f32 %v8131, 1e-05
      %v8164 = vadd.f32 %v8132, 1e-05
      %v8165 = vadd.f32 %v8133, 1e-05
      %v8166 = vadd.f32 %v8134, 1e-05
      %v8167 = vrsqrt.pop %v8135
      %v8168 = vrsqrt.pop %v8136
      %v8169 = vrsqrt.pop %v8137
      %v8170 = vrsqrt.pop %v8138
      %v8171 = vrsqrt.pop %v8139
      %v8172 = vrsqrt.pop %v8140
      %v8173 = vrsqrt.pop %v8141
      %v8174 = vrsqrt.pop %v8142
      %v8175 = vrsqrt.pop %v8143
      %v8176 = vrsqrt.pop %v8144
      %v8177 = vrsqrt.pop %v8145
      %v8178 = vrsqrt.pop %v8146
      %v8179 = vrsqrt.pop %v8147
      %v8180 = vrsqrt.pop %v8148
      %v8181 = vrsqrt.pop %v8149
      %v8182 = vrsqrt.pop %v8150
      %v8183 = vrsqrt.pop %v8151
      %v8184 = vrsqrt.pop %v8152
      %v8185 = vrsqrt.pop %v8153
      %v8186 = vrsqrt.pop %v8154
      %v8187 = vrsqrt.pop %v8155
      %v8188 = vrsqrt.pop %v8156
      %v8189 = vrsqrt.pop %v8157
      %v8190 = vrsqrt.pop %v8158
      %v8191 = vrsqrt.pop %v8159
      %v8192 = vrsqrt.pop %v8160
      %v8193 = vrsqrt.pop %v8161
      %v8194 = vrsqrt.pop %v8162
      %v8195 = vrsqrt.pop %v8163
      %v8196 = vrsqrt.pop %v8164
      %v8197 = vrsqrt.pop %v8165
      %v8198 = vrsqrt.pop %v8166
      %v8199 = vmul.f32 %v7975, %v8167
      %v8200 = vmul.f32 %v7976, %v8168
      %v8201 = vmul.f32 %v7977, %v8169
      %v8202 = vmul.f32 %v7978, %v8170
      %v8203 = vmul.f32 %v7979, %v8171
      %v8204 = vmul.f32 %v7980, %v8172
      %v8205 = vmul.f32 %v7981, %v8173
      %v8206 = vmul.f32 %v7982, %v8174
      %v8207 = vmul.f32 %v7983, %v8175
      %v8208 = vmul.f32 %v7984, %v8176
      %v8209 = vmul.f32 %v7985, %v8177
      %v8210 = vmul.f32 %v7986, %v8178
      %v8211 = vmul.f32 %v7987, %v8179
      %v8212 = vmul.f32 %v7988, %v8180
      %v8213 = vmul.f32 %v7989, %v8181
      %v8214 = vmul.f32 %v7990, %v8182
      %v8215 = vmul.f32 %v7991, %v8183
      %v8216 = vmul.f32 %v7992, %v8184
      %v8217 = vmul.f32 %v7993, %v8185
      %v8218 = vmul.f32 %v7994, %v8186
      %v8219 = vmul.f32 %v7995, %v8187
      %v8220 = vmul.f32 %v7996, %v8188
      %v8221 = vmul.f32 %v7997, %v8189
      %v8222 = vmul.f32 %v7998, %v8190
      %v8223 = vmul.f32 %v7999, %v8191
      %v8224 = vmul.f32 %v8000, %v8192
      %v8225 = vmul.f32 %v8001, %v8193
      %v8226 = vmul.f32 %v8002, %v8194
      %v8227 = vmul.f32 %v8003, %v8195
      %v8228 = vmul.f32 %v8004, %v8196
      %v8229 = vmul.f32 %v8005, %v8197
      %v8230 = vmul.f32 %v8006, %v8198
      %v8231 = vld [vmem:[%s8] sm:$0x1]
      %v8233 = vlaneseq
      %v8234 = vshrl.u32 %v8233, 7
      %v8235 = vsub.s32 0, %v8234
      %v8236 = vrot.slane %v8231, %v8235
      %v8238 = vmul.f32 %v8199, %v8236
      %v8239 = vmul.f32 %v8200, %v8236
      %v8240 = vmul.f32 %v8201, %v8236
      %v8241 = vmul.f32 %v8202, %v8236
      %v8242 = vmul.f32 %v8203, %v8236
      %v8243 = vmul.f32 %v8204, %v8236
      %v8244 = vmul.f32 %v8205, %v8236
      %v8245 = vmul.f32 %v8206, %v8236
      %v8246 = vmul.f32 %v8207, %v8236
      %v8247 = vmul.f32 %v8208, %v8236
      %v8248 = vmul.f32 %v8209, %v8236
      %v8249 = vmul.f32 %v8210, %v8236
      %v8250 = vmul.f32 %v8211, %v8236
      %v8251 = vmul.f32 %v8212, %v8236
      %v8252 = vmul.f32 %v8213, %v8236
      %v8253 = vmul.f32 %v8214, %v8236
      %v8254 = vmul.f32 %v8215, %v8236
      %v8255 = vmul.f32 %v8216, %v8236
      %v8256 = vmul.f32 %v8217, %v8236
      %v8257 = vmul.f32 %v8218, %v8236
      %v8258 = vmul.f32 %v8219, %v8236
      %v8259 = vmul.f32 %v8220, %v8236
      %v8260 = vmul.f32 %v8221, %v8236
      %v8261 = vmul.f32 %v8222, %v8236
      %v8262 = vmul.f32 %v8223, %v8236
      %v8263 = vmul.f32 %v8224, %v8236
      %v8264 = vmul.f32 %v8225, %v8236
      %v8265 = vmul.f32 %v8226, %v8236
      %v8266 = vmul.f32 %v8227, %v8236
      %v8267 = vmul.f32 %v8228, %v8236
      %v8268 = vmul.f32 %v8229, %v8236
      %v8269 = vmul.f32 %v8230, %v8236
      %v8270 = vld [vmem:[%s9] sm:$0x1]
      %v8272 = vlaneseq
      %v8273 = vshrl.u32 %v8272, 7
      %v8274 = vsub.s32 0, %v8273
      %v8275 = vrot.slane %v8270, %v8274
      %v8277 = vadd.f32 %v8238, %v8275
      %v8278 = vadd.f32 %v8239, %v8275
      %v8279 = vadd.f32 %v8240, %v8275
      %v8280 = vadd.f32 %v8241, %v8275
      %v8281 = vadd.f32 %v8242, %v8275
      %v8282 = vadd.f32 %v8243, %v8275
      %v8283 = vadd.f32 %v8244, %v8275
      %v8284 = vadd.f32 %v8245, %v8275
      %v8285 = vadd.f32 %v8246, %v8275
      %v8286 = vadd.f32 %v8247, %v8275
      %v8287 = vadd.f32 %v8248, %v8275
      %v8288 = vadd.f32 %v8249, %v8275
      %v8289 = vadd.f32 %v8250, %v8275
      %v8290 = vadd.f32 %v8251, %v8275
      %v8291 = vadd.f32 %v8252, %v8275
      %v8292 = vadd.f32 %v8253, %v8275
      %v8293 = vadd.f32 %v8254, %v8275
      %v8294 = vadd.f32 %v8255, %v8275
      %v8295 = vadd.f32 %v8256, %v8275
      %v8296 = vadd.f32 %v8257, %v8275
      %v8297 = vadd.f32 %v8258, %v8275
      %v8298 = vadd.f32 %v8259, %v8275
      %v8299 = vadd.f32 %v8260, %v8275
      %v8300 = vadd.f32 %v8261, %v8275
      %v8301 = vadd.f32 %v8262, %v8275
      %v8302 = vadd.f32 %v8263, %v8275
      %v8303 = vadd.f32 %v8264, %v8275
      %v8304 = vadd.f32 %v8265, %v8275
      %v8305 = vadd.f32 %v8266, %v8275
      %v8306 = vadd.f32 %v8267, %v8275
      %v8307 = vadd.f32 %v8268, %v8275
      %v8308 = vadd.f32 %v8269, %v8275
      %v8309 = vpack.c.bf16 %v8278, %v8277
      %v8310 = vpack.c.bf16 %v8280, %v8279
      %v8311 = vpack.c.bf16 %v8282, %v8281
      %v8312 = vpack.c.bf16 %v8284, %v8283
      %v8313 = vpack.c.bf16 %v8286, %v8285
      %v8314 = vpack.c.bf16 %v8288, %v8287
      %v8315 = vpack.c.bf16 %v8290, %v8289
      %v8316 = vpack.c.bf16 %v8292, %v8291
      %v8317 = vpack.c.bf16 %v8294, %v8293
      %v8318 = vpack.c.bf16 %v8296, %v8295
      %v8319 = vpack.c.bf16 %v8298, %v8297
      %v8320 = vpack.c.bf16 %v8300, %v8299
      %v8321 = vpack.c.bf16 %v8302, %v8301
      %v8322 = vpack.c.bf16 %v8304, %v8303
      %v8323 = vpack.c.bf16 %v8306, %v8305
      %v8324 = vpack.c.bf16 %v8308, %v8307
      %v8325 = vld [vmem:[%s10] sm:$0xff]
      %v8326 = vld [vmem:[%s10 + $0x8] sm:$0xff]
      %v8327 = vld [vmem:[%s10 + $0x10] sm:$0xff]
      %v8328 = vld [vmem:[%s10 + $0x18] sm:$0xff]
      %v8329 = vld [vmem:[%s10 + $0x20] sm:$0xff]
      %v8330 = vld [vmem:[%s10 + $0x28] sm:$0xff]
      %v8331 = vld [vmem:[%s10 + $0x30] sm:$0xff]
      %v8332 = vld [vmem:[%s10 + $0x38] sm:$0xff]
      %v8333 = vld [vmem:[%s10 + $0x40] sm:$0xff]
      %v8334 = vld [vmem:[%s10 + $0x48] sm:$0xff]
      %v8335 = vld [vmem:[%s10 + $0x50] sm:$0xff]
      %v8336 = vld [vmem:[%s10 + $0x58] sm:$0xff]
      %v8337 = vld [vmem:[%s10 + $0x60] sm:$0xff]
      %v8338 = vld [vmem:[%s10 + $0x68] sm:$0xff]
      %v8339 = vld [vmem:[%s10 + $0x70] sm:$0xff]
      %v8340 = vld [vmem:[%s10 + $0x78] sm:$0xff]
      %v8341 = vld [vmem:[%s10 + $0x80] sm:$0xff]
      %v8342 = vld [vmem:[%s10 + $0x88] sm:$0xff]
      %v8343 = vld [vmem:[%s10 + $0x90] sm:$0xff]
      %v8344 = vld [vmem:[%s10 + $0x98] sm:$0xff]
      %v8345 = vld [vmem:[%s10 + $0xa0] sm:$0xff]
      %v8346 = vld [vmem:[%s10 + $0xa8] sm:$0xff]
      %v8347 = vld [vmem:[%s10 + $0xb0] sm:$0xff]
      %v8348 = vld [vmem:[%s10 + $0xb8] sm:$0xff]
      %v8349 = vld [vmem:[%s10 + $0xc0] sm:$0xff]
      %v8350 = vld [vmem:[%s10 + $0xc8] sm:$0xff]
      %v8351 = vld [vmem:[%s10 + $0xd0] sm:$0xff]
      %v8352 = vld [vmem:[%s10 + $0xd8] sm:$0xff]
      %v8353 = vld [vmem:[%s10 + $0xe0] sm:$0xff]
      %v8354 = vld [vmem:[%s10 + $0xe8] sm:$0xff]
      %v8355 = vld [vmem:[%s10 + $0xf0] sm:$0xff]
      %v8356 = vld [vmem:[%s10 + $0xf8] sm:$0xff]
      %v8357 = vld [vmem:[%s11] sm:$0xf]
      %v8359 = vlaneseq
      %v8360 = vshrl.u32 %v8359, 7
      %v8361 = vsub.s32 0, %v8360
      %v8362 = vrot.slane %v8357, %v8361
      %v8363 = vlaneseq
      %v8364 = vshrl.u32 %v8363, 7
      %v8365 = vsub.s32 1, %v8364
      %v8366 = vrot.slane %v8357, %v8365
      %v8367 = vlaneseq
      %v8368 = vshrl.u32 %v8367, 7
      %v8369 = vsub.s32 2, %v8368
      %v8370 = vrot.slane %v8357, %v8369
      %v8371 = vlaneseq
      %v8372 = vshrl.u32 %v8371, 7
      %v8373 = vsub.s32 3, %v8372
      %v8374 = vrot.slane %v8357, %v8373
      %v8411 = vunpack.c.l.b16 %v8325
      %v8412 = vunpack.c.h.b16 %v8325
      %v8413 = vunpack.c.l.b16 %v8326
      %v8414 = vunpack.c.h.b16 %v8326
      %v8415 = vunpack.c.l.b16 %v8327
      %v8416 = vunpack.c.h.b16 %v8327
      %v8417 = vunpack.c.l.b16 %v8328
      %v8418 = vunpack.c.h.b16 %v8328
      %v8419 = vunpack.c.l.b16 %v8329
      %v8420 = vunpack.c.h.b16 %v8329
      %v8421 = vunpack.c.l.b16 %v8330
      %v8422 = vunpack.c.h.b16 %v8330
      %v8423 = vunpack.c.l.b16 %v8331
      %v8424 = vunpack.c.h.b16 %v8331
      %v8425 = vunpack.c.l.b16 %v8332
      %v8426 = vunpack.c.h.b16 %v8332
      %v8427 = vunpack.c.l.b16 %v8333
      %v8428 = vunpack.c.h.b16 %v8333
      %v8429 = vunpack.c.l.b16 %v8334
      %v8430 = vunpack.c.h.b16 %v8334
      %v8431 = vunpack.c.l.b16 %v8335
      %v8432 = vunpack.c.h.b16 %v8335
      %v8433 = vunpack.c.l.b16 %v8336
      %v8434 = vunpack.c.h.b16 %v8336
      %v8435 = vunpack.c.l.b16 %v8337
      %v8436 = vunpack.c.h.b16 %v8337
      %v8437 = vunpack.c.l.b16 %v8338
      %v8438 = vunpack.c.h.b16 %v8338
      %v8439 = vunpack.c.l.b16 %v8339
      %v8440 = vunpack.c.h.b16 %v8339
      %v8441 = vunpack.c.l.b16 %v8340
      %v8442 = vunpack.c.h.b16 %v8340
      %v8443 = vunpack.c.l.b16 %v8341
      %v8444 = vunpack.c.h.b16 %v8341
      %v8445 = vunpack.c.l.b16 %v8342
      %v8446 = vunpack.c.h.b16 %v8342
      %v8447 = vunpack.c.l.b16 %v8343
      %v8448 = vunpack.c.h.b16 %v8343
      %v8449 = vunpack.c.l.b16 %v8344
      %v8450 = vunpack.c.h.b16 %v8344
      %v8451 = vunpack.c.l.b16 %v8345
      %v8452 = vunpack.c.h.b16 %v8345
      %v8453 = vunpack.c.l.b16 %v8346
      %v8454 = vunpack.c.h.b16 %v8346
      %v8455 = vunpack.c.l.b16 %v8347
      %v8456 = vunpack.c.h.b16 %v8347
      %v8457 = vunpack.c.l.b16 %v8348
      %v8458 = vunpack.c.h.b16 %v8348
      %v8459 = vunpack.c.l.b16 %v8349
      %v8460 = vunpack.c.h.b16 %v8349
      %v8461 = vunpack.c.l.b16 %v8350
      %v8462 = vunpack.c.h.b16 %v8350
      %v8463 = vunpack.c.l.b16 %v8351
      %v8464 = vunpack.c.h.b16 %v8351
      %v8465 = vunpack.c.l.b16 %v8352
      %v8466 = vunpack.c.h.b16 %v8352
      %v8467 = vunpack.c.l.b16 %v8353
      %v8468 = vunpack.c.h.b16 %v8353
      %v8469 = vunpack.c.l.b16 %v8354
      %v8470 = vunpack.c.h.b16 %v8354
      %v8471 = vunpack.c.l.b16 %v8355
      %v8472 = vunpack.c.h.b16 %v8355
      %v8473 = vunpack.c.l.b16 %v8356
      %v8474 = vunpack.c.h.b16 %v8356
      %v8475 = vpack.c.b16 %v8415, %v8411
      %v8476 = vpack.c.b16 %v8416, %v8412
      %v8477 = vpack.c.b16 %v8417, %v8413
      %v8478 = vpack.c.b16 %v8418, %v8414
      %v8479 = vpack.c.b16 %v8423, %v8419
      %v8480 = vpack.c.b16 %v8424, %v8420
      %v8481 = vpack.c.b16 %v8425, %v8421
      %v8482 = vpack.c.b16 %v8426, %v8422
      %v8483 = vpack.c.b16 %v8431, %v8427
      %v8484 = vpack.c.b16 %v8432, %v8428
      %v8485 = vpack.c.b16 %v8433, %v8429
      %v8486 = vpack.c.b16 %v8434, %v8430
      %v8487 = vpack.c.b16 %v8439, %v8435
      %v8488 = vpack.c.b16 %v8440, %v8436
      %v8489 = vpack.c.b16 %v8441, %v8437
      %v8490 = vpack.c.b16 %v8442, %v8438
      %v8491 = vpack.c.b16 %v8447, %v8443
      %v8492 = vpack.c.b16 %v8448, %v8444
      %v8493 = vpack.c.b16 %v8449, %v8445
      %v8494 = vpack.c.b16 %v8450, %v8446
      %v8495 = vpack.c.b16 %v8455, %v8451
      %v8496 = vpack.c.b16 %v8456, %v8452
      %v8497 = vpack.c.b16 %v8457, %v8453
      %v8498 = vpack.c.b16 %v8458, %v8454
      %v8499 = vpack.c.b16 %v8463, %v8459
      %v8500 = vpack.c.b16 %v8464, %v8460
      %v8501 = vpack.c.b16 %v8465, %v8461
      %v8502 = vpack.c.b16 %v8466, %v8462
      %v8503 = vpack.c.b16 %v8471, %v8467
      %v8504 = vpack.c.b16 %v8472, %v8468
      %v8505 = vpack.c.b16 %v8473, %v8469
      %v8506 = vpack.c.b16 %v8474, %v8470
      %8539 = vmatprep.subr.bf16.mxu0 %v8504
      %8540 = vmatpush1.bf16.msra.mxu0 %v8503
      %8541 = vmatprep.subr.bf16.mxu0 %v8500
      %8542 = vmatpush1.bf16.msra.mxu0 %v8499
      %8543 = vmatprep.subr.bf16.mxu0 %v8496
      %8544 = vmatpush1.bf16.msra.mxu0 %v8495
      %8545 = vmatprep.subr.bf16.mxu0 %v8492
      %8546 = vmatpush1.bf16.msra.mxu0 %v8491
      %8547 = vmatprep.subr.bf16.mxu0 %v8488
      %8548 = vmatpush1.bf16.msra.mxu0 %v8487
      %8549 = vmatprep.subr.bf16.mxu0 %v8484
      %8550 = vmatpush1.bf16.msra.mxu0 %v8483
      %8551 = vmatprep.subr.bf16.mxu0 %v8480
      %8552 = vmatpush1.bf16.msra.mxu0 %v8479
      %8553 = vmatprep.subr.bf16.mxu0 %v8476
      %8554 = vmatpush1.bf16.msra.mxu0 %v8475
      %8555 = vmatprep.subr.bf16.mxu0 0
      %8556 = vmatpush2.bf16.msra.mxu0 0
      %8557 = vmatprep.subr.bf16.mxu0 0
      %8558 = vmatpush2.bf16.msra.mxu0 0
      %8559 = vmatprep.subr.bf16.mxu0 0
      %8560 = vmatpush2.bf16.msra.mxu0 0
      %8561 = vmatprep.subr.bf16.mxu0 0
      %8562 = vmatpush2.bf16.msra.mxu0 0
      %8563 = vmatprep.subr.bf16.mxu0 0
      %8564 = vmatpush2.bf16.msra.mxu0 0
      %8565 = vmatprep.subr.bf16.mxu0 0
      %8566 = vmatpush2.bf16.msra.mxu0 0
      %8567 = vmatprep.subr.bf16.mxu0 0
      %8568 = vmatpush2.bf16.msra.mxu0 0
      %8569 = vmatprep.subr.bf16.mxu0 0
      %8570 = vmatpush2.bf16.msra.mxu0 0
      %8571 = vmatprep.mubr.bf16.mxu0 0
      %8572 = vmatmul.mubr.bf16.gmra.mxu0 %v8309
      %v8573 = vpop.f32.mrf.mxu0
      %v8574 = vadd.f32 %v8362, %v8573
      %v8575 = vpop.f32.mrf.mxu0
      %v8576 = vadd.f32 %v8366, %v8575
      %v8577 = vpop.f32.mrf.mxu0
      %v8578 = vadd.f32 %v8362, %v8577
      %v8579 = vpop.f32.mrf.mxu0
      %v8580 = vadd.f32 %v8366, %v8579
      %8581 = vmatprep.mubr.bf16.mxu0 0
      %8582 = vmatmul.mubr.bf16.gmra.mxu0 %v8310
      %v8583 = vpop.f32.mrf.mxu0
      %v8584 = vadd.f32 %v8362, %v8583
      %v8585 = vpop.f32.mrf.mxu0
      %v8586 = vadd.f32 %v8366, %v8585
      %v8587 = vpop.f32.mrf.mxu0
      %v8588 = vadd.f32 %v8362, %v8587
      %v8589 = vpop.f32.mrf.mxu0
      %v8590 = vadd.f32 %v8366, %v8589
      %8591 = vmatprep.mubr.bf16.mxu0 0
      %8592 = vmatmul.mubr.bf16.gmra.mxu0 %v8311
      %v8593 = vpop.f32.mrf.mxu0
      %v8594 = vadd.f32 %v8362, %v8593
      %v8595 = vpop.f32.mrf.mxu0
      %v8596 = vadd.f32 %v8366, %v8595
      %v8597 = vpop.f32.mrf.mxu0
      %v8598 = vadd.f32 %v8362, %v8597
      %v8599 = vpop.f32.mrf.mxu0
      %v8600 = vadd.f32 %v8366, %v8599
      %8601 = vmatprep.mubr.bf16.mxu0 0
      %8602 = vmatmul.mubr.bf16.gmra.mxu0 %v8312
      %v8603 = vpop.f32.mrf.mxu0
      %v8604 = vadd.f32 %v8362, %v8603
      %v8605 = vpop.f32.mrf.mxu0
      %v8606 = vadd.f32 %v8366, %v8605
      %v8607 = vpop.f32.mrf.mxu0
      %v8608 = vadd.f32 %v8362, %v8607
      %v8609 = vpop.f32.mrf.mxu0
      %v8610 = vadd.f32 %v8366, %v8609
      %8611 = vmatprep.mubr.bf16.mxu0 0
      %8612 = vmatmul.mubr.bf16.gmra.mxu0 %v8313
      %v8613 = vpop.f32.mrf.mxu0
      %v8614 = vadd.f32 %v8362, %v8613
      %v8615 = vpop.f32.mrf.mxu0
      %v8616 = vadd.f32 %v8366, %v8615
      %v8617 = vpop.f32.mrf.mxu0
      %v8618 = vadd.f32 %v8362, %v8617
      %v8619 = vpop.f32.mrf.mxu0
      %v8620 = vadd.f32 %v8366, %v8619
      %8621 = vmatprep.mubr.bf16.mxu0 0
      %8622 = vmatmul.mubr.bf16.gmra.mxu0 %v8314
      %v8623 = vpop.f32.mrf.mxu0
      %v8624 = vadd.f32 %v8362, %v8623
      %v8625 = vpop.f32.mrf.mxu0
      %v8626 = vadd.f32 %v8366, %v8625
      %v8627 = vpop.f32.mrf.mxu0
      %v8628 = vadd.f32 %v8362, %v8627
      %v8629 = vpop.f32.mrf.mxu0
      %v8630 = vadd.f32 %v8366, %v8629
      %8631 = vmatprep.mubr.bf16.mxu0 0
      %8632 = vmatmul.mubr.bf16.gmra.mxu0 %v8315
      %v8633 = vpop.f32.mrf.mxu0
      %v8634 = vadd.f32 %v8362, %v8633
      %v8635 = vpop.f32.mrf.mxu0
      %v8636 = vadd.f32 %v8366, %v8635
      %v8637 = vpop.f32.mrf.mxu0
      %v8638 = vadd.f32 %v8362, %v8637
      %v8639 = vpop.f32.mrf.mxu0
      %v8640 = vadd.f32 %v8366, %v8639
      %8641 = vmatprep.mubr.bf16.mxu0 0
      %8642 = vmatmul.mubr.bf16.gmra.mxu0 %v8316
      %v8643 = vpop.f32.mrf.mxu0
      %v8644 = vadd.f32 %v8362, %v8643
      %v8645 = vpop.f32.mrf.mxu0
      %v8646 = vadd.f32 %v8366, %v8645
      %v8647 = vpop.f32.mrf.mxu0
      %v8648 = vadd.f32 %v8362, %v8647
      %v8649 = vpop.f32.mrf.mxu0
      %v8650 = vadd.f32 %v8366, %v8649
      %8651 = vmatprep.mubr.bf16.mxu0 0
      %8652 = vmatmul.mubr.bf16.gmra.mxu0 %v8317
      %v8653 = vpop.f32.mrf.mxu0
      %v8654 = vadd.f32 %v8362, %v8653
      %v8655 = vpop.f32.mrf.mxu0
      %v8656 = vadd.f32 %v8366, %v8655
      %v8657 = vpop.f32.mrf.mxu0
      %v8658 = vadd.f32 %v8362, %v8657
      %v8659 = vpop.f32.mrf.mxu0
      %v8660 = vadd.f32 %v8366, %v8659
      %8661 = vmatprep.mubr.bf16.mxu0 0
      %8662 = vmatmul.mubr.bf16.gmra.mxu0 %v8318
      %v8663 = vpop.f32.mrf.mxu0
      %v8664 = vadd.f32 %v8362, %v8663
      %v8665 = vpop.f32.mrf.mxu0
      %v8666 = vadd.f32 %v8366, %v8665
      %v8667 = vpop.f32.mrf.mxu0
      %v8668 = vadd.f32 %v8362, %v8667
      %v8669 = vpop.f32.mrf.mxu0
      %v8670 = vadd.f32 %v8366, %v8669
      %8671 = vmatprep.mubr.bf16.mxu0 0
      %8672 = vmatmul.mubr.bf16.gmra.mxu0 %v8319
      %v8673 = vpop.f32.mrf.mxu0
      %v8674 = vadd.f32 %v8362, %v8673
      %v8675 = vpop.f32.mrf.mxu0
      %v8676 = vadd.f32 %v8366, %v8675
      %v8677 = vpop.f32.mrf.mxu0
      %v8678 = vadd.f32 %v8362, %v8677
      %v8679 = vpop.f32.mrf.mxu0
      %v8680 = vadd.f32 %v8366, %v8679
      %8681 = vmatprep.mubr.bf16.mxu0 0
      %8682 = vmatmul.mubr.bf16.gmra.mxu0 %v8320
      %v8683 = vpop.f32.mrf.mxu0
      %v8684 = vadd.f32 %v8362, %v8683
      %v8685 = vpop.f32.mrf.mxu0
      %v8686 = vadd.f32 %v8366, %v8685
      %v8687 = vpop.f32.mrf.mxu0
      %v8688 = vadd.f32 %v8362, %v8687
      %v8689 = vpop.f32.mrf.mxu0
      %v8690 = vadd.f32 %v8366, %v8689
      %8691 = vmatprep.mubr.bf16.mxu0 0
      %8692 = vmatmul.mubr.bf16.gmra.mxu0 %v8321
      %v8693 = vpop.f32.mrf.mxu0
      %v8694 = vadd.f32 %v8362, %v8693
      %v8695 = vpop.f32.mrf.mxu0
      %v8696 = vadd.f32 %v8366, %v8695
      %v8697 = vpop.f32.mrf.mxu0
      %v8698 = vadd.f32 %v8362, %v8697
      %v8699 = vpop.f32.mrf.mxu0
      %v8700 = vadd.f32 %v8366, %v8699
      %8701 = vmatprep.mubr.bf16.mxu0 0
      %8702 = vmatmul.mubr.bf16.gmra.mxu0 %v8322
      %v8703 = vpop.f32.mrf.mxu0
      %v8704 = vadd.f32 %v8362, %v8703
      %v8705 = vpop.f32.mrf.mxu0
      %v8706 = vadd.f32 %v8366, %v8705
      %v8707 = vpop.f32.mrf.mxu0
      %v8708 = vadd.f32 %v8362, %v8707
      %v8709 = vpop.f32.mrf.mxu0
      %v8710 = vadd.f32 %v8366, %v8709
      %8711 = vmatprep.mubr.bf16.mxu0 0
      %8712 = vmatmul.mubr.bf16.gmra.mxu0 %v8323
      %v8713 = vpop.f32.mrf.mxu0
      %v8714 = vadd.f32 %v8362, %v8713
      %v8715 = vpop.f32.mrf.mxu0
      %v8716 = vadd.f32 %v8366, %v8715
      %v8717 = vpop.f32.mrf.mxu0
      %v8718 = vadd.f32 %v8362, %v8717
      %v8719 = vpop.f32.mrf.mxu0
      %v8720 = vadd.f32 %v8366, %v8719
      %8721 = vmatprep.mubr.bf16.mxu0 0
      %8722 = vmatmul.mubr.bf16.gmra.mxu0 %v8324
      %v8723 = vpop.f32.mrf.mxu0
      %v8724 = vadd.f32 %v8362, %v8723
      %v8725 = vpop.f32.mrf.mxu0
      %v8726 = vadd.f32 %v8366, %v8725
      %v8727 = vpop.f32.mrf.mxu0
      %v8728 = vadd.f32 %v8362, %v8727
      %v8729 = vpop.f32.mrf.mxu0
      %v8730 = vadd.f32 %v8366, %v8729
      %8731 = vdwg.mxu0
      %8732 = vmatprep.subr.bf16.mxu0 %v8506
      %8733 = vmatpush1.bf16.msra.mxu0 %v8505
      %8734 = vmatprep.subr.bf16.mxu0 %v8502
      %8735 = vmatpush1.bf16.msra.mxu0 %v8501
      %8736 = vmatprep.subr.bf16.mxu0 %v8498
      %8737 = vmatpush1.bf16.msra.mxu0 %v8497
      %8738 = vmatprep.subr.bf16.mxu0 %v8494
      %8739 = vmatpush1.bf16.msra.mxu0 %v8493
      %8740 = vmatprep.subr.bf16.mxu0 %v8490
      %8741 = vmatpush1.bf16.msra.mxu0 %v8489
      %8742 = vmatprep.subr.bf16.mxu0 %v8486
      %8743 = vmatpush1.bf16.msra.mxu0 %v8485
      %8744 = vmatprep.subr.bf16.mxu0 %v8482
      %8745 = vmatpush1.bf16.msra.mxu0 %v8481
      %8746 = vmatprep.subr.bf16.mxu0 %v8478
      %8747 = vmatpush1.bf16.msra.mxu0 %v8477
      %8748 = vmatprep.subr.bf16.mxu0 0
      %8749 = vmatpush2.bf16.msra.mxu0 0
      %8750 = vmatprep.subr.bf16.mxu0 0
      %8751 = vmatpush2.bf16.msra.mxu0 0
      %8752 = vmatprep.subr.bf16.mxu0 0
      %8753 = vmatpush2.bf16.msra.mxu0 0
      %8754 = vmatprep.subr.bf16.mxu0 0
      %8755 = vmatpush2.bf16.msra.mxu0 0
      %8756 = vmatprep.subr.bf16.mxu0 0
      %8757 = vmatpush2.bf16.msra.mxu0 0
      %8758 = vmatprep.subr.bf16.mxu0 0
      %8759 = vmatpush2.bf16.msra.mxu0 0
      %8760 = vmatprep.subr.bf16.mxu0 0
      %8761 = vmatpush2.bf16.msra.mxu0 0
      %8762 = vmatprep.subr.bf16.mxu0 0
      %8763 = vmatpush2.bf16.msra.mxu0 0
      %8764 = vmatprep.mubr.bf16.mxu0 0
      %8765 = vmatmul.mubr.bf16.gmra.mxu0 %v8309
      %v8766 = vpop.f32.mrf.mxu0
      %v8767 = vadd.f32 %v8370, %v8766
      %v8768 = vpop.f32.mrf.mxu0
      %v8769 = vadd.f32 %v8374, %v8768
      %v8770 = vpop.f32.mrf.mxu0
      %v8771 = vadd.f32 %v8370, %v8770
      %v8772 = vpop.f32.mrf.mxu0
      %v8773 = vadd.f32 %v8374, %v8772
      %8774 = vmatprep.mubr.bf16.mxu0 0
      %8775 = vmatmul.mubr.bf16.gmra.mxu0 %v8310
      %v8776 = vpop.f32.mrf.mxu0
      %v8777 = vadd.f32 %v8370, %v8776
      %v8778 = vpop.f32.mrf.mxu0
      %v8779 = vadd.f32 %v8374, %v8778
      %v8780 = vpop.f32.mrf.mxu0
      %v8781 = vadd.f32 %v8370, %v8780
      %v8782 = vpop.f32.mrf.mxu0
      %v8783 = vadd.f32 %v8374, %v8782
      %8784 = vmatprep.mubr.bf16.mxu0 0
      %8785 = vmatmul.mubr.bf16.gmra.mxu0 %v8311
      %v8786 = vpop.f32.mrf.mxu0
      %v8787 = vadd.f32 %v8370, %v8786
      %v8788 = vpop.f32.mrf.mxu0
      %v8789 = vadd.f32 %v8374, %v8788
      %v8790 = vpop.f32.mrf.mxu0
      %v8791 = vadd.f32 %v8370, %v8790
      %v8792 = vpop.f32.mrf.mxu0
      %v8793 = vadd.f32 %v8374, %v8792
      %8794 = vmatprep.mubr.bf16.mxu0 0
      %8795 = vmatmul.mubr.bf16.gmra.mxu0 %v8312
      %v8796 = vpop.f32.mrf.mxu0
      %v8797 = vadd.f32 %v8370, %v8796
      %v8798 = vpop.f32.mrf.mxu0
      %v8799 = vadd.f32 %v8374, %v8798
      %v8800 = vpop.f32.mrf.mxu0
      %v8801 = vadd.f32 %v8370, %v8800
      %v8802 = vpop.f32.mrf.mxu0
      %v8803 = vadd.f32 %v8374, %v8802
      %8804 = vmatprep.mubr.bf16.mxu0 0
      %8805 = vmatmul.mubr.bf16.gmra.mxu0 %v8313
      %v8806 = vpop.f32.mrf.mxu0
      %v8807 = vadd.f32 %v8370, %v8806
      %v8808 = vpop.f32.mrf.mxu0
      %v8809 = vadd.f32 %v8374, %v8808
      %v8810 = vpop.f32.mrf.mxu0
      %v8811 = vadd.f32 %v8370, %v8810
      %v8812 = vpop.f32.mrf.mxu0
      %v8813 = vadd.f32 %v8374, %v8812
      %8814 = vmatprep.mubr.bf16.mxu0 0
      %8815 = vmatmul.mubr.bf16.gmra.mxu0 %v8314
      %v8816 = vpop.f32.mrf.mxu0
      %v8817 = vadd.f32 %v8370, %v8816
      %v8818 = vpop.f32.mrf.mxu0
      %v8819 = vadd.f32 %v8374, %v8818
      %v8820 = vpop.f32.mrf.mxu0
      %v8821 = vadd.f32 %v8370, %v8820
      %v8822 = vpop.f32.mrf.mxu0
      %v8823 = vadd.f32 %v8374, %v8822
      %8824 = vmatprep.mubr.bf16.mxu0 0
      %8825 = vmatmul.mubr.bf16.gmra.mxu0 %v8315
      %v8826 = vpop.f32.mrf.mxu0
      %v8827 = vadd.f32 %v8370, %v8826
      %v8828 = vpop.f32.mrf.mxu0
      %v8829 = vadd.f32 %v8374, %v8828
      %v8830 = vpop.f32.mrf.mxu0
      %v8831 = vadd.f32 %v8370, %v8830
      %v8832 = vpop.f32.mrf.mxu0
      %v8833 = vadd.f32 %v8374, %v8832
      %8834 = vmatprep.mubr.bf16.mxu0 0
      %8835 = vmatmul.mubr.bf16.gmra.mxu0 %v8316
      %v8836 = vpop.f32.mrf.mxu0
      %v8837 = vadd.f32 %v8370, %v8836
      %v8838 = vpop.f32.mrf.mxu0
      %v8839 = vadd.f32 %v8374, %v8838
      %v8840 = vpop.f32.mrf.mxu0
      %v8841 = vadd.f32 %v8370, %v8840
      %v8842 = vpop.f32.mrf.mxu0
      %v8843 = vadd.f32 %v8374, %v8842
      %8844 = vmatprep.mubr.bf16.mxu0 0
      %8845 = vmatmul.mubr.bf16.gmra.mxu0 %v8317
      %v8846 = vpop.f32.mrf.mxu0
      %v8847 = vadd.f32 %v8370, %v8846
      %v8848 = vpop.f32.mrf.mxu0
      %v8849 = vadd.f32 %v8374, %v8848
      %v8850 = vpop.f32.mrf.mxu0
      %v8851 = vadd.f32 %v8370, %v8850
      %v8852 = vpop.f32.mrf.mxu0
      %v8853 = vadd.f32 %v8374, %v8852
      %8854 = vmatprep.mubr.bf16.mxu0 0
      %8855 = vmatmul.mubr.bf16.gmra.mxu0 %v8318
      %v8856 = vpop.f32.mrf.mxu0
      %v8857 = vadd.f32 %v8370, %v8856
      %v8858 = vpop.f32.mrf.mxu0
      %v8859 = vadd.f32 %v8374, %v8858
      %v8860 = vpop.f32.mrf.mxu0
      %v8861 = vadd.f32 %v8370, %v8860
      %v8862 = vpop.f32.mrf.mxu0
      %v8863 = vadd.f32 %v8374, %v8862
      %8864 = vmatprep.mubr.bf16.mxu0 0
      %8865 = vmatmul.mubr.bf16.gmra.mxu0 %v8319
      %v8866 = vpop.f32.mrf.mxu0
      %v8867 = vadd.f32 %v8370, %v8866
      %v8868 = vpop.f32.mrf.mxu0
      %v8869 = vadd.f32 %v8374, %v8868
      %v8870 = vpop.f32.mrf.mxu0
      %v8871 = vadd.f32 %v8370, %v8870
      %v8872 = vpop.f32.mrf.mxu0
      %v8873 = vadd.f32 %v8374, %v8872
      %8874 = vmatprep.mubr.bf16.mxu0 0
      %8875 = vmatmul.mubr.bf16.gmra.mxu0 %v8320
      %v8876 = vpop.f32.mrf.mxu0
      %v8877 = vadd.f32 %v8370, %v8876
      %v8878 = vpop.f32.mrf.mxu0
      %v8879 = vadd.f32 %v8374, %v8878
      %v8880 = vpop.f32.mrf.mxu0
      %v8881 = vadd.f32 %v8370, %v8880
      %v8882 = vpop.f32.mrf.mxu0
      %v8883 = vadd.f32 %v8374, %v8882
      %8884 = vmatprep.mubr.bf16.mxu0 0
      %8885 = vmatmul.mubr.bf16.gmra.mxu0 %v8321
      %v8886 = vpop.f32.mrf.mxu0
      %v8887 = vadd.f32 %v8370, %v8886
      %v8888 = vpop.f32.mrf.mxu0
      %v8889 = vadd.f32 %v8374, %v8888
      %v8890 = vpop.f32.mrf.mxu0
      %v8891 = vadd.f32 %v8370, %v8890
      %v8892 = vpop.f32.mrf.mxu0
      %v8893 = vadd.f32 %v8374, %v8892
      %8894 = vmatprep.mubr.bf16.mxu0 0
      %8895 = vmatmul.mubr.bf16.gmra.mxu0 %v8322
      %v8896 = vpop.f32.mrf.mxu0
      %v8897 = vadd.f32 %v8370, %v8896
      %v8898 = vpop.f32.mrf.mxu0
      %v8899 = vadd.f32 %v8374, %v8898
      %v8900 = vpop.f32.mrf.mxu0
      %v8901 = vadd.f32 %v8370, %v8900
      %v8902 = vpop.f32.mrf.mxu0
      %v8903 = vadd.f32 %v8374, %v8902
      %8904 = vmatprep.mubr.bf16.mxu0 0
      %8905 = vmatmul.mubr.bf16.gmra.mxu0 %v8323
      %v8906 = vpop.f32.mrf.mxu0
      %v8907 = vadd.f32 %v8370, %v8906
      %v8908 = vpop.f32.mrf.mxu0
      %v8909 = vadd.f32 %v8374, %v8908
      %v8910 = vpop.f32.mrf.mxu0
      %v8911 = vadd.f32 %v8370, %v8910
      %v8912 = vpop.f32.mrf.mxu0
      %v8913 = vadd.f32 %v8374, %v8912
      %8914 = vmatprep.mubr.bf16.mxu0 0
      %8915 = vmatmul.mubr.bf16.gmra.mxu0 %v8324
      %v8916 = vpop.f32.mrf.mxu0
      %v8917 = vadd.f32 %v8370, %v8916
      %v8918 = vpop.f32.mrf.mxu0
      %v8919 = vadd.f32 %v8374, %v8918
      %v8920 = vpop.f32.mrf.mxu0
      %v8921 = vadd.f32 %v8370, %v8920
      %v8922 = vpop.f32.mrf.mxu0
      %v8923 = vadd.f32 %v8374, %v8922
      %8924 = vdwg.mxu0
      %v8925 = vmul.f32 %v8574, 0.5
      %v8926 = vmul.f32 %v8576, 0.5
      %v8927 = vmul.f32 %v8767, 0.5
      %v8928 = vmul.f32 %v8769, 0.5
      %v8929 = vmul.f32 %v8578, 0.5
      %v8930 = vmul.f32 %v8580, 0.5
      %v8931 = vmul.f32 %v8771, 0.5
      %v8932 = vmul.f32 %v8773, 0.5
      %v8933 = vmul.f32 %v8584, 0.5
      %v8934 = vmul.f32 %v8586, 0.5
      %v8935 = vmul.f32 %v8777, 0.5
      %v8936 = vmul.f32 %v8779, 0.5
      %v8937 = vmul.f32 %v8588, 0.5
      %v8938 = vmul.f32 %v8590, 0.5
      %v8939 = vmul.f32 %v8781, 0.5
      %v8940 = vmul.f32 %v8783, 0.5
      %v8941 = vmul.f32 %v8594, 0.5
      %v8942 = vmul.f32 %v8596, 0.5
      %v8943 = vmul.f32 %v8787, 0.5
      %v8944 = vmul.f32 %v8789, 0.5
      %v8945 = vmul.f32 %v8598, 0.5
      %v8946 = vmul.f32 %v8600, 0.5
      %v8947 = vmul.f32 %v8791, 0.5
      %v8948 = vmul.f32 %v8793, 0.5
      %v8949 = vmul.f32 %v8604, 0.5
      %v8950 = vmul.f32 %v8606, 0.5
      %v8951 = vmul.f32 %v8797, 0.5
      %v8952 = vmul.f32 %v8799, 0.5
      %v8953 = vmul.f32 %v8608, 0.5
      %v8954 = vmul.f32 %v8610, 0.5
      %v8955 = vmul.f32 %v8801, 0.5
      %v8956 = vmul.f32 %v8803, 0.5
      %v8957 = vmul.f32 %v8614, 0.5
      %v8958 = vmul.f32 %v8616, 0.5
      %v8959 = vmul.f32 %v8807, 0.5
      %v8960 = vmul.f32 %v8809, 0.5
      %v8961 = vmul.f32 %v8618, 0.5
      %v8962 = vmul.f32 %v8620, 0.5
      %v8963 = vmul.f32 %v8811, 0.5
      %v8964 = vmul.f32 %v8813, 0.5
      %v8965 = vmul.f32 %v8624, 0.5
      %v8966 = vmul.f32 %v8626, 0.5
      %v8967 = vmul.f32 %v8817, 0.5
      %v8968 = vmul.f32 %v8819, 0.5
      %v8969 = vmul.f32 %v8628, 0.5
      %v8970 = vmul.f32 %v8630, 0.5
      %v8971 = vmul.f32 %v8821, 0.5
      %v8972 = vmul.f32 %v8823, 0.5
      %v8973 = vmul.f32 %v8634, 0.5
      %v8974 = vmul.f32 %v8636, 0.5
      %v8975 = vmul.f32 %v8827, 0.5
      %v8976 = vmul.f32 %v8829, 0.5
      %v8977 = vmul.f32 %v8638, 0.5
      %v8978 = vmul.f32 %v8640, 0.5
      %v8979 = vmul.f32 %v8831, 0.5
      %v8980 = vmul.f32 %v8833, 0.5
      %v8981 = vmul.f32 %v8644, 0.5
      %v8982 = vmul.f32 %v8646, 0.5
      %v8983 = vmul.f32 %v8837, 0.5
      %v8984 = vmul.f32 %v8839, 0.5
      %v8985 = vmul.f32 %v8648, 0.5
      %v8986 = vmul.f32 %v8650, 0.5
      %v8987 = vmul.f32 %v8841, 0.5
      %v8988 = vmul.f32 %v8843, 0.5
      %v8989 = vmul.f32 %v8654, 0.5
      %v8990 = vmul.f32 %v8656, 0.5
      %v8991 = vmul.f32 %v8847, 0.5
      %v8992 = vmul.f32 %v8849, 0.5
      %v8993 = vmul.f32 %v8658, 0.5
      %v8994 = vmul.f32 %v8660, 0.5
      %v8995 = vmul.f32 %v8851, 0.5
      %v8996 = vmul.f32 %v8853, 0.5
      %v8997 = vmul.f32 %v8664, 0.5
      %v8998 = vmul.f32 %v8666, 0.5
      %v8999 = vmul.f32 %v8857, 0.5
      %v9000 = vmul.f32 %v8859, 0.5
      %v9001 = vmul.f32 %v8668, 0.5
      %v9002 = vmul.f32 %v8670, 0.5
      %v9003 = vmul.f32 %v8861, 0.5
      %v9004 = vmul.f32 %v8863, 0.5
      %v9005 = vmul.f32 %v8674, 0.5
      %v9006 = vmul.f32 %v8676, 0.5
      %v9007 = vmul.f32 %v8867, 0.5
      %v9008 = vmul.f32 %v8869, 0.5
      %v9009 = vmul.f32 %v8678, 0.5
      %v9010 = vmul.f32 %v8680, 0.5
      %v9011 = vmul.f32 %v8871, 0.5
      %v9012 = vmul.f32 %v8873, 0.5
      %v9013 = vmul.f32 %v8684, 0.5
      %v9014 = vmul.f32 %v8686, 0.5
      %v9015 = vmul.f32 %v8877, 0.5
      %v9016 = vmul.f32 %v8879, 0.5
      %v9017 = vmul.f32 %v8688, 0.5
      %v9018 = vmul.f32 %v8690, 0.5
      %v9019 = vmul.f32 %v8881, 0.5
      %v9020 = vmul.f32 %v8883, 0.5
      %v9021 = vmul.f32 %v8694, 0.5
      %v9022 = vmul.f32 %v8696, 0.5
      %v9023 = vmul.f32 %v8887, 0.5
      %v9024 = vmul.f32 %v8889, 0.5
      %v9025 = vmul.f32 %v8698, 0.5
      %v9026 = vmul.f32 %v8700, 0.5
      %v9027 = vmul.f32 %v8891, 0.5
      %v9028 = vmul.f32 %v8893, 0.5
      %v9029 = vmul.f32 %v8704, 0.5
      %v9030 = vmul.f32 %v8706, 0.5
      %v9031 = vmul.f32 %v8897, 0.5
      %v9032 = vmul.f32 %v8899, 0.5
      %v9033 = vmul.f32 %v8708, 0.5
      %v9034 = vmul.f32 %v8710, 0.5
      %v9035 = vmul.f32 %v8901, 0.5
      %v9036 = vmul.f32 %v8903, 0.5
      %v9037 = vmul.f32 %v8714, 0.5
      %v9038 = vmul.f32 %v8716, 0.5
      %v9039 = vmul.f32 %v8907, 0.5
      %v9040 = vmul.f32 %v8909, 0.5
      %v9041 = vmul.f32 %v8718, 0.5
      %v9042 = vmul.f32 %v8720, 0.5
      %v9043 = vmul.f32 %v8911, 0.5
      %v9044 = vmul.f32 %v8913, 0.5
      %v9045 = vmul.f32 %v8724, 0.5
      %v9046 = vmul.f32 %v8726, 0.5
      %v9047 = vmul.f32 %v8917, 0.5
      %v9048 = vmul.f32 %v8919, 0.5
      %v9049 = vmul.f32 %v8728, 0.5
      %v9050 = vmul.f32 %v8730, 0.5
      %v9051 = vmul.f32 %v8921, 0.5
      %v9052 = vmul.f32 %v8923, 0.5
      %v9053 = vmul.f32 %v8574, 0.044715
      %v9054 = vmul.f32 %v8576, 0.044715
      %v9055 = vmul.f32 %v8767, 0.044715
      %v9056 = vmul.f32 %v8769, 0.044715
      %v9057 = vmul.f32 %v8578, 0.044715
      %v9058 = vmul.f32 %v8580, 0.044715
      %v9059 = vmul.f32 %v8771, 0.044715
      %v9060 = vmul.f32 %v8773, 0.044715
      %v9061 = vmul.f32 %v8584, 0.044715
      %v9062 = vmul.f32 %v8586, 0.044715
      %v9063 = vmul.f32 %v8777, 0.044715
      %v9064 = vmul.f32 %v8779, 0.044715
      %v9065 = vmul.f32 %v8588, 0.044715
      %v9066 = vmul.f32 %v8590, 0.044715
      %v9067 = vmul.f32 %v8781, 0.044715
      %v9068 = vmul.f32 %v8783, 0.044715
      %v9069 = vmul.f32 %v8594, 0.044715
      %v9070 = vmul.f32 %v8596, 0.044715
      %v9071 = vmul.f32 %v8787, 0.044715
      %v9072 = vmul.f32 %v8789, 0.044715
      %v9073 = vmul.f32 %v8598, 0.044715
      %v9074 = vmul.f32 %v8600, 0.044715
      %v9075 = vmul.f32 %v8791, 0.044715
      %v9076 = vmul.f32 %v8793, 0.044715
      %v9077 = vmul.f32 %v8604, 0.044715
      %v9078 = vmul.f32 %v8606, 0.044715
      %v9079 = vmul.f32 %v8797, 0.044715
      %v9080 = vmul.f32 %v8799, 0.044715
      %v9081 = vmul.f32 %v8608, 0.044715
      %v9082 = vmul.f32 %v8610, 0.044715
      %v9083 = vmul.f32 %v8801, 0.044715
      %v9084 = vmul.f32 %v8803, 0.044715
      %v9085 = vmul.f32 %v8614, 0.044715
      %v9086 = vmul.f32 %v8616, 0.044715
      %v9087 = vmul.f32 %v8807, 0.044715
      %v9088 = vmul.f32 %v8809, 0.044715
      %v9089 = vmul.f32 %v8618, 0.044715
      %v9090 = vmul.f32 %v8620, 0.044715
      %v9091 = vmul.f32 %v8811, 0.044715
      %v9092 = vmul.f32 %v8813, 0.044715
      %v9093 = vmul.f32 %v8624, 0.044715
      %v9094 = vmul.f32 %v8626, 0.044715
      %v9095 = vmul.f32 %v8817, 0.044715
      %v9096 = vmul.f32 %v8819, 0.044715
      %v9097 = vmul.f32 %v8628, 0.044715
      %v9098 = vmul.f32 %v8630, 0.044715
      %v9099 = vmul.f32 %v8821, 0.044715
      %v9100 = vmul.f32 %v8823, 0.044715
      %v9101 = vmul.f32 %v8634, 0.044715
      %v9102 = vmul.f32 %v8636, 0.044715
      %v9103 = vmul.f32 %v8827, 0.044715
      %v9104 = vmul.f32 %v8829, 0.044715
      %v9105 = vmul.f32 %v8638, 0.044715
      %v9106 = vmul.f32 %v8640, 0.044715
      %v9107 = vmul.f32 %v8831, 0.044715
      %v9108 = vmul.f32 %v8833, 0.044715
      %v9109 = vmul.f32 %v8644, 0.044715
      %v9110 = vmul.f32 %v8646, 0.044715
      %v9111 = vmul.f32 %v8837, 0.044715
      %v9112 = vmul.f32 %v8839, 0.044715
      %v9113 = vmul.f32 %v8648, 0.044715
      %v9114 = vmul.f32 %v8650, 0.044715
      %v9115 = vmul.f32 %v8841, 0.044715
      %v9116 = vmul.f32 %v8843, 0.044715
      %v9117 = vmul.f32 %v8654, 0.044715
      %v9118 = vmul.f32 %v8656, 0.044715
      %v9119 = vmul.f32 %v8847, 0.044715
      %v9120 = vmul.f32 %v8849, 0.044715
      %v9121 = vmul.f32 %v8658, 0.044715
      %v9122 = vmul.f32 %v8660, 0.044715
      %v9123 = vmul.f32 %v8851, 0.044715
      %v9124 = vmul.f32 %v8853, 0.044715
      %v9125 = vmul.f32 %v8664, 0.044715
      %v9126 = vmul.f32 %v8666, 0.044715
      %v9127 = vmul.f32 %v8857, 0.044715
      %v9128 = vmul.f32 %v8859, 0.044715
      %v9129 = vmul.f32 %v8668, 0.044715
      %v9130 = vmul.f32 %v8670, 0.044715
      %v9131 = vmul.f32 %v8861, 0.044715
      %v9132 = vmul.f32 %v8863, 0.044715
      %v9133 = vmul.f32 %v8674, 0.044715
      %v9134 = vmul.f32 %v8676, 0.044715
      %v9135 = vmul.f32 %v8867, 0.044715
      %v9136 = vmul.f32 %v8869, 0.044715
      %v9137 = vmul.f32 %v8678, 0.044715
      %v9138 = vmul.f32 %v8680, 0.044715
      %v9139 = vmul.f32 %v8871, 0.044715
      %v9140 = vmul.f32 %v8873, 0.044715
      %v9141 = vmul.f32 %v8684, 0.044715
      %v9142 = vmul.f32 %v8686, 0.044715
      %v9143 = vmul.f32 %v8877, 0.044715
      %v9144 = vmul.f32 %v8879, 0.044715
      %v9145 = vmul.f32 %v8688, 0.044715
      %v9146 = vmul.f32 %v8690, 0.044715
      %v9147 = vmul.f32 %v8881, 0.044715
      %v9148 = vmul.f32 %v8883, 0.044715
      %v9149 = vmul.f32 %v8694, 0.044715
      %v9150 = vmul.f32 %v8696, 0.044715
      %v9151 = vmul.f32 %v8887, 0.044715
      %v9152 = vmul.f32 %v8889, 0.044715
      %v9153 = vmul.f32 %v8698, 0.044715
      %v9154 = vmul.f32 %v8700, 0.044715
      %v9155 = vmul.f32 %v8891, 0.044715
      %v9156 = vmul.f32 %v8893, 0.044715
      %v9157 = vmul.f32 %v8704, 0.044715
      %v9158 = vmul.f32 %v8706, 0.044715
      %v9159 = vmul.f32 %v8897, 0.044715
      %v9160 = vmul.f32 %v8899, 0.044715
      %v9161 = vmul.f32 %v8708, 0.044715
      %v9162 = vmul.f32 %v8710, 0.044715
      %v9163 = vmul.f32 %v8901, 0.044715
      %v9164 = vmul.f32 %v8903, 0.044715
      %v9165 = vmul.f32 %v8714, 0.044715
      %v9166 = vmul.f32 %v8716, 0.044715
      %v9167 = vmul.f32 %v8907, 0.044715
      %v9168 = vmul.f32 %v8909, 0.044715
      %v9169 = vmul.f32 %v8718, 0.044715
      %v9170 = vmul.f32 %v8720, 0.044715
      %v9171 = vmul.f32 %v8911, 0.044715
      %v9172 = vmul.f32 %v8913, 0.044715
      %v9173 = vmul.f32 %v8724, 0.044715
      %v9174 = vmul.f32 %v8726, 0.044715
      %v9175 = vmul.f32 %v8917, 0.044715
      %v9176 = vmul.f32 %v8919, 0.044715
      %v9177 = vmul.f32 %v8728, 0.044715
      %v9178 = vmul.f32 %v8730, 0.044715
      %v9179 = vmul.f32 %v8921, 0.044715
      %v9180 = vmul.f32 %v8923, 0.044715
      %v9181 = vmul.f32 %v9053, %v8574
      %v9182 = vmul.f32 %v9054, %v8576
      %v9183 = vmul.f32 %v9055, %v8767
      %v9184 = vmul.f32 %v9056, %v8769
      %v9185 = vmul.f32 %v9057, %v8578
      %v9186 = vmul.f32 %v9058, %v8580
      %v9187 = vmul.f32 %v9059, %v8771
      %v9188 = vmul.f32 %v9060, %v8773
      %v9189 = vmul.f32 %v9061, %v8584
      %v9190 = vmul.f32 %v9062, %v8586
      %v9191 = vmul.f32 %v9063, %v8777
      %v9192 = vmul.f32 %v9064, %v8779
      %v9193 = vmul.f32 %v9065, %v8588
      %v9194 = vmul.f32 %v9066, %v8590
      %v9195 = vmul.f32 %v9067, %v8781
      %v9196 = vmul.f32 %v9068, %v8783
      %v9197 = vmul.f32 %v9069, %v8594
      %v9198 = vmul.f32 %v9070, %v8596
      %v9199 = vmul.f32 %v9071, %v8787
      %v9200 = vmul.f32 %v9072, %v8789
      %v9201 = vmul.f32 %v9073, %v8598
      %v9202 = vmul.f32 %v9074, %v8600
      %v9203 = vmul.f32 %v9075, %v8791
      %v9204 = vmul.f32 %v9076, %v8793
      %v9205 = vmul.f32 %v9077, %v8604
      %v9206 = vmul.f32 %v9078, %v8606
      %v9207 = vmul.f32 %v9079, %v8797
      %v9208 = vmul.f32 %v9080, %v8799
      %v9209 = vmul.f32 %v9081, %v8608
      %v9210 = vmul.f32 %v9082, %v8610
      %v9211 = vmul.f32 %v9083, %v8801
      %v9212 = vmul.f32 %v9084, %v8803
      %v9213 = vmul.f32 %v9085, %v8614
      %v9214 = vmul.f32 %v9086, %v8616
      %v9215 = vmul.f32 %v9087, %v8807
      %v9216 = vmul.f32 %v9088, %v8809
      %v9217 = vmul.f32 %v9089, %v8618
      %v9218 = vmul.f32 %v9090, %v8620
      %v9219 = vmul.f32 %v9091, %v8811
      %v9220 = vmul.f32 %v9092, %v8813
      %v9221 = vmul.f32 %v9093, %v8624
      %v9222 = vmul.f32 %v9094, %v8626
      %v9223 = vmul.f32 %v9095, %v8817
      %v9224 = vmul.f32 %v9096, %v8819
      %v9225 = vmul.f32 %v9097, %v8628
      %v9226 = vmul.f32 %v9098, %v8630
      %v9227 = vmul.f32 %v9099, %v8821
      %v9228 = vmul.f32 %v9100, %v8823
      %v9229 = vmul.f32 %v9101, %v8634
      %v9230 = vmul.f32 %v9102, %v8636
      %v9231 = vmul.f32 %v9103, %v8827
      %v9232 = vmul.f32 %v9104, %v8829
      %v9233 = vmul.f32 %v9105, %v8638
      %v9234 = vmul.f32 %v9106, %v8640
      %v9235 = vmul.f32 %v9107, %v8831
      %v9236 = vmul.f32 %v9108, %v8833
      %v9237 = vmul.f32 %v9109, %v8644
      %v9238 = vmul.f32 %v9110, %v8646
      %v9239 = vmul.f32 %v9111, %v8837
      %v9240 = vmul.f32 %v9112, %v8839
      %v9241 = vmul.f32 %v9113, %v8648
      %v9242 = vmul.f32 %v9114, %v8650
      %v9243 = vmul.f32 %v9115, %v8841
      %v9244 = vmul.f32 %v9116, %v8843
      %v9245 = vmul.f32 %v9117, %v8654
      %v9246 = vmul.f32 %v9118, %v8656
      %v9247 = vmul.f32 %v9119, %v8847
      %v9248 = vmul.f32 %v9120, %v8849
      %v9249 = vmul.f32 %v9121, %v8658
      %v9250 = vmul.f32 %v9122, %v8660
      %v9251 = vmul.f32 %v9123, %v8851
      %v9252 = vmul.f32 %v9124, %v8853
      %v9253 = vmul.f32 %v9125, %v8664
      %v9254 = vmul.f32 %v9126, %v8666
      %v9255 = vmul.f32 %v9127, %v8857
      %v9256 = vmul.f32 %v9128, %v8859
      %v9257 = vmul.f32 %v9129, %v8668
      %v9258 = vmul.f32 %v9130, %v8670
      %v9259 = vmul.f32 %v9131, %v8861
      %v9260 = vmul.f32 %v9132, %v8863
      %v9261 = vmul.f32 %v9133, %v8674
      %v9262 = vmul.f32 %v9134, %v8676
      %v9263 = vmul.f32 %v9135, %v8867
      %v9264 = vmul.f32 %v9136, %v8869
      %v9265 = vmul.f32 %v9137, %v8678
      %v9266 = vmul.f32 %v9138, %v8680
      %v9267 = vmul.f32 %v9139, %v8871
      %v9268 = vmul.f32 %v9140, %v8873
      %v9269 = vmul.f32 %v9141, %v8684
      %v9270 = vmul.f32 %v9142, %v8686
      %v9271 = vmul.f32 %v9143, %v8877
      %v9272 = vmul.f32 %v9144, %v8879
      %v9273 = vmul.f32 %v9145, %v8688
      %v9274 = vmul.f32 %v9146, %v8690
      %v9275 = vmul.f32 %v9147, %v8881
      %v9276 = vmul.f32 %v9148, %v8883
      %v9277 = vmul.f32 %v9149, %v8694
      %v9278 = vmul.f32 %v9150, %v8696
      %v9279 = vmul.f32 %v9151, %v8887
      %v9280 = vmul.f32 %v9152, %v8889
      %v9281 = vmul.f32 %v9153, %v8698
      %v9282 = vmul.f32 %v9154, %v8700
      %v9283 = vmul.f32 %v9155, %v8891
      %v9284 = vmul.f32 %v9156, %v8893
      %v9285 = vmul.f32 %v9157, %v8704
      %v9286 = vmul.f32 %v9158, %v8706
      %v9287 = vmul.f32 %v9159, %v8897
      %v9288 = vmul.f32 %v9160, %v8899
      %v9289 = vmul.f32 %v9161, %v8708
      %v9290 = vmul.f32 %v9162, %v8710
      %v9291 = vmul.f32 %v9163, %v8901
      %v9292 = vmul.f32 %v9164, %v8903
      %v9293 = vmul.f32 %v9165, %v8714
      %v9294 = vmul.f32 %v9166, %v8716
      %v9295 = vmul.f32 %v9167, %v8907
      %v9296 = vmul.f32 %v9168, %v8909
      %v9297 = vmul.f32 %v9169, %v8718
      %v9298 = vmul.f32 %v9170, %v8720
      %v9299 = vmul.f32 %v9171, %v8911
      %v9300 = vmul.f32 %v9172, %v8913
      %v9301 = vmul.f32 %v9173, %v8724
      %v9302 = vmul.f32 %v9174, %v8726
      %v9303 = vmul.f32 %v9175, %v8917
      %v9304 = vmul.f32 %v9176, %v8919
      %v9305 = vmul.f32 %v9177, %v8728
      %v9306 = vmul.f32 %v9178, %v8730
      %v9307 = vmul.f32 %v9179, %v8921
      %v9308 = vmul.f32 %v9180, %v8923
      %v9309 = vmul.f32 %v9181, %v8574
      %v9310 = vmul.f32 %v9182, %v8576
      %v9311 = vmul.f32 %v9183, %v8767
      %v9312 = vmul.f32 %v9184, %v8769
      %v9313 = vmul.f32 %v9185, %v8578
      %v9314 = vmul.f32 %v9186, %v8580
      %v9315 = vmul.f32 %v9187, %v8771
      %v9316 = vmul.f32 %v9188, %v8773
      %v9317 = vmul.f32 %v9189, %v8584
      %v9318 = vmul.f32 %v9190, %v8586
      %v9319 = vmul.f32 %v9191, %v8777
      %v9320 = vmul.f32 %v9192, %v8779
      %v9321 = vmul.f32 %v9193, %v8588
      %v9322 = vmul.f32 %v9194, %v8590
      %v9323 = vmul.f32 %v9195, %v8781
      %v9324 = vmul.f32 %v9196, %v8783
      %v9325 = vmul.f32 %v9197, %v8594
      %v9326 = vmul.f32 %v9198, %v8596
      %v9327 = vmul.f32 %v9199, %v8787
      %v9328 = vmul.f32 %v9200, %v8789
      %v9329 = vmul.f32 %v9201, %v8598
      %v9330 = vmul.f32 %v9202, %v8600
      %v9331 = vmul.f32 %v9203, %v8791
      %v9332 = vmul.f32 %v9204, %v8793
      %v9333 = vmul.f32 %v9205, %v8604
      %v9334 = vmul.f32 %v9206, %v8606
      %v9335 = vmul.f32 %v9207, %v8797
      %v9336 = vmul.f32 %v9208, %v8799
      %v9337 = vmul.f32 %v9209, %v8608
      %v9338 = vmul.f32 %v9210, %v8610
      %v9339 = vmul.f32 %v9211, %v8801
      %v9340 = vmul.f32 %v9212, %v8803
      %v9341 = vmul.f32 %v9213, %v8614
      %v9342 = vmul.f32 %v9214, %v8616
      %v9343 = vmul.f32 %v9215, %v8807
      %v9344 = vmul.f32 %v9216, %v8809
      %v9345 = vmul.f32 %v9217, %v8618
      %v9346 = vmul.f32 %v9218, %v8620
      %v9347 = vmul.f32 %v9219, %v8811
      %v9348 = vmul.f32 %v9220, %v8813
      %v9349 = vmul.f32 %v9221, %v8624
      %v9350 = vmul.f32 %v9222, %v8626
      %v9351 = vmul.f32 %v9223, %v8817
      %v9352 = vmul.f32 %v9224, %v8819
      %v9353 = vmul.f32 %v9225, %v8628
      %v9354 = vmul.f32 %v9226, %v8630
      %v9355 = vmul.f32 %v9227, %v8821
      %v9356 = vmul.f32 %v9228, %v8823
      %v9357 = vmul.f32 %v9229, %v8634
      %v9358 = vmul.f32 %v9230, %v8636
      %v9359 = vmul.f32 %v9231, %v8827
      %v9360 = vmul.f32 %v9232, %v8829
      %v9361 = vmul.f32 %v9233, %v8638
      %v9362 = vmul.f32 %v9234, %v8640
      %v9363 = vmul.f32 %v9235, %v8831
      %v9364 = vmul.f32 %v9236, %v8833
      %v9365 = vmul.f32 %v9237, %v8644
      %v9366 = vmul.f32 %v9238, %v8646
      %v9367 = vmul.f32 %v9239, %v8837
      %v9368 = vmul.f32 %v9240, %v8839
      %v9369 = vmul.f32 %v9241, %v8648
      %v9370 = vmul.f32 %v9242, %v8650
      %v9371 = vmul.f32 %v9243, %v8841
      %v9372 = vmul.f32 %v9244, %v8843
      %v9373 = vmul.f32 %v9245, %v8654
      %v9374 = vmul.f32 %v9246, %v8656
      %v9375 = vmul.f32 %v9247, %v8847
      %v9376 = vmul.f32 %v9248, %v8849
      %v9377 = vmul.f32 %v9249, %v8658
      %v9378 = vmul.f32 %v9250, %v8660
      %v9379 = vmul.f32 %v9251, %v8851
      %v9380 = vmul.f32 %v9252, %v8853
      %v9381 = vmul.f32 %v9253, %v8664
      %v9382 = vmul.f32 %v9254, %v8666
      %v9383 = vmul.f32 %v9255, %v8857
      %v9384 = vmul.f32 %v9256, %v8859
      %v9385 = vmul.f32 %v9257, %v8668
      %v9386 = vmul.f32 %v9258, %v8670
      %v9387 = vmul.f32 %v9259, %v8861
      %v9388 = vmul.f32 %v9260, %v8863
      %v9389 = vmul.f32 %v9261, %v8674
      %v9390 = vmul.f32 %v9262, %v8676
      %v9391 = vmul.f32 %v9263, %v8867
      %v9392 = vmul.f32 %v9264, %v8869
      %v9393 = vmul.f32 %v9265, %v8678
      %v9394 = vmul.f32 %v9266, %v8680
      %v9395 = vmul.f32 %v9267, %v8871
      %v9396 = vmul.f32 %v9268, %v8873
      %v9397 = vmul.f32 %v9269, %v8684
      %v9398 = vmul.f32 %v9270, %v8686
      %v9399 = vmul.f32 %v9271, %v8877
      %v9400 = vmul.f32 %v9272, %v8879
      %v9401 = vmul.f32 %v9273, %v8688
      %v9402 = vmul.f32 %v9274, %v8690
      %v9403 = vmul.f32 %v9275, %v8881
      %v9404 = vmul.f32 %v9276, %v8883
      %v9405 = vmul.f32 %v9277, %v8694
      %v9406 = vmul.f32 %v9278, %v8696
      %v9407 = vmul.f32 %v9279, %v8887
      %v9408 = vmul.f32 %v9280, %v8889
      %v9409 = vmul.f32 %v9281, %v8698
      %v9410 = vmul.f32 %v9282, %v8700
      %v9411 = vmul.f32 %v9283, %v8891
      %v9412 = vmul.f32 %v9284, %v8893
      %v9413 = vmul.f32 %v9285, %v8704
      %v9414 = vmul.f32 %v9286, %v8706
      %v9415 = vmul.f32 %v9287, %v8897
      %v9416 = vmul.f32 %v9288, %v8899
      %v9417 = vmul.f32 %v9289, %v8708
      %v9418 = vmul.f32 %v9290, %v8710
      %v9419 = vmul.f32 %v9291, %v8901
      %v9420 = vmul.f32 %v9292, %v8903
      %v9421 = vmul.f32 %v9293, %v8714
      %v9422 = vmul.f32 %v9294, %v8716
      %v9423 = vmul.f32 %v9295, %v8907
      %v9424 = vmul.f32 %v9296, %v8909
      %v9425 = vmul.f32 %v9297, %v8718
      %v9426 = vmul.f32 %v9298, %v8720
      %v9427 = vmul.f32 %v9299, %v8911
      %v9428 = vmul.f32 %v9300, %v8913
      %v9429 = vmul.f32 %v9301, %v8724
      %v9430 = vmul.f32 %v9302, %v8726
      %v9431 = vmul.f32 %v9303, %v8917
      %v9432 = vmul.f32 %v9304, %v8919
      %v9433 = vmul.f32 %v9305, %v8728
      %v9434 = vmul.f32 %v9306, %v8730
      %v9435 = vmul.f32 %v9307, %v8921
      %v9436 = vmul.f32 %v9308, %v8923
      %v9437 = vadd.f32 %v8574, %v9309
      %v9438 = vadd.f32 %v8576, %v9310
      %v9439 = vadd.f32 %v8767, %v9311
      %v9440 = vadd.f32 %v8769, %v9312
      %v9441 = vadd.f32 %v8578, %v9313
      %v9442 = vadd.f32 %v8580, %v9314
      %v9443 = vadd.f32 %v8771, %v9315
      %v9444 = vadd.f32 %v8773, %v9316
      %v9445 = vadd.f32 %v8584, %v9317
      %v9446 = vadd.f32 %v8586, %v9318
      %v9447 = vadd.f32 %v8777, %v9319
      %v9448 = vadd.f32 %v8779, %v9320
      %v9449 = vadd.f32 %v8588, %v9321
      %v9450 = vadd.f32 %v8590, %v9322
      %v9451 = vadd.f32 %v8781, %v9323
      %v9452 = vadd.f32 %v8783, %v9324
      %v9453 = vadd.f32 %v8594, %v9325
      %v9454 = vadd.f32 %v8596, %v9326
      %v9455 = vadd.f32 %v8787, %v9327
      %v9456 = vadd.f32 %v8789, %v9328
      %v9457 = vadd.f32 %v8598, %v9329
      %v9458 = vadd.f32 %v8600, %v9330
      %v9459 = vadd.f32 %v8791, %v9331
      %v9460 = vadd.f32 %v8793, %v9332
      %v9461 = vadd.f32 %v8604, %v9333
      %v9462 = vadd.f32 %v8606, %v9334
      %v9463 = vadd.f32 %v8797, %v9335
      %v9464 = vadd.f32 %v8799, %v9336
      %v9465 = vadd.f32 %v8608, %v9337
      %v9466 = vadd.f32 %v8610, %v9338
      %v9467 = vadd.f32 %v8801, %v9339
      %v9468 = vadd.f32 %v8803, %v9340
      %v9469 = vadd.f32 %v8614, %v9341
      %v9470 = vadd.f32 %v8616, %v9342
      %v9471 = vadd.f32 %v8807, %v9343
      %v9472 = vadd.f32 %v8809, %v9344
      %v9473 = vadd.f32 %v8618, %v9345
      %v9474 = vadd.f32 %v8620, %v9346
      %v9475 = vadd.f32 %v8811, %v9347
      %v9476 = vadd.f32 %v8813, %v9348
      %v9477 = vadd.f32 %v8624, %v9349
      %v9478 = vadd.f32 %v8626, %v9350
      %v9479 = vadd.f32 %v8817, %v9351
      %v9480 = vadd.f32 %v8819, %v9352
      %v9481 = vadd.f32 %v8628, %v9353
      %v9482 = vadd.f32 %v8630, %v9354
      %v9483 = vadd.f32 %v8821, %v9355
      %v9484 = vadd.f32 %v8823, %v9356
      %v9485 = vadd.f32 %v8634, %v9357
      %v9486 = vadd.f32 %v8636, %v9358
      %v9487 = vadd.f32 %v8827, %v9359
      %v9488 = vadd.f32 %v8829, %v9360
      %v9489 = vadd.f32 %v8638, %v9361
      %v9490 = vadd.f32 %v8640, %v9362
      %v9491 = vadd.f32 %v8831, %v9363
      %v9492 = vadd.f32 %v8833, %v9364
      %v9493 = vadd.f32 %v8644, %v9365
      %v9494 = vadd.f32 %v8646, %v9366
      %v9495 = vadd.f32 %v8837, %v9367
      %v9496 = vadd.f32 %v8839, %v9368
      %v9497 = vadd.f32 %v8648, %v9369
      %v9498 = vadd.f32 %v8650, %v9370
      %v9499 = vadd.f32 %v8841, %v9371
      %v9500 = vadd.f32 %v8843, %v9372
      %v9501 = vadd.f32 %v8654, %v9373
      %v9502 = vadd.f32 %v8656, %v9374
      %v9503 = vadd.f32 %v8847, %v9375
      %v9504 = vadd.f32 %v8849, %v9376
      %v9505 = vadd.f32 %v8658, %v9377
      %v9506 = vadd.f32 %v8660, %v9378
      %v9507 = vadd.f32 %v8851, %v9379
      %v9508 = vadd.f32 %v8853, %v9380
      %v9509 = vadd.f32 %v8664, %v9381
      %v9510 = vadd.f32 %v8666, %v9382
      %v9511 = vadd.f32 %v8857, %v9383
      %v9512 = vadd.f32 %v8859, %v9384
      %v9513 = vadd.f32 %v8668, %v9385
      %v9514 = vadd.f32 %v8670, %v9386
      %v9515 = vadd.f32 %v8861, %v9387
      %v9516 = vadd.f32 %v8863, %v9388
      %v9517 = vadd.f32 %v8674, %v9389
      %v9518 = vadd.f32 %v8676, %v9390
      %v9519 = vadd.f32 %v8867, %v9391
      %v9520 = vadd.f32 %v8869, %v9392
      %v9521 = vadd.f32 %v8678, %v9393
      %v9522 = vadd.f32 %v8680, %v9394
      %v9523 = vadd.f32 %v8871, %v9395
      %v9524 = vadd.f32 %v8873, %v9396
      %v9525 = vadd.f32 %v8684, %v9397
      %v9526 = vadd.f32 %v8686, %v9398
      %v9527 = vadd.f32 %v8877, %v9399
      %v9528 = vadd.f32 %v8879, %v9400
      %v9529 = vadd.f32 %v8688, %v9401
      %v9530 = vadd.f32 %v8690, %v9402
      %v9531 = vadd.f32 %v8881, %v9403
      %v9532 = vadd.f32 %v8883, %v9404
      %v9533 = vadd.f32 %v8694, %v9405
      %v9534 = vadd.f32 %v8696, %v9406
      %v9535 = vadd.f32 %v8887, %v9407
      %v9536 = vadd.f32 %v8889, %v9408
      %v9537 = vadd.f32 %v8698, %v9409
      %v9538 = vadd.f32 %v8700, %v9410
      %v9539 = vadd.f32 %v8891, %v9411
      %v9540 = vadd.f32 %v8893, %v9412
      %v9541 = vadd.f32 %v8704, %v9413
      %v9542 = vadd.f32 %v8706, %v9414
      %v9543 = vadd.f32 %v8897, %v9415
      %v9544 = vadd.f32 %v8899, %v9416
      %v9545 = vadd.f32 %v8708, %v9417
      %v9546 = vadd.f32 %v8710, %v9418
      %v9547 = vadd.f32 %v8901, %v9419
      %v9548 = vadd.f32 %v8903, %v9420
      %v9549 = vadd.f32 %v8714, %v9421
      %v9550 = vadd.f32 %v8716, %v9422
      %v9551 = vadd.f32 %v8907, %v9423
      %v9552 = vadd.f32 %v8909, %v9424
      %v9553 = vadd.f32 %v8718, %v9425
      %v9554 = vadd.f32 %v8720, %v9426
      %v9555 = vadd.f32 %v8911, %v9427
      %v9556 = vadd.f32 %v8913, %v9428
      %v9557 = vadd.f32 %v8724, %v9429
      %v9558 = vadd.f32 %v8726, %v9430
      %v9559 = vadd.f32 %v8917, %v9431
      %v9560 = vadd.f32 %v8919, %v9432
      %v9561 = vadd.f32 %v8728, %v9433
      %v9562 = vadd.f32 %v8730, %v9434
      %v9563 = vadd.f32 %v8921, %v9435
      %v9564 = vadd.f32 %v8923, %v9436
      %v9565 = vmul.f32 %v9437, 0.7978846
      %v9566 = vmul.f32 %v9438, 0.7978846
      %v9567 = vmul.f32 %v9439, 0.7978846
      %v9568 = vmul.f32 %v9440, 0.7978846
      %v9569 = vmul.f32 %v9441, 0.7978846
      %v9570 = vmul.f32 %v9442, 0.7978846
      %v9571 = vmul.f32 %v9443, 0.7978846
      %v9572 = vmul.f32 %v9444, 0.7978846
      %v9573 = vmul.f32 %v9445, 0.7978846
      %v9574 = vmul.f32 %v9446, 0.7978846
      %v9575 = vmul.f32 %v9447, 0.7978846
      %v9576 = vmul.f32 %v9448, 0.7978846
      %v9577 = vmul.f32 %v9449, 0.7978846
      %v9578 = vmul.f32 %v9450, 0.7978846
      %v9579 = vmul.f32 %v9451, 0.7978846
      %v9580 = vmul.f32 %v9452, 0.7978846
      %v9581 = vmul.f32 %v9453, 0.7978846
      %v9582 = vmul.f32 %v9454, 0.7978846
      %v9583 = vmul.f32 %v9455, 0.7978846
      %v9584 = vmul.f32 %v9456, 0.7978846
      %v9585 = vmul.f32 %v9457, 0.7978846
      %v9586 = vmul.f32 %v9458, 0.7978846
      %v9587 = vmul.f32 %v9459, 0.7978846
      %v9588 = vmul.f32 %v9460, 0.7978846
      %v9589 = vmul.f32 %v9461, 0.7978846
      %v9590 = vmul.f32 %v9462, 0.7978846
      %v9591 = vmul.f32 %v9463, 0.7978846
      %v9592 = vmul.f32 %v9464, 0.7978846
      %v9593 = vmul.f32 %v9465, 0.7978846
      %v9594 = vmul.f32 %v9466, 0.7978846
      %v9595 = vmul.f32 %v9467, 0.7978846
      %v9596 = vmul.f32 %v9468, 0.7978846
      %v9597 = vmul.f32 %v9469, 0.7978846
      %v9598 = vmul.f32 %v9470, 0.7978846
      %v9599 = vmul.f32 %v9471, 0.7978846
      %v9600 = vmul.f32 %v9472, 0.7978846
      %v9601 = vmul.f32 %v9473, 0.7978846
      %v9602 = vmul.f32 %v9474, 0.7978846
      %v9603 = vmul.f32 %v9475, 0.7978846
      %v9604 = vmul.f32 %v9476, 0.7978846
      %v9605 = vmul.f32 %v9477, 0.7978846
      %v9606 = vmul.f32 %v9478, 0.7978846
      %v9607 = vmul.f32 %v9479, 0.7978846
      %v9608 = vmul.f32 %v9480, 0.7978846
      %v9609 = vmul.f32 %v9481, 0.7978846
      %v9610 = vmul.f32 %v9482, 0.7978846
      %v9611 = vmul.f32 %v9483, 0.7978846
      %v9612 = vmul.f32 %v9484, 0.7978846
      %v9613 = vmul.f32 %v9485, 0.7978846
      %v9614 = vmul.f32 %v9486, 0.7978846
      %v9615 = vmul.f32 %v9487, 0.7978846
      %v9616 = vmul.f32 %v9488, 0.7978846
      %v9617 = vmul.f32 %v9489, 0.7978846
      %v9618 = vmul.f32 %v9490, 0.7978846
      %v9619 = vmul.f32 %v9491, 0.7978846
      %v9620 = vmul.f32 %v9492, 0.7978846
      %v9621 = vmul.f32 %v9493, 0.7978846
      %v9622 = vmul.f32 %v9494, 0.7978846
      %v9623 = vmul.f32 %v9495, 0.7978846
      %v9624 = vmul.f32 %v9496, 0.7978846
      %v9625 = vmul.f32 %v9497, 0.7978846
      %v9626 = vmul.f32 %v9498, 0.7978846
      %v9627 = vmul.f32 %v9499, 0.7978846
      %v9628 = vmul.f32 %v9500, 0.7978846
      %v9629 = vmul.f32 %v9501, 0.7978846
      %v9630 = vmul.f32 %v9502, 0.7978846
      %v9631 = vmul.f32 %v9503, 0.7978846
      %v9632 = vmul.f32 %v9504, 0.7978846
      %v9633 = vmul.f32 %v9505, 0.7978846
      %v9634 = vmul.f32 %v9506, 0.7978846
      %v9635 = vmul.f32 %v9507, 0.7978846
      %v9636 = vmul.f32 %v9508, 0.7978846
      %v9637 = vmul.f32 %v9509, 0.7978846
      %v9638 = vmul.f32 %v9510, 0.7978846
      %v9639 = vmul.f32 %v9511, 0.7978846
      %v9640 = vmul.f32 %v9512, 0.7978846
      %v9641 = vmul.f32 %v9513, 0.7978846
      %v9642 = vmul.f32 %v9514, 0.7978846
      %v9643 = vmul.f32 %v9515, 0.7978846
      %v9644 = vmul.f32 %v9516, 0.7978846
      %v9645 = vmul.f32 %v9517, 0.7978846
      %v9646 = vmul.f32 %v9518, 0.7978846
      %v9647 = vmul.f32 %v9519, 0.7978846
      %v9648 = vmul.f32 %v9520, 0.7978846
      %v9649 = vmul.f32 %v9521, 0.7978846
      %v9650 = vmul.f32 %v9522, 0.7978846
      %v9651 = vmul.f32 %v9523, 0.7978846
      %v9652 = vmul.f32 %v9524, 0.7978846
      %v9653 = vmul.f32 %v9525, 0.7978846
      %v9654 = vmul.f32 %v9526, 0.7978846
      %v9655 = vmul.f32 %v9527, 0.7978846
      %v9656 = vmul.f32 %v9528, 0.7978846
      %v9657 = vmul.f32 %v9529, 0.7978846
      %v9658 = vmul.f32 %v9530, 0.7978846
      %v9659 = vmul.f32 %v9531, 0.7978846
      %v9660 = vmul.f32 %v9532, 0.7978846
      %v9661 = vmul.f32 %v9533, 0.7978846
      %v9662 = vmul.f32 %v9534, 0.7978846
      %v9663 = vmul.f32 %v9535, 0.7978846
      %v9664 = vmul.f32 %v9536, 0.7978846
      %v9665 = vmul.f32 %v9537, 0.7978846
      %v9666 = vmul.f32 %v9538, 0.7978846
      %v9667 = vmul.f32 %v9539, 0.7978846
      %v9668 = vmul.f32 %v9540, 0.7978846
      %v9669 = vmul.f32 %v9541, 0.7978846
      %v9670 = vmul.f32 %v9542, 0.7978846
      %v9671 = vmul.f32 %v9543, 0.7978846
      %v9672 = vmul.f32 %v9544, 0.7978846
      %v9673 = vmul.f32 %v9545, 0.7978846
      %v9674 = vmul.f32 %v9546, 0.7978846
      %v9675 = vmul.f32 %v9547, 0.7978846
      %v9676 = vmul.f32 %v9548, 0.7978846
      %v9677 = vmul.f32 %v9549, 0.7978846
      %v9678 = vmul.f32 %v9550, 0.7978846
      %v9679 = vmul.f32 %v9551, 0.7978846
      %v9680 = vmul.f32 %v9552, 0.7978846
      %v9681 = vmul.f32 %v9553, 0.7978846
      %v9682 = vmul.f32 %v9554, 0.7978846
      %v9683 = vmul.f32 %v9555, 0.7978846
      %v9684 = vmul.f32 %v9556, 0.7978846
      %v9685 = vmul.f32 %v9557, 0.7978846
      %v9686 = vmul.f32 %v9558, 0.7978846
      %v9687 = vmul.f32 %v9559, 0.7978846
      %v9688 = vmul.f32 %v9560, 0.7978846
      %v9689 = vmul.f32 %v9561, 0.7978846
      %v9690 = vmul.f32 %v9562, 0.7978846
      %v9691 = vmul.f32 %v9563, 0.7978846
      %v9692 = vmul.f32 %v9564, 0.7978846
      %v9693 = vtanh.pop %v9565
      %v9694 = vtanh.pop %v9566
      %v9695 = vtanh.pop %v9567
      %v9696 = vtanh.pop %v9568
      %v9697 = vtanh.pop %v9569
      %v9698 = vtanh.pop %v9570
      %v9699 = vtanh.pop %v9571
      %v9700 = vtanh.pop %v9572
      %v9701 = vtanh.pop %v9573
      %v9702 = vtanh.pop %v9574
      %v9703 = vtanh.pop %v9575
      %v9704 = vtanh.pop %v9576
      %v9705 = vtanh.pop %v9577
      %v9706 = vtanh.pop %v9578
      %v9707 = vtanh.pop %v9579
      %v9708 = vtanh.pop %v9580
      %v9709 = vtanh.pop %v9581
      %v9710 = vtanh.pop %v9582
      %v9711 = vtanh.pop %v9583
      %v9712 = vtanh.pop %v9584
      %v9713 = vtanh.pop %v9585
      %v9714 = vtanh.pop %v9586
      %v9715 = vtanh.pop %v9587
      %v9716 = vtanh.pop %v9588
      %v9717 = vtanh.pop %v9589
      %v9718 = vtanh.pop %v9590
      %v9719 = vtanh.pop %v9591
      %v9720 = vtanh.pop %v9592
      %v9721 = vtanh.pop %v9593
      %v9722 = vtanh.pop %v9594
      %v9723 = vtanh.pop %v9595
      %v9724 = vtanh.pop %v9596
      %v9725 = vtanh.pop %v9597
      %v9726 = vtanh.pop %v9598
      %v9727 = vtanh.pop %v9599
      %v9728 = vtanh.pop %v9600
      %v9729 = vtanh.pop %v9601
      %v9730 = vtanh.pop %v9602
      %v9731 = vtanh.pop %v9603
      %v9732 = vtanh.pop %v9604
      %v9733 = vtanh.pop %v9605
      %v9734 = vtanh.pop %v9606
      %v9735 = vtanh.pop %v9607
      %v9736 = vtanh.pop %v9608
      %v9737 = vtanh.pop %v9609
      %v9738 = vtanh.pop %v9610
      %v9739 = vtanh.pop %v9611
      %v9740 = vtanh.pop %v9612
      %v9741 = vtanh.pop %v9613
      %v9742 = vtanh.pop %v9614
      %v9743 = vtanh.pop %v9615
      %v9744 = vtanh.pop %v9616
      %v9745 = vtanh.pop %v9617
      %v9746 = vtanh.pop %v9618
      %v9747 = vtanh.pop %v9619
      %v9748 = vtanh.pop %v9620
      %v9749 = vtanh.pop %v9621
      %v9750 = vtanh.pop %v9622
      %v9751 = vtanh.pop %v9623
      %v9752 = vtanh.pop %v9624
      %v9753 = vtanh.pop %v9625
      %v9754 = vtanh.pop %v9626
      %v9755 = vtanh.pop %v9627
      %v9756 = vtanh.pop %v9628
      %v9757 = vtanh.pop %v9629
      %v9758 = vtanh.pop %v9630
      %v9759 = vtanh.pop %v9631
      %v9760 = vtanh.pop %v9632
      %v9761 = vtanh.pop %v9633
      %v9762 = vtanh.pop %v9634
      %v9763 = vtanh.pop %v9635
      %v9764 = vtanh.pop %v9636
      %v9765 = vtanh.pop %v9637
      %v9766 = vtanh.pop %v9638
      %v9767 = vtanh.pop %v9639
      %v9768 = vtanh.pop %v9640
      %v9769 = vtanh.pop %v9641
      %v9770 = vtanh.pop %v9642
      %v9771 = vtanh.pop %v9643
      %v9772 = vtanh.pop %v9644
      %v9773 = vtanh.pop %v9645
      %v9774 = vtanh.pop %v9646
      %v9775 = vtanh.pop %v9647
      %v9776 = vtanh.pop %v9648
      %v9777 = vtanh.pop %v9649
      %v9778 = vtanh.pop %v9650
      %v9779 = vtanh.pop %v9651
      %v9780 = vtanh.pop %v9652
      %v9781 = vtanh.pop %v9653
      %v9782 = vtanh.pop %v9654
      %v9783 = vtanh.pop %v9655
      %v9784 = vtanh.pop %v9656
      %v9785 = vtanh.pop %v9657
      %v9786 = vtanh.pop %v9658
      %v9787 = vtanh.pop %v9659
      %v9788 = vtanh.pop %v9660
      %v9789 = vtanh.pop %v9661
      %v9790 = vtanh.pop %v9662
      %v9791 = vtanh.pop %v9663
      %v9792 = vtanh.pop %v9664
      %v9793 = vtanh.pop %v9665
      %v9794 = vtanh.pop %v9666
      %v9795 = vtanh.pop %v9667
      %v9796 = vtanh.pop %v9668
      %v9797 = vtanh.pop %v9669
      %v9798 = vtanh.pop %v9670
      %v9799 = vtanh.pop %v9671
      %v9800 = vtanh.pop %v9672
      %v9801 = vtanh.pop %v9673
      %v9802 = vtanh.pop %v9674
      %v9803 = vtanh.pop %v9675
      %v9804 = vtanh.pop %v9676
      %v9805 = vtanh.pop %v9677
      %v9806 = vtanh.pop %v9678
      %v9807 = vtanh.pop %v9679
      %v9808 = vtanh.pop %v9680
      %v9809 = vtanh.pop %v9681
      %v9810 = vtanh.pop %v9682
      %v9811 = vtanh.pop %v9683
      %v9812 = vtanh.pop %v9684
      %v9813 = vtanh.pop %v9685
      %v9814 = vtanh.pop %v9686
      %v9815 = vtanh.pop %v9687
      %v9816 = vtanh.pop %v9688
      %v9817 = vtanh.pop %v9689
      %v9818 = vtanh.pop %v9690
      %v9819 = vtanh.pop %v9691
      %v9820 = vtanh.pop %v9692
      %v9821 = vadd.f32 %v9693, 1.0
      %v9822 = vadd.f32 %v9694, 1.0
      %v9823 = vadd.f32 %v9695, 1.0
      %v9824 = vadd.f32 %v9696, 1.0
      %v9825 = vadd.f32 %v9697, 1.0
      %v9826 = vadd.f32 %v9698, 1.0
      %v9827 = vadd.f32 %v9699, 1.0
      %v9828 = vadd.f32 %v9700, 1.0
      %v9829 = vadd.f32 %v9701, 1.0
      %v9830 = vadd.f32 %v9702, 1.0
      %v9831 = vadd.f32 %v9703, 1.0
      %v9832 = vadd.f32 %v9704, 1.0
      %v9833 = vadd.f32 %v9705, 1.0
      %v9834 = vadd.f32 %v9706, 1.0
      %v9835 = vadd.f32 %v9707, 1.0
      %v9836 = vadd.f32 %v9708, 1.0
      %v9837 = vadd.f32 %v9709, 1.0
      %v9838 = vadd.f32 %v9710, 1.0
      %v9839 = vadd.f32 %v9711, 1.0
      %v9840 = vadd.f32 %v9712, 1.0
      %v9841 = vadd.f32 %v9713, 1.0
      %v9842 = vadd.f32 %v9714, 1.0
      %v9843 = vadd.f32 %v9715, 1.0
      %v9844 = vadd.f32 %v9716, 1.0
      %v9845 = vadd.f32 %v9717, 1.0
      %v9846 = vadd.f32 %v9718, 1.0
      %v9847 = vadd.f32 %v9719, 1.0
      %v9848 = vadd.f32 %v9720, 1.0
      %v9849 = vadd.f32 %v9721, 1.0
      %v9850 = vadd.f32 %v9722, 1.0
      %v9851 = vadd.f32 %v9723, 1.0
      %v9852 = vadd.f32 %v9724, 1.0
      %v9853 = vadd.f32 %v9725, 1.0
      %v9854 = vadd.f32 %v9726, 1.0
      %v9855 = vadd.f32 %v9727, 1.0
      %v9856 = vadd.f32 %v9728, 1.0
      %v9857 = vadd.f32 %v9729, 1.0
      %v9858 = vadd.f32 %v9730, 1.0
      %v9859 = vadd.f32 %v9731, 1.0
      %v9860 = vadd.f32 %v9732, 1.0
      %v9861 = vadd.f32 %v9733, 1.0
      %v9862 = vadd.f32 %v9734, 1.0
      %v9863 = vadd.f32 %v9735, 1.0
      %v9864 = vadd.f32 %v9736, 1.0
      %v9865 = vadd.f32 %v9737, 1.0
      %v9866 = vadd.f32 %v9738, 1.0
      %v9867 = vadd.f32 %v9739, 1.0
      %v9868 = vadd.f32 %v9740, 1.0
      %v9869 = vadd.f32 %v9741, 1.0
      %v9870 = vadd.f32 %v9742, 1.0
      %v9871 = vadd.f32 %v9743, 1.0
      %v9872 = vadd.f32 %v9744, 1.0
      %v9873 = vadd.f32 %v9745, 1.0
      %v9874 = vadd.f32 %v9746, 1.0
      %v9875 = vadd.f32 %v9747, 1.0
      %v9876 = vadd.f32 %v9748, 1.0
      %v9877 = vadd.f32 %v9749, 1.0
      %v9878 = vadd.f32 %v9750, 1.0
      %v9879 = vadd.f32 %v9751, 1.0
      %v9880 = vadd.f32 %v9752, 1.0
      %v9881 = vadd.f32 %v9753, 1.0
      %v9882 = vadd.f32 %v9754, 1.0
      %v9883 = vadd.f32 %v9755, 1.0
      %v9884 = vadd.f32 %v9756, 1.0
      %v9885 = vadd.f32 %v9757, 1.0
      %v9886 = vadd.f32 %v9758, 1.0
      %v9887 = vadd.f32 %v9759, 1.0
      %v9888 = vadd.f32 %v9760, 1.0
      %v9889 = vadd.f32 %v9761, 1.0
      %v9890 = vadd.f32 %v9762, 1.0
      %v9891 = vadd.f32 %v9763, 1.0
      %v9892 = vadd.f32 %v9764, 1.0
      %v9893 = vadd.f32 %v9765, 1.0
      %v9894 = vadd.f32 %v9766, 1.0
      %v9895 = vadd.f32 %v9767, 1.0
      %v9896 = vadd.f32 %v9768, 1.0
      %v9897 = vadd.f32 %v9769, 1.0
      %v9898 = vadd.f32 %v9770, 1.0
      %v9899 = vadd.f32 %v9771, 1.0
      %v9900 = vadd.f32 %v9772, 1.0
      %v9901 = vadd.f32 %v9773, 1.0
      %v9902 = vadd.f32 %v9774, 1.0
      %v9903 = vadd.f32 %v9775, 1.0
      %v9904 = vadd.f32 %v9776, 1.0
      %v9905 = vadd.f32 %v9777, 1.0
      %v9906 = vadd.f32 %v9778, 1.0
      %v9907 = vadd.f32 %v9779, 1.0
      %v9908 = vadd.f32 %v9780, 1.0
      %v9909 = vadd.f32 %v9781, 1.0
      %v9910 = vadd.f32 %v9782, 1.0
      %v9911 = vadd.f32 %v9783, 1.0
      %v9912 = vadd.f32 %v9784, 1.0
      %v9913 = vadd.f32 %v9785, 1.0
      %v9914 = vadd.f32 %v9786, 1.0
      %v9915 = vadd.f32 %v9787, 1.0
      %v9916 = vadd.f32 %v9788, 1.0
      %v9917 = vadd.f32 %v9789, 1.0
      %v9918 = vadd.f32 %v9790, 1.0
      %v9919 = vadd.f32 %v9791, 1.0
      %v9920 = vadd.f32 %v9792, 1.0
      %v9921 = vadd.f32 %v9793, 1.0
      %v9922 = vadd.f32 %v9794, 1.0
      %v9923 = vadd.f32 %v9795, 1.0
      %v9924 = vadd.f32 %v9796, 1.0
      %v9925 = vadd.f32 %v9797, 1.0
      %v9926 = vadd.f32 %v9798, 1.0
      %v9927 = vadd.f32 %v9799, 1.0
      %v9928 = vadd.f32 %v9800, 1.0
      %v9929 = vadd.f32 %v9801, 1.0
      %v9930 = vadd.f32 %v9802, 1.0
      %v9931 = vadd.f32 %v9803, 1.0
      %v9932 = vadd.f32 %v9804, 1.0
      %v9933 = vadd.f32 %v9805, 1.0
      %v9934 = vadd.f32 %v9806, 1.0
      %v9935 = vadd.f32 %v9807, 1.0
      %v9936 = vadd.f32 %v9808, 1.0
      %v9937 = vadd.f32 %v9809, 1.0
      %v9938 = vadd.f32 %v9810, 1.0
      %v9939 = vadd.f32 %v9811, 1.0
      %v9940 = vadd.f32 %v9812, 1.0
      %v9941 = vadd.f32 %v9813, 1.0
      %v9942 = vadd.f32 %v9814, 1.0
      %v9943 = vadd.f32 %v9815, 1.0
      %v9944 = vadd.f32 %v9816, 1.0
      %v9945 = vadd.f32 %v9817, 1.0
      %v9946 = vadd.f32 %v9818, 1.0
      %v9947 = vadd.f32 %v9819, 1.0
      %v9948 = vadd.f32 %v9820, 1.0
      %v9949 = vmul.f32 %v8925, %v9821
      %v9950 = vmul.f32 %v8926, %v9822
      %v9951 = vmul.f32 %v8927, %v9823
      %v9952 = vmul.f32 %v8928, %v9824
      %v9953 = vmul.f32 %v8929, %v9825
      %v9954 = vmul.f32 %v8930, %v9826
      %v9955 = vmul.f32 %v8931, %v9827
      %v9956 = vmul.f32 %v8932, %v9828
      %v9957 = vmul.f32 %v8933, %v9829
      %v9958 = vmul.f32 %v8934, %v9830
      %v9959 = vmul.f32 %v8935, %v9831
      %v9960 = vmul.f32 %v8936, %v9832
      %v9961 = vmul.f32 %v8937, %v9833
      %v9962 = vmul.f32 %v8938, %v9834
      %v9963 = vmul.f32 %v8939, %v9835
      %v9964 = vmul.f32 %v8940, %v9836
      %v9965 = vmul.f32 %v8941, %v9837
      %v9966 = vmul.f32 %v8942, %v9838
      %v9967 = vmul.f32 %v8943, %v9839
      %v9968 = vmul.f32 %v8944, %v9840
      %v9969 = vmul.f32 %v8945, %v9841
      %v9970 = vmul.f32 %v8946, %v9842
      %v9971 = vmul.f32 %v8947, %v9843
      %v9972 = vmul.f32 %v8948, %v9844
      %v9973 = vmul.f32 %v8949, %v9845
      %v9974 = vmul.f32 %v8950, %v9846
      %v9975 = vmul.f32 %v8951, %v9847
      %v9976 = vmul.f32 %v8952, %v9848
      %v9977 = vmul.f32 %v8953, %v9849
      %v9978 = vmul.f32 %v8954, %v9850
      %v9979 = vmul.f32 %v8955, %v9851
      %v9980 = vmul.f32 %v8956, %v9852
      %v9981 = vmul.f32 %v8957, %v9853
      %v9982 = vmul.f32 %v8958, %v9854
      %v9983 = vmul.f32 %v8959, %v9855
      %v9984 = vmul.f32 %v8960, %v9856
      %v9985 = vmul.f32 %v8961, %v9857
      %v9986 = vmul.f32 %v8962, %v9858
      %v9987 = vmul.f32 %v8963, %v9859
      %v9988 = vmul.f32 %v8964, %v9860
      %v9989 = vmul.f32 %v8965, %v9861
      %v9990 = vmul.f32 %v8966, %v9862
      %v9991 = vmul.f32 %v8967, %v9863
      %v9992 = vmul.f32 %v8968, %v9864
      %v9993 = vmul.f32 %v8969, %v9865
      %v9994 = vmul.f32 %v8970, %v9866
      %v9995 = vmul.f32 %v8971, %v9867
      %v9996 = vmul.f32 %v8972, %v9868
      %v9997 = vmul.f32 %v8973, %v9869
      %v9998 = vmul.f32 %v8974, %v9870
      %v9999 = vmul.f32 %v8975, %v9871
      %v10000 = vmul.f32 %v8976, %v9872
      %v10001 = vmul.f32 %v8977, %v9873
      %v10002 = vmul.f32 %v8978, %v9874
      %v10003 = vmul.f32 %v8979, %v9875
      %v10004 = vmul.f32 %v8980, %v9876
      %v10005 = vmul.f32 %v8981, %v9877
      %v10006 = vmul.f32 %v8982, %v9878
      %v10007 = vmul.f32 %v8983, %v9879
      %v10008 = vmul.f32 %v8984, %v9880
      %v10009 = vmul.f32 %v8985, %v9881
      %v10010 = vmul.f32 %v8986, %v9882
      %v10011 = vmul.f32 %v8987, %v9883
      %v10012 = vmul.f32 %v8988, %v9884
      %v10013 = vmul.f32 %v8989, %v9885
      %v10014 = vmul.f32 %v8990, %v9886
      %v10015 = vmul.f32 %v8991, %v9887
      %v10016 = vmul.f32 %v8992, %v9888
      %v10017 = vmul.f32 %v8993, %v9889
      %v10018 = vmul.f32 %v8994, %v9890
      %v10019 = vmul.f32 %v8995, %v9891
      %v10020 = vmul.f32 %v8996, %v9892
      %v10021 = vmul.f32 %v8997, %v9893
      %v10022 = vmul.f32 %v8998, %v9894
      %v10023 = vmul.f32 %v8999, %v9895
      %v10024 = vmul.f32 %v9000, %v9896
      %v10025 = vmul.f32 %v9001, %v9897
      %v10026 = vmul.f32 %v9002, %v9898
      %v10027 = vmul.f32 %v9003, %v9899
      %v10028 = vmul.f32 %v9004, %v9900
      %v10029 = vmul.f32 %v9005, %v9901
      %v10030 = vmul.f32 %v9006, %v9902
      %v10031 = vmul.f32 %v9007, %v9903
      %v10032 = vmul.f32 %v9008, %v9904
      %v10033 = vmul.f32 %v9009, %v9905
      %v10034 = vmul.f32 %v9010, %v9906
      %v10035 = vmul.f32 %v9011, %v9907
      %v10036 = vmul.f32 %v9012, %v9908
      %v10037 = vmul.f32 %v9013, %v9909
      %v10038 = vmul.f32 %v9014, %v9910
      %v10039 = vmul.f32 %v9015, %v9911
      %v10040 = vmul.f32 %v9016, %v9912
      %v10041 = vmul.f32 %v9017, %v9913
      %v10042 = vmul.f32 %v9018, %v9914
      %v10043 = vmul.f32 %v9019, %v9915
      %v10044 = vmul.f32 %v9020, %v9916
      %v10045 = vmul.f32 %v9021, %v9917
      %v10046 = vmul.f32 %v9022, %v9918
      %v10047 = vmul.f32 %v9023, %v9919
      %v10048 = vmul.f32 %v9024, %v9920
      %v10049 = vmul.f32 %v9025, %v9921
      %v10050 = vmul.f32 %v9026, %v9922
      %v10051 = vmul.f32 %v9027, %v9923
      %v10052 = vmul.f32 %v9028, %v9924
      %v10053 = vmul.f32 %v9029, %v9925
      %v10054 = vmul.f32 %v9030, %v9926
      %v10055 = vmul.f32 %v9031, %v9927
      %v10056 = vmul.f32 %v9032, %v9928
      %v10057 = vmul.f32 %v9033, %v9929
      %v10058 = vmul.f32 %v9034, %v9930
      %v10059 = vmul.f32 %v9035, %v9931
      %v10060 = vmul.f32 %v9036, %v9932
      %v10061 = vmul.f32 %v9037, %v9933
      %v10062 = vmul.f32 %v9038, %v9934
      %v10063 = vmul.f32 %v9039, %v9935
      %v10064 = vmul.f32 %v9040, %v9936
      %v10065 = vmul.f32 %v9041, %v9937
      %v10066 = vmul.f32 %v9042, %v9938
      %v10067 = vmul.f32 %v9043, %v9939
      %v10068 = vmul.f32 %v9044, %v9940
      %v10069 = vmul.f32 %v9045, %v9941
      %v10070 = vmul.f32 %v9046, %v9942
      %v10071 = vmul.f32 %v9047, %v9943
      %v10072 = vmul.f32 %v9048, %v9944
      %v10073 = vmul.f32 %v9049, %v9945
      %v10074 = vmul.f32 %v9050, %v9946
      %v10075 = vmul.f32 %v9051, %v9947
      %v10076 = vmul.f32 %v9052, %v9948
      %v10077 = vpack.c.bf16 %v9953, %v9949
      %v10078 = vpack.c.bf16 %v9954, %v9950
      %v10079 = vpack.c.bf16 %v9955, %v9951
      %v10080 = vpack.c.bf16 %v9956, %v9952
      %v10081 = vpack.c.bf16 %v9961, %v9957
      %v10082 = vpack.c.bf16 %v9962, %v9958
      %v10083 = vpack.c.bf16 %v9963, %v9959
      %v10084 = vpack.c.bf16 %v9964, %v9960
      %v10085 = vpack.c.bf16 %v9969, %v9965
      %v10086 = vpack.c.bf16 %v9970, %v9966
      %v10087 = vpack.c.bf16 %v9971, %v9967
      %v10088 = vpack.c.bf16 %v9972, %v9968
      %v10089 = vpack.c.bf16 %v9977, %v9973
      %v10090 = vpack.c.bf16 %v9978, %v9974
      %v10091 = vpack.c.bf16 %v9979, %v9975
      %v10092 = vpack.c.bf16 %v9980, %v9976
      %v10093 = vpack.c.bf16 %v9985, %v9981
      %v10094 = vpack.c.bf16 %v9986, %v9982
      %v10095 = vpack.c.bf16 %v9987, %v9983
      %v10096 = vpack.c.bf16 %v9988, %v9984
      %v10097 = vpack.c.bf16 %v9993, %v9989
      %v10098 = vpack.c.bf16 %v9994, %v9990
      %v10099 = vpack.c.bf16 %v9995, %v9991
      %v10100 = vpack.c.bf16 %v9996, %v9992
      %v10101 = vpack.c.bf16 %v10001, %v9997
      %v10102 = vpack.c.bf16 %v10002, %v9998
      %v10103 = vpack.c.bf16 %v10003, %v9999
      %v10104 = vpack.c.bf16 %v10004, %v10000
      %v10105 = vpack.c.bf16 %v10009, %v10005
      %v10106 = vpack.c.bf16 %v10010, %v10006
      %v10107 = vpack.c.bf16 %v10011, %v10007
      %v10108 = vpack.c.bf16 %v10012, %v10008
      %v10109 = vpack.c.bf16 %v10017, %v10013
      %v10110 = vpack.c.bf16 %v10018, %v10014
      %v10111 = vpack.c.bf16 %v10019, %v10015
      %v10112 = vpack.c.bf16 %v10020, %v10016
      %v10113 = vpack.c.bf16 %v10025, %v10021
      %v10114 = vpack.c.bf16 %v10026, %v10022
      %v10115 = vpack.c.bf16 %v10027, %v10023
      %v10116 = vpack.c.bf16 %v10028, %v10024
      %v10117 = vpack.c.bf16 %v10033, %v10029
      %v10118 = vpack.c.bf16 %v10034, %v10030
      %v10119 = vpack.c.bf16 %v10035, %v10031
      %v10120 = vpack.c.bf16 %v10036, %v10032
      %v10121 = vpack.c.bf16 %v10041, %v10037
      %v10122 = vpack.c.bf16 %v10042, %v10038
      %v10123 = vpack.c.bf16 %v10043, %v10039
      %v10124 = vpack.c.bf16 %v10044, %v10040
      %v10125 = vpack.c.bf16 %v10049, %v10045
      %v10126 = vpack.c.bf16 %v10050, %v10046
      %v10127 = vpack.c.bf16 %v10051, %v10047
      %v10128 = vpack.c.bf16 %v10052, %v10048
      %v10129 = vpack.c.bf16 %v10057, %v10053
      %v10130 = vpack.c.bf16 %v10058, %v10054
      %v10131 = vpack.c.bf16 %v10059, %v10055
      %v10132 = vpack.c.bf16 %v10060, %v10056
      %v10133 = vpack.c.bf16 %v10065, %v10061
      %v10134 = vpack.c.bf16 %v10066, %v10062
      %v10135 = vpack.c.bf16 %v10067, %v10063
      %v10136 = vpack.c.bf16 %v10068, %v10064
      %v10137 = vpack.c.bf16 %v10073, %v10069
      %v10138 = vpack.c.bf16 %v10074, %v10070
      %v10139 = vpack.c.bf16 %v10075, %v10071
      %v10140 = vpack.c.bf16 %v10076, %v10072
      %v10141 = vld [vmem:[%s12] sm:$0xf]
      %v10142 = vld [vmem:[%s12 + $0x4] sm:$0xf]
      %v10143 = vld [vmem:[%s12 + $0x8] sm:$0xf]
      %v10144 = vld [vmem:[%s12 + $0xc] sm:$0xf]
      %v10145 = vld [vmem:[%s12 + $0x10] sm:$0xf]
      %v10146 = vld [vmem:[%s12 + $0x14] sm:$0xf]
      %v10147 = vld [vmem:[%s12 + $0x18] sm:$0xf]
      %v10148 = vld [vmem:[%s12 + $0x1c] sm:$0xf]
      %v10149 = vld [vmem:[%s12 + $0x20] sm:$0xf]
      %v10150 = vld [vmem:[%s12 + $0x24] sm:$0xf]
      %v10151 = vld [vmem:[%s12 + $0x28] sm:$0xf]
      %v10152 = vld [vmem:[%s12 + $0x2c] sm:$0xf]
      %v10153 = vld [vmem:[%s12 + $0x30] sm:$0xf]
      %v10154 = vld [vmem:[%s12 + $0x34] sm:$0xf]
      %v10155 = vld [vmem:[%s12 + $0x38] sm:$0xf]
      %v10156 = vld [vmem:[%s12 + $0x3c] sm:$0xf]
      %v10157 = vld [vmem:[%s12 + $0x40] sm:$0xf]
      %v10158 = vld [vmem:[%s12 + $0x44] sm:$0xf]
      %v10159 = vld [vmem:[%s12 + $0x48] sm:$0xf]
      %v10160 = vld [vmem:[%s12 + $0x4c] sm:$0xf]
      %v10161 = vld [vmem:[%s12 + $0x50] sm:$0xf]
      %v10162 = vld [vmem:[%s12 + $0x54] sm:$0xf]
      %v10163 = vld [vmem:[%s12 + $0x58] sm:$0xf]
      %v10164 = vld [vmem:[%s12 + $0x5c] sm:$0xf]
      %v10165 = vld [vmem:[%s12 + $0x60] sm:$0xf]
      %v10166 = vld [vmem:[%s12 + $0x64] sm:$0xf]
      %v10167 = vld [vmem:[%s12 + $0x68] sm:$0xf]
      %v10168 = vld [vmem:[%s12 + $0x6c] sm:$0xf]
      %v10169 = vld [vmem:[%s12 + $0x70] sm:$0xf]
      %v10170 = vld [vmem:[%s12 + $0x74] sm:$0xf]
      %v10171 = vld [vmem:[%s12 + $0x78] sm:$0xf]
      %v10172 = vld [vmem:[%s12 + $0x7c] sm:$0xf]
      %v10173 = vld [vmem:[%s12 + $0x80] sm:$0xf]
      %v10174 = vld [vmem:[%s12 + $0x84] sm:$0xf]
      %v10175 = vld [vmem:[%s12 + $0x88] sm:$0xf]
      %v10176 = vld [vmem:[%s12 + $0x8c] sm:$0xf]
      %v10177 = vld [vmem:[%s12 + $0x90] sm:$0xf]
      %v10178 = vld [vmem:[%s12 + $0x94] sm:$0xf]
      %v10179 = vld [vmem:[%s12 + $0x98] sm:$0xf]
      %v10180 = vld [vmem:[%s12 + $0x9c] sm:$0xf]
      %v10181 = vld [vmem:[%s12 + $0xa0] sm:$0xf]
      %v10182 = vld [vmem:[%s12 + $0xa4] sm:$0xf]
      %v10183 = vld [vmem:[%s12 + $0xa8] sm:$0xf]
      %v10184 = vld [vmem:[%s12 + $0xac] sm:$0xf]
      %v10185 = vld [vmem:[%s12 + $0xb0] sm:$0xf]
      %v10186 = vld [vmem:[%s12 + $0xb4] sm:$0xf]
      %v10187 = vld [vmem:[%s12 + $0xb8] sm:$0xf]
      %v10188 = vld [vmem:[%s12 + $0xbc] sm:$0xf]
      %v10189 = vld [vmem:[%s12 + $0xc0] sm:$0xf]
      %v10190 = vld [vmem:[%s12 + $0xc4] sm:$0xf]
      %v10191 = vld [vmem:[%s12 + $0xc8] sm:$0xf]
      %v10192 = vld [vmem:[%s12 + $0xcc] sm:$0xf]
      %v10193 = vld [vmem:[%s12 + $0xd0] sm:$0xf]
      %v10194 = vld [vmem:[%s12 + $0xd4] sm:$0xf]
      %v10195 = vld [vmem:[%s12 + $0xd8] sm:$0xf]
      %v10196 = vld [vmem:[%s12 + $0xdc] sm:$0xf]
      %v10197 = vld [vmem:[%s12 + $0xe0] sm:$0xf]
      %v10198 = vld [vmem:[%s12 + $0xe4] sm:$0xf]
      %v10199 = vld [vmem:[%s12 + $0xe8] sm:$0xf]
      %v10200 = vld [vmem:[%s12 + $0xec] sm:$0xf]
      %v10201 = vld [vmem:[%s12 + $0xf0] sm:$0xf]
      %v10202 = vld [vmem:[%s12 + $0xf4] sm:$0xf]
      %v10203 = vld [vmem:[%s12 + $0xf8] sm:$0xf]
      %v10204 = vld [vmem:[%s12 + $0xfc] sm:$0xf]
      %v10269 = vunpack.c.l.b16 %v10141
      %v10270 = vunpack.c.l.b16 %v10142
      %v10271 = vunpack.c.l.b16 %v10143
      %v10272 = vunpack.c.l.b16 %v10144
      %v10273 = vunpack.c.l.b16 %v10145
      %v10274 = vunpack.c.l.b16 %v10146
      %v10275 = vunpack.c.l.b16 %v10147
      %v10276 = vunpack.c.l.b16 %v10148
      %v10277 = vunpack.c.l.b16 %v10149
      %v10278 = vunpack.c.l.b16 %v10150
      %v10279 = vunpack.c.l.b16 %v10151
      %v10280 = vunpack.c.l.b16 %v10152
      %v10281 = vunpack.c.l.b16 %v10153
      %v10282 = vunpack.c.l.b16 %v10154
      %v10283 = vunpack.c.l.b16 %v10155
      %v10284 = vunpack.c.l.b16 %v10156
      %v10285 = vunpack.c.l.b16 %v10157
      %v10286 = vunpack.c.l.b16 %v10158
      %v10287 = vunpack.c.l.b16 %v10159
      %v10288 = vunpack.c.l.b16 %v10160
      %v10289 = vunpack.c.l.b16 %v10161
      %v10290 = vunpack.c.l.b16 %v10162
      %v10291 = vunpack.c.l.b16 %v10163
      %v10292 = vunpack.c.l.b16 %v10164
      %v10293 = vunpack.c.l.b16 %v10165
      %v10294 = vunpack.c.l.b16 %v10166
      %v10295 = vunpack.c.l.b16 %v10167
      %v10296 = vunpack.c.l.b16 %v10168
      %v10297 = vunpack.c.l.b16 %v10169
      %v10298 = vunpack.c.l.b16 %v10170
      %v10299 = vunpack.c.l.b16 %v10171
      %v10300 = vunpack.c.l.b16 %v10172
      %v10301 = vunpack.c.l.b16 %v10173
      %v10302 = vunpack.c.l.b16 %v10174
      %v10303 = vunpack.c.l.b16 %v10175
      %v10304 = vunpack.c.l.b16 %v10176
      %v10305 = vunpack.c.l.b16 %v10177
      %v10306 = vunpack.c.l.b16 %v10178
      %v10307 = vunpack.c.l.b16 %v10179
      %v10308 = vunpack.c.l.b16 %v10180
      %v10309 = vunpack.c.l.b16 %v10181
      %v10310 = vunpack.c.l.b16 %v10182
      %v10311 = vunpack.c.l.b16 %v10183
      %v10312 = vunpack.c.l.b16 %v10184
      %v10313 = vunpack.c.l.b16 %v10185
      %v10314 = vunpack.c.l.b16 %v10186
      %v10315 = vunpack.c.l.b16 %v10187
      %v10316 = vunpack.c.l.b16 %v10188
      %v10317 = vunpack.c.l.b16 %v10189
      %v10318 = vunpack.c.l.b16 %v10190
      %v10319 = vunpack.c.l.b16 %v10191
      %v10320 = vunpack.c.l.b16 %v10192
      %v10321 = vunpack.c.l.b16 %v10193
      %v10322 = vunpack.c.l.b16 %v10194
      %v10323 = vunpack.c.l.b16 %v10195
      %v10324 = vunpack.c.l.b16 %v10196
      %v10325 = vunpack.c.l.b16 %v10197
      %v10326 = vunpack.c.l.b16 %v10198
      %v10327 = vunpack.c.l.b16 %v10199
      %v10328 = vunpack.c.l.b16 %v10200
      %v10329 = vunpack.c.l.b16 %v10201
      %v10330 = vunpack.c.l.b16 %v10202
      %v10331 = vunpack.c.l.b16 %v10203
      %v10332 = vunpack.c.l.b16 %v10204
      %v10333 = vpack.c.b16 %v10270, %v10269
      %v10334 = vpack.c.b16 %v10272, %v10271
      %v10335 = vpack.c.b16 %v10274, %v10273
      %v10336 = vpack.c.b16 %v10276, %v10275
      %v10337 = vpack.c.b16 %v10278, %v10277
      %v10338 = vpack.c.b16 %v10280, %v10279
      %v10339 = vpack.c.b16 %v10282, %v10281
      %v10340 = vpack.c.b16 %v10284, %v10283
      %v10341 = vpack.c.b16 %v10286, %v10285
      %v10342 = vpack.c.b16 %v10288, %v10287
      %v10343 = vpack.c.b16 %v10290, %v10289
      %v10344 = vpack.c.b16 %v10292, %v10291
      %v10345 = vpack.c.b16 %v10294, %v10293
      %v10346 = vpack.c.b16 %v10296, %v10295
      %v10347 = vpack.c.b16 %v10298, %v10297
      %v10348 = vpack.c.b16 %v10300, %v10299
      %v10349 = vpack.c.b16 %v10302, %v10301
      %v10350 = vpack.c.b16 %v10304, %v10303
      %v10351 = vpack.c.b16 %v10306, %v10305
      %v10352 = vpack.c.b16 %v10308, %v10307
      %v10353 = vpack.c.b16 %v10310, %v10309
      %v10354 = vpack.c.b16 %v10312, %v10311
      %v10355 = vpack.c.b16 %v10314, %v10313
      %v10356 = vpack.c.b16 %v10316, %v10315
      %v10357 = vpack.c.b16 %v10318, %v10317
      %v10358 = vpack.c.b16 %v10320, %v10319
      %v10359 = vpack.c.b16 %v10322, %v10321
      %v10360 = vpack.c.b16 %v10324, %v10323
      %v10361 = vpack.c.b16 %v10326, %v10325
      %v10362 = vpack.c.b16 %v10328, %v10327
      %v10363 = vpack.c.b16 %v10330, %v10329
      %v10364 = vpack.c.b16 %v10332, %v10331
      %10397 = vmatprep.subr.bf16.mxu0 0
      %10398 = vmatpush1.bf16.msra.mxu0 %v10340
      %10399 = vmatprep.subr.bf16.mxu0 0
      %10400 = vmatpush1.bf16.msra.mxu0 %v10339
      %10401 = vmatprep.subr.bf16.mxu0 0
      %10402 = vmatpush1.bf16.msra.mxu0 %v10338
      %10403 = vmatprep.subr.bf16.mxu0 0
      %10404 = vmatpush1.bf16.msra.mxu0 %v10337
      %10405 = vmatprep.subr.bf16.mxu0 0
      %10406 = vmatpush1.bf16.msra.mxu0 %v10336
      %10407 = vmatprep.subr.bf16.mxu0 0
      %10408 = vmatpush1.bf16.msra.mxu0 %v10335
      %10409 = vmatprep.subr.bf16.mxu0 0
      %10410 = vmatpush1.bf16.msra.mxu0 %v10334
      %10411 = vmatprep.subr.bf16.mxu0 0
      %10412 = vmatpush1.bf16.msra.mxu0 %v10333
      %10413 = vmatprep.subr.bf16.mxu0 0
      %10414 = vmatpush2.bf16.msra.mxu0 %v10348
      %10415 = vmatprep.subr.bf16.mxu0 0
      %10416 = vmatpush2.bf16.msra.mxu0 %v10347
      %10417 = vmatprep.subr.bf16.mxu0 0
      %10418 = vmatpush2.bf16.msra.mxu0 %v10346
      %10419 = vmatprep.subr.bf16.mxu0 0
      %10420 = vmatpush2.bf16.msra.mxu0 %v10345
      %10421 = vmatprep.subr.bf16.mxu0 0
      %10422 = vmatpush2.bf16.msra.mxu0 %v10344
      %10423 = vmatprep.subr.bf16.mxu0 0
      %10424 = vmatpush2.bf16.msra.mxu0 %v10343
      %10425 = vmatprep.subr.bf16.mxu0 0
      %10426 = vmatpush2.bf16.msra.mxu0 %v10342
      %10427 = vmatprep.subr.bf16.mxu0 0
      %10428 = vmatpush2.bf16.msra.mxu0 %v10341
      %10429 = vmatprep.mubr.bf16.mxu0 %v10078
      %10430 = vmatmul.mubr.bf16.gmra.mxu0 %v10077
      %v10431 = vpop.f32.mrf.mxu0
      %v10432 = vadd.f32 0.0, %v10431
      %v10433 = vpop.f32.mrf.mxu0
      %v10434 = vpop.f32.mrf.mxu0
      %v10435 = vadd.f32 0.0, %v10434
      %v10436 = vpop.f32.mrf.mxu0
      %10437 = vmatprep.mubr.bf16.mxu0 %v10082
      %10438 = vmatmul.mubr.bf16.gmra.mxu0 %v10081
      %v10439 = vpop.f32.mrf.mxu0
      %v10440 = vadd.f32 0.0, %v10439
      %v10441 = vpop.f32.mrf.mxu0
      %v10442 = vpop.f32.mrf.mxu0
      %v10443 = vadd.f32 0.0, %v10442
      %v10444 = vpop.f32.mrf.mxu0
      %10445 = vmatprep.mubr.bf16.mxu0 %v10086
      %10446 = vmatmul.mubr.bf16.gmra.mxu0 %v10085
      %v10447 = vpop.f32.mrf.mxu0
      %v10448 = vadd.f32 0.0, %v10447
      %v10449 = vpop.f32.mrf.mxu0
      %v10450 = vpop.f32.mrf.mxu0
      %v10451 = vadd.f32 0.0, %v10450
      %v10452 = vpop.f32.mrf.mxu0
      %10453 = vmatprep.mubr.bf16.mxu0 %v10090
      %10454 = vmatmul.mubr.bf16.gmra.mxu0 %v10089
      %v10455 = vpop.f32.mrf.mxu0
      %v10456 = vadd.f32 0.0, %v10455
      %v10457 = vpop.f32.mrf.mxu0
      %v10458 = vpop.f32.mrf.mxu0
      %v10459 = vadd.f32 0.0, %v10458
      %v10460 = vpop.f32.mrf.mxu0
      %10461 = vmatprep.mubr.bf16.mxu0 %v10094
      %10462 = vmatmul.mubr.bf16.gmra.mxu0 %v10093
      %v10463 = vpop.f32.mrf.mxu0
      %v10464 = vadd.f32 0.0, %v10463
      %v10465 = vpop.f32.mrf.mxu0
      %v10466 = vpop.f32.mrf.mxu0
      %v10467 = vadd.f32 0.0, %v10466
      %v10468 = vpop.f32.mrf.mxu0
      %10469 = vmatprep.mubr.bf16.mxu0 %v10098
      %10470 = vmatmul.mubr.bf16.gmra.mxu0 %v10097
      %v10471 = vpop.f32.mrf.mxu0
      %v10472 = vadd.f32 0.0, %v10471
      %v10473 = vpop.f32.mrf.mxu0
      %v10474 = vpop.f32.mrf.mxu0
      %v10475 = vadd.f32 0.0, %v10474
      %v10476 = vpop.f32.mrf.mxu0
      %10477 = vmatprep.mubr.bf16.mxu0 %v10102
      %10478 = vmatmul.mubr.bf16.gmra.mxu0 %v10101
      %v10479 = vpop.f32.mrf.mxu0
      %v10480 = vadd.f32 0.0, %v10479
      %v10481 = vpop.f32.mrf.mxu0
      %v10482 = vpop.f32.mrf.mxu0
      %v10483 = vadd.f32 0.0, %v10482
      %v10484 = vpop.f32.mrf.mxu0
      %10485 = vmatprep.mubr.bf16.mxu0 %v10106
      %10486 = vmatmul.mubr.bf16.gmra.mxu0 %v10105
      %v10487 = vpop.f32.mrf.mxu0
      %v10488 = vadd.f32 0.0, %v10487
      %v10489 = vpop.f32.mrf.mxu0
      %v10490 = vpop.f32.mrf.mxu0
      %v10491 = vadd.f32 0.0, %v10490
      %v10492 = vpop.f32.mrf.mxu0
      %10493 = vmatprep.mubr.bf16.mxu0 %v10110
      %10494 = vmatmul.mubr.bf16.gmra.mxu0 %v10109
      %v10495 = vpop.f32.mrf.mxu0
      %v10496 = vadd.f32 0.0, %v10495
      %v10497 = vpop.f32.mrf.mxu0
      %v10498 = vpop.f32.mrf.mxu0
      %v10499 = vadd.f32 0.0, %v10498
      %v10500 = vpop.f32.mrf.mxu0
      %10501 = vmatprep.mubr.bf16.mxu0 %v10114
      %10502 = vmatmul.mubr.bf16.gmra.mxu0 %v10113
      %v10503 = vpop.f32.mrf.mxu0
      %v10504 = vadd.f32 0.0, %v10503
      %v10505 = vpop.f32.mrf.mxu0
      %v10506 = vpop.f32.mrf.mxu0
      %v10507 = vadd.f32 0.0, %v10506
      %v10508 = vpop.f32.mrf.mxu0
      %10509 = vmatprep.mubr.bf16.mxu0 %v10118
      %10510 = vmatmul.mubr.bf16.gmra.mxu0 %v10117
      %v10511 = vpop.f32.mrf.mxu0
      %v10512 = vadd.f32 0.0, %v10511
      %v10513 = vpop.f32.mrf.mxu0
      %v10514 = vpop.f32.mrf.mxu0
      %v10515 = vadd.f32 0.0, %v10514
      %v10516 = vpop.f32.mrf.mxu0
      %10517 = vmatprep.mubr.bf16.mxu0 %v10122
      %10518 = vmatmul.mubr.bf16.gmra.mxu0 %v10121
      %v10519 = vpop.f32.mrf.mxu0
      %v10520 = vadd.f32 0.0, %v10519
      %v10521 = vpop.f32.mrf.mxu0
      %v10522 = vpop.f32.mrf.mxu0
      %v10523 = vadd.f32 0.0, %v10522
      %v10524 = vpop.f32.mrf.mxu0
      %10525 = vmatprep.mubr.bf16.mxu0 %v10126
      %10526 = vmatmul.mubr.bf16.gmra.mxu0 %v10125
      %v10527 = vpop.f32.mrf.mxu0
      %v10528 = vadd.f32 0.0, %v10527
      %v10529 = vpop.f32.mrf.mxu0
      %v10530 = vpop.f32.mrf.mxu0
      %v10531 = vadd.f32 0.0, %v10530
      %v10532 = vpop.f32.mrf.mxu0
      %10533 = vmatprep.mubr.bf16.mxu0 %v10130
      %10534 = vmatmul.mubr.bf16.gmra.mxu0 %v10129
      %v10535 = vpop.f32.mrf.mxu0
      %v10536 = vadd.f32 0.0, %v10535
      %v10537 = vpop.f32.mrf.mxu0
      %v10538 = vpop.f32.mrf.mxu0
      %v10539 = vadd.f32 0.0, %v10538
      %v10540 = vpop.f32.mrf.mxu0
      %10541 = vmatprep.mubr.bf16.mxu0 %v10134
      %10542 = vmatmul.mubr.bf16.gmra.mxu0 %v10133
      %v10543 = vpop.f32.mrf.mxu0
      %v10544 = vadd.f32 0.0, %v10543
      %v10545 = vpop.f32.mrf.mxu0
      %v10546 = vpop.f32.mrf.mxu0
      %v10547 = vadd.f32 0.0, %v10546
      %v10548 = vpop.f32.mrf.mxu0
      %10549 = vmatprep.mubr.bf16.mxu0 %v10138
      %10550 = vmatmul.mubr.bf16.gmra.mxu0 %v10137
      %v10551 = vpop.f32.mrf.mxu0
      %v10552 = vadd.f32 0.0, %v10551
      %v10553 = vpop.f32.mrf.mxu0
      %v10554 = vpop.f32.mrf.mxu0
      %v10555 = vadd.f32 0.0, %v10554
      %v10556 = vpop.f32.mrf.mxu0
      %10557 = vdwg.mxu0
      %10558 = vmatprep.subr.bf16.mxu0 0
      %10559 = vmatpush1.bf16.msra.mxu0 %v10356
      %10560 = vmatprep.subr.bf16.mxu0 0
      %10561 = vmatpush1.bf16.msra.mxu0 %v10355
      %10562 = vmatprep.subr.bf16.mxu0 0
      %10563 = vmatpush1.bf16.msra.mxu0 %v10354
      %10564 = vmatprep.subr.bf16.mxu0 0
      %10565 = vmatpush1.bf16.msra.mxu0 %v10353
      %10566 = vmatprep.subr.bf16.mxu0 0
      %10567 = vmatpush1.bf16.msra.mxu0 %v10352
      %10568 = vmatprep.subr.bf16.mxu0 0
      %10569 = vmatpush1.bf16.msra.mxu0 %v10351
      %10570 = vmatprep.subr.bf16.mxu0 0
      %10571 = vmatpush1.bf16.msra.mxu0 %v10350
      %10572 = vmatprep.subr.bf16.mxu0 0
      %10573 = vmatpush1.bf16.msra.mxu0 %v10349
      %10574 = vmatprep.subr.bf16.mxu0 0
      %10575 = vmatpush2.bf16.msra.mxu0 %v10364
      %10576 = vmatprep.subr.bf16.mxu0 0
      %10577 = vmatpush2.bf16.msra.mxu0 %v10363
      %10578 = vmatprep.subr.bf16.mxu0 0
      %10579 = vmatpush2.bf16.msra.mxu0 %v10362
      %10580 = vmatprep.subr.bf16.mxu0 0
      %10581 = vmatpush2.bf16.msra.mxu0 %v10361
      %10582 = vmatprep.subr.bf16.mxu0 0
      %10583 = vmatpush2.bf16.msra.mxu0 %v10360
      %10584 = vmatprep.subr.bf16.mxu0 0
      %10585 = vmatpush2.bf16.msra.mxu0 %v10359
      %10586 = vmatprep.subr.bf16.mxu0 0
      %10587 = vmatpush2.bf16.msra.mxu0 %v10358
      %10588 = vmatprep.subr.bf16.mxu0 0
      %10589 = vmatpush2.bf16.msra.mxu0 %v10357
      %10590 = vmatprep.mubr.bf16.mxu0 %v10080
      %10591 = vmatmul.mubr.bf16.gmra.mxu0 %v10079
      %v10592 = vpop.f32.mrf.mxu0
      %v10593 = vadd.f32 %v10432, %v10592
      %v10594 = vpop.f32.mrf.mxu0
      %v10595 = vpop.f32.mrf.mxu0
      %v10596 = vadd.f32 %v10435, %v10595
      %v10597 = vpop.f32.mrf.mxu0
      %10598 = vmatprep.mubr.bf16.mxu0 %v10084
      %10599 = vmatmul.mubr.bf16.gmra.mxu0 %v10083
      %v10600 = vpop.f32.mrf.mxu0
      %v10601 = vadd.f32 %v10440, %v10600
      %v10602 = vpop.f32.mrf.mxu0
      %v10603 = vpop.f32.mrf.mxu0
      %v10604 = vadd.f32 %v10443, %v10603
      %v10605 = vpop.f32.mrf.mxu0
      %10606 = vmatprep.mubr.bf16.mxu0 %v10088
      %10607 = vmatmul.mubr.bf16.gmra.mxu0 %v10087
      %v10608 = vpop.f32.mrf.mxu0
      %v10609 = vadd.f32 %v10448, %v10608
      %v10610 = vpop.f32.mrf.mxu0
      %v10611 = vpop.f32.mrf.mxu0
      %v10612 = vadd.f32 %v10451, %v10611
      %v10613 = vpop.f32.mrf.mxu0
      %10614 = vmatprep.mubr.bf16.mxu0 %v10092
      %10615 = vmatmul.mubr.bf16.gmra.mxu0 %v10091
      %v10616 = vpop.f32.mrf.mxu0
      %v10617 = vadd.f32 %v10456, %v10616
      %v10618 = vpop.f32.mrf.mxu0
      %v10619 = vpop.f32.mrf.mxu0
      %v10620 = vadd.f32 %v10459, %v10619
      %v10621 = vpop.f32.mrf.mxu0
      %10622 = vmatprep.mubr.bf16.mxu0 %v10096
      %10623 = vmatmul.mubr.bf16.gmra.mxu0 %v10095
      %v10624 = vpop.f32.mrf.mxu0
      %v10625 = vadd.f32 %v10464, %v10624
      %v10626 = vpop.f32.mrf.mxu0
      %v10627 = vpop.f32.mrf.mxu0
      %v10628 = vadd.f32 %v10467, %v10627
      %v10629 = vpop.f32.mrf.mxu0
      %10630 = vmatprep.mubr.bf16.mxu0 %v10100
      %10631 = vmatmul.mubr.bf16.gmra.mxu0 %v10099
      %v10632 = vpop.f32.mrf.mxu0
      %v10633 = vadd.f32 %v10472, %v10632
      %v10634 = vpop.f32.mrf.mxu0
      %v10635 = vpop.f32.mrf.mxu0
      %v10636 = vadd.f32 %v10475, %v10635
      %v10637 = vpop.f32.mrf.mxu0
      %10638 = vmatprep.mubr.bf16.mxu0 %v10104
      %10639 = vmatmul.mubr.bf16.gmra.mxu0 %v10103
      %v10640 = vpop.f32.mrf.mxu0
      %v10641 = vadd.f32 %v10480, %v10640
      %v10642 = vpop.f32.mrf.mxu0
      %v10643 = vpop.f32.mrf.mxu0
      %v10644 = vadd.f32 %v10483, %v10643
      %v10645 = vpop.f32.mrf.mxu0
      %10646 = vmatprep.mubr.bf16.mxu0 %v10108
      %10647 = vmatmul.mubr.bf16.gmra.mxu0 %v10107
      %v10648 = vpop.f32.mrf.mxu0
      %v10649 = vadd.f32 %v10488, %v10648
      %v10650 = vpop.f32.mrf.mxu0
      %v10651 = vpop.f32.mrf.mxu0
      %v10652 = vadd.f32 %v10491, %v10651
      %v10653 = vpop.f32.mrf.mxu0
      %10654 = vmatprep.mubr.bf16.mxu0 %v10112
      %10655 = vmatmul.mubr.bf16.gmra.mxu0 %v10111
      %v10656 = vpop.f32.mrf.mxu0
      %v10657 = vadd.f32 %v10496, %v10656
      %v10658 = vpop.f32.mrf.mxu0
      %v10659 = vpop.f32.mrf.mxu0
      %v10660 = vadd.f32 %v10499, %v10659
      %v10661 = vpop.f32.mrf.mxu0
      %10662 = vmatprep.mubr.bf16.mxu0 %v10116
      %10663 = vmatmul.mubr.bf16.gmra.mxu0 %v10115
      %v10664 = vpop.f32.mrf.mxu0
      %v10665 = vadd.f32 %v10504, %v10664
      %v10666 = vpop.f32.mrf.mxu0
      %v10667 = vpop.f32.mrf.mxu0
      %v10668 = vadd.f32 %v10507, %v10667
      %v10669 = vpop.f32.mrf.mxu0
      %10670 = vmatprep.mubr.bf16.mxu0 %v10120
      %10671 = vmatmul.mubr.bf16.gmra.mxu0 %v10119
      %v10672 = vpop.f32.mrf.mxu0
      %v10673 = vadd.f32 %v10512, %v10672
      %v10674 = vpop.f32.mrf.mxu0
      %v10675 = vpop.f32.mrf.mxu0
      %v10676 = vadd.f32 %v10515, %v10675
      %v10677 = vpop.f32.mrf.mxu0
      %10678 = vmatprep.mubr.bf16.mxu0 %v10124
      %10679 = vmatmul.mubr.bf16.gmra.mxu0 %v10123
      %v10680 = vpop.f32.mrf.mxu0
      %v10681 = vadd.f32 %v10520, %v10680
      %v10682 = vpop.f32.mrf.mxu0
      %v10683 = vpop.f32.mrf.mxu0
      %v10684 = vadd.f32 %v10523, %v10683
      %v10685 = vpop.f32.mrf.mxu0
      %10686 = vmatprep.mubr.bf16.mxu0 %v10128
      %10687 = vmatmul.mubr.bf16.gmra.mxu0 %v10127
      %v10688 = vpop.f32.mrf.mxu0
      %v10689 = vadd.f32 %v10528, %v10688
      %v10690 = vpop.f32.mrf.mxu0
      %v10691 = vpop.f32.mrf.mxu0
      %v10692 = vadd.f32 %v10531, %v10691
      %v10693 = vpop.f32.mrf.mxu0
      %10694 = vmatprep.mubr.bf16.mxu0 %v10132
      %10695 = vmatmul.mubr.bf16.gmra.mxu0 %v10131
      %v10696 = vpop.f32.mrf.mxu0
      %v10697 = vadd.f32 %v10536, %v10696
      %v10698 = vpop.f32.mrf.mxu0
      %v10699 = vpop.f32.mrf.mxu0
      %v10700 = vadd.f32 %v10539, %v10699
      %v10701 = vpop.f32.mrf.mxu0
      %10702 = vmatprep.mubr.bf16.mxu0 %v10136
      %10703 = vmatmul.mubr.bf16.gmra.mxu0 %v10135
      %v10704 = vpop.f32.mrf.mxu0
      %v10705 = vadd.f32 %v10544, %v10704
      %v10706 = vpop.f32.mrf.mxu0
      %v10707 = vpop.f32.mrf.mxu0
      %v10708 = vadd.f32 %v10547, %v10707
      %v10709 = vpop.f32.mrf.mxu0
      %10710 = vmatprep.mubr.bf16.mxu0 %v10140
      %10711 = vmatmul.mubr.bf16.gmra.mxu0 %v10139
      %v10712 = vpop.f32.mrf.mxu0
      %v10713 = vadd.f32 %v10552, %v10712
      %v10714 = vpop.f32.mrf.mxu0
      %v10715 = vpop.f32.mrf.mxu0
      %v10716 = vadd.f32 %v10555, %v10715
      %v10717 = vpop.f32.mrf.mxu0
      %10718 = vdwg.mxu0
      %v10719 = vadd.f32 %v7847, %v10593
      %v10720 = vadd.f32 %v7848, %v10596
      %v10721 = vadd.f32 %v7849, %v10601
      %v10722 = vadd.f32 %v7850, %v10604
      %v10723 = vadd.f32 %v7851, %v10609
      %v10724 = vadd.f32 %v7852, %v10612
      %v10725 = vadd.f32 %v7853, %v10617
      %v10726 = vadd.f32 %v7854, %v10620
      %v10727 = vadd.f32 %v7855, %v10625
      %v10728 = vadd.f32 %v7856, %v10628
      %v10729 = vadd.f32 %v7857, %v10633
      %v10730 = vadd.f32 %v7858, %v10636
      %v10731 = vadd.f32 %v7859, %v10641
      %v10732 = vadd.f32 %v7860, %v10644
      %v10733 = vadd.f32 %v7861, %v10649
      %v10734 = vadd.f32 %v7862, %v10652
      %v10735 = vadd.f32 %v7863, %v10657
      %v10736 = vadd.f32 %v7864, %v10660
      %v10737 = vadd.f32 %v7865, %v10665
      %v10738 = vadd.f32 %v7866, %v10668
      %v10739 = vadd.f32 %v7867, %v10673
      %v10740 = vadd.f32 %v7868, %v10676
      %v10741 = vadd.f32 %v7869, %v10681
      %v10742 = vadd.f32 %v7870, %v10684
      %v10743 = vadd.f32 %v7871, %v10689
      %v10744 = vadd.f32 %v7872, %v10692
      %v10745 = vadd.f32 %v7873, %v10697
      %v10746 = vadd.f32 %v7874, %v10700
      %v10747 = vadd.f32 %v7875, %v10705
      %v10748 = vadd.f32 %v7876, %v10708
      %v10749 = vadd.f32 %v7877, %v10713
      %v10750 = vadd.f32 %v7878, %v10716
      %v10751 = vld [vmem:[%s13] sm:$0x1]
      %v10753 = vlaneseq
      %v10754 = vshrl.u32 %v10753, 7
      %v10755 = vsub.s32 0, %v10754
      %v10756 = vrot.slane %v10751, %v10755
      %v10758 = vadd.f32 %v10719, %v10756
      %v10759 = vadd.f32 %v10720, %v10756
      %v10760 = vadd.f32 %v10721, %v10756
      %v10761 = vadd.f32 %v10722, %v10756
      %v10762 = vadd.f32 %v10723, %v10756
      %v10763 = vadd.f32 %v10724, %v10756
      %v10764 = vadd.f32 %v10725, %v10756
      %v10765 = vadd.f32 %v10726, %v10756
      %v10766 = vadd.f32 %v10727, %v10756
      %v10767 = vadd.f32 %v10728, %v10756
      %v10768 = vadd.f32 %v10729, %v10756
      %v10769 = vadd.f32 %v10730, %v10756
      %v10770 = vadd.f32 %v10731, %v10756
      %v10771 = vadd.f32 %v10732, %v10756
      %v10772 = vadd.f32 %v10733, %v10756
      %v10773 = vadd.f32 %v10734, %v10756
      %v10774 = vadd.f32 %v10735, %v10756
      %v10775 = vadd.f32 %v10736, %v10756
      %v10776 = vadd.f32 %v10737, %v10756
      %v10777 = vadd.f32 %v10738, %v10756
      %v10778 = vadd.f32 %v10739, %v10756
      %v10779 = vadd.f32 %v10740, %v10756
      %v10780 = vadd.f32 %v10741, %v10756
      %v10781 = vadd.f32 %v10742, %v10756
      %v10782 = vadd.f32 %v10743, %v10756
      %v10783 = vadd.f32 %v10744, %v10756
      %v10784 = vadd.f32 %v10745, %v10756
      %v10785 = vadd.f32 %v10746, %v10756
      %v10786 = vadd.f32 %v10747, %v10756
      %v10787 = vadd.f32 %v10748, %v10756
      %v10788 = vadd.f32 %v10749, %v10756
      %v10789 = vadd.f32 %v10750, %v10756
      %10790 = vst [vmem:[%s535] sm:$0xff] %v10758
      %10791 = vst [vmem:[%s535 + $0x8] sm:$0xff] %v10766
      %10792 = vst [vmem:[%s535 + $0x10] sm:$0xff] %v10759
      %10793 = vst [vmem:[%s535 + $0x18] sm:$0xff] %v10767
      %10794 = vst [vmem:[%s535 + $0x20] sm:$0xff] %v10760
      %10795 = vst [vmem:[%s535 + $0x28] sm:$0xff] %v10768
      %10796 = vst [vmem:[%s535 + $0x30] sm:$0xff] %v10761
      %10797 = vst [vmem:[%s535 + $0x38] sm:$0xff] %v10769
      %10798 = vst [vmem:[%s535 + $0x40] sm:$0xff] %v10762
      %10799 = vst [vmem:[%s535 + $0x48] sm:$0xff] %v10770
      %10800 = vst [vmem:[%s535 + $0x50] sm:$0xff] %v10763
      %10801 = vst [vmem:[%s535 + $0x58] sm:$0xff] %v10771
      %10802 = vst [vmem:[%s535 + $0x60] sm:$0xff] %v10764
      %10803 = vst [vmem:[%s535 + $0x68] sm:$0xff] %v10772
      %10804 = vst [vmem:[%s535 + $0x70] sm:$0xff] %v10765
      %10805 = vst [vmem:[%s535 + $0x78] sm:$0xff] %v10773
      %10806 = vst [vmem:[%s535 + $0x80] sm:$0xff] %v10774
      %10807 = vst [vmem:[%s535 + $0x88] sm:$0xff] %v10782
      %10808 = vst [vmem:[%s535 + $0x90] sm:$0xff] %v10775
      %10809 = vst [vmem:[%s535 + $0x98] sm:$0xff] %v10783
      %10810 = vst [vmem:[%s535 + $0xa0] sm:$0xff] %v10776
      %10811 = vst [vmem:[%s535 + $0xa8] sm:$0xff] %v10784
      %10812 = vst [vmem:[%s535 + $0xb0] sm:$0xff] %v10777
      %10813 = vst [vmem:[%s535 + $0xb8] sm:$0xff] %v10785
      %10814 = vst [vmem:[%s535 + $0xc0] sm:$0xff] %v10778
      %10815 = vst [vmem:[%s535 + $0xc8] sm:$0xff] %v10786
      %10816 = vst [vmem:[%s535 + $0xd0] sm:$0xff] %v10779
      %10817 = vst [vmem:[%s535 + $0xd8] sm:$0xff] %v10787
      %10818 = vst [vmem:[%s535 + $0xe0] sm:$0xff] %v10780
      %10819 = vst [vmem:[%s535 + $0xe8] sm:$0xff] %v10788
      %10820 = vst [vmem:[%s535 + $0xf0] sm:$0xff] %v10781
      %10821 = vst [vmem:[%s535 + $0xf8] sm:$0xff] %v10789
      %s10822 = smul.u32 16, %s30
      %p10823 = scmp.lt.s32.totalorder %s29, 1
      %s10824 = scalar_select %p10823, %s29, 1
      %p10825 = scmp.lt.s32.totalorder %s10822, 15
      %s10826 = scalar_select %p10825, %s10822, 15
      %s10827 = smul.addr %s10826, 2
      %s10828 = smul.addr %s10824, 32
      %s10829 = sadd.s32 %s10827, %s10828
      %s10830 = smul.addr %s10829, 8
      %s10831 = scalar_lea.vmem %s14, %s10830
      // Predicated region
      $region77: #{swin_block_forward.1} parent=75 // pred_check
        %p10832 = pneg %p363
      $region78: #{swin_block_forward.1} parent=75 // pred_check_branch
        %10834 = sbr.rel (%p10832) target = $region80
      $region79: #{swin_block_forward.1} parent=75 // pred_region
        %s10835 = smul.u32 16, %s30
      $region80: #{swin_block_forward.1} parent=75 // pred_fallthru
        _
    $region76: #{swin_block_forward.1} parent=5 // pred_fallthru
      _
    %p10836 = scmp.le.s32.totalorder 2, %s20
    // Predicated region
    $region81: #{swin_block_forward.1} parent=5 // pred_check
      %p10837 = pneg %p10836
    $region82: #{swin_block_forward.1} parent=5 // pred_check_branch
      %10839 = sbr.rel (%p10837) target = $region84
    $region83: #{swin_block_forward.1} parent=5 // pred_region
      %s10840 = ssub.s32 %s20, 2
      // Predicated region
      $region85: #{swin_block_forward.1} parent=83 // pred_check
        %p10841 = pneg %p369
      $region86: #{swin_block_forward.1} parent=83 // pred_check_branch
        %10843 = sbr.rel (%p10841) target = $region88
      $region87: #{swin_block_forward.1} parent=83 // pred_region
        %s10844 = smul.u32 16, %s32
        %p10845 = scmp.lt.s32.totalorder %s31, 1
        %s10846 = scalar_select %p10845, %s31, 1
        %p10847 = scmp.lt.s32.totalorder %s10844, 15
        %s10848 = scalar_select %p10847, %s10844, 15
        %s10849 = smul.addr %s10848, 2
        %s10850 = smul.addr %s10846, 32
        %s10851 = sadd.s32 %s10849, %s10850
        %s10852 = smul.addr %s10851, 8
        %s10853 = scalar_lea.vmem %s14, %s10852
      $region88: #{swin_block_forward.1} parent=83 // pred_fallthru
        _
    $region84: #{swin_block_forward.1} parent=5 // pred_fallthru
      _
  $region6: #{swin_block_forward.1} parent=0 // loop_footer
    %s24 = sadd.s32 1, %s20
  $region7: #{swin_block_forward.1} parent=0 // loop_footer_branch
    %19 = sbr.rel target = $region3
  $region8: #{swin_block_forward.1} parent=0 // loop_exit
    _

</llo_original>
